<compile_context>
chip_gen: v5e
topology: v5e:2x2
jax: 0.10.0
libtpu: 0.0.40
codegen_flags: <defaults>
</compile_context>

<pallas_src>
import functools

import jax
import jax.numpy as jnp
from jax.experimental import pallas as pl
from jax.experimental.pallas import tpu as pltpu

EPS = 1e-5
_PADW = 8   # sublane-aligned column offset of the interior inside padded scratches


# ----------------------------------------------------------------------------
# Fused kernel: (conv3x3 + folded BN + ReLU) x 2 for one NHWC image
# ----------------------------------------------------------------------------
def _double_conv_kernel(x_ref, w1_ref, b1_ref, w2_ref, b2_ref, o_ref,
                        xpad_ref, hpad_ref, xcol1_ref, xcol2_ref,
                        *, H, W, cin, cmid):
    # x_ref    : (1, H, W, Cin)            f32   unpadded input image
    # w1_ref   : (9*Cin,  Cmid)            bf16  BN-folded weights, tap-major K
    # b1_ref   : (1, Cmid)                 f32
    # w2_ref   : (9*Cmid, Cout)            bf16
    # b2_ref   : (1, Cout)                 f32
    # o_ref    : (1, H, W, Cout)           f32
    # xpad_ref : (H+2, W+2*_PADW, Cin)     f32   zero-padded input (in VMEM)
    # hpad_ref : (H+2, W+2*_PADW, Cmid)    f32   zero-padded intermediate (VMEM)
    # xcol1_ref: (H, W, 9*Cin)             bf16  conv1 im2col scratch
    # xcol2_ref: (H, W, 9*Cmid)            bf16  conv2 im2col scratch
    cout = o_ref.shape[3]

    # ---- zero-padded input built in VMEM (no host-side jnp.pad) --------------
    xpad_ref[...] = jnp.zeros_like(xpad_ref)
    xpad_ref[pl.ds(1, H), pl.ds(_PADW, W), :] = x_ref[0]

    # ---- conv1: direct-store im2col (no per-tap reshape) + one K=9*Cin matmul
    for dy in range(3):                       # static unroll: 9 VMEM-local taps
        for dx in range(3):
            t = dy * 3 + dx
            xcol1_ref[:, :, pl.ds(t * cin, cin)] = (
                xpad_ref[pl.ds(dy, H), pl.ds(_PADW - 1 + dx, W), :]
                .astype(jnp.bfloat16))
    acc1 = jnp.dot(xcol1_ref[...].reshape(H * W, 9 * cin), w1_ref[...],
                   preferred_element_type=jnp.float32)
    h = jnp.maximum(acc1 + b1_ref[...], 0.0)          # folded BN shift + ReLU
    # TODO(synk): Dropout2d is the identity in eval mode (inference semantics).

    # ---- intermediate stays in VMEM: write into padded scratch interior ------
    hpad_ref[...] = jnp.zeros_like(hpad_ref)
    hpad_ref[pl.ds(1, H), pl.ds(_PADW, W), :] = h.reshape(H, W, cmid)

    # ---- conv2: same structure, K = 9*Cmid ------------------------------------
    for dy in range(3):
        for dx in range(3):
            t = dy * 3 + dx
            xcol2_ref[:, :, pl.ds(t * cmid, cmid)] = (
                hpad_ref[pl.ds(dy, H), pl.ds(_PADW - 1 + dx, W), :]
                .astype(jnp.bfloat16))
    acc2 = jnp.dot(xcol2_ref[...].reshape(H * W, 9 * cmid), w2_ref[...],
                   preferred_element_type=jnp.float32)
    y = jnp.maximum(acc2 + b2_ref[...], 0.0)
    o_ref[0] = y.reshape(H, W, cout).astype(o_ref.dtype)


# ----------------------------------------------------------------------------
# Pallas wrapper
# ----------------------------------------------------------------------------
def double_conv_fused(x_nhwc, w1, b1, w2, b2):
    """Fused DoubleConv (eval mode) in NHWC: conv+BN+ReLU -> conv+BN+ReLU."""
    N, H, W, cin = x_nhwc.shape
    cmid = w1.shape[-1]
    cout = w2.shape[-1]
    wpad = W + 2 * _PADW

    kernel = functools.partial(_double_conv_kernel, H=H, W=W, cin=cin, cmid=cmid)

    # VMEM budget: scratches + double-buffered I/O blocks + weights + headroom.
    f32b, bf16b = 4, 2
    scratch_bytes = ((H + 2) * wpad * (cin + cmid) * f32b
                     + H * W * 9 * (cin + cmid) * bf16b)
    io_bytes = 2 * H * W * (cin + cout) * f32b            # pipelined in/out blocks
    w_bytes = 2 * 9 * (cin * cmid + cmid * cout) * bf16b + 2 * (cmid + cout) * f32b
    vmem_limit = int(min(64 * 1024 * 1024,
                         scratch_bytes + io_bytes + w_bytes + 8 * 1024 * 1024))

    # TODO(synk): for large feature maps (whole padded intermediate no longer
    # fitting VMEM, e.g. 256x256x128 f32 on v7x's 64 MiB) switch to per-row-band
    # processing with a 1-row halo recompute instead of keeping the full
    # intermediate resident.
    return pl.pallas_call(
        kernel,
        out_shape=jax.ShapeDtypeStruct((N, H, W, cout), jnp.float32),
        grid=(N,),
        in_specs=[
            pl.BlockSpec((1, H, W, cin), lambda n: (n, 0, 0, 0)),
            pl.BlockSpec((9 * cin, cmid), lambda n: (0, 0)),
            pl.BlockSpec((1, cmid), lambda n: (0, 0)),
            pl.BlockSpec((9 * cmid, cout), lambda n: (0, 0)),
            pl.BlockSpec((1, cout), lambda n: (0, 0)),
        ],
        out_specs=pl.BlockSpec((1, H, W, cout), lambda n: (n, 0, 0, 0)),
        scratch_shapes=[
            pltpu.VMEM((H + 2, wpad, cin), jnp.float32),    # padded input
            pltpu.VMEM((H + 2, wpad, cmid), jnp.float32),   # padded intermediate
            pltpu.VMEM((H, W, 9 * cin), jnp.bfloat16),      # conv1 im2col
            pltpu.VMEM((H, W, 9 * cmid), jnp.bfloat16),     # conv2 im2col
        ],
        compiler_params=pltpu.CompilerParams(
            dimension_semantics=("parallel",),
            vmem_limit_bytes=vmem_limit),
    )(x_nhwc, w1, b1, w2, b2)


# ----------------------------------------------------------------------------
# Parameters (deterministic, synthetic — same shapes as the torch module)
# ----------------------------------------------------------------------------
def init_params(key, in_channels, out_channels):
    ks = iter(jax.random.split(key, 12))

    def conv_bn(cin, cout):
        return dict(
            w=0.05 * jax.random.normal(next(ks), (cout, cin, 3, 3), jnp.float32),
            b=0.05 * jax.random.normal(next(ks), (cout,), jnp.float32),
            gamma=1.0 + 0.1 * jax.random.normal(next(ks), (cout,), jnp.float32),
            beta=0.1 * jax.random.normal(next(ks), (cout,), jnp.float32),
            mean=0.1 * jax.random.normal(next(ks), (cout,), jnp.float32),
            var=0.5 + jnp.abs(jax.random.normal(next(ks), (cout,), jnp.float32)),
        )

    return dict(c1=conv_bn(in_channels, out_channels),
                c2=conv_bn(out_channels, out_channels))


def _fold_conv_bn(c):
    """Fold eval-mode BatchNorm into the conv; layout (9*Cin, Cout), weight bf16."""
    cout, cin = c["w"].shape[0], c["w"].shape[1]
    scale = c["gamma"] / jnp.sqrt(c["var"] + EPS)                     # (Cout,)
    w = jnp.transpose(c["w"], (2, 3, 1, 0)).reshape(9 * cin, cout)    # (dy*3+dx)*Cin+ci
    w = (w * scale).astype(jnp.bfloat16)
    b = ((c["b"] - c["mean"]) * scale + c["beta"]).reshape(1, cout).astype(jnp.float32)
    return w, b


# ----------------------------------------------------------------------------
# Forward (matches DoubleConv.forward, eval mode)
# ----------------------------------------------------------------------------
def double_conv(params, x_nchw):
    # TODO(synk): Dropout2d is a no-op and BatchNorm uses running stats
    # (inference semantics); training-mode batch statistics are not modeled.
    x = jnp.transpose(x_nchw, (0, 2, 3, 1)).astype(jnp.float32)   # NCHW -> NHWC
    w1, b1 = _fold_conv_bn(params["c1"])
    w2, b2 = _fold_conv_bn(params["c2"])
    h = double_conv_fused(x, w1, b1, w2, b2)
    return jnp.transpose(h, (0, 3, 1, 2))                         # back to NCHW


# ----------------------------------------------------------------------------
# Pure-JAX reference (independent of the kernel) for correctness checking
# ----------------------------------------------------------------------------
def reference_forward(params, x_nchw):
    x = jnp.transpose(x_nchw, (0, 2, 3, 1)).astype(jnp.float32)

    def step(t, c):
        y = jax.lax.conv_general_dilated(
            t, jnp.transpose(c["w"], (2, 3, 1, 0)), (1, 1), "SAME",
            dimension_numbers=("NHWC", "HWIO", "NHWC")) + c["b"]
        y = (y - c["mean"]) / jnp.sqrt(c["var"] + EPS) * c["gamma"] + c["beta"]
        return jnp.maximum(y, 0.0)

    h = step(x, params["c1"])
    h = step(h, params["c2"])
    return jnp.transpose(h, (0, 3, 1, 2))


if __name__ == "__main__":
    key = jax.random.PRNGKey(0)
    kx, kp = jax.random.split(key)
    # DoubleConv(64, 128, drop_r) on a small feature map.
    N, Cin, Cout, H, W = 2, 64, 128, 16, 16
    x = jax.random.normal(kx, (N, Cin, H, W), jnp.float32)
    params = init_params(kp, Cin, Cout)

    out = jax.jit(double_conv)(params, x)
    out = jax.block_until_ready(out)
    assert out.shape == (N, Cout, H, W), out.shape

    ref = reference_forward(params, x)
    err = float(jnp.max(jnp.abs(out - ref)))
    # bf16 MXU operands with f32 accumulation -> slightly loosened tolerance.
    assert jnp.allclose(out, ref, atol=5e-2, rtol=5e-2), err
    print("KERNEL_OK")
</pallas_src>

<mosaic_0001>
module attributes {stable_mosaic.version = 11 : i64} {
  func.func @_double_conv_kernel(%arg0: i32, %arg1: memref<1x16x16x64xf32, #tpu.memory_space<vmem>>, %arg2: memref<576x128xbf16, #tpu.memory_space<vmem>>, %arg3: memref<1x128xf32, #tpu.memory_space<vmem>>, %arg4: memref<1152x128xbf16, #tpu.memory_space<vmem>>, %arg5: memref<1x128xf32, #tpu.memory_space<vmem>>, %arg6: memref<1x16x16x128xf32, #tpu.memory_space<vmem>>, %arg7: memref<18x32x64xf32, #tpu.memory_space<vmem>>, %arg8: memref<18x32x128xf32, #tpu.memory_space<vmem>>, %arg9: memref<16x16x576xbf16, #tpu.memory_space<vmem>>, %arg10: memref<16x16x1152xbf16, #tpu.memory_space<vmem>>) attributes {dimension_semantics = [#tpu.dimension_semantics<parallel>], iteration_bounds = array<i64: 2>, scalar_prefetch = 0 : i64, scratch_operands = 4 : i64, tpu.core_type = #tpu.core_type<tc>, window_params = [{transform_indices = @transform_0, window_bounds = array<i64: 1, 16, 16, 64>}, {pipeline_mode = #tpu.pipeline_mode<synchronous>, transform_indices = @transform_1, window_bounds = array<i64: 576, 128>}, {pipeline_mode = #tpu.pipeline_mode<synchronous>, transform_indices = @transform_2, window_bounds = array<i64: 1, 128>}, {pipeline_mode = #tpu.pipeline_mode<synchronous>, transform_indices = @transform_3, window_bounds = array<i64: 1152, 128>}, {pipeline_mode = #tpu.pipeline_mode<synchronous>, transform_indices = @transform_4, window_bounds = array<i64: 1, 128>}, {transform_indices = @transform_5, window_bounds = array<i64: 1, 16, 16, 128>}]} {
    %cst = arith.constant 0.000000e+00 : f32
    %0 = vector.broadcast %cst : f32 to vector<18x32x64xf32>
    %c0 = arith.constant 0 : index
    %c0_0 = arith.constant 0 : index
    %c0_1 = arith.constant 0 : index
    %1 = vector.load %arg7[%c0, %c0_0, %c0_1] : memref<18x32x64xf32, #tpu.memory_space<vmem>>, vector<18x32x64xf32>
    tpu.vector_store %arg7[%c0, %c0_0, %c0_1], %0 {strides = array<i32>} : memref<18x32x64xf32, #tpu.memory_space<vmem>>, vector<18x32x64xf32>,
    %c0_2 = arith.constant 0 : index
    %c0_3 = arith.constant 0 : index
    %c0_4 = arith.constant 0 : index
    %c0_5 = arith.constant 0 : index
    %2 = vector.load %arg1[%c0_2, %c0_3, %c0_4, %c0_5] : memref<1x16x16x64xf32, #tpu.memory_space<vmem>>, vector<1x16x16x64xf32>
    %3 = vector.shape_cast %2 : vector<1x16x16x64xf32> to vector<16x16x64xf32>
    %c1 = arith.constant 1 : index
    %c8 = arith.constant 8 : index
    %c0_6 = arith.constant 0 : index
    %4 = vector.load %arg7[%c1, %c8, %c0_6] : memref<18x32x64xf32, #tpu.memory_space<vmem>>, vector<16x16x64xf32>
    tpu.vector_store %arg7[%c1, %c8, %c0_6], %3 {strides = array<i32>} : memref<18x32x64xf32, #tpu.memory_space<vmem>>, vector<16x16x64xf32>,
    %c0_7 = arith.constant 0 : index
    %c7 = arith.constant 7 : index
    %c0_8 = arith.constant 0 : index
    %5 = vector.load %arg7[%c0_7, %c7, %c0_8] : memref<18x32x64xf32, #tpu.memory_space<vmem>>, vector<16x16x64xf32>
    %6 = arith.truncf %5 : vector<16x16x64xf32> to vector<16x16x64xbf16>
    %c0_9 = arith.constant 0 : index
    %c0_10 = arith.constant 0 : index
    %c0_11 = arith.constant 0 : index
    %7 = vector.load %arg9[%c0_9, %c0_10, %c0_11] : memref<16x16x576xbf16, #tpu.memory_space<vmem>>, vector<16x16x64xbf16>
    tpu.vector_store %arg9[%c0_9, %c0_10, %c0_11], %6 {strides = array<i32>} : memref<16x16x576xbf16, #tpu.memory_space<vmem>>, vector<16x16x64xbf16>,
    %c0_12 = arith.constant 0 : index
    %c8_13 = arith.constant 8 : index
    %c0_14 = arith.constant 0 : index
    %8 = vector.load %arg7[%c0_12, %c8_13, %c0_14] : memref<18x32x64xf32, #tpu.memory_space<vmem>>, vector<16x16x64xf32>
    %9 = arith.truncf %8 : vector<16x16x64xf32> to vector<16x16x64xbf16>
    %c0_15 = arith.constant 0 : index
    %c0_16 = arith.constant 0 : index
    %c64 = arith.constant 64 : index
    %10 = vector.load %arg9[%c0_15, %c0_16, %c64] : memref<16x16x576xbf16, #tpu.memory_space<vmem>>, vector<16x16x64xbf16>
    tpu.vector_store %arg9[%c0_15, %c0_16, %c64], %9 {strides = array<i32>} : memref<16x16x576xbf16, #tpu.memory_space<vmem>>, vector<16x16x64xbf16>,
    %c0_17 = arith.constant 0 : index
    %c9 = arith.constant 9 : index
    %c0_18 = arith.constant 0 : index
    %11 = vector.load %arg7[%c0_17, %c9, %c0_18] : memref<18x32x64xf32, #tpu.memory_space<vmem>>, vector<16x16x64xf32>
    %12 = arith.truncf %11 : vector<16x16x64xf32> to vector<16x16x64xbf16>
    %c0_19 = arith.constant 0 : index
    %c0_20 = arith.constant 0 : index
    %c128 = arith.constant 128 : index
    %13 = vector.load %arg9[%c0_19, %c0_20, %c128] : memref<16x16x576xbf16, #tpu.memory_space<vmem>>, vector<16x16x64xbf16>
    tpu.vector_store %arg9[%c0_19, %c0_20, %c128], %12 {strides = array<i32>} : memref<16x16x576xbf16, #tpu.memory_space<vmem>>, vector<16x16x64xbf16>,
    %c1_21 = arith.constant 1 : index
    %c7_22 = arith.constant 7 : index
    %c0_23 = arith.constant 0 : index
    %14 = vector.load %arg7[%c1_21, %c7_22, %c0_23] : memref<18x32x64xf32, #tpu.memory_space<vmem>>, vector<16x16x64xf32>
    %15 = arith.truncf %14 : vector<16x16x64xf32> to vector<16x16x64xbf16>
    %c0_24 = arith.constant 0 : index
    %c0_25 = arith.constant 0 : index
    %c192 = arith.constant 192 : index
    %16 = vector.load %arg9[%c0_24, %c0_25, %c192] : memref<16x16x576xbf16, #tpu.memory_space<vmem>>, vector<16x16x64xbf16>
    tpu.vector_store %arg9[%c0_24, %c0_25, %c192], %15 {strides = array<i32>} : memref<16x16x576xbf16, #tpu.memory_space<vmem>>, vector<16x16x64xbf16>,
    %c1_26 = arith.constant 1 : index
    %c8_27 = arith.constant 8 : index
    %c0_28 = arith.constant 0 : index
    %17 = vector.load %arg7[%c1_26, %c8_27, %c0_28] : memref<18x32x64xf32, #tpu.memory_space<vmem>>, vector<16x16x64xf32>
    %18 = arith.truncf %17 : vector<16x16x64xf32> to vector<16x16x64xbf16>
    %c0_29 = arith.constant 0 : index
    %c0_30 = arith.constant 0 : index
    %c256 = arith.constant 256 : index
    %19 = vector.load %arg9[%c0_29, %c0_30, %c256] : memref<16x16x576xbf16, #tpu.memory_space<vmem>>, vector<16x16x64xbf16>
    tpu.vector_store %arg9[%c0_29, %c0_30, %c256], %18 {strides = array<i32>} : memref<16x16x576xbf16, #tpu.memory_space<vmem>>, vector<16x16x64xbf16>,
    %c1_31 = arith.constant 1 : index
    %c9_32 = arith.constant 9 : index
    %c0_33 = arith.constant 0 : index
    %20 = vector.load %arg7[%c1_31, %c9_32, %c0_33] : memref<18x32x64xf32, #tpu.memory_space<vmem>>, vector<16x16x64xf32>
    %21 = arith.truncf %20 : vector<16x16x64xf32> to vector<16x16x64xbf16>
    %c0_34 = arith.constant 0 : index
    %c0_35 = arith.constant 0 : index
    %c320 = arith.constant 320 : index
    %22 = vector.load %arg9[%c0_34, %c0_35, %c320] : memref<16x16x576xbf16, #tpu.memory_space<vmem>>, vector<16x16x64xbf16>
    tpu.vector_store %arg9[%c0_34, %c0_35, %c320], %21 {strides = array<i32>} : memref<16x16x576xbf16, #tpu.memory_space<vmem>>, vector<16x16x64xbf16>,
    %c2 = arith.constant 2 : index
    %c7_36 = arith.constant 7 : index
    %c0_37 = arith.constant 0 : index
    %23 = vector.load %arg7[%c2, %c7_36, %c0_37] : memref<18x32x64xf32, #tpu.memory_space<vmem>>, vector<16x16x64xf32>
    %24 = arith.truncf %23 : vector<16x16x64xf32> to vector<16x16x64xbf16>
    %c0_38 = arith.constant 0 : index
    %c0_39 = arith.constant 0 : index
    %c384 = arith.constant 384 : index
    %25 = vector.load %arg9[%c0_38, %c0_39, %c384] : memref<16x16x576xbf16, #tpu.memory_space<vmem>>, vector<16x16x64xbf16>
    tpu.vector_store %arg9[%c0_38, %c0_39, %c384], %24 {strides = array<i32>} : memref<16x16x576xbf16, #tpu.memory_space<vmem>>, vector<16x16x64xbf16>,
    %c2_40 = arith.constant 2 : index
    %c8_41 = arith.constant 8 : index
    %c0_42 = arith.constant 0 : index
    %26 = vector.load %arg7[%c2_40, %c8_41, %c0_42] : memref<18x32x64xf32, #tpu.memory_space<vmem>>, vector<16x16x64xf32>
    %27 = arith.truncf %26 : vector<16x16x64xf32> to vector<16x16x64xbf16>
    %c0_43 = arith.constant 0 : index
    %c0_44 = arith.constant 0 : index
    %c448 = arith.constant 448 : index
    %28 = vector.load %arg9[%c0_43, %c0_44, %c448] : memref<16x16x576xbf16, #tpu.memory_space<vmem>>, vector<16x16x64xbf16>
    tpu.vector_store %arg9[%c0_43, %c0_44, %c448], %27 {strides = array<i32>} : memref<16x16x576xbf16, #tpu.memory_space<vmem>>, vector<16x16x64xbf16>,
    %c2_45 = arith.constant 2 : index
    %c9_46 = arith.constant 9 : index
    %c0_47 = arith.constant 0 : index
    %29 = vector.load %arg7[%c2_45, %c9_46, %c0_47] : memref<18x32x64xf32, #tpu.memory_space<vmem>>, vector<16x16x64xf32>
    %30 = arith.truncf %29 : vector<16x16x64xf32> to vector<16x16x64xbf16>
    %c0_48 = arith.constant 0 : index
    %c0_49 = arith.constant 0 : index
    %c512 = arith.constant 512 : index
    %31 = vector.load %arg9[%c0_48, %c0_49, %c512] : memref<16x16x576xbf16, #tpu.memory_space<vmem>>, vector<16x16x64xbf16>
    tpu.vector_store %arg9[%c0_48, %c0_49, %c512], %30 {strides = array<i32>} : memref<16x16x576xbf16, #tpu.memory_space<vmem>>, vector<16x16x64xbf16>,
    %c0_50 = arith.constant 0 : index
    %c0_51 = arith.constant 0 : index
    %c0_52 = arith.constant 0 : index
    %32 = vector.load %arg9[%c0_50, %c0_51, %c0_52] : memref<16x16x576xbf16, #tpu.memory_space<vmem>>, vector<16x16x576xbf16>
    %33 = vector.shape_cast %32 : vector<16x16x576xbf16> to vector<256x576xbf16>
    %c0_53 = arith.constant 0 : index
    %c0_54 = arith.constant 0 : index
    %34 = vector.load %arg2[%c0_53, %c0_54] : memref<576x128xbf16, #tpu.memory_space<vmem>>, vector<576x128xbf16>
    %cst_55 = arith.constant dense<0.000000e+00> : vector<256x128xf32>
    %35 = tpu.matmul %33, %34, %cst_55 {dimension_numbers = #tpu.dot_dimension_numbers<[1], [0], [0], [1], [0, 0, 1, 1], [], []>} : vector<256x576xbf16>, vector<576x128xbf16>, vector<256x128xf32> -> vector<256x128xf32>
    %c0_56 = arith.constant 0 : index
    %c0_57 = arith.constant 0 : index
    %36 = vector.load %arg3[%c0_56, %c0_57] : memref<1x128xf32, #tpu.memory_space<vmem>>, vector<1x128xf32>
    %37 = vector.broadcast %36 : vector<1x128xf32> to vector<256x128xf32>
    %38 = arith.addf %35, %37 : vector<256x128xf32>
    %cst_58 = arith.constant 0.000000e+00 : f32
    %39 = vector.broadcast %cst_58 : f32 to vector<256x128xf32>
    %40 = arith.maximumf %38, %39 : vector<256x128xf32>
    %cst_59 = arith.constant 0.000000e+00 : f32
    %41 = vector.broadcast %cst_59 : f32 to vector<18x32x128xf32>
    %c0_60 = arith.constant 0 : index
    %c0_61 = arith.constant 0 : index
    %c0_62 = arith.constant 0 : index
    %42 = vector.load %arg8[%c0_60, %c0_61, %c0_62] : memref<18x32x128xf32, #tpu.memory_space<vmem>>, vector<18x32x128xf32>
    tpu.vector_store %arg8[%c0_60, %c0_61, %c0_62], %41 {strides = array<i32>} : memref<18x32x128xf32, #tpu.memory_space<vmem>>, vector<18x32x128xf32>,
    %43 = vector.shape_cast %40 : vector<256x128xf32> to vector<16x16x128xf32>
    %c1_63 = arith.constant 1 : index
    %c8_64 = arith.constant 8 : index
    %c0_65 = arith.constant 0 : index
    %44 = vector.load %arg8[%c1_63, %c8_64, %c0_65] : memref<18x32x128xf32, #tpu.memory_space<vmem>>, vector<16x16x128xf32>
    tpu.vector_store %arg8[%c1_63, %c8_64, %c0_65], %43 {strides = array<i32>} : memref<18x32x128xf32, #tpu.memory_space<vmem>>, vector<16x16x128xf32>,
    %c0_66 = arith.constant 0 : index
    %c7_67 = arith.constant 7 : index
    %c0_68 = arith.constant 0 : index
    %45 = vector.load %arg8[%c0_66, %c7_67, %c0_68] : memref<18x32x128xf32, #tpu.memory_space<vmem>>, vector<16x16x128xf32>
    %46 = arith.truncf %45 : vector<16x16x128xf32> to vector<16x16x128xbf16>
    %c0_69 = arith.constant 0 : index
    %c0_70 = arith.constant 0 : index
    %c0_71 = arith.constant 0 : index
    %47 = vector.load %arg10[%c0_69, %c0_70, %c0_71] : memref<16x16x1152xbf16, #tpu.memory_space<vmem>>, vector<16x16x128xbf16>
    tpu.vector_store %arg10[%c0_69, %c0_70, %c0_71], %46 {strides = array<i32>} : memref<16x16x1152xbf16, #tpu.memory_space<vmem>>, vector<16x16x128xbf16>,
    %c0_72 = arith.constant 0 : index
    %c8_73 = arith.constant 8 : index
    %c0_74 = arith.constant 0 : index
    %48 = vector.load %arg8[%c0_72, %c8_73, %c0_74] : memref<18x32x128xf32, #tpu.memory_space<vmem>>, vector<16x16x128xf32>
    %49 = arith.truncf %48 : vector<16x16x128xf32> to vector<16x16x128xbf16>
    %c0_75 = arith.constant 0 : index
    %c0_76 = arith.constant 0 : index
    %c128_77 = arith.constant 128 : index
    %50 = vector.load %arg10[%c0_75, %c0_76, %c128_77] : memref<16x16x1152xbf16, #tpu.memory_space<vmem>>, vector<16x16x128xbf16>
    tpu.vector_store %arg10[%c0_75, %c0_76, %c128_77], %49 {strides = array<i32>} : memref<16x16x1152xbf16, #tpu.memory_space<vmem>>, vector<16x16x128xbf16>,
    %c0_78 = arith.constant 0 : index
    %c9_79 = arith.constant 9 : index
    %c0_80 = arith.constant 0 : index
    %51 = vector.load %arg8[%c0_78, %c9_79, %c0_80] : memref<18x32x128xf32, #tpu.memory_space<vmem>>, vector<16x16x128xf32>
    %52 = arith.truncf %51 : vector<16x16x128xf32> to vector<16x16x128xbf16>
    %c0_81 = arith.constant 0 : index
    %c0_82 = arith.constant 0 : index
    %c256_83 = arith.constant 256 : index
    %53 = vector.load %arg10[%c0_81, %c0_82, %c256_83] : memref<16x16x1152xbf16, #tpu.memory_space<vmem>>, vector<16x16x128xbf16>
    tpu.vector_store %arg10[%c0_81, %c0_82, %c256_83], %52 {strides = array<i32>} : memref<16x16x1152xbf16, #tpu.memory_space<vmem>>, vector<16x16x128xbf16>,
    %c1_84 = arith.constant 1 : index
    %c7_85 = arith.constant 7 : index
    %c0_86 = arith.constant 0 : index
    %54 = vector.load %arg8[%c1_84, %c7_85, %c0_86] : memref<18x32x128xf32, #tpu.memory_space<vmem>>, vector<16x16x128xf32>
    %55 = arith.truncf %54 : vector<16x16x128xf32> to vector<16x16x128xbf16>
    %c0_87 = arith.constant 0 : index
    %c0_88 = arith.constant 0 : index
    %c384_89 = arith.constant 384 : index
    %56 = vector.load %arg10[%c0_87, %c0_88, %c384_89] : memref<16x16x1152xbf16, #tpu.memory_space<vmem>>, vector<16x16x128xbf16>
    tpu.vector_store %arg10[%c0_87, %c0_88, %c384_89], %55 {strides = array<i32>} : memref<16x16x1152xbf16, #tpu.memory_space<vmem>>, vector<16x16x128xbf16>,
    %c1_90 = arith.constant 1 : index
    %c8_91 = arith.constant 8 : index
    %c0_92 = arith.constant 0 : index
    %57 = vector.load %arg8[%c1_90, %c8_91, %c0_92] : memref<18x32x128xf32, #tpu.memory_space<vmem>>, vector<16x16x128xf32>
    %58 = arith.truncf %57 : vector<16x16x128xf32> to vector<16x16x128xbf16>
    %c0_93 = arith.constant 0 : index
    %c0_94 = arith.constant 0 : index
    %c512_95 = arith.constant 512 : index
    %59 = vector.load %arg10[%c0_93, %c0_94, %c512_95] : memref<16x16x1152xbf16, #tpu.memory_space<vmem>>, vector<16x16x128xbf16>
    tpu.vector_store %arg10[%c0_93, %c0_94, %c512_95], %58 {strides = array<i32>} : memref<16x16x1152xbf16, #tpu.memory_space<vmem>>, vector<16x16x128xbf16>,
    %c1_96 = arith.constant 1 : index
    %c9_97 = arith.constant 9 : index
    %c0_98 = arith.constant 0 : index
    %60 = vector.load %arg8[%c1_96, %c9_97, %c0_98] : memref<18x32x128xf32, #tpu.memory_space<vmem>>, vector<16x16x128xf32>
    %61 = arith.truncf %60 : vector<16x16x128xf32> to vector<16x16x128xbf16>
    %c0_99 = arith.constant 0 : index
    %c0_100 = arith.constant 0 : index
    %c640 = arith.constant 640 : index
    %62 = vector.load %arg10[%c0_99, %c0_100, %c640] : memref<16x16x1152xbf16, #tpu.memory_space<vmem>>, vector<16x16x128xbf16>
    tpu.vector_store %arg10[%c0_99, %c0_100, %c640], %61 {strides = array<i32>} : memref<16x16x1152xbf16, #tpu.memory_space<vmem>>, vector<16x16x128xbf16>,
    %c2_101 = arith.constant 2 : index
    %c7_102 = arith.constant 7 : index
    %c0_103 = arith.constant 0 : index
    %63 = vector.load %arg8[%c2_101, %c7_102, %c0_103] : memref<18x32x128xf32, #tpu.memory_space<vmem>>, vector<16x16x128xf32>
    %64 = arith.truncf %63 : vector<16x16x128xf32> to vector<16x16x128xbf16>
    %c0_104 = arith.constant 0 : index
    %c0_105 = arith.constant 0 : index
    %c768 = arith.constant 768 : index
    %65 = vector.load %arg10[%c0_104, %c0_105, %c768] : memref<16x16x1152xbf16, #tpu.memory_space<vmem>>, vector<16x16x128xbf16>
    tpu.vector_store %arg10[%c0_104, %c0_105, %c768], %64 {strides = array<i32>} : memref<16x16x1152xbf16, #tpu.memory_space<vmem>>, vector<16x16x128xbf16>,
    %c2_106 = arith.constant 2 : index
    %c8_107 = arith.constant 8 : index
    %c0_108 = arith.constant 0 : index
    %66 = vector.load %arg8[%c2_106, %c8_107, %c0_108] : memref<18x32x128xf32, #tpu.memory_space<vmem>>, vector<16x16x128xf32>
    %67 = arith.truncf %66 : vector<16x16x128xf32> to vector<16x16x128xbf16>
    %c0_109 = arith.constant 0 : index
    %c0_110 = arith.constant 0 : index
    %c896 = arith.constant 896 : index
    %68 = vector.load %arg10[%c0_109, %c0_110, %c896] : memref<16x16x1152xbf16, #tpu.memory_space<vmem>>, vector<16x16x128xbf16>
    tpu.vector_store %arg10[%c0_109, %c0_110, %c896], %67 {strides = array<i32>} : memref<16x16x1152xbf16, #tpu.memory_space<vmem>>, vector<16x16x128xbf16>,
    %c2_111 = arith.constant 2 : index
    %c9_112 = arith.constant 9 : index
    %c0_113 = arith.constant 0 : index
    %69 = vector.load %arg8[%c2_111, %c9_112, %c0_113] : memref<18x32x128xf32, #tpu.memory_space<vmem>>, vector<16x16x128xf32>
    %70 = arith.truncf %69 : vector<16x16x128xf32> to vector<16x16x128xbf16>
    %c0_114 = arith.constant 0 : index
    %c0_115 = arith.constant 0 : index
    %c1024 = arith.constant 1024 : index
    %71 = vector.load %arg10[%c0_114, %c0_115, %c1024] : memref<16x16x1152xbf16, #tpu.memory_space<vmem>>, vector<16x16x128xbf16>
    tpu.vector_store %arg10[%c0_114, %c0_115, %c1024], %70 {strides = array<i32>} : memref<16x16x1152xbf16, #tpu.memory_space<vmem>>, vector<16x16x128xbf16>,
    %c0_116 = arith.constant 0 : index
    %c0_117 = arith.constant 0 : index
    %c0_118 = arith.constant 0 : index
    %72 = vector.load %arg10[%c0_116, %c0_117, %c0_118] : memref<16x16x1152xbf16, #tpu.memory_space<vmem>>, vector<16x16x1152xbf16>
    %73 = vector.shape_cast %72 : vector<16x16x1152xbf16> to vector<256x1152xbf16>
    %c0_119 = arith.constant 0 : index
    %c0_120 = arith.constant 0 : index
    %74 = vector.load %arg4[%c0_119, %c0_120] : memref<1152x128xbf16, #tpu.memory_space<vmem>>, vector<1152x128xbf16>
    %cst_121 = arith.constant dense<0.000000e+00> : vector<256x128xf32>
    %75 = tpu.matmul %73, %74, %cst_121 {dimension_numbers = #tpu.dot_dimension_numbers<[1], [0], [0], [1], [0, 0, 1, 1], [], []>} : vector<256x1152xbf16>, vector<1152x128xbf16>, vector<256x128xf32> -> vector<256x128xf32>
    %c0_122 = arith.constant 0 : index
    %c0_123 = arith.constant 0 : index
    %76 = vector.load %arg5[%c0_122, %c0_123] : memref<1x128xf32, #tpu.memory_space<vmem>>, vector<1x128xf32>
    %77 = vector.broadcast %76 : vector<1x128xf32> to vector<256x128xf32>
    %78 = arith.addf %75, %77 : vector<256x128xf32>
    %cst_124 = arith.constant 0.000000e+00 : f32
    %79 = vector.broadcast %cst_124 : f32 to vector<256x128xf32>
    %80 = arith.maximumf %78, %79 : vector<256x128xf32>
    %81 = vector.shape_cast %80 : vector<256x128xf32> to vector<16x16x128xf32>
    %c0_125 = arith.constant 0 : index
    %c0_126 = arith.constant 0 : index
    %c0_127 = arith.constant 0 : index
    %c0_128 = arith.constant 0 : index
    %82 = vector.load %arg6[%c0_125, %c0_126, %c0_127, %c0_128] : memref<1x16x16x128xf32, #tpu.memory_space<vmem>>, vector<1x16x16x128xf32>
    %83 = vector.shape_cast %82 : vector<1x16x16x128xf32> to vector<16x16x128xf32>
    %84 = vector.shape_cast %81 : vector<16x16x128xf32> to vector<1x16x16x128xf32>
    tpu.vector_store %arg6[%c0_125, %c0_126, %c0_127, %c0_128], %84 {strides = array<i32>} : memref<1x16x16x128xf32, #tpu.memory_space<vmem>>, vector<1x16x16x128xf32>,
    return
  }
  func.func @transform_0(%arg0: i32) -> (i32, i32, i32, i32) {
    %c0_i32 = arith.constant 0 : i32
    %c0_i32_0 = arith.constant 0 : i32
    %c0_i32_1 = arith.constant 0 : i32
    %c0_i32_2 = arith.constant 0 : i32
    return %arg0, %c0_i32, %c0_i32_0, %c0_i32_1 : i32, i32, i32, i32
  }
  func.func @transform_1(%arg0: i32) -> (i32, i32) {
    %c0_i32 = arith.constant 0 : i32
    %c0_i32_0 = arith.constant 0 : i32
    %c0_i32_1 = arith.constant 0 : i32
    return %c0_i32, %c0_i32_0 : i32, i32
  }
  func.func @transform_2(%arg0: i32) -> (i32, i32) {
    %c0_i32 = arith.constant 0 : i32
    %c0_i32_0 = arith.constant 0 : i32
    %c0_i32_1 = arith.constant 0 : i32
    return %c0_i32, %c0_i32_0 : i32, i32
  }
  func.func @transform_3(%arg0: i32) -> (i32, i32) {
    %c0_i32 = arith.constant 0 : i32
    %c0_i32_0 = arith.constant 0 : i32
    %c0_i32_1 = arith.constant 0 : i32
    return %c0_i32, %c0_i32_0 : i32, i32
  }
  func.func @transform_4(%arg0: i32) -> (i32, i32) {
    %c0_i32 = arith.constant 0 : i32
    %c0_i32_0 = arith.constant 0 : i32
    %c0_i32_1 = arith.constant 0 : i32
    return %c0_i32, %c0_i32_0 : i32, i32
  }
  func.func @transform_5(%arg0: i32) -> (i32, i32, i32, i32) {
    %c0_i32 = arith.constant 0 : i32
    %c0_i32_0 = arith.constant 0 : i32
    %c0_i32_1 = arith.constant 0 : i32
    %c0_i32_2 = arith.constant 0 : i32
    return %arg0, %c0_i32, %c0_i32_0, %c0_i32_1 : i32, i32, i32, i32
  }
}

</mosaic_0001>

<llo_original>
// kernel: double_conv.1
$region0: #{double_conv.1}
  #allocation0 [shape = 'u32[]', space=smem, size = 0x4, offset = 0x4, fixed_abs, tag = 'smem constant byte address 0x4 - core index']
  #allocation1 [shape = 'u32[72,128]{1,0:T(1,128)}', space=vmem, size = 0x9000, scoped, tag = 'internal scratch']
  #allocation2 [shape = 'f32[18,32,64]{2,1,0:T(8,128)}', space=vmem, size = 0x48000, scoped, tag = 'scratch operand']
  #allocation3 [shape = 'f32[18,32,128]{2,1,0:T(8,128)}', space=vmem, size = 0x48000, scoped, tag = 'scratch operand']
  #allocation4 [shape = 'bf16[16,16,576]{2,1,0:T(8,128)(2,1)}', space=vmem, size = 0x50000, scoped, tag = 'scratch operand']
  #allocation5 [shape = 'bf16[16,16,1152]{2,1,0:T(8,128)(2,1)}', space=vmem, size = 0x90000, scoped, tag = 'scratch operand']
  %s0 = inlined_call_operand.vmem [shape: f32[2,16,16,64], index: 0, kind: input, shape index: {}]
  %s1 = inlined_call_operand.vmem [shape: bf16[576,128], index: 1, kind: input, shape index: {}]
  %s2 = inlined_call_operand.vmem [shape: f32[1,128], index: 2, kind: input, shape index: {}]
  %s3 = inlined_call_operand.vmem [shape: bf16[1152,128], index: 3, kind: input, shape index: {}]
  %s4 = inlined_call_operand.vmem [shape: f32[1,128], index: 4, kind: input, shape index: {}]
  %s5 = inlined_call_operand.hbm [shape: f32[2,16,16,128], index: 5, kind: output, shape index: {}]
  %s6 = sld [smem:[#allocation0]]
  $region53: #{double_conv.1} parent=0
    _
  %s8 = ssub.s32 1, %s6
  %s9 = scalar_select 0, %s8, %s6
  $region1: #{double_conv.1} parent=0
    #allocation6 [shape = 'u8[262144]{0}', space=vmem, size = 0x40000, scoped, tag = 'output window, operand 0']
    #allocation7 [shape = 's32[2]{0}', space=sflag, size = 0x8, scoped, tag = 'scoped memory for double_conv.1']
    %10 = vsyncpa [#allocation7], 0
    %s11 = scalar_lea.sflag [#allocation7], 1
    %12 = vsyncpa %s11, 0
    loop: start=0, step=1, limit=4
    $region2: #{double_conv.1} parent=1 // loop_pre_header
      _
    $region3: #{double_conv.1} parent=1 // loop_header
      %s14 = sphi 0, %s18
      %p15 = scmp.ge.s32.totalorder %s14, 4
      %s24 = sphi 0, %s26
      %s27 = sphi 0, %s24
      %s28 = sphi 0, %s27
      %s44 = sphi 0, %s28
      %s48 = sphi 0, %s48
      %s50 = sphi 0, %s48
      %s51 = sphi 0, %s50
      %s65 = sphi 0, %s51
      %s69 = sphi 0, %s69
      %s71 = sphi 0, %s69
      %s72 = sphi 0, %s71
      %s86 = sphi 0, %s72
      %s90 = sphi 0, %s90
      %s92 = sphi 0, %s90
      %s93 = sphi 0, %s92
      %s107 = sphi 0, %s93
      %s111 = sphi 0, %s111
      %s113 = sphi 0, %s111
      %s114 = sphi 0, %s113
      %s128 = sphi 0, %s114
      %s134 = sphi 0, %s136
      %s137 = sphi 0, %s134
      %s138 = sphi 0, %s137
      %s154 = sphi 0, %s138
    $region4: #{double_conv.1} parent=1 // loop_header_branch
      %17 = sbr.rel (%p15) target = $region8
    $region5: #{double_conv.1} parent=1 // loop_body
      %s19 = ssub.s32 %s14, 1
      %s20 = ssub.s32 %s14, 2
      %s21 = sadd.s32 %s14, 1
      %s22 = ssub.s32 %s14, %s21
      %p23 = scmp.eq.s32.totalorder %s22, 0
      %s25 = sadd.s32 %s24, 1
      %s26 = scalar_select %p23, %s24, %s25
      %p29 = pneg %p23
      %p30 = scmp.eq.s32.totalorder %s14, 1
      %p31 = por %p29, %p30
      %p32 = scmp.ne.s32.totalorder %s24, %s27
      %p33 = scmp.eq.s32.totalorder %s14, 0
      %p34 = por %p32, %p33
      %p35 = scmp.ne.s32.totalorder %s24, %s27
      %p36 = scmp.eq.s32.totalorder %s19, 1
      %p37 = por %p35, %p36
      %p38 = scmp.ne.s32.totalorder %s27, %s28
      %p39 = scmp.eq.s32.totalorder %s19, 0
      %p40 = por %p38, %p39
      %p41 = scmp.ne.s32.totalorder %s27, %s28
      %p42 = scmp.eq.s32.totalorder %s20, 1
      %p43 = por %p41, %p42
      %p45 = scmp.ne.s32.totalorder %s28, %s44
      %p46 = scmp.eq.s32.totalorder %s20, 0
      %p47 = por %p45, %p46
      %s49 = sadd.s32 %s48, 1
      %p52 = scmp.eq.s32.totalorder %s14, 1
      %p53 = scmp.ne.s32.totalorder %s48, %s50
      %p54 = scmp.eq.s32.totalorder %s14, 0
      %p55 = por %p53, %p54
      %p56 = scmp.ne.s32.totalorder %s48, %s50
      %p57 = scmp.eq.s32.totalorder %s19, 1
      %p58 = por %p56, %p57
      %p59 = scmp.ne.s32.totalorder %s50, %s51
      %p60 = scmp.eq.s32.totalorder %s19, 0
      %p61 = por %p59, %p60
      %p62 = scmp.ne.s32.totalorder %s50, %s51
      %p63 = scmp.eq.s32.totalorder %s20, 1
      %p64 = por %p62, %p63
      %p66 = scmp.ne.s32.totalorder %s51, %s65
      %p67 = scmp.eq.s32.totalorder %s20, 0
      %p68 = por %p66, %p67
      %s70 = sadd.s32 %s69, 1
      %p73 = scmp.eq.s32.totalorder %s14, 1
      %p74 = scmp.ne.s32.totalorder %s69, %s71
      %p75 = scmp.eq.s32.totalorder %s14, 0
      %p76 = por %p74, %p75
      %p77 = scmp.ne.s32.totalorder %s69, %s71
      %p78 = scmp.eq.s32.totalorder %s19, 1
      %p79 = por %p77, %p78
      %p80 = scmp.ne.s32.totalorder %s71, %s72
      %p81 = scmp.eq.s32.totalorder %s19, 0
      %p82 = por %p80, %p81
      %p83 = scmp.ne.s32.totalorder %s71, %s72
      %p84 = scmp.eq.s32.totalorder %s20, 1
      %p85 = por %p83, %p84
      %p87 = scmp.ne.s32.totalorder %s72, %s86
      %p88 = scmp.eq.s32.totalorder %s20, 0
      %p89 = por %p87, %p88
      %s91 = sadd.s32 %s90, 1
      %p94 = scmp.eq.s32.totalorder %s14, 1
      %p95 = scmp.ne.s32.totalorder %s90, %s92
      %p96 = scmp.eq.s32.totalorder %s14, 0
      %p97 = por %p95, %p96
      %p98 = scmp.ne.s32.totalorder %s90, %s92
      %p99 = scmp.eq.s32.totalorder %s19, 1
      %p100 = por %p98, %p99
      %p101 = scmp.ne.s32.totalorder %s92, %s93
      %p102 = scmp.eq.s32.totalorder %s19, 0
      %p103 = por %p101, %p102
      %p104 = scmp.ne.s32.totalorder %s92, %s93
      %p105 = scmp.eq.s32.totalorder %s20, 1
      %p106 = por %p104, %p105
      %p108 = scmp.ne.s32.totalorder %s93, %s107
      %p109 = scmp.eq.s32.totalorder %s20, 0
      %p110 = por %p108, %p109
      %s112 = sadd.s32 %s111, 1
      %p115 = scmp.eq.s32.totalorder %s14, 1
      %p116 = scmp.ne.s32.totalorder %s111, %s113
      %p117 = scmp.eq.s32.totalorder %s14, 0
      %p118 = por %p116, %p117
      %p119 = scmp.ne.s32.totalorder %s111, %s113
      %p120 = scmp.eq.s32.totalorder %s19, 1
      %p121 = por %p119, %p120
      %p122 = scmp.ne.s32.totalorder %s113, %s114
      %p123 = scmp.eq.s32.totalorder %s19, 0
      %p124 = por %p122, %p123
      %p125 = scmp.ne.s32.totalorder %s113, %s114
      %p126 = scmp.eq.s32.totalorder %s20, 1
      %p127 = por %p125, %p126
      %p129 = scmp.ne.s32.totalorder %s114, %s128
      %p130 = scmp.eq.s32.totalorder %s20, 0
      %p131 = por %p129, %p130
      %s132 = ssub.s32 %s14, %s21
      %p133 = scmp.eq.s32.totalorder %s132, 0
      %s135 = sadd.s32 %s134, 1
      %s136 = scalar_select %p133, %s134, %s135
      %p139 = pneg %p133
      %p140 = scmp.eq.s32.totalorder %s14, 1
      %p141 = por %p139, %p140
      %p142 = scmp.ne.s32.totalorder %s134, %s137
      %p143 = scmp.eq.s32.totalorder %s14, 0
      %p144 = por %p142, %p143
      %p145 = scmp.ne.s32.totalorder %s134, %s137
      %p146 = scmp.eq.s32.totalorder %s19, 1
      %p147 = por %p145, %p146
      %p148 = scmp.ne.s32.totalorder %s137, %s138
      %p149 = scmp.eq.s32.totalorder %s19, 0
      %p150 = por %p148, %p149
      %p151 = scmp.ne.s32.totalorder %s137, %s138
      %p152 = scmp.eq.s32.totalorder %s20, 1
      %p153 = por %p151, %p152
      %p155 = scmp.ne.s32.totalorder %s138, %s154
      %p156 = scmp.eq.s32.totalorder %s20, 0
      %p157 = por %p155, %p156
      %p158 = scmp.le.s32.totalorder 1, %s14
      %p159 = scmp.lt.s32.totalorder %s14, 3
      %p160 = pnand %p158, %p159
      %p161 = pneg %p160
      // Predicated region
      $region9: #{double_conv.1} parent=5 // pred_check
        _
      $region10: #{double_conv.1} parent=5 // pred_check_branch
        %163 = sbr.rel (%p160) target = $region12
      $region11: #{double_conv.1} parent=5 // pred_region
        %s164 = ssub.s32 %s14, 1
        // Predicated region
        $region13: #{double_conv.1} parent=11 // pred_check
          %p165 = pneg %p61
        $region14: #{double_conv.1} parent=11 // pred_check_branch
          %167 = sbr.rel (%p165) target = $region16
        $region15: #{double_conv.1} parent=11 // pred_region
          _
        $region16: #{double_conv.1} parent=11 // pred_fallthru
          _
        // Predicated region
        $region17: #{double_conv.1} parent=11 // pred_check
          %p168 = pneg %p82
        $region18: #{double_conv.1} parent=11 // pred_check_branch
          %170 = sbr.rel (%p168) target = $region20
        $region19: #{double_conv.1} parent=11 // pred_region
          _
        $region20: #{double_conv.1} parent=11 // pred_fallthru
          _
        // Predicated region
        $region21: #{double_conv.1} parent=11 // pred_check
          %p171 = pneg %p103
        $region22: #{double_conv.1} parent=11 // pred_check_branch
          %173 = sbr.rel (%p171) target = $region24
        $region23: #{double_conv.1} parent=11 // pred_region
          _
        $region24: #{double_conv.1} parent=11 // pred_fallthru
          _
        // Predicated region
        $region25: #{double_conv.1} parent=11 // pred_check
          %p174 = pneg %p124
        $region26: #{double_conv.1} parent=11 // pred_check_branch
          %176 = sbr.rel (%p174) target = $region28
        $region27: #{double_conv.1} parent=11 // pred_region
          _
        $region28: #{double_conv.1} parent=11 // pred_fallthru
          _
      $region12: #{double_conv.1} parent=5 // pred_fallthru
        _
      %p177 = scmp.lt.s32.totalorder %s14, 2
      // Predicated region
      $region29: #{double_conv.1} parent=5 // pred_check
        %p178 = pneg %p177
      $region30: #{double_conv.1} parent=5 // pred_check_branch
        %180 = sbr.rel (%p178) target = $region32
      $region31: #{double_conv.1} parent=5 // pred_region
        // Predicated region
        $region33: #{double_conv.1} parent=31 // pred_check
          %p181 = pneg %p34
        $region34: #{double_conv.1} parent=31 // pred_check_branch
          %183 = sbr.rel (%p181) target = $region36
        $region35: #{double_conv.1} parent=31 // pred_region
          %p184 = scmp.lt.s32.totalorder %s14, 1
          %s185 = scalar_select %p184, %s14, 1
          %s186 = smul.addr %s185, 32
          %s187 = smul.addr %s186, 8
          %s188 = scalar_lea.vmem %s0, %s187
        $region36: #{double_conv.1} parent=31 // pred_fallthru
          _
      $region32: #{double_conv.1} parent=5 // pred_fallthru
        _
      %p189 = scmp.le.s32.totalorder 1, %s14
      %p190 = scmp.lt.s32.totalorder %s14, 3
      %p191 = pnand %p189, %p190
      %p192 = pneg %p191
      // Predicated region
      $region37: #{double_conv.1} parent=5 // pred_check
        _
      $region38: #{double_conv.1} parent=5 // pred_check_branch
        %194 = sbr.rel (%p191) target = $region40
      $region39: #{double_conv.1} parent=5 // pred_region
        %s195 = ssub.s32 %s14, 1
        %p196 = scmp.lt.s32.totalorder %s19, 1
        %s197 = scalar_select %p196, %s19, 1
        %s198 = smul.addr %s197, 32
        %s199 = smul.addr %s198, 8
        %s200 = scalar_lea.vmem %s0, %s199
        %p201 = pneg %p40
        %p202 = pneg %p37
        %p203 = pneg %p61
        %p204 = pneg %p58
        %p205 = pneg %p82
        %p206 = pneg %p79
        %p207 = pneg %p103
        %p208 = pneg %p100
        %p209 = pneg %p124
        %p210 = pneg %p121
        %p211 = pneg %p150
        %p212 = pneg %p147
        %s213 = sand.u32 %s137, 1
        %s214 = scalar_lea.sflag [#allocation7], %s213
        %s215 = sand.u32 %s137, 1
        %s216 = smul.addr %s215, 256
        %s217 = scalar_lea.vmem [#allocation6], %s216
        %p218 = scmp.lt.s32.totalorder %s19, 1
        %s219 = scalar_select %p218, %s19, 1
        %s220 = smul.addr %s219, 32
        %s221 = smul.addr %s220, 8
        %s222 = scalar_lea.vmem %s0, %s221
        %vm224 = vcmask 523264
        %225 = vst.msk [vmem:[#allocation2] sm:$0xff] %vm224, 0.0
        %226 = vst.msk [vmem:[#allocation2 + $0x8] sm:$0xff] %vm224, 0.0
        %227 = vst.msk [vmem:[#allocation2 + $0x10] sm:$0xff] %vm224, 0.0
        %228 = vst.msk [vmem:[#allocation2 + $0x18] sm:$0xff] %vm224, 0.0
        %229 = vst.msk [vmem:[#allocation2 + $0x20] sm:$0xff] %vm224, 0.0
        %230 = vst.msk [vmem:[#allocation2 + $0x28] sm:$0xff] %vm224, 0.0
        %231 = vst.msk [vmem:[#allocation2 + $0x30] sm:$0xff] %vm224, 0.0
        %232 = vst.msk [vmem:[#allocation2 + $0x38] sm:$0xff] %vm224, 0.0
        %233 = vst.msk [vmem:[#allocation2 + $0x40] sm:$0xff] %vm224, 0.0
        %234 = vst.msk [vmem:[#allocation2 + $0x48] sm:$0xff] %vm224, 0.0
        %235 = vst.msk [vmem:[#allocation2 + $0x50] sm:$0xff] %vm224, 0.0
        %236 = vst.msk [vmem:[#allocation2 + $0x58] sm:$0xff] %vm224, 0.0
        %237 = vst.msk [vmem:[#allocation2 + $0x60] sm:$0xff] %vm224, 0.0
        %238 = vst.msk [vmem:[#allocation2 + $0x68] sm:$0xff] %vm224, 0.0
        %239 = vst.msk [vmem:[#allocation2 + $0x70] sm:$0xff] %vm224, 0.0
        %240 = vst.msk [vmem:[#allocation2 + $0x78] sm:$0xff] %vm224, 0.0
        %241 = vst.msk [vmem:[#allocation2 + $0x80] sm:$0xff] %vm224, 0.0
        %242 = vst.msk [vmem:[#allocation2 + $0x88] sm:$0xff] %vm224, 0.0
        %243 = vst.msk [vmem:[#allocation2 + $0x90] sm:$0xff] %vm224, 0.0
        %244 = vst.msk [vmem:[#allocation2 + $0x98] sm:$0xff] %vm224, 0.0
        %245 = vst.msk [vmem:[#allocation2 + $0xa0] sm:$0xff] %vm224, 0.0
        %246 = vst.msk [vmem:[#allocation2 + $0xa8] sm:$0xff] %vm224, 0.0
        %247 = vst.msk [vmem:[#allocation2 + $0xb0] sm:$0xff] %vm224, 0.0
        %248 = vst.msk [vmem:[#allocation2 + $0xb8] sm:$0xff] %vm224, 0.0
        %249 = vst.msk [vmem:[#allocation2 + $0xc0] sm:$0xff] %vm224, 0.0
        %250 = vst.msk [vmem:[#allocation2 + $0xc8] sm:$0xff] %vm224, 0.0
        %251 = vst.msk [vmem:[#allocation2 + $0xd0] sm:$0xff] %vm224, 0.0
        %252 = vst.msk [vmem:[#allocation2 + $0xd8] sm:$0xff] %vm224, 0.0
        %253 = vst.msk [vmem:[#allocation2 + $0xe0] sm:$0xff] %vm224, 0.0
        %254 = vst.msk [vmem:[#allocation2 + $0xe8] sm:$0xff] %vm224, 0.0
        %255 = vst.msk [vmem:[#allocation2 + $0xf0] sm:$0xff] %vm224, 0.0
        %256 = vst.msk [vmem:[#allocation2 + $0xf8] sm:$0xff] %vm224, 0.0
        %257 = vst.msk [vmem:[#allocation2 + $0x100] sm:$0xff] %vm224, 0.0
        %258 = vst.msk [vmem:[#allocation2 + $0x108] sm:$0xff] %vm224, 0.0
        %259 = vst.msk [vmem:[#allocation2 + $0x110] sm:$0xff] %vm224, 0.0
        %260 = vst.msk [vmem:[#allocation2 + $0x118] sm:$0xff] %vm224, 0.0
        %261 = vst.msk [vmem:[#allocation2 + $0x120] sm:$0xff] %vm224, 0.0
        %262 = vst.msk [vmem:[#allocation2 + $0x128] sm:$0xff] %vm224, 0.0
        %263 = vst.msk [vmem:[#allocation2 + $0x130] sm:$0xff] %vm224, 0.0
        %264 = vst.msk [vmem:[#allocation2 + $0x138] sm:$0xff] %vm224, 0.0
        %265 = vst.msk [vmem:[#allocation2 + $0x140] sm:$0xff] %vm224, 0.0
        %266 = vst.msk [vmem:[#allocation2 + $0x148] sm:$0xff] %vm224, 0.0
        %267 = vst.msk [vmem:[#allocation2 + $0x150] sm:$0xff] %vm224, 0.0
        %268 = vst.msk [vmem:[#allocation2 + $0x158] sm:$0xff] %vm224, 0.0
        %269 = vst.msk [vmem:[#allocation2 + $0x160] sm:$0xff] %vm224, 0.0
        %270 = vst.msk [vmem:[#allocation2 + $0x168] sm:$0xff] %vm224, 0.0
        %271 = vst.msk [vmem:[#allocation2 + $0x170] sm:$0xff] %vm224, 0.0
        %272 = vst.msk [vmem:[#allocation2 + $0x178] sm:$0xff] %vm224, 0.0
        %273 = vst.msk [vmem:[#allocation2 + $0x180] sm:$0xff] %vm224, 0.0
        %274 = vst.msk [vmem:[#allocation2 + $0x188] sm:$0xff] %vm224, 0.0
        %275 = vst.msk [vmem:[#allocation2 + $0x190] sm:$0xff] %vm224, 0.0
        %276 = vst.msk [vmem:[#allocation2 + $0x198] sm:$0xff] %vm224, 0.0
        %277 = vst.msk [vmem:[#allocation2 + $0x1a0] sm:$0xff] %vm224, 0.0
        %278 = vst.msk [vmem:[#allocation2 + $0x1a8] sm:$0xff] %vm224, 0.0
        %279 = vst.msk [vmem:[#allocation2 + $0x1b0] sm:$0xff] %vm224, 0.0
        %280 = vst.msk [vmem:[#allocation2 + $0x1b8] sm:$0xff] %vm224, 0.0
        %281 = vst.msk [vmem:[#allocation2 + $0x1c0] sm:$0xff] %vm224, 0.0
        %282 = vst.msk [vmem:[#allocation2 + $0x1c8] sm:$0xff] %vm224, 0.0
        %283 = vst.msk [vmem:[#allocation2 + $0x1d0] sm:$0xff] %vm224, 0.0
        %284 = vst.msk [vmem:[#allocation2 + $0x1d8] sm:$0xff] %vm224, 0.0
        %285 = vst.msk [vmem:[#allocation2 + $0x1e0] sm:$0xff] %vm224, 0.0
        %286 = vst.msk [vmem:[#allocation2 + $0x1e8] sm:$0xff] %vm224, 0.0
        %287 = vst.msk [vmem:[#allocation2 + $0x1f0] sm:$0xff] %vm224, 0.0
        %288 = vst.msk [vmem:[#allocation2 + $0x1f8] sm:$0xff] %vm224, 0.0
        %289 = vst.msk [vmem:[#allocation2 + $0x200] sm:$0xff] %vm224, 0.0
        %290 = vst.msk [vmem:[#allocation2 + $0x208] sm:$0xff] %vm224, 0.0
        %291 = vst.msk [vmem:[#allocation2 + $0x210] sm:$0xff] %vm224, 0.0
        %292 = vst.msk [vmem:[#allocation2 + $0x218] sm:$0xff] %vm224, 0.0
        %293 = vst.msk [vmem:[#allocation2 + $0x220] sm:$0xff] %vm224, 0.0
        %294 = vst.msk [vmem:[#allocation2 + $0x228] sm:$0xff] %vm224, 0.0
        %295 = vst.msk [vmem:[#allocation2 + $0x230] sm:$0xff] %vm224, 0.0
        %296 = vst.msk [vmem:[#allocation2 + $0x238] sm:$0xff] %vm224, 0.0
        %v297 = vld [vmem:[%s222] sm:$0xff]
        %v298 = vld [vmem:[%s222 + $0x8] sm:$0xff]
        %v299 = vld [vmem:[%s222 + $0x10] sm:$0xff]
        %v300 = vld [vmem:[%s222 + $0x18] sm:$0xff]
        %v301 = vld [vmem:[%s222 + $0x20] sm:$0xff]
        %v302 = vld [vmem:[%s222 + $0x28] sm:$0xff]
        %v303 = vld [vmem:[%s222 + $0x30] sm:$0xff]
        %v304 = vld [vmem:[%s222 + $0x38] sm:$0xff]
        %v305 = vld [vmem:[%s222 + $0x40] sm:$0xff]
        %v306 = vld [vmem:[%s222 + $0x48] sm:$0xff]
        %v307 = vld [vmem:[%s222 + $0x50] sm:$0xff]
        %v308 = vld [vmem:[%s222 + $0x58] sm:$0xff]
        %v309 = vld [vmem:[%s222 + $0x60] sm:$0xff]
        %v310 = vld [vmem:[%s222 + $0x68] sm:$0xff]
        %v311 = vld [vmem:[%s222 + $0x70] sm:$0xff]
        %v312 = vld [vmem:[%s222 + $0x78] sm:$0xff]
        %v313 = vld [vmem:[%s222 + $0x80] sm:$0xff]
        %v314 = vld [vmem:[%s222 + $0x88] sm:$0xff]
        %v315 = vld [vmem:[%s222 + $0x90] sm:$0xff]
        %v316 = vld [vmem:[%s222 + $0x98] sm:$0xff]
        %v317 = vld [vmem:[%s222 + $0xa0] sm:$0xff]
        %v318 = vld [vmem:[%s222 + $0xa8] sm:$0xff]
        %v319 = vld [vmem:[%s222 + $0xb0] sm:$0xff]
        %v320 = vld [vmem:[%s222 + $0xb8] sm:$0xff]
        %v321 = vld [vmem:[%s222 + $0xc0] sm:$0xff]
        %v322 = vld [vmem:[%s222 + $0xc8] sm:$0xff]
        %v323 = vld [vmem:[%s222 + $0xd0] sm:$0xff]
        %v324 = vld [vmem:[%s222 + $0xd8] sm:$0xff]
        %v325 = vld [vmem:[%s222 + $0xe0] sm:$0xff]
        %v326 = vld [vmem:[%s222 + $0xe8] sm:$0xff]
        %v327 = vld [vmem:[%s222 + $0xf0] sm:$0xff]
        %v328 = vld [vmem:[%s222 + $0xf8] sm:$0xff]
        %s329 = scalar_lea.vmem [#allocation2], 32
        %330 = vst.msk [vmem:[%s329 + $0x8] sm:$0xff] %vm224, %v297
        %331 = vst.msk [vmem:[%s329 + $0x10] sm:$0xff] %vm224, %v298
        %332 = vst.msk [vmem:[%s329 + $0x28] sm:$0xff] %vm224, %v299
        %333 = vst.msk [vmem:[%s329 + $0x30] sm:$0xff] %vm224, %v300
        %334 = vst.msk [vmem:[%s329 + $0x48] sm:$0xff] %vm224, %v301
        %335 = vst.msk [vmem:[%s329 + $0x50] sm:$0xff] %vm224, %v302
        %336 = vst.msk [vmem:[%s329 + $0x68] sm:$0xff] %vm224, %v303
        %337 = vst.msk [vmem:[%s329 + $0x70] sm:$0xff] %vm224, %v304
        %338 = vst.msk [vmem:[%s329 + $0x88] sm:$0xff] %vm224, %v305
        %339 = vst.msk [vmem:[%s329 + $0x90] sm:$0xff] %vm224, %v306
        %340 = vst.msk [vmem:[%s329 + $0xa8] sm:$0xff] %vm224, %v307
        %341 = vst.msk [vmem:[%s329 + $0xb0] sm:$0xff] %vm224, %v308
        %342 = vst.msk [vmem:[%s329 + $0xc8] sm:$0xff] %vm224, %v309
        %343 = vst.msk [vmem:[%s329 + $0xd0] sm:$0xff] %vm224, %v310
        %344 = vst.msk [vmem:[%s329 + $0xe8] sm:$0xff] %vm224, %v311
        %345 = vst.msk [vmem:[%s329 + $0xf0] sm:$0xff] %vm224, %v312
        %346 = vst.msk [vmem:[%s329 + $0x108] sm:$0xff] %vm224, %v313
        %347 = vst.msk [vmem:[%s329 + $0x110] sm:$0xff] %vm224, %v314
        %348 = vst.msk [vmem:[%s329 + $0x128] sm:$0xff] %vm224, %v315
        %349 = vst.msk [vmem:[%s329 + $0x130] sm:$0xff] %vm224, %v316
        %350 = vst.msk [vmem:[%s329 + $0x148] sm:$0xff] %vm224, %v317
        %351 = vst.msk [vmem:[%s329 + $0x150] sm:$0xff] %vm224, %v318
        %352 = vst.msk [vmem:[%s329 + $0x168] sm:$0xff] %vm224, %v319
        %353 = vst.msk [vmem:[%s329 + $0x170] sm:$0xff] %vm224, %v320
        %354 = vst.msk [vmem:[%s329 + $0x188] sm:$0xff] %vm224, %v321
        %355 = vst.msk [vmem:[%s329 + $0x190] sm:$0xff] %vm224, %v322
        %356 = vst.msk [vmem:[%s329 + $0x1a8] sm:$0xff] %vm224, %v323
        %357 = vst.msk [vmem:[%s329 + $0x1b0] sm:$0xff] %vm224, %v324
        %358 = vst.msk [vmem:[%s329 + $0x1c8] sm:$0xff] %vm224, %v325
        %359 = vst.msk [vmem:[%s329 + $0x1d0] sm:$0xff] %vm224, %v326
        %360 = vst.msk [vmem:[%s329 + $0x1e8] sm:$0xff] %vm224, %v327
        %361 = vst.msk [vmem:[%s329 + $0x1f0] sm:$0xff] %vm224, %v328
        %v362 = vld [vmem:[#allocation2 + $0x7] sm:$0xff]
        %v363 = vld [vmem:[#allocation2 + $0xf] sm:$0xff]
        %v364 = vld [vmem:[#allocation2 + $0x27] sm:$0xff]
        %v365 = vld [vmem:[#allocation2 + $0x2f] sm:$0xff]
        %v366 = vld [vmem:[#allocation2 + $0x47] sm:$0xff]
        %v367 = vld [vmem:[#allocation2 + $0x4f] sm:$0xff]
        %v368 = vld [vmem:[#allocation2 + $0x67] sm:$0xff]
        %v369 = vld [vmem:[#allocation2 + $0x6f] sm:$0xff]
        %v370 = vld [vmem:[#allocation2 + $0x87] sm:$0xff]
        %v371 = vld [vmem:[#allocation2 + $0x8f] sm:$0xff]
        %v372 = vld [vmem:[#allocation2 + $0xa7] sm:$0xff]
        %v373 = vld [vmem:[#allocation2 + $0xaf] sm:$0xff]
        %v374 = vld [vmem:[#allocation2 + $0xc7] sm:$0xff]
        %v375 = vld [vmem:[#allocation2 + $0xcf] sm:$0xff]
        %v376 = vld [vmem:[#allocation2 + $0xe7] sm:$0xff]
        %v377 = vld [vmem:[#allocation2 + $0xef] sm:$0xff]
        %v378 = vld [vmem:[#allocation2 + $0x107] sm:$0xff]
        %v379 = vld [vmem:[#allocation2 + $0x10f] sm:$0xff]
        %v380 = vld [vmem:[#allocation2 + $0x127] sm:$0xff]
        %v381 = vld [vmem:[#allocation2 + $0x12f] sm:$0xff]
        %v382 = vld [vmem:[#allocation2 + $0x147] sm:$0xff]
        %v383 = vld [vmem:[#allocation2 + $0x14f] sm:$0xff]
        %v384 = vld [vmem:[#allocation2 + $0x167] sm:$0xff]
        %v385 = vld [vmem:[#allocation2 + $0x16f] sm:$0xff]
        %v386 = vld [vmem:[#allocation2 + $0x187] sm:$0xff]
        %v387 = vld [vmem:[#allocation2 + $0x18f] sm:$0xff]
        %v388 = vld [vmem:[#allocation2 + $0x1a7] sm:$0xff]
        %v389 = vld [vmem:[#allocation2 + $0x1af] sm:$0xff]
        %v390 = vld [vmem:[#allocation2 + $0x1c7] sm:$0xff]
        %v391 = vld [vmem:[#allocation2 + $0x1cf] sm:$0xff]
        %v392 = vld [vmem:[#allocation2 + $0x1e7] sm:$0xff]
        %v393 = vld [vmem:[#allocation2 + $0x1ef] sm:$0xff]
        %v394 = vpack.c.bf16 %v362, %v362
        %v395 = vpack.c.bf16 %v363, %v363
        %v396 = vpack.c.bf16 %v364, %v364
        %v397 = vpack.c.bf16 %v365, %v365
        %v398 = vpack.c.bf16 %v366, %v366
        %v399 = vpack.c.bf16 %v367, %v367
        %v400 = vpack.c.bf16 %v368, %v368
        %v401 = vpack.c.bf16 %v369, %v369
        %v402 = vpack.c.bf16 %v370, %v370
        %v403 = vpack.c.bf16 %v371, %v371
        %v404 = vpack.c.bf16 %v372, %v372
        %v405 = vpack.c.bf16 %v373, %v373
        %v406 = vpack.c.bf16 %v374, %v374
        %v407 = vpack.c.bf16 %v375, %v375
        %v408 = vpack.c.bf16 %v376, %v376
        %v409 = vpack.c.bf16 %v377, %v377
        %v410 = vpack.c.bf16 %v378, %v378
        %v411 = vpack.c.bf16 %v379, %v379
        %v412 = vpack.c.bf16 %v380, %v380
        %v413 = vpack.c.bf16 %v381, %v381
        %v414 = vpack.c.bf16 %v382, %v382
        %v415 = vpack.c.bf16 %v383, %v383
        %v416 = vpack.c.bf16 %v384, %v384
        %v417 = vpack.c.bf16 %v385, %v385
        %v418 = vpack.c.bf16 %v386, %v386
        %v419 = vpack.c.bf16 %v387, %v387
        %v420 = vpack.c.bf16 %v388, %v388
        %v421 = vpack.c.bf16 %v389, %v389
        %v422 = vpack.c.bf16 %v390, %v390
        %v423 = vpack.c.bf16 %v391, %v391
        %v424 = vpack.c.bf16 %v392, %v392
        %v425 = vpack.c.bf16 %v393, %v393
        %vm426 = vcmask 519168
        %427 = vst.msk [vmem:[#allocation4] sm:$0xf] %vm426, %v394
        %428 = vst.msk [vmem:[#allocation4 + $0x14] sm:$0xf] %vm426, %v395
        %429 = vst.msk [vmem:[#allocation4 + $0x28] sm:$0xf] %vm426, %v396
        %430 = vst.msk [vmem:[#allocation4 + $0x3c] sm:$0xf] %vm426, %v397
        %431 = vst.msk [vmem:[#allocation4 + $0x50] sm:$0xf] %vm426, %v398
        %432 = vst.msk [vmem:[#allocation4 + $0x64] sm:$0xf] %vm426, %v399
        %433 = vst.msk [vmem:[#allocation4 + $0x78] sm:$0xf] %vm426, %v400
        %434 = vst.msk [vmem:[#allocation4 + $0x8c] sm:$0xf] %vm426, %v401
        %435 = vst.msk [vmem:[#allocation4 + $0xa0] sm:$0xf] %vm426, %v402
        %436 = vst.msk [vmem:[#allocation4 + $0xb4] sm:$0xf] %vm426, %v403
        %437 = vst.msk [vmem:[#allocation4 + $0xc8] sm:$0xf] %vm426, %v404
        %438 = vst.msk [vmem:[#allocation4 + $0xdc] sm:$0xf] %vm426, %v405
        %439 = vst.msk [vmem:[#allocation4 + $0xf0] sm:$0xf] %vm426, %v406
        %440 = vst.msk [vmem:[#allocation4 + $0x104] sm:$0xf] %vm426, %v407
        %441 = vst.msk [vmem:[#allocation4 + $0x118] sm:$0xf] %vm426, %v408
        %442 = vst.msk [vmem:[#allocation4 + $0x12c] sm:$0xf] %vm426, %v409
        %443 = vst.msk [vmem:[#allocation4 + $0x140] sm:$0xf] %vm426, %v410
        %444 = vst.msk [vmem:[#allocation4 + $0x154] sm:$0xf] %vm426, %v411
        %445 = vst.msk [vmem:[#allocation4 + $0x168] sm:$0xf] %vm426, %v412
        %446 = vst.msk [vmem:[#allocation4 + $0x17c] sm:$0xf] %vm426, %v413
        %447 = vst.msk [vmem:[#allocation4 + $0x190] sm:$0xf] %vm426, %v414
        %448 = vst.msk [vmem:[#allocation4 + $0x1a4] sm:$0xf] %vm426, %v415
        %449 = vst.msk [vmem:[#allocation4 + $0x1b8] sm:$0xf] %vm426, %v416
        %450 = vst.msk [vmem:[#allocation4 + $0x1cc] sm:$0xf] %vm426, %v417
        %451 = vst.msk [vmem:[#allocation4 + $0x1e0] sm:$0xf] %vm426, %v418
        %452 = vst.msk [vmem:[#allocation4 + $0x1f4] sm:$0xf] %vm426, %v419
        %453 = vst.msk [vmem:[#allocation4 + $0x208] sm:$0xf] %vm426, %v420
        %454 = vst.msk [vmem:[#allocation4 + $0x21c] sm:$0xf] %vm426, %v421
        %455 = vst.msk [vmem:[#allocation4 + $0x230] sm:$0xf] %vm426, %v422
        %456 = vst.msk [vmem:[#allocation4 + $0x244] sm:$0xf] %vm426, %v423
        %457 = vst.msk [vmem:[#allocation4 + $0x258] sm:$0xf] %vm426, %v424
        %458 = vst.msk [vmem:[#allocation4 + $0x26c] sm:$0xf] %vm426, %v425
        %v459 = vld [vmem:[#allocation2 + $0x8] sm:$0xff]
        %v460 = vld [vmem:[#allocation2 + $0x10] sm:$0xff]
        %v461 = vld [vmem:[#allocation2 + $0x28] sm:$0xff]
        %v462 = vld [vmem:[#allocation2 + $0x30] sm:$0xff]
        %v463 = vld [vmem:[#allocation2 + $0x48] sm:$0xff]
        %v464 = vld [vmem:[#allocation2 + $0x50] sm:$0xff]
        %v465 = vld [vmem:[#allocation2 + $0x68] sm:$0xff]
        %v466 = vld [vmem:[#allocation2 + $0x70] sm:$0xff]
        %v467 = vld [vmem:[#allocation2 + $0x88] sm:$0xff]
        %v468 = vld [vmem:[#allocation2 + $0x90] sm:$0xff]
        %v469 = vld [vmem:[#allocation2 + $0xa8] sm:$0xff]
        %v470 = vld [vmem:[#allocation2 + $0xb0] sm:$0xff]
        %v471 = vld [vmem:[#allocation2 + $0xc8] sm:$0xff]
        %v472 = vld [vmem:[#allocation2 + $0xd0] sm:$0xff]
        %v473 = vld [vmem:[#allocation2 + $0xe8] sm:$0xff]
        %v474 = vld [vmem:[#allocation2 + $0xf0] sm:$0xff]
        %v475 = vld [vmem:[#allocation2 + $0x108] sm:$0xff]
        %v476 = vld [vmem:[#allocation2 + $0x110] sm:$0xff]
        %v477 = vld [vmem:[#allocation2 + $0x128] sm:$0xff]
        %v478 = vld [vmem:[#allocation2 + $0x130] sm:$0xff]
        %v479 = vld [vmem:[#allocation2 + $0x148] sm:$0xff]
        %v480 = vld [vmem:[#allocation2 + $0x150] sm:$0xff]
        %v481 = vld [vmem:[#allocation2 + $0x168] sm:$0xff]
        %v482 = vld [vmem:[#allocation2 + $0x170] sm:$0xff]
        %v483 = vld [vmem:[#allocation2 + $0x188] sm:$0xff]
        %v484 = vld [vmem:[#allocation2 + $0x190] sm:$0xff]
        %v485 = vld [vmem:[#allocation2 + $0x1a8] sm:$0xff]
        %v486 = vld [vmem:[#allocation2 + $0x1b0] sm:$0xff]
        %v487 = vld [vmem:[#allocation2 + $0x1c8] sm:$0xff]
        %v488 = vld [vmem:[#allocation2 + $0x1d0] sm:$0xff]
        %v489 = vld [vmem:[#allocation2 + $0x1e8] sm:$0xff]
        %v490 = vld [vmem:[#allocation2 + $0x1f0] sm:$0xff]
        %v491 = vpack.c.bf16 %v459, %v459
        %v492 = vpack.c.bf16 %v460, %v460
        %v493 = vpack.c.bf16 %v461, %v461
        %v494 = vpack.c.bf16 %v462, %v462
        %v495 = vpack.c.bf16 %v463, %v463
        %v496 = vpack.c.bf16 %v464, %v464
        %v497 = vpack.c.bf16 %v465, %v465
        %v498 = vpack.c.bf16 %v466, %v466
        %v499 = vpack.c.bf16 %v467, %v467
        %v500 = vpack.c.bf16 %v468, %v468
        %v501 = vpack.c.bf16 %v469, %v469
        %v502 = vpack.c.bf16 %v470, %v470
        %v503 = vpack.c.bf16 %v471, %v471
        %v504 = vpack.c.bf16 %v472, %v472
        %v505 = vpack.c.bf16 %v473, %v473
        %v506 = vpack.c.bf16 %v474, %v474
        %v507 = vpack.c.bf16 %v475, %v475
        %v508 = vpack.c.bf16 %v476, %v476
        %v509 = vpack.c.bf16 %v477, %v477
        %v510 = vpack.c.bf16 %v478, %v478
        %v511 = vpack.c.bf16 %v479, %v479
        %v512 = vpack.c.bf16 %v480, %v480
        %v513 = vpack.c.bf16 %v481, %v481
        %v514 = vpack.c.bf16 %v482, %v482
        %v515 = vpack.c.bf16 %v483, %v483
        %v516 = vpack.c.bf16 %v484, %v484
        %v517 = vpack.c.bf16 %v485, %v485
        %v518 = vpack.c.bf16 %v486, %v486
        %v519 = vpack.c.bf16 %v487, %v487
        %v520 = vpack.c.bf16 %v488, %v488
        %v521 = vpack.c.bf16 %v489, %v489
        %v522 = vpack.c.bf16 %v490, %v490
        %555 = vrot.lane.b32.xlu0 %v491, 64
        %v556 = vpop.permute.xlu0 %555
        %557 = vrot.lane.b32.xlu0 %v492, 64
        %v558 = vpop.permute.xlu0 %557
        %559 = vrot.lane.b32.xlu0 %v493, 64
        %v560 = vpop.permute.xlu0 %559
        %561 = vrot.lane.b32.xlu0 %v494, 64
        %v562 = vpop.permute.xlu0 %561
        %563 = vrot.lane.b32.xlu0 %v495, 64
        %v564 = vpop.permute.xlu0 %563
        %565 = vrot.lane.b32.xlu0 %v496, 64
        %v566 = vpop.permute.xlu0 %565
        %567 = vrot.lane.b32.xlu0 %v497, 64
        %v568 = vpop.permute.xlu0 %567
        %569 = vrot.lane.b32.xlu0 %v498, 64
        %v570 = vpop.permute.xlu0 %569
        %571 = vrot.lane.b32.xlu0 %v499, 64
        %v572 = vpop.permute.xlu0 %571
        %573 = vrot.lane.b32.xlu0 %v500, 64
        %v574 = vpop.permute.xlu0 %573
        %575 = vrot.lane.b32.xlu0 %v501, 64
        %v576 = vpop.permute.xlu0 %575
        %577 = vrot.lane.b32.xlu0 %v502, 64
        %v578 = vpop.permute.xlu0 %577
        %579 = vrot.lane.b32.xlu0 %v503, 64
        %v580 = vpop.permute.xlu0 %579
        %581 = vrot.lane.b32.xlu0 %v504, 64
        %v582 = vpop.permute.xlu0 %581
        %583 = vrot.lane.b32.xlu0 %v505, 64
        %v584 = vpop.permute.xlu0 %583
        %585 = vrot.lane.b32.xlu0 %v506, 64
        %v586 = vpop.permute.xlu0 %585
        %587 = vrot.lane.b32.xlu0 %v507, 64
        %v588 = vpop.permute.xlu0 %587
        %589 = vrot.lane.b32.xlu0 %v508, 64
        %v590 = vpop.permute.xlu0 %589
        %591 = vrot.lane.b32.xlu0 %v509, 64
        %v592 = vpop.permute.xlu0 %591
        %593 = vrot.lane.b32.xlu0 %v510, 64
        %v594 = vpop.permute.xlu0 %593
        %595 = vrot.lane.b32.xlu0 %v511, 64
        %v596 = vpop.permute.xlu0 %595
        %597 = vrot.lane.b32.xlu0 %v512, 64
        %v598 = vpop.permute.xlu0 %597
        %599 = vrot.lane.b32.xlu0 %v513, 64
        %v600 = vpop.permute.xlu0 %599
        %601 = vrot.lane.b32.xlu0 %v514, 64
        %v602 = vpop.permute.xlu0 %601
        %603 = vrot.lane.b32.xlu0 %v515, 64
        %v604 = vpop.permute.xlu0 %603
        %605 = vrot.lane.b32.xlu0 %v516, 64
        %v606 = vpop.permute.xlu0 %605
        %607 = vrot.lane.b32.xlu0 %v517, 64
        %v608 = vpop.permute.xlu0 %607
        %609 = vrot.lane.b32.xlu0 %v518, 64
        %v610 = vpop.permute.xlu0 %609
        %611 = vrot.lane.b32.xlu0 %v519, 64
        %v612 = vpop.permute.xlu0 %611
        %613 = vrot.lane.b32.xlu0 %v520, 64
        %v614 = vpop.permute.xlu0 %613
        %615 = vrot.lane.b32.xlu0 %v521, 64
        %v616 = vpop.permute.xlu0 %615
        %617 = vrot.lane.b32.xlu0 %v522, 64
        %v618 = vpop.permute.xlu0 %617
        %vm651 = vcmask 1043968
        %652 = vst.msk [vmem:[#allocation4] sm:$0xf] %vm651, %v556
        %653 = vst.msk [vmem:[#allocation4 + $0x14] sm:$0xf] %vm651, %v558
        %654 = vst.msk [vmem:[#allocation4 + $0x28] sm:$0xf] %vm651, %v560
        %655 = vst.msk [vmem:[#allocation4 + $0x3c] sm:$0xf] %vm651, %v562
        %656 = vst.msk [vmem:[#allocation4 + $0x50] sm:$0xf] %vm651, %v564
        %657 = vst.msk [vmem:[#allocation4 + $0x64] sm:$0xf] %vm651, %v566
        %658 = vst.msk [vmem:[#allocation4 + $0x78] sm:$0xf] %vm651, %v568
        %659 = vst.msk [vmem:[#allocation4 + $0x8c] sm:$0xf] %vm651, %v570
        %660 = vst.msk [vmem:[#allocation4 + $0xa0] sm:$0xf] %vm651, %v572
        %661 = vst.msk [vmem:[#allocation4 + $0xb4] sm:$0xf] %vm651, %v574
        %662 = vst.msk [vmem:[#allocation4 + $0xc8] sm:$0xf] %vm651, %v576
        %663 = vst.msk [vmem:[#allocation4 + $0xdc] sm:$0xf] %vm651, %v578
        %664 = vst.msk [vmem:[#allocation4 + $0xf0] sm:$0xf] %vm651, %v580
        %665 = vst.msk [vmem:[#allocation4 + $0x104] sm:$0xf] %vm651, %v582
        %666 = vst.msk [vmem:[#allocation4 + $0x118] sm:$0xf] %vm651, %v584
        %667 = vst.msk [vmem:[#allocation4 + $0x12c] sm:$0xf] %vm651, %v586
        %668 = vst.msk [vmem:[#allocation4 + $0x140] sm:$0xf] %vm651, %v588
        %669 = vst.msk [vmem:[#allocation4 + $0x154] sm:$0xf] %vm651, %v590
        %670 = vst.msk [vmem:[#allocation4 + $0x168] sm:$0xf] %vm651, %v592
        %671 = vst.msk [vmem:[#allocation4 + $0x17c] sm:$0xf] %vm651, %v594
        %672 = vst.msk [vmem:[#allocation4 + $0x190] sm:$0xf] %vm651, %v596
        %673 = vst.msk [vmem:[#allocation4 + $0x1a4] sm:$0xf] %vm651, %v598
        %674 = vst.msk [vmem:[#allocation4 + $0x1b8] sm:$0xf] %vm651, %v600
        %675 = vst.msk [vmem:[#allocation4 + $0x1cc] sm:$0xf] %vm651, %v602
        %676 = vst.msk [vmem:[#allocation4 + $0x1e0] sm:$0xf] %vm651, %v604
        %677 = vst.msk [vmem:[#allocation4 + $0x1f4] sm:$0xf] %vm651, %v606
        %678 = vst.msk [vmem:[#allocation4 + $0x208] sm:$0xf] %vm651, %v608
        %679 = vst.msk [vmem:[#allocation4 + $0x21c] sm:$0xf] %vm651, %v610
        %680 = vst.msk [vmem:[#allocation4 + $0x230] sm:$0xf] %vm651, %v612
        %681 = vst.msk [vmem:[#allocation4 + $0x244] sm:$0xf] %vm651, %v614
        %682 = vst.msk [vmem:[#allocation4 + $0x258] sm:$0xf] %vm651, %v616
        %683 = vst.msk [vmem:[#allocation4 + $0x26c] sm:$0xf] %vm651, %v618
        %v684 = vld [vmem:[#allocation2 + $0x9] sm:$0xff]
        %v685 = vld [vmem:[#allocation2 + $0x11] sm:$0xff]
        %v686 = vld [vmem:[#allocation2 + $0x29] sm:$0xff]
        %v687 = vld [vmem:[#allocation2 + $0x31] sm:$0xff]
        %v688 = vld [vmem:[#allocation2 + $0x49] sm:$0xff]
        %v689 = vld [vmem:[#allocation2 + $0x51] sm:$0xff]
        %v690 = vld [vmem:[#allocation2 + $0x69] sm:$0xff]
        %v691 = vld [vmem:[#allocation2 + $0x71] sm:$0xff]
        %v692 = vld [vmem:[#allocation2 + $0x89] sm:$0xff]
        %v693 = vld [vmem:[#allocation2 + $0x91] sm:$0xff]
        %v694 = vld [vmem:[#allocation2 + $0xa9] sm:$0xff]
        %v695 = vld [vmem:[#allocation2 + $0xb1] sm:$0xff]
        %v696 = vld [vmem:[#allocation2 + $0xc9] sm:$0xff]
        %v697 = vld [vmem:[#allocation2 + $0xd1] sm:$0xff]
        %v698 = vld [vmem:[#allocation2 + $0xe9] sm:$0xff]
        %v699 = vld [vmem:[#allocation2 + $0xf1] sm:$0xff]
        %v700 = vld [vmem:[#allocation2 + $0x109] sm:$0xff]
        %v701 = vld [vmem:[#allocation2 + $0x111] sm:$0xff]
        %v702 = vld [vmem:[#allocation2 + $0x129] sm:$0xff]
        %v703 = vld [vmem:[#allocation2 + $0x131] sm:$0xff]
        %v704 = vld [vmem:[#allocation2 + $0x149] sm:$0xff]
        %v705 = vld [vmem:[#allocation2 + $0x151] sm:$0xff]
        %v706 = vld [vmem:[#allocation2 + $0x169] sm:$0xff]
        %v707 = vld [vmem:[#allocation2 + $0x171] sm:$0xff]
        %v708 = vld [vmem:[#allocation2 + $0x189] sm:$0xff]
        %v709 = vld [vmem:[#allocation2 + $0x191] sm:$0xff]
        %v710 = vld [vmem:[#allocation2 + $0x1a9] sm:$0xff]
        %v711 = vld [vmem:[#allocation2 + $0x1b1] sm:$0xff]
        %v712 = vld [vmem:[#allocation2 + $0x1c9] sm:$0xff]
        %v713 = vld [vmem:[#allocation2 + $0x1d1] sm:$0xff]
        %v714 = vld [vmem:[#allocation2 + $0x1e9] sm:$0xff]
        %v715 = vld [vmem:[#allocation2 + $0x1f1] sm:$0xff]
        %v716 = vpack.c.bf16 %v684, %v684
        %v717 = vpack.c.bf16 %v685, %v685
        %v718 = vpack.c.bf16 %v686, %v686
        %v719 = vpack.c.bf16 %v687, %v687
        %v720 = vpack.c.bf16 %v688, %v688
        %v721 = vpack.c.bf16 %v689, %v689
        %v722 = vpack.c.bf16 %v690, %v690
        %v723 = vpack.c.bf16 %v691, %v691
        %v724 = vpack.c.bf16 %v692, %v692
        %v725 = vpack.c.bf16 %v693, %v693
        %v726 = vpack.c.bf16 %v694, %v694
        %v727 = vpack.c.bf16 %v695, %v695
        %v728 = vpack.c.bf16 %v696, %v696
        %v729 = vpack.c.bf16 %v697, %v697
        %v730 = vpack.c.bf16 %v698, %v698
        %v731 = vpack.c.bf16 %v699, %v699
        %v732 = vpack.c.bf16 %v700, %v700
        %v733 = vpack.c.bf16 %v701, %v701
        %v734 = vpack.c.bf16 %v702, %v702
        %v735 = vpack.c.bf16 %v703, %v703
        %v736 = vpack.c.bf16 %v704, %v704
        %v737 = vpack.c.bf16 %v705, %v705
        %v738 = vpack.c.bf16 %v706, %v706
        %v739 = vpack.c.bf16 %v707, %v707
        %v740 = vpack.c.bf16 %v708, %v708
        %v741 = vpack.c.bf16 %v709, %v709
        %v742 = vpack.c.bf16 %v710, %v710
        %v743 = vpack.c.bf16 %v711, %v711
        %v744 = vpack.c.bf16 %v712, %v712
        %v745 = vpack.c.bf16 %v713, %v713
        %v746 = vpack.c.bf16 %v714, %v714
        %v747 = vpack.c.bf16 %v715, %v715
        %748 = vst.msk [vmem:[#allocation4 + $0x4] sm:$0xf] %vm426, %v716
        %749 = vst.msk [vmem:[#allocation4 + $0x18] sm:$0xf] %vm426, %v717
        %750 = vst.msk [vmem:[#allocation4 + $0x2c] sm:$0xf] %vm426, %v718
        %751 = vst.msk [vmem:[#allocation4 + $0x40] sm:$0xf] %vm426, %v719
        %752 = vst.msk [vmem:[#allocation4 + $0x54] sm:$0xf] %vm426, %v720
        %753 = vst.msk [vmem:[#allocation4 + $0x68] sm:$0xf] %vm426, %v721
        %754 = vst.msk [vmem:[#allocation4 + $0x7c] sm:$0xf] %vm426, %v722
        %755 = vst.msk [vmem:[#allocation4 + $0x90] sm:$0xf] %vm426, %v723
        %756 = vst.msk [vmem:[#allocation4 + $0xa4] sm:$0xf] %vm426, %v724
        %757 = vst.msk [vmem:[#allocation4 + $0xb8] sm:$0xf] %vm426, %v725
        %758 = vst.msk [vmem:[#allocation4 + $0xcc] sm:$0xf] %vm426, %v726
        %759 = vst.msk [vmem:[#allocation4 + $0xe0] sm:$0xf] %vm426, %v727
        %760 = vst.msk [vmem:[#allocation4 + $0xf4] sm:$0xf] %vm426, %v728
        %761 = vst.msk [vmem:[#allocation4 + $0x108] sm:$0xf] %vm426, %v729
        %762 = vst.msk [vmem:[#allocation4 + $0x11c] sm:$0xf] %vm426, %v730
        %763 = vst.msk [vmem:[#allocation4 + $0x130] sm:$0xf] %vm426, %v731
        %764 = vst.msk [vmem:[#allocation4 + $0x144] sm:$0xf] %vm426, %v732
        %765 = vst.msk [vmem:[#allocation4 + $0x158] sm:$0xf] %vm426, %v733
        %766 = vst.msk [vmem:[#allocation4 + $0x16c] sm:$0xf] %vm426, %v734
        %767 = vst.msk [vmem:[#allocation4 + $0x180] sm:$0xf] %vm426, %v735
        %768 = vst.msk [vmem:[#allocation4 + $0x194] sm:$0xf] %vm426, %v736
        %769 = vst.msk [vmem:[#allocation4 + $0x1a8] sm:$0xf] %vm426, %v737
        %770 = vst.msk [vmem:[#allocation4 + $0x1bc] sm:$0xf] %vm426, %v738
        %771 = vst.msk [vmem:[#allocation4 + $0x1d0] sm:$0xf] %vm426, %v739
        %772 = vst.msk [vmem:[#allocation4 + $0x1e4] sm:$0xf] %vm426, %v740
        %773 = vst.msk [vmem:[#allocation4 + $0x1f8] sm:$0xf] %vm426, %v741
        %774 = vst.msk [vmem:[#allocation4 + $0x20c] sm:$0xf] %vm426, %v742
        %775 = vst.msk [vmem:[#allocation4 + $0x220] sm:$0xf] %vm426, %v743
        %776 = vst.msk [vmem:[#allocation4 + $0x234] sm:$0xf] %vm426, %v744
        %777 = vst.msk [vmem:[#allocation4 + $0x248] sm:$0xf] %vm426, %v745
        %778 = vst.msk [vmem:[#allocation4 + $0x25c] sm:$0xf] %vm426, %v746
        %779 = vst.msk [vmem:[#allocation4 + $0x270] sm:$0xf] %vm426, %v747
        %v780 = vld [vmem:[%s329 + $0x7] sm:$0xff]
        %v781 = vld [vmem:[%s329 + $0xf] sm:$0xff]
        %v782 = vld [vmem:[%s329 + $0x27] sm:$0xff]
        %v783 = vld [vmem:[%s329 + $0x2f] sm:$0xff]
        %v784 = vld [vmem:[%s329 + $0x47] sm:$0xff]
        %v785 = vld [vmem:[%s329 + $0x4f] sm:$0xff]
        %v786 = vld [vmem:[%s329 + $0x67] sm:$0xff]
        %v787 = vld [vmem:[%s329 + $0x6f] sm:$0xff]
        %v788 = vld [vmem:[%s329 + $0x87] sm:$0xff]
        %v789 = vld [vmem:[%s329 + $0x8f] sm:$0xff]
        %v790 = vld [vmem:[%s329 + $0xa7] sm:$0xff]
        %v791 = vld [vmem:[%s329 + $0xaf] sm:$0xff]
        %v792 = vld [vmem:[%s329 + $0xc7] sm:$0xff]
        %v793 = vld [vmem:[%s329 + $0xcf] sm:$0xff]
        %v794 = vld [vmem:[%s329 + $0xe7] sm:$0xff]
        %v795 = vld [vmem:[%s329 + $0xef] sm:$0xff]
        %v796 = vld [vmem:[%s329 + $0x107] sm:$0xff]
        %v797 = vld [vmem:[%s329 + $0x10f] sm:$0xff]
        %v798 = vld [vmem:[%s329 + $0x127] sm:$0xff]
        %v799 = vld [vmem:[%s329 + $0x12f] sm:$0xff]
        %v800 = vld [vmem:[%s329 + $0x147] sm:$0xff]
        %v801 = vld [vmem:[%s329 + $0x14f] sm:$0xff]
        %v802 = vld [vmem:[%s329 + $0x167] sm:$0xff]
        %v803 = vld [vmem:[%s329 + $0x16f] sm:$0xff]
        %v804 = vld [vmem:[%s329 + $0x187] sm:$0xff]
        %v805 = vld [vmem:[%s329 + $0x18f] sm:$0xff]
        %v806 = vld [vmem:[%s329 + $0x1a7] sm:$0xff]
        %v807 = vld [vmem:[%s329 + $0x1af] sm:$0xff]
        %v808 = vld [vmem:[%s329 + $0x1c7] sm:$0xff]
        %v809 = vld [vmem:[%s329 + $0x1cf] sm:$0xff]
        %v810 = vld [vmem:[%s329 + $0x1e7] sm:$0xff]
        %v811 = vld [vmem:[%s329 + $0x1ef] sm:$0xff]
        %v812 = vpack.c.bf16 %v780, %v780
        %v813 = vpack.c.bf16 %v781, %v781
        %v814 = vpack.c.bf16 %v782, %v782
        %v815 = vpack.c.bf16 %v783, %v783
        %v816 = vpack.c.bf16 %v784, %v784
        %v817 = vpack.c.bf16 %v785, %v785
        %v818 = vpack.c.bf16 %v786, %v786
        %v819 = vpack.c.bf16 %v787, %v787
        %v820 = vpack.c.bf16 %v788, %v788
        %v821 = vpack.c.bf16 %v789, %v789
        %v822 = vpack.c.bf16 %v790, %v790
        %v823 = vpack.c.bf16 %v791, %v791
        %v824 = vpack.c.bf16 %v792, %v792
        %v825 = vpack.c.bf16 %v793, %v793
        %v826 = vpack.c.bf16 %v794, %v794
        %v827 = vpack.c.bf16 %v795, %v795
        %v828 = vpack.c.bf16 %v796, %v796
        %v829 = vpack.c.bf16 %v797, %v797
        %v830 = vpack.c.bf16 %v798, %v798
        %v831 = vpack.c.bf16 %v799, %v799
        %v832 = vpack.c.bf16 %v800, %v800
        %v833 = vpack.c.bf16 %v801, %v801
        %v834 = vpack.c.bf16 %v802, %v802
        %v835 = vpack.c.bf16 %v803, %v803
        %v836 = vpack.c.bf16 %v804, %v804
        %v837 = vpack.c.bf16 %v805, %v805
        %v838 = vpack.c.bf16 %v806, %v806
        %v839 = vpack.c.bf16 %v807, %v807
        %v840 = vpack.c.bf16 %v808, %v808
        %v841 = vpack.c.bf16 %v809, %v809
        %v842 = vpack.c.bf16 %v810, %v810
        %v843 = vpack.c.bf16 %v811, %v811
        %876 = vrot.lane.b32.xlu0 %v812, 64
        %v877 = vpop.permute.xlu0 %876
        %878 = vrot.lane.b32.xlu0 %v813, 64
        %v879 = vpop.permute.xlu0 %878
        %880 = vrot.lane.b32.xlu0 %v814, 64
        %v881 = vpop.permute.xlu0 %880
        %882 = vrot.lane.b32.xlu0 %v815, 64
        %v883 = vpop.permute.xlu0 %882
        %884 = vrot.lane.b32.xlu0 %v816, 64
        %v885 = vpop.permute.xlu0 %884
        %886 = vrot.lane.b32.xlu0 %v817, 64
        %v887 = vpop.permute.xlu0 %886
        %888 = vrot.lane.b32.xlu0 %v818, 64
        %v889 = vpop.permute.xlu0 %888
        %890 = vrot.lane.b32.xlu0 %v819, 64
        %v891 = vpop.permute.xlu0 %890
        %892 = vrot.lane.b32.xlu0 %v820, 64
        %v893 = vpop.permute.xlu0 %892
        %894 = vrot.lane.b32.xlu0 %v821, 64
        %v895 = vpop.permute.xlu0 %894
        %896 = vrot.lane.b32.xlu0 %v822, 64
        %v897 = vpop.permute.xlu0 %896
        %898 = vrot.lane.b32.xlu0 %v823, 64
        %v899 = vpop.permute.xlu0 %898
        %900 = vrot.lane.b32.xlu0 %v824, 64
        %v901 = vpop.permute.xlu0 %900
        %902 = vrot.lane.b32.xlu0 %v825, 64
        %v903 = vpop.permute.xlu0 %902
        %904 = vrot.lane.b32.xlu0 %v826, 64
        %v905 = vpop.permute.xlu0 %904
        %906 = vrot.lane.b32.xlu0 %v827, 64
        %v907 = vpop.permute.xlu0 %906
        %908 = vrot.lane.b32.xlu0 %v828, 64
        %v909 = vpop.permute.xlu0 %908
        %910 = vrot.lane.b32.xlu0 %v829, 64
        %v911 = vpop.permute.xlu0 %910
        %912 = vrot.lane.b32.xlu0 %v830, 64
        %v913 = vpop.permute.xlu0 %912
        %914 = vrot.lane.b32.xlu0 %v831, 64
        %v915 = vpop.permute.xlu0 %914
        %916 = vrot.lane.b32.xlu0 %v832, 64
        %v917 = vpop.permute.xlu0 %916
        %918 = vrot.lane.b32.xlu0 %v833, 64
        %v919 = vpop.permute.xlu0 %918
        %920 = vrot.lane.b32.xlu0 %v834, 64
        %v921 = vpop.permute.xlu0 %920
        %922 = vrot.lane.b32.xlu0 %v835, 64
        %v923 = vpop.permute.xlu0 %922
        %924 = vrot.lane.b32.xlu0 %v836, 64
        %v925 = vpop.permute.xlu0 %924
        %926 = vrot.lane.b32.xlu0 %v837, 64
        %v927 = vpop.permute.xlu0 %926
        %928 = vrot.lane.b32.xlu0 %v838, 64
        %v929 = vpop.permute.xlu0 %928
        %930 = vrot.lane.b32.xlu0 %v839, 64
        %v931 = vpop.permute.xlu0 %930
        %932 = vrot.lane.b32.xlu0 %v840, 64
        %v933 = vpop.permute.xlu0 %932
        %934 = vrot.lane.b32.xlu0 %v841, 64
        %v935 = vpop.permute.xlu0 %934
        %936 = vrot.lane.b32.xlu0 %v842, 64
        %v937 = vpop.permute.xlu0 %936
        %938 = vrot.lane.b32.xlu0 %v843, 64
        %v939 = vpop.permute.xlu0 %938
        %972 = vst.msk [vmem:[#allocation4 + $0x4] sm:$0xf] %vm651, %v877
        %973 = vst.msk [vmem:[#allocation4 + $0x18] sm:$0xf] %vm651, %v879
        %974 = vst.msk [vmem:[#allocation4 + $0x2c] sm:$0xf] %vm651, %v881
        %975 = vst.msk [vmem:[#allocation4 + $0x40] sm:$0xf] %vm651, %v883
        %976 = vst.msk [vmem:[#allocation4 + $0x54] sm:$0xf] %vm651, %v885
        %977 = vst.msk [vmem:[#allocation4 + $0x68] sm:$0xf] %vm651, %v887
        %978 = vst.msk [vmem:[#allocation4 + $0x7c] sm:$0xf] %vm651, %v889
        %979 = vst.msk [vmem:[#allocation4 + $0x90] sm:$0xf] %vm651, %v891
        %980 = vst.msk [vmem:[#allocation4 + $0xa4] sm:$0xf] %vm651, %v893
        %981 = vst.msk [vmem:[#allocation4 + $0xb8] sm:$0xf] %vm651, %v895
        %982 = vst.msk [vmem:[#allocation4 + $0xcc] sm:$0xf] %vm651, %v897
        %983 = vst.msk [vmem:[#allocation4 + $0xe0] sm:$0xf] %vm651, %v899
        %984 = vst.msk [vmem:[#allocation4 + $0xf4] sm:$0xf] %vm651, %v901
        %985 = vst.msk [vmem:[#allocation4 + $0x108] sm:$0xf] %vm651, %v903
        %986 = vst.msk [vmem:[#allocation4 + $0x11c] sm:$0xf] %vm651, %v905
        %987 = vst.msk [vmem:[#allocation4 + $0x130] sm:$0xf] %vm651, %v907
        %988 = vst.msk [vmem:[#allocation4 + $0x144] sm:$0xf] %vm651, %v909
        %989 = vst.msk [vmem:[#allocation4 + $0x158] sm:$0xf] %vm651, %v911
        %990 = vst.msk [vmem:[#allocation4 + $0x16c] sm:$0xf] %vm651, %v913
        %991 = vst.msk [vmem:[#allocation4 + $0x180] sm:$0xf] %vm651, %v915
        %992 = vst.msk [vmem:[#allocation4 + $0x194] sm:$0xf] %vm651, %v917
        %993 = vst.msk [vmem:[#allocation4 + $0x1a8] sm:$0xf] %vm651, %v919
        %994 = vst.msk [vmem:[#allocation4 + $0x1bc] sm:$0xf] %vm651, %v921
        %995 = vst.msk [vmem:[#allocation4 + $0x1d0] sm:$0xf] %vm651, %v923
        %996 = vst.msk [vmem:[#allocation4 + $0x1e4] sm:$0xf] %vm651, %v925
        %997 = vst.msk [vmem:[#allocation4 + $0x1f8] sm:$0xf] %vm651, %v927
        %998 = vst.msk [vmem:[#allocation4 + $0x20c] sm:$0xf] %vm651, %v929
        %999 = vst.msk [vmem:[#allocation4 + $0x220] sm:$0xf] %vm651, %v931
        %1000 = vst.msk [vmem:[#allocation4 + $0x234] sm:$0xf] %vm651, %v933
        %1001 = vst.msk [vmem:[#allocation4 + $0x248] sm:$0xf] %vm651, %v935
        %1002 = vst.msk [vmem:[#allocation4 + $0x25c] sm:$0xf] %vm651, %v937
        %1003 = vst.msk [vmem:[#allocation4 + $0x270] sm:$0xf] %vm651, %v939
        %v1004 = vld [vmem:[%s329 + $0x8] sm:$0xff]
        %v1005 = vld [vmem:[%s329 + $0x10] sm:$0xff]
        %v1006 = vld [vmem:[%s329 + $0x28] sm:$0xff]
        %v1007 = vld [vmem:[%s329 + $0x30] sm:$0xff]
        %v1008 = vld [vmem:[%s329 + $0x48] sm:$0xff]
        %v1009 = vld [vmem:[%s329 + $0x50] sm:$0xff]
        %v1010 = vld [vmem:[%s329 + $0x68] sm:$0xff]
        %v1011 = vld [vmem:[%s329 + $0x70] sm:$0xff]
        %v1012 = vld [vmem:[%s329 + $0x88] sm:$0xff]
        %v1013 = vld [vmem:[%s329 + $0x90] sm:$0xff]
        %v1014 = vld [vmem:[%s329 + $0xa8] sm:$0xff]
        %v1015 = vld [vmem:[%s329 + $0xb0] sm:$0xff]
        %v1016 = vld [vmem:[%s329 + $0xc8] sm:$0xff]
        %v1017 = vld [vmem:[%s329 + $0xd0] sm:$0xff]
        %v1018 = vld [vmem:[%s329 + $0xe8] sm:$0xff]
        %v1019 = vld [vmem:[%s329 + $0xf0] sm:$0xff]
        %v1020 = vld [vmem:[%s329 + $0x108] sm:$0xff]
        %v1021 = vld [vmem:[%s329 + $0x110] sm:$0xff]
        %v1022 = vld [vmem:[%s329 + $0x128] sm:$0xff]
        %v1023 = vld [vmem:[%s329 + $0x130] sm:$0xff]
        %v1024 = vld [vmem:[%s329 + $0x148] sm:$0xff]
        %v1025 = vld [vmem:[%s329 + $0x150] sm:$0xff]
        %v1026 = vld [vmem:[%s329 + $0x168] sm:$0xff]
        %v1027 = vld [vmem:[%s329 + $0x170] sm:$0xff]
        %v1028 = vld [vmem:[%s329 + $0x188] sm:$0xff]
        %v1029 = vld [vmem:[%s329 + $0x190] sm:$0xff]
        %v1030 = vld [vmem:[%s329 + $0x1a8] sm:$0xff]
        %v1031 = vld [vmem:[%s329 + $0x1b0] sm:$0xff]
        %v1032 = vld [vmem:[%s329 + $0x1c8] sm:$0xff]
        %v1033 = vld [vmem:[%s329 + $0x1d0] sm:$0xff]
        %v1034 = vld [vmem:[%s329 + $0x1e8] sm:$0xff]
        %v1035 = vld [vmem:[%s329 + $0x1f0] sm:$0xff]
        %v1036 = vpack.c.bf16 %v1004, %v1004
        %v1037 = vpack.c.bf16 %v1005, %v1005
        %v1038 = vpack.c.bf16 %v1006, %v1006
        %v1039 = vpack.c.bf16 %v1007, %v1007
        %v1040 = vpack.c.bf16 %v1008, %v1008
        %v1041 = vpack.c.bf16 %v1009, %v1009
        %v1042 = vpack.c.bf16 %v1010, %v1010
        %v1043 = vpack.c.bf16 %v1011, %v1011
        %v1044 = vpack.c.bf16 %v1012, %v1012
        %v1045 = vpack.c.bf16 %v1013, %v1013
        %v1046 = vpack.c.bf16 %v1014, %v1014
        %v1047 = vpack.c.bf16 %v1015, %v1015
        %v1048 = vpack.c.bf16 %v1016, %v1016
        %v1049 = vpack.c.bf16 %v1017, %v1017
        %v1050 = vpack.c.bf16 %v1018, %v1018
        %v1051 = vpack.c.bf16 %v1019, %v1019
        %v1052 = vpack.c.bf16 %v1020, %v1020
        %v1053 = vpack.c.bf16 %v1021, %v1021
        %v1054 = vpack.c.bf16 %v1022, %v1022
        %v1055 = vpack.c.bf16 %v1023, %v1023
        %v1056 = vpack.c.bf16 %v1024, %v1024
        %v1057 = vpack.c.bf16 %v1025, %v1025
        %v1058 = vpack.c.bf16 %v1026, %v1026
        %v1059 = vpack.c.bf16 %v1027, %v1027
        %v1060 = vpack.c.bf16 %v1028, %v1028
        %v1061 = vpack.c.bf16 %v1029, %v1029
        %v1062 = vpack.c.bf16 %v1030, %v1030
        %v1063 = vpack.c.bf16 %v1031, %v1031
        %v1064 = vpack.c.bf16 %v1032, %v1032
        %v1065 = vpack.c.bf16 %v1033, %v1033
        %v1066 = vpack.c.bf16 %v1034, %v1034
        %v1067 = vpack.c.bf16 %v1035, %v1035
        %1068 = vst.msk [vmem:[#allocation4 + $0x8] sm:$0xf] %vm426, %v1036
        %1069 = vst.msk [vmem:[#allocation4 + $0x1c] sm:$0xf] %vm426, %v1037
        %1070 = vst.msk [vmem:[#allocation4 + $0x30] sm:$0xf] %vm426, %v1038
        %1071 = vst.msk [vmem:[#allocation4 + $0x44] sm:$0xf] %vm426, %v1039
        %1072 = vst.msk [vmem:[#allocation4 + $0x58] sm:$0xf] %vm426, %v1040
        %1073 = vst.msk [vmem:[#allocation4 + $0x6c] sm:$0xf] %vm426, %v1041
        %1074 = vst.msk [vmem:[#allocation4 + $0x80] sm:$0xf] %vm426, %v1042
        %1075 = vst.msk [vmem:[#allocation4 + $0x94] sm:$0xf] %vm426, %v1043
        %1076 = vst.msk [vmem:[#allocation4 + $0xa8] sm:$0xf] %vm426, %v1044
        %1077 = vst.msk [vmem:[#allocation4 + $0xbc] sm:$0xf] %vm426, %v1045
        %1078 = vst.msk [vmem:[#allocation4 + $0xd0] sm:$0xf] %vm426, %v1046
        %1079 = vst.msk [vmem:[#allocation4 + $0xe4] sm:$0xf] %vm426, %v1047
        %1080 = vst.msk [vmem:[#allocation4 + $0xf8] sm:$0xf] %vm426, %v1048
        %1081 = vst.msk [vmem:[#allocation4 + $0x10c] sm:$0xf] %vm426, %v1049
        %1082 = vst.msk [vmem:[#allocation4 + $0x120] sm:$0xf] %vm426, %v1050
        %1083 = vst.msk [vmem:[#allocation4 + $0x134] sm:$0xf] %vm426, %v1051
        %1084 = vst.msk [vmem:[#allocation4 + $0x148] sm:$0xf] %vm426, %v1052
        %1085 = vst.msk [vmem:[#allocation4 + $0x15c] sm:$0xf] %vm426, %v1053
        %1086 = vst.msk [vmem:[#allocation4 + $0x170] sm:$0xf] %vm426, %v1054
        %1087 = vst.msk [vmem:[#allocation4 + $0x184] sm:$0xf] %vm426, %v1055
        %1088 = vst.msk [vmem:[#allocation4 + $0x198] sm:$0xf] %vm426, %v1056
        %1089 = vst.msk [vmem:[#allocation4 + $0x1ac] sm:$0xf] %vm426, %v1057
        %1090 = vst.msk [vmem:[#allocation4 + $0x1c0] sm:$0xf] %vm426, %v1058
        %1091 = vst.msk [vmem:[#allocation4 + $0x1d4] sm:$0xf] %vm426, %v1059
        %1092 = vst.msk [vmem:[#allocation4 + $0x1e8] sm:$0xf] %vm426, %v1060
        %1093 = vst.msk [vmem:[#allocation4 + $0x1fc] sm:$0xf] %vm426, %v1061
        %1094 = vst.msk [vmem:[#allocation4 + $0x210] sm:$0xf] %vm426, %v1062
        %1095 = vst.msk [vmem:[#allocation4 + $0x224] sm:$0xf] %vm426, %v1063
        %1096 = vst.msk [vmem:[#allocation4 + $0x238] sm:$0xf] %vm426, %v1064
        %1097 = vst.msk [vmem:[#allocation4 + $0x24c] sm:$0xf] %vm426, %v1065
        %1098 = vst.msk [vmem:[#allocation4 + $0x260] sm:$0xf] %vm426, %v1066
        %1099 = vst.msk [vmem:[#allocation4 + $0x274] sm:$0xf] %vm426, %v1067
        %v1100 = vld [vmem:[%s329 + $0x9] sm:$0xff]
        %v1101 = vld [vmem:[%s329 + $0x11] sm:$0xff]
        %v1102 = vld [vmem:[%s329 + $0x29] sm:$0xff]
        %v1103 = vld [vmem:[%s329 + $0x31] sm:$0xff]
        %v1104 = vld [vmem:[%s329 + $0x49] sm:$0xff]
        %v1105 = vld [vmem:[%s329 + $0x51] sm:$0xff]
        %v1106 = vld [vmem:[%s329 + $0x69] sm:$0xff]
        %v1107 = vld [vmem:[%s329 + $0x71] sm:$0xff]
        %v1108 = vld [vmem:[%s329 + $0x89] sm:$0xff]
        %v1109 = vld [vmem:[%s329 + $0x91] sm:$0xff]
        %v1110 = vld [vmem:[%s329 + $0xa9] sm:$0xff]
        %v1111 = vld [vmem:[%s329 + $0xb1] sm:$0xff]
        %v1112 = vld [vmem:[%s329 + $0xc9] sm:$0xff]
        %v1113 = vld [vmem:[%s329 + $0xd1] sm:$0xff]
        %v1114 = vld [vmem:[%s329 + $0xe9] sm:$0xff]
        %v1115 = vld [vmem:[%s329 + $0xf1] sm:$0xff]
        %v1116 = vld [vmem:[%s329 + $0x109] sm:$0xff]
        %v1117 = vld [vmem:[%s329 + $0x111] sm:$0xff]
        %v1118 = vld [vmem:[%s329 + $0x129] sm:$0xff]
        %v1119 = vld [vmem:[%s329 + $0x131] sm:$0xff]
        %v1120 = vld [vmem:[%s329 + $0x149] sm:$0xff]
        %v1121 = vld [vmem:[%s329 + $0x151] sm:$0xff]
        %v1122 = vld [vmem:[%s329 + $0x169] sm:$0xff]
        %v1123 = vld [vmem:[%s329 + $0x171] sm:$0xff]
        %v1124 = vld [vmem:[%s329 + $0x189] sm:$0xff]
        %v1125 = vld [vmem:[%s329 + $0x191] sm:$0xff]
        %v1126 = vld [vmem:[%s329 + $0x1a9] sm:$0xff]
        %v1127 = vld [vmem:[%s329 + $0x1b1] sm:$0xff]
        %v1128 = vld [vmem:[%s329 + $0x1c9] sm:$0xff]
        %v1129 = vld [vmem:[%s329 + $0x1d1] sm:$0xff]
        %v1130 = vld [vmem:[%s329 + $0x1e9] sm:$0xff]
        %v1131 = vld [vmem:[%s329 + $0x1f1] sm:$0xff]
        %v1132 = vpack.c.bf16 %v1100, %v1100
        %v1133 = vpack.c.bf16 %v1101, %v1101
        %v1134 = vpack.c.bf16 %v1102, %v1102
        %v1135 = vpack.c.bf16 %v1103, %v1103
        %v1136 = vpack.c.bf16 %v1104, %v1104
        %v1137 = vpack.c.bf16 %v1105, %v1105
        %v1138 = vpack.c.bf16 %v1106, %v1106
        %v1139 = vpack.c.bf16 %v1107, %v1107
        %v1140 = vpack.c.bf16 %v1108, %v1108
        %v1141 = vpack.c.bf16 %v1109, %v1109
        %v1142 = vpack.c.bf16 %v1110, %v1110
        %v1143 = vpack.c.bf16 %v1111, %v1111
        %v1144 = vpack.c.bf16 %v1112, %v1112
        %v1145 = vpack.c.bf16 %v1113, %v1113
        %v1146 = vpack.c.bf16 %v1114, %v1114
        %v1147 = vpack.c.bf16 %v1115, %v1115
        %v1148 = vpack.c.bf16 %v1116, %v1116
        %v1149 = vpack.c.bf16 %v1117, %v1117
        %v1150 = vpack.c.bf16 %v1118, %v1118
        %v1151 = vpack.c.bf16 %v1119, %v1119
        %v1152 = vpack.c.bf16 %v1120, %v1120
        %v1153 = vpack.c.bf16 %v1121, %v1121
        %v1154 = vpack.c.bf16 %v1122, %v1122
        %v1155 = vpack.c.bf16 %v1123, %v1123
        %v1156 = vpack.c.bf16 %v1124, %v1124
        %v1157 = vpack.c.bf16 %v1125, %v1125
        %v1158 = vpack.c.bf16 %v1126, %v1126
        %v1159 = vpack.c.bf16 %v1127, %v1127
        %v1160 = vpack.c.bf16 %v1128, %v1128
        %v1161 = vpack.c.bf16 %v1129, %v1129
        %v1162 = vpack.c.bf16 %v1130, %v1130
        %v1163 = vpack.c.bf16 %v1131, %v1131
        %1196 = vrot.lane.b32.xlu0 %v1132, 64
        %v1197 = vpop.permute.xlu0 %1196
        %1198 = vrot.lane.b32.xlu0 %v1133, 64
        %v1199 = vpop.permute.xlu0 %1198
        %1200 = vrot.lane.b32.xlu0 %v1134, 64
        %v1201 = vpop.permute.xlu0 %1200
        %1202 = vrot.lane.b32.xlu0 %v1135, 64
        %v1203 = vpop.permute.xlu0 %1202
        %1204 = vrot.lane.b32.xlu0 %v1136, 64
        %v1205 = vpop.permute.xlu0 %1204
        %1206 = vrot.lane.b32.xlu0 %v1137, 64
        %v1207 = vpop.permute.xlu0 %1206
        %1208 = vrot.lane.b32.xlu0 %v1138, 64
        %v1209 = vpop.permute.xlu0 %1208
        %1210 = vrot.lane.b32.xlu0 %v1139, 64
        %v1211 = vpop.permute.xlu0 %1210
        %1212 = vrot.lane.b32.xlu0 %v1140, 64
        %v1213 = vpop.permute.xlu0 %1212
        %1214 = vrot.lane.b32.xlu0 %v1141, 64
        %v1215 = vpop.permute.xlu0 %1214
        %1216 = vrot.lane.b32.xlu0 %v1142, 64
        %v1217 = vpop.permute.xlu0 %1216
        %1218 = vrot.lane.b32.xlu0 %v1143, 64
        %v1219 = vpop.permute.xlu0 %1218
        %1220 = vrot.lane.b32.xlu0 %v1144, 64
        %v1221 = vpop.permute.xlu0 %1220
        %1222 = vrot.lane.b32.xlu0 %v1145, 64
        %v1223 = vpop.permute.xlu0 %1222
        %1224 = vrot.lane.b32.xlu0 %v1146, 64
        %v1225 = vpop.permute.xlu0 %1224
        %1226 = vrot.lane.b32.xlu0 %v1147, 64
        %v1227 = vpop.permute.xlu0 %1226
        %1228 = vrot.lane.b32.xlu0 %v1148, 64
        %v1229 = vpop.permute.xlu0 %1228
        %1230 = vrot.lane.b32.xlu0 %v1149, 64
        %v1231 = vpop.permute.xlu0 %1230
        %1232 = vrot.lane.b32.xlu0 %v1150, 64
        %v1233 = vpop.permute.xlu0 %1232
        %1234 = vrot.lane.b32.xlu0 %v1151, 64
        %v1235 = vpop.permute.xlu0 %1234
        %1236 = vrot.lane.b32.xlu0 %v1152, 64
        %v1237 = vpop.permute.xlu0 %1236
        %1238 = vrot.lane.b32.xlu0 %v1153, 64
        %v1239 = vpop.permute.xlu0 %1238
        %1240 = vrot.lane.b32.xlu0 %v1154, 64
        %v1241 = vpop.permute.xlu0 %1240
        %1242 = vrot.lane.b32.xlu0 %v1155, 64
        %v1243 = vpop.permute.xlu0 %1242
        %1244 = vrot.lane.b32.xlu0 %v1156, 64
        %v1245 = vpop.permute.xlu0 %1244
        %1246 = vrot.lane.b32.xlu0 %v1157, 64
        %v1247 = vpop.permute.xlu0 %1246
        %1248 = vrot.lane.b32.xlu0 %v1158, 64
        %v1249 = vpop.permute.xlu0 %1248
        %1250 = vrot.lane.b32.xlu0 %v1159, 64
        %v1251 = vpop.permute.xlu0 %1250
        %1252 = vrot.lane.b32.xlu0 %v1160, 64
        %v1253 = vpop.permute.xlu0 %1252
        %1254 = vrot.lane.b32.xlu0 %v1161, 64
        %v1255 = vpop.permute.xlu0 %1254
        %1256 = vrot.lane.b32.xlu0 %v1162, 64
        %v1257 = vpop.permute.xlu0 %1256
        %1258 = vrot.lane.b32.xlu0 %v1163, 64
        %v1259 = vpop.permute.xlu0 %1258
        %1292 = vst.msk [vmem:[#allocation4 + $0x8] sm:$0xf] %vm651, %v1197
        %1293 = vst.msk [vmem:[#allocation4 + $0x1c] sm:$0xf] %vm651, %v1199
        %1294 = vst.msk [vmem:[#allocation4 + $0x30] sm:$0xf] %vm651, %v1201
        %1295 = vst.msk [vmem:[#allocation4 + $0x44] sm:$0xf] %vm651, %v1203
        %1296 = vst.msk [vmem:[#allocation4 + $0x58] sm:$0xf] %vm651, %v1205
        %1297 = vst.msk [vmem:[#allocation4 + $0x6c] sm:$0xf] %vm651, %v1207
        %1298 = vst.msk [vmem:[#allocation4 + $0x80] sm:$0xf] %vm651, %v1209
        %1299 = vst.msk [vmem:[#allocation4 + $0x94] sm:$0xf] %vm651, %v1211
        %1300 = vst.msk [vmem:[#allocation4 + $0xa8] sm:$0xf] %vm651, %v1213
        %1301 = vst.msk [vmem:[#allocation4 + $0xbc] sm:$0xf] %vm651, %v1215
        %1302 = vst.msk [vmem:[#allocation4 + $0xd0] sm:$0xf] %vm651, %v1217
        %1303 = vst.msk [vmem:[#allocation4 + $0xe4] sm:$0xf] %vm651, %v1219
        %1304 = vst.msk [vmem:[#allocation4 + $0xf8] sm:$0xf] %vm651, %v1221
        %1305 = vst.msk [vmem:[#allocation4 + $0x10c] sm:$0xf] %vm651, %v1223
        %1306 = vst.msk [vmem:[#allocation4 + $0x120] sm:$0xf] %vm651, %v1225
        %1307 = vst.msk [vmem:[#allocation4 + $0x134] sm:$0xf] %vm651, %v1227
        %1308 = vst.msk [vmem:[#allocation4 + $0x148] sm:$0xf] %vm651, %v1229
        %1309 = vst.msk [vmem:[#allocation4 + $0x15c] sm:$0xf] %vm651, %v1231
        %1310 = vst.msk [vmem:[#allocation4 + $0x170] sm:$0xf] %vm651, %v1233
        %1311 = vst.msk [vmem:[#allocation4 + $0x184] sm:$0xf] %vm651, %v1235
        %1312 = vst.msk [vmem:[#allocation4 + $0x198] sm:$0xf] %vm651, %v1237
        %1313 = vst.msk [vmem:[#allocation4 + $0x1ac] sm:$0xf] %vm651, %v1239
        %1314 = vst.msk [vmem:[#allocation4 + $0x1c0] sm:$0xf] %vm651, %v1241
        %1315 = vst.msk [vmem:[#allocation4 + $0x1d4] sm:$0xf] %vm651, %v1243
        %1316 = vst.msk [vmem:[#allocation4 + $0x1e8] sm:$0xf] %vm651, %v1245
        %1317 = vst.msk [vmem:[#allocation4 + $0x1fc] sm:$0xf] %vm651, %v1247
        %1318 = vst.msk [vmem:[#allocation4 + $0x210] sm:$0xf] %vm651, %v1249
        %1319 = vst.msk [vmem:[#allocation4 + $0x224] sm:$0xf] %vm651, %v1251
        %1320 = vst.msk [vmem:[#allocation4 + $0x238] sm:$0xf] %vm651, %v1253
        %1321 = vst.msk [vmem:[#allocation4 + $0x24c] sm:$0xf] %vm651, %v1255
        %1322 = vst.msk [vmem:[#allocation4 + $0x260] sm:$0xf] %vm651, %v1257
        %1323 = vst.msk [vmem:[#allocation4 + $0x274] sm:$0xf] %vm651, %v1259
        %s1324 = scalar_lea.vmem [#allocation2], 64
        %v1325 = vld [vmem:[%s1324 + $0x7] sm:$0xff]
        %v1326 = vld [vmem:[%s1324 + $0xf] sm:$0xff]
        %v1327 = vld [vmem:[%s1324 + $0x27] sm:$0xff]
        %v1328 = vld [vmem:[%s1324 + $0x2f] sm:$0xff]
        %v1329 = vld [vmem:[%s1324 + $0x47] sm:$0xff]
        %v1330 = vld [vmem:[%s1324 + $0x4f] sm:$0xff]
        %v1331 = vld [vmem:[%s1324 + $0x67] sm:$0xff]
        %v1332 = vld [vmem:[%s1324 + $0x6f] sm:$0xff]
        %v1333 = vld [vmem:[%s1324 + $0x87] sm:$0xff]
        %v1334 = vld [vmem:[%s1324 + $0x8f] sm:$0xff]
        %v1335 = vld [vmem:[%s1324 + $0xa7] sm:$0xff]
        %v1336 = vld [vmem:[%s1324 + $0xaf] sm:$0xff]
        %v1337 = vld [vmem:[%s1324 + $0xc7] sm:$0xff]
        %v1338 = vld [vmem:[%s1324 + $0xcf] sm:$0xff]
        %v1339 = vld [vmem:[%s1324 + $0xe7] sm:$0xff]
        %v1340 = vld [vmem:[%s1324 + $0xef] sm:$0xff]
        %v1341 = vld [vmem:[%s1324 + $0x107] sm:$0xff]
        %v1342 = vld [vmem:[%s1324 + $0x10f] sm:$0xff]
        %v1343 = vld [vmem:[%s1324 + $0x127] sm:$0xff]
        %v1344 = vld [vmem:[%s1324 + $0x12f] sm:$0xff]
        %v1345 = vld [vmem:[%s1324 + $0x147] sm:$0xff]
        %v1346 = vld [vmem:[%s1324 + $0x14f] sm:$0xff]
        %v1347 = vld [vmem:[%s1324 + $0x167] sm:$0xff]
        %v1348 = vld [vmem:[%s1324 + $0x16f] sm:$0xff]
        %v1349 = vld [vmem:[%s1324 + $0x187] sm:$0xff]
        %v1350 = vld [vmem:[%s1324 + $0x18f] sm:$0xff]
        %v1351 = vld [vmem:[%s1324 + $0x1a7] sm:$0xff]
        %v1352 = vld [vmem:[%s1324 + $0x1af] sm:$0xff]
        %v1353 = vld [vmem:[%s1324 + $0x1c7] sm:$0xff]
        %v1354 = vld [vmem:[%s1324 + $0x1cf] sm:$0xff]
        %v1355 = vld [vmem:[%s1324 + $0x1e7] sm:$0xff]
        %v1356 = vld [vmem:[%s1324 + $0x1ef] sm:$0xff]
        %v1357 = vpack.c.bf16 %v1325, %v1325
        %v1358 = vpack.c.bf16 %v1326, %v1326
        %v1359 = vpack.c.bf16 %v1327, %v1327
        %v1360 = vpack.c.bf16 %v1328, %v1328
        %v1361 = vpack.c.bf16 %v1329, %v1329
        %v1362 = vpack.c.bf16 %v1330, %v1330
        %v1363 = vpack.c.bf16 %v1331, %v1331
        %v1364 = vpack.c.bf16 %v1332, %v1332
        %v1365 = vpack.c.bf16 %v1333, %v1333
        %v1366 = vpack.c.bf16 %v1334, %v1334
        %v1367 = vpack.c.bf16 %v1335, %v1335
        %v1368 = vpack.c.bf16 %v1336, %v1336
        %v1369 = vpack.c.bf16 %v1337, %v1337
        %v1370 = vpack.c.bf16 %v1338, %v1338
        %v1371 = vpack.c.bf16 %v1339, %v1339
        %v1372 = vpack.c.bf16 %v1340, %v1340
        %v1373 = vpack.c.bf16 %v1341, %v1341
        %v1374 = vpack.c.bf16 %v1342, %v1342
        %v1375 = vpack.c.bf16 %v1343, %v1343
        %v1376 = vpack.c.bf16 %v1344, %v1344
        %v1377 = vpack.c.bf16 %v1345, %v1345
        %v1378 = vpack.c.bf16 %v1346, %v1346
        %v1379 = vpack.c.bf16 %v1347, %v1347
        %v1380 = vpack.c.bf16 %v1348, %v1348
        %v1381 = vpack.c.bf16 %v1349, %v1349
        %v1382 = vpack.c.bf16 %v1350, %v1350
        %v1383 = vpack.c.bf16 %v1351, %v1351
        %v1384 = vpack.c.bf16 %v1352, %v1352
        %v1385 = vpack.c.bf16 %v1353, %v1353
        %v1386 = vpack.c.bf16 %v1354, %v1354
        %v1387 = vpack.c.bf16 %v1355, %v1355
        %v1388 = vpack.c.bf16 %v1356, %v1356
        %1389 = vst.msk [vmem:[#allocation4 + $0xc] sm:$0xf] %vm426, %v1357
        %1390 = vst.msk [vmem:[#allocation4 + $0x20] sm:$0xf] %vm426, %v1358
        %1391 = vst.msk [vmem:[#allocation4 + $0x34] sm:$0xf] %vm426, %v1359
        %1392 = vst.msk [vmem:[#allocation4 + $0x48] sm:$0xf] %vm426, %v1360
        %1393 = vst.msk [vmem:[#allocation4 + $0x5c] sm:$0xf] %vm426, %v1361
        %1394 = vst.msk [vmem:[#allocation4 + $0x70] sm:$0xf] %vm426, %v1362
        %1395 = vst.msk [vmem:[#allocation4 + $0x84] sm:$0xf] %vm426, %v1363
        %1396 = vst.msk [vmem:[#allocation4 + $0x98] sm:$0xf] %vm426, %v1364
        %1397 = vst.msk [vmem:[#allocation4 + $0xac] sm:$0xf] %vm426, %v1365
        %1398 = vst.msk [vmem:[#allocation4 + $0xc0] sm:$0xf] %vm426, %v1366
        %1399 = vst.msk [vmem:[#allocation4 + $0xd4] sm:$0xf] %vm426, %v1367
        %1400 = vst.msk [vmem:[#allocation4 + $0xe8] sm:$0xf] %vm426, %v1368
        %1401 = vst.msk [vmem:[#allocation4 + $0xfc] sm:$0xf] %vm426, %v1369
        %1402 = vst.msk [vmem:[#allocation4 + $0x110] sm:$0xf] %vm426, %v1370
        %1403 = vst.msk [vmem:[#allocation4 + $0x124] sm:$0xf] %vm426, %v1371
        %1404 = vst.msk [vmem:[#allocation4 + $0x138] sm:$0xf] %vm426, %v1372
        %1405 = vst.msk [vmem:[#allocation4 + $0x14c] sm:$0xf] %vm426, %v1373
        %1406 = vst.msk [vmem:[#allocation4 + $0x160] sm:$0xf] %vm426, %v1374
        %1407 = vst.msk [vmem:[#allocation4 + $0x174] sm:$0xf] %vm426, %v1375
        %1408 = vst.msk [vmem:[#allocation4 + $0x188] sm:$0xf] %vm426, %v1376
        %1409 = vst.msk [vmem:[#allocation4 + $0x19c] sm:$0xf] %vm426, %v1377
        %1410 = vst.msk [vmem:[#allocation4 + $0x1b0] sm:$0xf] %vm426, %v1378
        %1411 = vst.msk [vmem:[#allocation4 + $0x1c4] sm:$0xf] %vm426, %v1379
        %1412 = vst.msk [vmem:[#allocation4 + $0x1d8] sm:$0xf] %vm426, %v1380
        %1413 = vst.msk [vmem:[#allocation4 + $0x1ec] sm:$0xf] %vm426, %v1381
        %1414 = vst.msk [vmem:[#allocation4 + $0x200] sm:$0xf] %vm426, %v1382
        %1415 = vst.msk [vmem:[#allocation4 + $0x214] sm:$0xf] %vm426, %v1383
        %1416 = vst.msk [vmem:[#allocation4 + $0x228] sm:$0xf] %vm426, %v1384
        %1417 = vst.msk [vmem:[#allocation4 + $0x23c] sm:$0xf] %vm426, %v1385
        %1418 = vst.msk [vmem:[#allocation4 + $0x250] sm:$0xf] %vm426, %v1386
        %1419 = vst.msk [vmem:[#allocation4 + $0x264] sm:$0xf] %vm426, %v1387
        %1420 = vst.msk [vmem:[#allocation4 + $0x278] sm:$0xf] %vm426, %v1388
        %v1421 = vld [vmem:[%s1324 + $0x8] sm:$0xff]
        %v1422 = vld [vmem:[%s1324 + $0x10] sm:$0xff]
        %v1423 = vld [vmem:[%s1324 + $0x28] sm:$0xff]
        %v1424 = vld [vmem:[%s1324 + $0x30] sm:$0xff]
        %v1425 = vld [vmem:[%s1324 + $0x48] sm:$0xff]
        %v1426 = vld [vmem:[%s1324 + $0x50] sm:$0xff]
        %v1427 = vld [vmem:[%s1324 + $0x68] sm:$0xff]
        %v1428 = vld [vmem:[%s1324 + $0x70] sm:$0xff]
        %v1429 = vld [vmem:[%s1324 + $0x88] sm:$0xff]
        %v1430 = vld [vmem:[%s1324 + $0x90] sm:$0xff]
        %v1431 = vld [vmem:[%s1324 + $0xa8] sm:$0xff]
        %v1432 = vld [vmem:[%s1324 + $0xb0] sm:$0xff]
        %v1433 = vld [vmem:[%s1324 + $0xc8] sm:$0xff]
        %v1434 = vld [vmem:[%s1324 + $0xd0] sm:$0xff]
        %v1435 = vld [vmem:[%s1324 + $0xe8] sm:$0xff]
        %v1436 = vld [vmem:[%s1324 + $0xf0] sm:$0xff]
        %v1437 = vld [vmem:[%s1324 + $0x108] sm:$0xff]
        %v1438 = vld [vmem:[%s1324 + $0x110] sm:$0xff]
        %v1439 = vld [vmem:[%s1324 + $0x128] sm:$0xff]
        %v1440 = vld [vmem:[%s1324 + $0x130] sm:$0xff]
        %v1441 = vld [vmem:[%s1324 + $0x148] sm:$0xff]
        %v1442 = vld [vmem:[%s1324 + $0x150] sm:$0xff]
        %v1443 = vld [vmem:[%s1324 + $0x168] sm:$0xff]
        %v1444 = vld [vmem:[%s1324 + $0x170] sm:$0xff]
        %v1445 = vld [vmem:[%s1324 + $0x188] sm:$0xff]
        %v1446 = vld [vmem:[%s1324 + $0x190] sm:$0xff]
        %v1447 = vld [vmem:[%s1324 + $0x1a8] sm:$0xff]
        %v1448 = vld [vmem:[%s1324 + $0x1b0] sm:$0xff]
        %v1449 = vld [vmem:[%s1324 + $0x1c8] sm:$0xff]
        %v1450 = vld [vmem:[%s1324 + $0x1d0] sm:$0xff]
        %v1451 = vld [vmem:[%s1324 + $0x1e8] sm:$0xff]
        %v1452 = vld [vmem:[%s1324 + $0x1f0] sm:$0xff]
        %v1453 = vpack.c.bf16 %v1421, %v1421
        %v1454 = vpack.c.bf16 %v1422, %v1422
        %v1455 = vpack.c.bf16 %v1423, %v1423
        %v1456 = vpack.c.bf16 %v1424, %v1424
        %v1457 = vpack.c.bf16 %v1425, %v1425
        %v1458 = vpack.c.bf16 %v1426, %v1426
        %v1459 = vpack.c.bf16 %v1427, %v1427
        %v1460 = vpack.c.bf16 %v1428, %v1428
        %v1461 = vpack.c.bf16 %v1429, %v1429
        %v1462 = vpack.c.bf16 %v1430, %v1430
        %v1463 = vpack.c.bf16 %v1431, %v1431
        %v1464 = vpack.c.bf16 %v1432, %v1432
        %v1465 = vpack.c.bf16 %v1433, %v1433
        %v1466 = vpack.c.bf16 %v1434, %v1434
        %v1467 = vpack.c.bf16 %v1435, %v1435
        %v1468 = vpack.c.bf16 %v1436, %v1436
        %v1469 = vpack.c.bf16 %v1437, %v1437
        %v1470 = vpack.c.bf16 %v1438, %v1438
        %v1471 = vpack.c.bf16 %v1439, %v1439
        %v1472 = vpack.c.bf16 %v1440, %v1440
        %v1473 = vpack.c.bf16 %v1441, %v1441
        %v1474 = vpack.c.bf16 %v1442, %v1442
        %v1475 = vpack.c.bf16 %v1443, %v1443
        %v1476 = vpack.c.bf16 %v1444, %v1444
        %v1477 = vpack.c.bf16 %v1445, %v1445
        %v1478 = vpack.c.bf16 %v1446, %v1446
        %v1479 = vpack.c.bf16 %v1447, %v1447
        %v1480 = vpack.c.bf16 %v1448, %v1448
        %v1481 = vpack.c.bf16 %v1449, %v1449
        %v1482 = vpack.c.bf16 %v1450, %v1450
        %v1483 = vpack.c.bf16 %v1451, %v1451
        %v1484 = vpack.c.bf16 %v1452, %v1452
        %1517 = vrot.lane.b32.xlu0 %v1453, 64
        %v1518 = vpop.permute.xlu0 %1517
        %1519 = vrot.lane.b32.xlu0 %v1454, 64
        %v1520 = vpop.permute.xlu0 %1519
        %1521 = vrot.lane.b32.xlu0 %v1455, 64
        %v1522 = vpop.permute.xlu0 %1521
        %1523 = vrot.lane.b32.xlu0 %v1456, 64
        %v1524 = vpop.permute.xlu0 %1523
        %1525 = vrot.lane.b32.xlu0 %v1457, 64
        %v1526 = vpop.permute.xlu0 %1525
        %1527 = vrot.lane.b32.xlu0 %v1458, 64
        %v1528 = vpop.permute.xlu0 %1527
        %1529 = vrot.lane.b32.xlu0 %v1459, 64
        %v1530 = vpop.permute.xlu0 %1529
        %1531 = vrot.lane.b32.xlu0 %v1460, 64
        %v1532 = vpop.permute.xlu0 %1531
        %1533 = vrot.lane.b32.xlu0 %v1461, 64
        %v1534 = vpop.permute.xlu0 %1533
        %1535 = vrot.lane.b32.xlu0 %v1462, 64
        %v1536 = vpop.permute.xlu0 %1535
        %1537 = vrot.lane.b32.xlu0 %v1463, 64
        %v1538 = vpop.permute.xlu0 %1537
        %1539 = vrot.lane.b32.xlu0 %v1464, 64
        %v1540 = vpop.permute.xlu0 %1539
        %1541 = vrot.lane.b32.xlu0 %v1465, 64
        %v1542 = vpop.permute.xlu0 %1541
        %1543 = vrot.lane.b32.xlu0 %v1466, 64
        %v1544 = vpop.permute.xlu0 %1543
        %1545 = vrot.lane.b32.xlu0 %v1467, 64
        %v1546 = vpop.permute.xlu0 %1545
        %1547 = vrot.lane.b32.xlu0 %v1468, 64
        %v1548 = vpop.permute.xlu0 %1547
        %1549 = vrot.lane.b32.xlu0 %v1469, 64
        %v1550 = vpop.permute.xlu0 %1549
        %1551 = vrot.lane.b32.xlu0 %v1470, 64
        %v1552 = vpop.permute.xlu0 %1551
        %1553 = vrot.lane.b32.xlu0 %v1471, 64
        %v1554 = vpop.permute.xlu0 %1553
        %1555 = vrot.lane.b32.xlu0 %v1472, 64
        %v1556 = vpop.permute.xlu0 %1555
        %1557 = vrot.lane.b32.xlu0 %v1473, 64
        %v1558 = vpop.permute.xlu0 %1557
        %1559 = vrot.lane.b32.xlu0 %v1474, 64
        %v1560 = vpop.permute.xlu0 %1559
        %1561 = vrot.lane.b32.xlu0 %v1475, 64
        %v1562 = vpop.permute.xlu0 %1561
        %1563 = vrot.lane.b32.xlu0 %v1476, 64
        %v1564 = vpop.permute.xlu0 %1563
        %1565 = vrot.lane.b32.xlu0 %v1477, 64
        %v1566 = vpop.permute.xlu0 %1565
        %1567 = vrot.lane.b32.xlu0 %v1478, 64
        %v1568 = vpop.permute.xlu0 %1567
        %1569 = vrot.lane.b32.xlu0 %v1479, 64
        %v1570 = vpop.permute.xlu0 %1569
        %1571 = vrot.lane.b32.xlu0 %v1480, 64
        %v1572 = vpop.permute.xlu0 %1571
        %1573 = vrot.lane.b32.xlu0 %v1481, 64
        %v1574 = vpop.permute.xlu0 %1573
        %1575 = vrot.lane.b32.xlu0 %v1482, 64
        %v1576 = vpop.permute.xlu0 %1575
        %1577 = vrot.lane.b32.xlu0 %v1483, 64
        %v1578 = vpop.permute.xlu0 %1577
        %1579 = vrot.lane.b32.xlu0 %v1484, 64
        %v1580 = vpop.permute.xlu0 %1579
        %1613 = vst.msk [vmem:[#allocation4 + $0xc] sm:$0xf] %vm651, %v1518
        %1614 = vst.msk [vmem:[#allocation4 + $0x20] sm:$0xf] %vm651, %v1520
        %1615 = vst.msk [vmem:[#allocation4 + $0x34] sm:$0xf] %vm651, %v1522
        %1616 = vst.msk [vmem:[#allocation4 + $0x48] sm:$0xf] %vm651, %v1524
        %1617 = vst.msk [vmem:[#allocation4 + $0x5c] sm:$0xf] %vm651, %v1526
        %1618 = vst.msk [vmem:[#allocation4 + $0x70] sm:$0xf] %vm651, %v1528
        %1619 = vst.msk [vmem:[#allocation4 + $0x84] sm:$0xf] %vm651, %v1530
        %1620 = vst.msk [vmem:[#allocation4 + $0x98] sm:$0xf] %vm651, %v1532
        %1621 = vst.msk [vmem:[#allocation4 + $0xac] sm:$0xf] %vm651, %v1534
        %1622 = vst.msk [vmem:[#allocation4 + $0xc0] sm:$0xf] %vm651, %v1536
        %1623 = vst.msk [vmem:[#allocation4 + $0xd4] sm:$0xf] %vm651, %v1538
        %1624 = vst.msk [vmem:[#allocation4 + $0xe8] sm:$0xf] %vm651, %v1540
        %1625 = vst.msk [vmem:[#allocation4 + $0xfc] sm:$0xf] %vm651, %v1542
        %1626 = vst.msk [vmem:[#allocation4 + $0x110] sm:$0xf] %vm651, %v1544
        %1627 = vst.msk [vmem:[#allocation4 + $0x124] sm:$0xf] %vm651, %v1546
        %1628 = vst.msk [vmem:[#allocation4 + $0x138] sm:$0xf] %vm651, %v1548
        %1629 = vst.msk [vmem:[#allocation4 + $0x14c] sm:$0xf] %vm651, %v1550
        %1630 = vst.msk [vmem:[#allocation4 + $0x160] sm:$0xf] %vm651, %v1552
        %1631 = vst.msk [vmem:[#allocation4 + $0x174] sm:$0xf] %vm651, %v1554
        %1632 = vst.msk [vmem:[#allocation4 + $0x188] sm:$0xf] %vm651, %v1556
        %1633 = vst.msk [vmem:[#allocation4 + $0x19c] sm:$0xf] %vm651, %v1558
        %1634 = vst.msk [vmem:[#allocation4 + $0x1b0] sm:$0xf] %vm651, %v1560
        %1635 = vst.msk [vmem:[#allocation4 + $0x1c4] sm:$0xf] %vm651, %v1562
        %1636 = vst.msk [vmem:[#allocation4 + $0x1d8] sm:$0xf] %vm651, %v1564
        %1637 = vst.msk [vmem:[#allocation4 + $0x1ec] sm:$0xf] %vm651, %v1566
        %1638 = vst.msk [vmem:[#allocation4 + $0x200] sm:$0xf] %vm651, %v1568
        %1639 = vst.msk [vmem:[#allocation4 + $0x214] sm:$0xf] %vm651, %v1570
        %1640 = vst.msk [vmem:[#allocation4 + $0x228] sm:$0xf] %vm651, %v1572
        %1641 = vst.msk [vmem:[#allocation4 + $0x23c] sm:$0xf] %vm651, %v1574
        %1642 = vst.msk [vmem:[#allocation4 + $0x250] sm:$0xf] %vm651, %v1576
        %1643 = vst.msk [vmem:[#allocation4 + $0x264] sm:$0xf] %vm651, %v1578
        %1644 = vst.msk [vmem:[#allocation4 + $0x278] sm:$0xf] %vm651, %v1580
        %v1645 = vld [vmem:[%s1324 + $0x9] sm:$0xff]
        %v1646 = vld [vmem:[%s1324 + $0x11] sm:$0xff]
        %v1647 = vld [vmem:[%s1324 + $0x29] sm:$0xff]
        %v1648 = vld [vmem:[%s1324 + $0x31] sm:$0xff]
        %v1649 = vld [vmem:[%s1324 + $0x49] sm:$0xff]
        %v1650 = vld [vmem:[%s1324 + $0x51] sm:$0xff]
        %v1651 = vld [vmem:[%s1324 + $0x69] sm:$0xff]
        %v1652 = vld [vmem:[%s1324 + $0x71] sm:$0xff]
        %v1653 = vld [vmem:[%s1324 + $0x89] sm:$0xff]
        %v1654 = vld [vmem:[%s1324 + $0x91] sm:$0xff]
        %v1655 = vld [vmem:[%s1324 + $0xa9] sm:$0xff]
        %v1656 = vld [vmem:[%s1324 + $0xb1] sm:$0xff]
        %v1657 = vld [vmem:[%s1324 + $0xc9] sm:$0xff]
        %v1658 = vld [vmem:[%s1324 + $0xd1] sm:$0xff]
        %v1659 = vld [vmem:[%s1324 + $0xe9] sm:$0xff]
        %v1660 = vld [vmem:[%s1324 + $0xf1] sm:$0xff]
        %v1661 = vld [vmem:[%s1324 + $0x109] sm:$0xff]
        %v1662 = vld [vmem:[%s1324 + $0x111] sm:$0xff]
        %v1663 = vld [vmem:[%s1324 + $0x129] sm:$0xff]
        %v1664 = vld [vmem:[%s1324 + $0x131] sm:$0xff]
        %v1665 = vld [vmem:[%s1324 + $0x149] sm:$0xff]
        %v1666 = vld [vmem:[%s1324 + $0x151] sm:$0xff]
        %v1667 = vld [vmem:[%s1324 + $0x169] sm:$0xff]
        %v1668 = vld [vmem:[%s1324 + $0x171] sm:$0xff]
        %v1669 = vld [vmem:[%s1324 + $0x189] sm:$0xff]
        %v1670 = vld [vmem:[%s1324 + $0x191] sm:$0xff]
        %v1671 = vld [vmem:[%s1324 + $0x1a9] sm:$0xff]
        %v1672 = vld [vmem:[%s1324 + $0x1b1] sm:$0xff]
        %v1673 = vld [vmem:[%s1324 + $0x1c9] sm:$0xff]
        %v1674 = vld [vmem:[%s1324 + $0x1d1] sm:$0xff]
        %v1675 = vld [vmem:[%s1324 + $0x1e9] sm:$0xff]
        %v1676 = vld [vmem:[%s1324 + $0x1f1] sm:$0xff]
        %v1677 = vpack.c.bf16 %v1645, %v1645
        %v1678 = vpack.c.bf16 %v1646, %v1646
        %v1679 = vpack.c.bf16 %v1647, %v1647
        %v1680 = vpack.c.bf16 %v1648, %v1648
        %v1681 = vpack.c.bf16 %v1649, %v1649
        %v1682 = vpack.c.bf16 %v1650, %v1650
        %v1683 = vpack.c.bf16 %v1651, %v1651
        %v1684 = vpack.c.bf16 %v1652, %v1652
        %v1685 = vpack.c.bf16 %v1653, %v1653
        %v1686 = vpack.c.bf16 %v1654, %v1654
        %v1687 = vpack.c.bf16 %v1655, %v1655
        %v1688 = vpack.c.bf16 %v1656, %v1656
        %v1689 = vpack.c.bf16 %v1657, %v1657
        %v1690 = vpack.c.bf16 %v1658, %v1658
        %v1691 = vpack.c.bf16 %v1659, %v1659
        %v1692 = vpack.c.bf16 %v1660, %v1660
        %v1693 = vpack.c.bf16 %v1661, %v1661
        %v1694 = vpack.c.bf16 %v1662, %v1662
        %v1695 = vpack.c.bf16 %v1663, %v1663
        %v1696 = vpack.c.bf16 %v1664, %v1664
        %v1697 = vpack.c.bf16 %v1665, %v1665
        %v1698 = vpack.c.bf16 %v1666, %v1666
        %v1699 = vpack.c.bf16 %v1667, %v1667
        %v1700 = vpack.c.bf16 %v1668, %v1668
        %v1701 = vpack.c.bf16 %v1669, %v1669
        %v1702 = vpack.c.bf16 %v1670, %v1670
        %v1703 = vpack.c.bf16 %v1671, %v1671
        %v1704 = vpack.c.bf16 %v1672, %v1672
        %v1705 = vpack.c.bf16 %v1673, %v1673
        %v1706 = vpack.c.bf16 %v1674, %v1674
        %v1707 = vpack.c.bf16 %v1675, %v1675
        %v1708 = vpack.c.bf16 %v1676, %v1676
        %1709 = vst.msk [vmem:[#allocation4 + $0x10] sm:$0xf] %vm426, %v1677
        %1710 = vst.msk [vmem:[#allocation4 + $0x24] sm:$0xf] %vm426, %v1678
        %1711 = vst.msk [vmem:[#allocation4 + $0x38] sm:$0xf] %vm426, %v1679
        %1712 = vst.msk [vmem:[#allocation4 + $0x4c] sm:$0xf] %vm426, %v1680
        %1713 = vst.msk [vmem:[#allocation4 + $0x60] sm:$0xf] %vm426, %v1681
        %1714 = vst.msk [vmem:[#allocation4 + $0x74] sm:$0xf] %vm426, %v1682
        %1715 = vst.msk [vmem:[#allocation4 + $0x88] sm:$0xf] %vm426, %v1683
        %1716 = vst.msk [vmem:[#allocation4 + $0x9c] sm:$0xf] %vm426, %v1684
        %1717 = vst.msk [vmem:[#allocation4 + $0xb0] sm:$0xf] %vm426, %v1685
        %1718 = vst.msk [vmem:[#allocation4 + $0xc4] sm:$0xf] %vm426, %v1686
        %1719 = vst.msk [vmem:[#allocation4 + $0xd8] sm:$0xf] %vm426, %v1687
        %1720 = vst.msk [vmem:[#allocation4 + $0xec] sm:$0xf] %vm426, %v1688
        %1721 = vst.msk [vmem:[#allocation4 + $0x100] sm:$0xf] %vm426, %v1689
        %1722 = vst.msk [vmem:[#allocation4 + $0x114] sm:$0xf] %vm426, %v1690
        %1723 = vst.msk [vmem:[#allocation4 + $0x128] sm:$0xf] %vm426, %v1691
        %1724 = vst.msk [vmem:[#allocation4 + $0x13c] sm:$0xf] %vm426, %v1692
        %1725 = vst.msk [vmem:[#allocation4 + $0x150] sm:$0xf] %vm426, %v1693
        %1726 = vst.msk [vmem:[#allocation4 + $0x164] sm:$0xf] %vm426, %v1694
        %1727 = vst.msk [vmem:[#allocation4 + $0x178] sm:$0xf] %vm426, %v1695
        %1728 = vst.msk [vmem:[#allocation4 + $0x18c] sm:$0xf] %vm426, %v1696
        %1729 = vst.msk [vmem:[#allocation4 + $0x1a0] sm:$0xf] %vm426, %v1697
        %1730 = vst.msk [vmem:[#allocation4 + $0x1b4] sm:$0xf] %vm426, %v1698
        %1731 = vst.msk [vmem:[#allocation4 + $0x1c8] sm:$0xf] %vm426, %v1699
        %1732 = vst.msk [vmem:[#allocation4 + $0x1dc] sm:$0xf] %vm426, %v1700
        %1733 = vst.msk [vmem:[#allocation4 + $0x1f0] sm:$0xf] %vm426, %v1701
        %1734 = vst.msk [vmem:[#allocation4 + $0x204] sm:$0xf] %vm426, %v1702
        %1735 = vst.msk [vmem:[#allocation4 + $0x218] sm:$0xf] %vm426, %v1703
        %1736 = vst.msk [vmem:[#allocation4 + $0x22c] sm:$0xf] %vm426, %v1704
        %1737 = vst.msk [vmem:[#allocation4 + $0x240] sm:$0xf] %vm426, %v1705
        %1738 = vst.msk [vmem:[#allocation4 + $0x254] sm:$0xf] %vm426, %v1706
        %1739 = vst.msk [vmem:[#allocation4 + $0x268] sm:$0xf] %vm426, %v1707
        %1740 = vst.msk [vmem:[#allocation4 + $0x27c] sm:$0xf] %vm426, %v1708
        %v1741 = vld [vmem:[#allocation4] sm:$0xff]
        %v1742 = vld [vmem:[#allocation4 + $0x8] sm:$0xff]
        %v1743 = vld [vmem:[#allocation4 + $0x10] sm:$0xf]
        %v1744 = vld [vmem:[#allocation4 + $0x14] sm:$0xff]
        %v1745 = vld [vmem:[#allocation4 + $0x1c] sm:$0xff]
        %v1746 = vld [vmem:[#allocation4 + $0x24] sm:$0xf]
        %v1747 = vld [vmem:[#allocation4 + $0x28] sm:$0xff]
        %v1748 = vld [vmem:[#allocation4 + $0x30] sm:$0xff]
        %v1749 = vld [vmem:[#allocation4 + $0x38] sm:$0xf]
        %v1750 = vld [vmem:[#allocation4 + $0x3c] sm:$0xff]
        %v1751 = vld [vmem:[#allocation4 + $0x44] sm:$0xff]
        %v1752 = vld [vmem:[#allocation4 + $0x4c] sm:$0xf]
        %v1753 = vld [vmem:[#allocation4 + $0x50] sm:$0xff]
        %v1754 = vld [vmem:[#allocation4 + $0x58] sm:$0xff]
        %v1755 = vld [vmem:[#allocation4 + $0x60] sm:$0xf]
        %v1756 = vld [vmem:[#allocation4 + $0x64] sm:$0xff]
        %v1757 = vld [vmem:[#allocation4 + $0x6c] sm:$0xff]
        %v1758 = vld [vmem:[#allocation4 + $0x74] sm:$0xf]
        %v1759 = vld [vmem:[#allocation4 + $0x78] sm:$0xff]
        %v1760 = vld [vmem:[#allocation4 + $0x80] sm:$0xff]
        %v1761 = vld [vmem:[#allocation4 + $0x88] sm:$0xf]
        %v1762 = vld [vmem:[#allocation4 + $0x8c] sm:$0xff]
        %v1763 = vld [vmem:[#allocation4 + $0x94] sm:$0xff]
        %v1764 = vld [vmem:[#allocation4 + $0x9c] sm:$0xf]
        %v1765 = vld [vmem:[#allocation4 + $0xa0] sm:$0xff]
        %v1766 = vld [vmem:[#allocation4 + $0xa8] sm:$0xff]
        %v1767 = vld [vmem:[#allocation4 + $0xb0] sm:$0xf]
        %v1768 = vld [vmem:[#allocation4 + $0xb4] sm:$0xff]
        %v1769 = vld [vmem:[#allocation4 + $0xbc] sm:$0xff]
        %v1770 = vld [vmem:[#allocation4 + $0xc4] sm:$0xf]
        %v1771 = vld [vmem:[#allocation4 + $0xc8] sm:$0xff]
        %v1772 = vld [vmem:[#allocation4 + $0xd0] sm:$0xff]
        %v1773 = vld [vmem:[#allocation4 + $0xd8] sm:$0xf]
        %v1774 = vld [vmem:[#allocation4 + $0xdc] sm:$0xff]
        %v1775 = vld [vmem:[#allocation4 + $0xe4] sm:$0xff]
        %v1776 = vld [vmem:[#allocation4 + $0xec] sm:$0xf]
        %v1777 = vld [vmem:[#allocation4 + $0xf0] sm:$0xff]
        %v1778 = vld [vmem:[#allocation4 + $0xf8] sm:$0xff]
        %v1779 = vld [vmem:[#allocation4 + $0x100] sm:$0xf]
        %v1780 = vld [vmem:[#allocation4 + $0x104] sm:$0xff]
        %v1781 = vld [vmem:[#allocation4 + $0x10c] sm:$0xff]
        %v1782 = vld [vmem:[#allocation4 + $0x114] sm:$0xf]
        %v1783 = vld [vmem:[#allocation4 + $0x118] sm:$0xff]
        %v1784 = vld [vmem:[#allocation4 + $0x120] sm:$0xff]
        %v1785 = vld [vmem:[#allocation4 + $0x128] sm:$0xf]
        %v1786 = vld [vmem:[#allocation4 + $0x12c] sm:$0xff]
        %v1787 = vld [vmem:[#allocation4 + $0x134] sm:$0xff]
        %v1788 = vld [vmem:[#allocation4 + $0x13c] sm:$0xf]
        %v1789 = vld [vmem:[#allocation4 + $0x140] sm:$0xff]
        %v1790 = vld [vmem:[#allocation4 + $0x148] sm:$0xff]
        %v1791 = vld [vmem:[#allocation4 + $0x150] sm:$0xf]
        %v1792 = vld [vmem:[#allocation4 + $0x154] sm:$0xff]
        %v1793 = vld [vmem:[#allocation4 + $0x15c] sm:$0xff]
        %v1794 = vld [vmem:[#allocation4 + $0x164] sm:$0xf]
        %v1795 = vld [vmem:[#allocation4 + $0x168] sm:$0xff]
        %v1796 = vld [vmem:[#allocation4 + $0x170] sm:$0xff]
        %v1797 = vld [vmem:[#allocation4 + $0x178] sm:$0xf]
        %v1798 = vld [vmem:[#allocation4 + $0x17c] sm:$0xff]
        %v1799 = vld [vmem:[#allocation4 + $0x184] sm:$0xff]
        %v1800 = vld [vmem:[#allocation4 + $0x18c] sm:$0xf]
        %v1801 = vld [vmem:[#allocation4 + $0x190] sm:$0xff]
        %v1802 = vld [vmem:[#allocation4 + $0x198] sm:$0xff]
        %v1803 = vld [vmem:[#allocation4 + $0x1a0] sm:$0xf]
        %v1804 = vld [vmem:[#allocation4 + $0x1a4] sm:$0xff]
        %v1805 = vld [vmem:[#allocation4 + $0x1ac] sm:$0xff]
        %v1806 = vld [vmem:[#allocation4 + $0x1b4] sm:$0xf]
        %v1807 = vld [vmem:[#allocation4 + $0x1b8] sm:$0xff]
        %v1808 = vld [vmem:[#allocation4 + $0x1c0] sm:$0xff]
        %v1809 = vld [vmem:[#allocation4 + $0x1c8] sm:$0xf]
        %v1810 = vld [vmem:[#allocation4 + $0x1cc] sm:$0xff]
        %v1811 = vld [vmem:[#allocation4 + $0x1d4] sm:$0xff]
        %v1812 = vld [vmem:[#allocation4 + $0x1dc] sm:$0xf]
        %v1813 = vld [vmem:[#allocation4 + $0x1e0] sm:$0xff]
        %v1814 = vld [vmem:[#allocation4 + $0x1e8] sm:$0xff]
        %v1815 = vld [vmem:[#allocation4 + $0x1f0] sm:$0xf]
        %v1816 = vld [vmem:[#allocation4 + $0x1f4] sm:$0xff]
        %v1817 = vld [vmem:[#allocation4 + $0x1fc] sm:$0xff]
        %v1818 = vld [vmem:[#allocation4 + $0x204] sm:$0xf]
        %v1819 = vld [vmem:[#allocation4 + $0x208] sm:$0xff]
        %v1820 = vld [vmem:[#allocation4 + $0x210] sm:$0xff]
        %v1821 = vld [vmem:[#allocation4 + $0x218] sm:$0xf]
        %v1822 = vld [vmem:[#allocation4 + $0x21c] sm:$0xff]
        %v1823 = vld [vmem:[#allocation4 + $0x224] sm:$0xff]
        %v1824 = vld [vmem:[#allocation4 + $0x22c] sm:$0xf]
        %v1825 = vld [vmem:[#allocation4 + $0x230] sm:$0xff]
        %v1826 = vld [vmem:[#allocation4 + $0x238] sm:$0xff]
        %v1827 = vld [vmem:[#allocation4 + $0x240] sm:$0xf]
        %v1828 = vld [vmem:[#allocation4 + $0x244] sm:$0xff]
        %v1829 = vld [vmem:[#allocation4 + $0x24c] sm:$0xff]
        %v1830 = vld [vmem:[#allocation4 + $0x254] sm:$0xf]
        %v1831 = vld [vmem:[#allocation4 + $0x258] sm:$0xff]
        %v1832 = vld [vmem:[#allocation4 + $0x260] sm:$0xff]
        %v1833 = vld [vmem:[#allocation4 + $0x268] sm:$0xf]
        %v1834 = vld [vmem:[#allocation4 + $0x26c] sm:$0xff]
        %v1835 = vld [vmem:[#allocation4 + $0x274] sm:$0xff]
        %v1836 = vld [vmem:[#allocation4 + $0x27c] sm:$0xf]
        %v1837 = vld [vmem:[%s1] sm:$0xf]
        %v1838 = vld [vmem:[%s1 + $0x4] sm:$0xf]
        %v1839 = vld [vmem:[%s1 + $0x8] sm:$0xf]
        %v1840 = vld [vmem:[%s1 + $0xc] sm:$0xf]
        %v1841 = vld [vmem:[%s1 + $0x10] sm:$0xf]
        %v1842 = vld [vmem:[%s1 + $0x14] sm:$0xf]
        %v1843 = vld [vmem:[%s1 + $0x18] sm:$0xf]
        %v1844 = vld [vmem:[%s1 + $0x1c] sm:$0xf]
        %v1845 = vld [vmem:[%s1 + $0x20] sm:$0xf]
        %v1846 = vld [vmem:[%s1 + $0x24] sm:$0xf]
        %v1847 = vld [vmem:[%s1 + $0x28] sm:$0xf]
        %v1848 = vld [vmem:[%s1 + $0x2c] sm:$0xf]
        %v1849 = vld [vmem:[%s1 + $0x30] sm:$0xf]
        %v1850 = vld [vmem:[%s1 + $0x34] sm:$0xf]
        %v1851 = vld [vmem:[%s1 + $0x38] sm:$0xf]
        %v1852 = vld [vmem:[%s1 + $0x3c] sm:$0xf]
        %v1853 = vld [vmem:[%s1 + $0x40] sm:$0xf]
        %v1854 = vld [vmem:[%s1 + $0x44] sm:$0xf]
        %v1855 = vld [vmem:[%s1 + $0x48] sm:$0xf]
        %v1856 = vld [vmem:[%s1 + $0x4c] sm:$0xf]
        %v1857 = vld [vmem:[%s1 + $0x50] sm:$0xf]
        %v1858 = vld [vmem:[%s1 + $0x54] sm:$0xf]
        %v1859 = vld [vmem:[%s1 + $0x58] sm:$0xf]
        %v1860 = vld [vmem:[%s1 + $0x5c] sm:$0xf]
        %v1861 = vld [vmem:[%s1 + $0x60] sm:$0xf]
        %v1862 = vld [vmem:[%s1 + $0x64] sm:$0xf]
        %v1863 = vld [vmem:[%s1 + $0x68] sm:$0xf]
        %v1864 = vld [vmem:[%s1 + $0x6c] sm:$0xf]
        %v1865 = vld [vmem:[%s1 + $0x70] sm:$0xf]
        %v1866 = vld [vmem:[%s1 + $0x74] sm:$0xf]
        %v1867 = vld [vmem:[%s1 + $0x78] sm:$0xf]
        %v1868 = vld [vmem:[%s1 + $0x7c] sm:$0xf]
        %v1869 = vld [vmem:[%s1 + $0x80] sm:$0xf]
        %v1870 = vld [vmem:[%s1 + $0x84] sm:$0xf]
        %v1871 = vld [vmem:[%s1 + $0x88] sm:$0xf]
        %v1872 = vld [vmem:[%s1 + $0x8c] sm:$0xf]
        %v1873 = vld [vmem:[%s1 + $0x90] sm:$0xf]
        %v1874 = vld [vmem:[%s1 + $0x94] sm:$0xf]
        %v1875 = vld [vmem:[%s1 + $0x98] sm:$0xf]
        %v1876 = vld [vmem:[%s1 + $0x9c] sm:$0xf]
        %v1877 = vld [vmem:[%s1 + $0xa0] sm:$0xf]
        %v1878 = vld [vmem:[%s1 + $0xa4] sm:$0xf]
        %v1879 = vld [vmem:[%s1 + $0xa8] sm:$0xf]
        %v1880 = vld [vmem:[%s1 + $0xac] sm:$0xf]
        %v1881 = vld [vmem:[%s1 + $0xb0] sm:$0xf]
        %v1882 = vld [vmem:[%s1 + $0xb4] sm:$0xf]
        %v1883 = vld [vmem:[%s1 + $0xb8] sm:$0xf]
        %v1884 = vld [vmem:[%s1 + $0xbc] sm:$0xf]
        %v1885 = vld [vmem:[%s1 + $0xc0] sm:$0xf]
        %v1886 = vld [vmem:[%s1 + $0xc4] sm:$0xf]
        %v1887 = vld [vmem:[%s1 + $0xc8] sm:$0xf]
        %v1888 = vld [vmem:[%s1 + $0xcc] sm:$0xf]
        %v1889 = vld [vmem:[%s1 + $0xd0] sm:$0xf]
        %v1890 = vld [vmem:[%s1 + $0xd4] sm:$0xf]
        %v1891 = vld [vmem:[%s1 + $0xd8] sm:$0xf]
        %v1892 = vld [vmem:[%s1 + $0xdc] sm:$0xf]
        %v1893 = vld [vmem:[%s1 + $0xe0] sm:$0xf]
        %v1894 = vld [vmem:[%s1 + $0xe4] sm:$0xf]
        %v1895 = vld [vmem:[%s1 + $0xe8] sm:$0xf]
        %v1896 = vld [vmem:[%s1 + $0xec] sm:$0xf]
        %v1897 = vld [vmem:[%s1 + $0xf0] sm:$0xf]
        %v1898 = vld [vmem:[%s1 + $0xf4] sm:$0xf]
        %v1899 = vld [vmem:[%s1 + $0xf8] sm:$0xf]
        %v1900 = vld [vmem:[%s1 + $0xfc] sm:$0xf]
        %v1901 = vld [vmem:[%s1 + $0x100] sm:$0xf]
        %v1902 = vld [vmem:[%s1 + $0x104] sm:$0xf]
        %v1903 = vld [vmem:[%s1 + $0x108] sm:$0xf]
        %v1904 = vld [vmem:[%s1 + $0x10c] sm:$0xf]
        %v1905 = vld [vmem:[%s1 + $0x110] sm:$0xf]
        %v1906 = vld [vmem:[%s1 + $0x114] sm:$0xf]
        %v1907 = vld [vmem:[%s1 + $0x118] sm:$0xf]
        %v1908 = vld [vmem:[%s1 + $0x11c] sm:$0xf]
        %v1909 = vld [vmem:[%s2] sm:$0x1]
        %v1911 = vperm.slane %v1909, 0
        %v2009 = vunpack.c.l.b16 %v1741
        %v2010 = vunpack.c.h.b16 %v1741
        %v2011 = vunpack.c.l.b16 %v1742
        %v2012 = vunpack.c.h.b16 %v1742
        %v2013 = vunpack.c.l.b16 %v1743
        %v2014 = vunpack.c.l.b16 %v1744
        %v2015 = vunpack.c.h.b16 %v1744
        %v2016 = vunpack.c.l.b16 %v1745
        %v2017 = vunpack.c.h.b16 %v1745
        %v2018 = vunpack.c.l.b16 %v1746
        %v2019 = vunpack.c.l.b16 %v1747
        %v2020 = vunpack.c.h.b16 %v1747
        %v2021 = vunpack.c.l.b16 %v1748
        %v2022 = vunpack.c.h.b16 %v1748
        %v2023 = vunpack.c.l.b16 %v1749
        %v2024 = vunpack.c.l.b16 %v1750
        %v2025 = vunpack.c.h.b16 %v1750
        %v2026 = vunpack.c.l.b16 %v1751
        %v2027 = vunpack.c.h.b16 %v1751
        %v2028 = vunpack.c.l.b16 %v1752
        %v2029 = vunpack.c.l.b16 %v1753
        %v2030 = vunpack.c.h.b16 %v1753
        %v2031 = vunpack.c.l.b16 %v1754
        %v2032 = vunpack.c.h.b16 %v1754
        %v2033 = vunpack.c.l.b16 %v1755
        %v2034 = vunpack.c.l.b16 %v1756
        %v2035 = vunpack.c.h.b16 %v1756
        %v2036 = vunpack.c.l.b16 %v1757
        %v2037 = vunpack.c.h.b16 %v1757
        %v2038 = vunpack.c.l.b16 %v1758
        %v2039 = vunpack.c.l.b16 %v1759
        %v2040 = vunpack.c.h.b16 %v1759
        %v2041 = vunpack.c.l.b16 %v1760
        %v2042 = vunpack.c.h.b16 %v1760
        %v2043 = vunpack.c.l.b16 %v1761
        %v2044 = vunpack.c.l.b16 %v1762
        %v2045 = vunpack.c.h.b16 %v1762
        %v2046 = vunpack.c.l.b16 %v1763
        %v2047 = vunpack.c.h.b16 %v1763
        %v2048 = vunpack.c.l.b16 %v1764
        %v2049 = vunpack.c.l.b16 %v1765
        %v2050 = vunpack.c.h.b16 %v1765
        %v2051 = vunpack.c.l.b16 %v1766
        %v2052 = vunpack.c.h.b16 %v1766
        %v2053 = vunpack.c.l.b16 %v1767
        %v2054 = vunpack.c.l.b16 %v1768
        %v2055 = vunpack.c.h.b16 %v1768
        %v2056 = vunpack.c.l.b16 %v1769
        %v2057 = vunpack.c.h.b16 %v1769
        %v2058 = vunpack.c.l.b16 %v1770
        %v2059 = vunpack.c.l.b16 %v1771
        %v2060 = vunpack.c.h.b16 %v1771
        %v2061 = vunpack.c.l.b16 %v1772
        %v2062 = vunpack.c.h.b16 %v1772
        %v2063 = vunpack.c.l.b16 %v1773
        %v2064 = vunpack.c.l.b16 %v1774
        %v2065 = vunpack.c.h.b16 %v1774
        %v2066 = vunpack.c.l.b16 %v1775
        %v2067 = vunpack.c.h.b16 %v1775
        %v2068 = vunpack.c.l.b16 %v1776
        %v2069 = vunpack.c.l.b16 %v1777
        %v2070 = vunpack.c.h.b16 %v1777
        %v2071 = vunpack.c.l.b16 %v1778
        %v2072 = vunpack.c.h.b16 %v1778
        %v2073 = vunpack.c.l.b16 %v1779
        %v2074 = vunpack.c.l.b16 %v1780
        %v2075 = vunpack.c.h.b16 %v1780
        %v2076 = vunpack.c.l.b16 %v1781
        %v2077 = vunpack.c.h.b16 %v1781
        %v2078 = vunpack.c.l.b16 %v1782
        %v2079 = vunpack.c.l.b16 %v1783
        %v2080 = vunpack.c.h.b16 %v1783
        %v2081 = vunpack.c.l.b16 %v1784
        %v2082 = vunpack.c.h.b16 %v1784
        %v2083 = vunpack.c.l.b16 %v1785
        %v2084 = vunpack.c.l.b16 %v1786
        %v2085 = vunpack.c.h.b16 %v1786
        %v2086 = vunpack.c.l.b16 %v1787
        %v2087 = vunpack.c.h.b16 %v1787
        %v2088 = vunpack.c.l.b16 %v1788
        %v2089 = vunpack.c.l.b16 %v1789
        %v2090 = vunpack.c.h.b16 %v1789
        %v2091 = vunpack.c.l.b16 %v1790
        %v2092 = vunpack.c.h.b16 %v1790
        %v2093 = vunpack.c.l.b16 %v1791
        %v2094 = vunpack.c.l.b16 %v1792
        %v2095 = vunpack.c.h.b16 %v1792
        %v2096 = vunpack.c.l.b16 %v1793
        %v2097 = vunpack.c.h.b16 %v1793
        %v2098 = vunpack.c.l.b16 %v1794
        %v2099 = vunpack.c.l.b16 %v1795
        %v2100 = vunpack.c.h.b16 %v1795
        %v2101 = vunpack.c.l.b16 %v1796
        %v2102 = vunpack.c.h.b16 %v1796
        %v2103 = vunpack.c.l.b16 %v1797
        %v2104 = vunpack.c.l.b16 %v1798
        %v2105 = vunpack.c.h.b16 %v1798
        %v2106 = vunpack.c.l.b16 %v1799
        %v2107 = vunpack.c.h.b16 %v1799
        %v2108 = vunpack.c.l.b16 %v1800
        %v2109 = vunpack.c.l.b16 %v1801
        %v2110 = vunpack.c.h.b16 %v1801
        %v2111 = vunpack.c.l.b16 %v1802
        %v2112 = vunpack.c.h.b16 %v1802
        %v2113 = vunpack.c.l.b16 %v1803
        %v2114 = vunpack.c.l.b16 %v1804
        %v2115 = vunpack.c.h.b16 %v1804
        %v2116 = vunpack.c.l.b16 %v1805
        %v2117 = vunpack.c.h.b16 %v1805
        %v2118 = vunpack.c.l.b16 %v1806
        %v2119 = vunpack.c.l.b16 %v1807
        %v2120 = vunpack.c.h.b16 %v1807
        %v2121 = vunpack.c.l.b16 %v1808
        %v2122 = vunpack.c.h.b16 %v1808
        %v2123 = vunpack.c.l.b16 %v1809
        %v2124 = vunpack.c.l.b16 %v1810
        %v2125 = vunpack.c.h.b16 %v1810
        %v2126 = vunpack.c.l.b16 %v1811
        %v2127 = vunpack.c.h.b16 %v1811
        %v2128 = vunpack.c.l.b16 %v1812
        %v2129 = vunpack.c.l.b16 %v1813
        %v2130 = vunpack.c.h.b16 %v1813
        %v2131 = vunpack.c.l.b16 %v1814
        %v2132 = vunpack.c.h.b16 %v1814
        %v2133 = vunpack.c.l.b16 %v1815
        %v2134 = vunpack.c.l.b16 %v1816
        %v2135 = vunpack.c.h.b16 %v1816
        %v2136 = vunpack.c.l.b16 %v1817
        %v2137 = vunpack.c.h.b16 %v1817
        %v2138 = vunpack.c.l.b16 %v1818
        %v2139 = vunpack.c.l.b16 %v1819
        %v2140 = vunpack.c.h.b16 %v1819
        %v2141 = vunpack.c.l.b16 %v1820
        %v2142 = vunpack.c.h.b16 %v1820
        %v2143 = vunpack.c.l.b16 %v1821
        %v2144 = vunpack.c.l.b16 %v1822
        %v2145 = vunpack.c.h.b16 %v1822
        %v2146 = vunpack.c.l.b16 %v1823
        %v2147 = vunpack.c.h.b16 %v1823
        %v2148 = vunpack.c.l.b16 %v1824
        %v2149 = vunpack.c.l.b16 %v1825
        %v2150 = vunpack.c.h.b16 %v1825
        %v2151 = vunpack.c.l.b16 %v1826
        %v2152 = vunpack.c.h.b16 %v1826
        %v2153 = vunpack.c.l.b16 %v1827
        %v2154 = vunpack.c.l.b16 %v1828
        %v2155 = vunpack.c.h.b16 %v1828
        %v2156 = vunpack.c.l.b16 %v1829
        %v2157 = vunpack.c.h.b16 %v1829
        %v2158 = vunpack.c.l.b16 %v1830
        %v2159 = vunpack.c.l.b16 %v1831
        %v2160 = vunpack.c.h.b16 %v1831
        %v2161 = vunpack.c.l.b16 %v1832
        %v2162 = vunpack.c.h.b16 %v1832
        %v2163 = vunpack.c.l.b16 %v1833
        %v2164 = vunpack.c.l.b16 %v1834
        %v2165 = vunpack.c.h.b16 %v1834
        %v2166 = vunpack.c.l.b16 %v1835
        %v2167 = vunpack.c.h.b16 %v1835
        %v2168 = vunpack.c.l.b16 %v1836
        %v2169 = vpack.c.b16 %v2014, %v2009
        %v2170 = vpack.c.b16 %v2015, %v2010
        %v2171 = vpack.c.b16 %v2016, %v2011
        %v2172 = vpack.c.b16 %v2017, %v2012
        %v2173 = vpack.c.b16 %v2018, %v2013
        %v2174 = vpack.c.b16 %v2024, %v2019
        %v2175 = vpack.c.b16 %v2025, %v2020
        %v2176 = vpack.c.b16 %v2026, %v2021
        %v2177 = vpack.c.b16 %v2027, %v2022
        %v2178 = vpack.c.b16 %v2028, %v2023
        %v2179 = vpack.c.b16 %v2034, %v2029
        %v2180 = vpack.c.b16 %v2035, %v2030
        %v2181 = vpack.c.b16 %v2036, %v2031
        %v2182 = vpack.c.b16 %v2037, %v2032
        %v2183 = vpack.c.b16 %v2038, %v2033
        %v2184 = vpack.c.b16 %v2044, %v2039
        %v2185 = vpack.c.b16 %v2045, %v2040
        %v2186 = vpack.c.b16 %v2046, %v2041
        %v2187 = vpack.c.b16 %v2047, %v2042
        %v2188 = vpack.c.b16 %v2048, %v2043
        %v2189 = vpack.c.b16 %v2054, %v2049
        %v2190 = vpack.c.b16 %v2055, %v2050
        %v2191 = vpack.c.b16 %v2056, %v2051
        %v2192 = vpack.c.b16 %v2057, %v2052
        %v2193 = vpack.c.b16 %v2058, %v2053
        %v2194 = vpack.c.b16 %v2064, %v2059
        %v2195 = vpack.c.b16 %v2065, %v2060
        %v2196 = vpack.c.b16 %v2066, %v2061
        %v2197 = vpack.c.b16 %v2067, %v2062
        %v2198 = vpack.c.b16 %v2068, %v2063
        %v2199 = vpack.c.b16 %v2074, %v2069
        %v2200 = vpack.c.b16 %v2075, %v2070
        %v2201 = vpack.c.b16 %v2076, %v2071
        %v2202 = vpack.c.b16 %v2077, %v2072
        %v2203 = vpack.c.b16 %v2078, %v2073
        %v2204 = vpack.c.b16 %v2084, %v2079
        %v2205 = vpack.c.b16 %v2085, %v2080
        %v2206 = vpack.c.b16 %v2086, %v2081
        %v2207 = vpack.c.b16 %v2087, %v2082
        %v2208 = vpack.c.b16 %v2088, %v2083
        %v2209 = vpack.c.b16 %v2094, %v2089
        %v2210 = vpack.c.b16 %v2095, %v2090
        %v2211 = vpack.c.b16 %v2096, %v2091
        %v2212 = vpack.c.b16 %v2097, %v2092
        %v2213 = vpack.c.b16 %v2098, %v2093
        %v2214 = vpack.c.b16 %v2104, %v2099
        %v2215 = vpack.c.b16 %v2105, %v2100
        %v2216 = vpack.c.b16 %v2106, %v2101
        %v2217 = vpack.c.b16 %v2107, %v2102
        %v2218 = vpack.c.b16 %v2108, %v2103
        %v2219 = vpack.c.b16 %v2114, %v2109
        %v2220 = vpack.c.b16 %v2115, %v2110
        %v2221 = vpack.c.b16 %v2116, %v2111
        %v2222 = vpack.c.b16 %v2117, %v2112
        %v2223 = vpack.c.b16 %v2118, %v2113
        %v2224 = vpack.c.b16 %v2124, %v2119
        %v2225 = vpack.c.b16 %v2125, %v2120
        %v2226 = vpack.c.b16 %v2126, %v2121
        %v2227 = vpack.c.b16 %v2127, %v2122
        %v2228 = vpack.c.b16 %v2128, %v2123
        %v2229 = vpack.c.b16 %v2134, %v2129
        %v2230 = vpack.c.b16 %v2135, %v2130
        %v2231 = vpack.c.b16 %v2136, %v2131
        %v2232 = vpack.c.b16 %v2137, %v2132
        %v2233 = vpack.c.b16 %v2138, %v2133
        %v2234 = vpack.c.b16 %v2144, %v2139
        %v2235 = vpack.c.b16 %v2145, %v2140
        %v2236 = vpack.c.b16 %v2146, %v2141
        %v2237 = vpack.c.b16 %v2147, %v2142
        %v2238 = vpack.c.b16 %v2148, %v2143
        %v2239 = vpack.c.b16 %v2154, %v2149
        %v2240 = vpack.c.b16 %v2155, %v2150
        %v2241 = vpack.c.b16 %v2156, %v2151
        %v2242 = vpack.c.b16 %v2157, %v2152
        %v2243 = vpack.c.b16 %v2158, %v2153
        %v2244 = vpack.c.b16 %v2164, %v2159
        %v2245 = vpack.c.b16 %v2165, %v2160
        %v2246 = vpack.c.b16 %v2166, %v2161
        %v2247 = vpack.c.b16 %v2167, %v2162
        %v2248 = vpack.c.b16 %v2168, %v2163
        %v2385 = vunpack.c.l.b16 %v1837
        %v2386 = vunpack.c.l.b16 %v1838
        %v2387 = vunpack.c.l.b16 %v1839
        %v2388 = vunpack.c.l.b16 %v1840
        %v2389 = vunpack.c.l.b16 %v1841
        %v2390 = vunpack.c.l.b16 %v1842
        %v2391 = vunpack.c.l.b16 %v1843
        %v2392 = vunpack.c.l.b16 %v1844
        %v2393 = vunpack.c.l.b16 %v1845
        %v2394 = vunpack.c.l.b16 %v1846
        %v2395 = vunpack.c.l.b16 %v1847
        %v2396 = vunpack.c.l.b16 %v1848
        %v2397 = vunpack.c.l.b16 %v1849
        %v2398 = vunpack.c.l.b16 %v1850
        %v2399 = vunpack.c.l.b16 %v1851
        %v2400 = vunpack.c.l.b16 %v1852
        %v2401 = vunpack.c.l.b16 %v1853
        %v2402 = vunpack.c.l.b16 %v1854
        %v2403 = vunpack.c.l.b16 %v1855
        %v2404 = vunpack.c.l.b16 %v1856
        %v2405 = vunpack.c.l.b16 %v1857
        %v2406 = vunpack.c.l.b16 %v1858
        %v2407 = vunpack.c.l.b16 %v1859
        %v2408 = vunpack.c.l.b16 %v1860
        %v2409 = vunpack.c.l.b16 %v1861
        %v2410 = vunpack.c.l.b16 %v1862
        %v2411 = vunpack.c.l.b16 %v1863
        %v2412 = vunpack.c.l.b16 %v1864
        %v2413 = vunpack.c.l.b16 %v1865
        %v2414 = vunpack.c.l.b16 %v1866
        %v2415 = vunpack.c.l.b16 %v1867
        %v2416 = vunpack.c.l.b16 %v1868
        %v2417 = vunpack.c.l.b16 %v1869
        %v2418 = vunpack.c.l.b16 %v1870
        %v2419 = vunpack.c.l.b16 %v1871
        %v2420 = vunpack.c.l.b16 %v1872
        %v2421 = vunpack.c.l.b16 %v1873
        %v2422 = vunpack.c.l.b16 %v1874
        %v2423 = vunpack.c.l.b16 %v1875
        %v2424 = vunpack.c.l.b16 %v1876
        %v2425 = vunpack.c.l.b16 %v1877
        %v2426 = vunpack.c.l.b16 %v1878
        %v2427 = vunpack.c.l.b16 %v1879
        %v2428 = vunpack.c.l.b16 %v1880
        %v2429 = vunpack.c.l.b16 %v1881
        %v2430 = vunpack.c.l.b16 %v1882
        %v2431 = vunpack.c.l.b16 %v1883
        %v2432 = vunpack.c.l.b16 %v1884
        %v2433 = vunpack.c.l.b16 %v1885
        %v2434 = vunpack.c.l.b16 %v1886
        %v2435 = vunpack.c.l.b16 %v1887
        %v2436 = vunpack.c.l.b16 %v1888
        %v2437 = vunpack.c.l.b16 %v1889
        %v2438 = vunpack.c.l.b16 %v1890
        %v2439 = vunpack.c.l.b16 %v1891
        %v2440 = vunpack.c.l.b16 %v1892
        %v2441 = vunpack.c.l.b16 %v1893
        %v2442 = vunpack.c.l.b16 %v1894
        %v2443 = vunpack.c.l.b16 %v1895
        %v2444 = vunpack.c.l.b16 %v1896
        %v2445 = vunpack.c.l.b16 %v1897
        %v2446 = vunpack.c.l.b16 %v1898
        %v2447 = vunpack.c.l.b16 %v1899
        %v2448 = vunpack.c.l.b16 %v1900
        %v2449 = vunpack.c.l.b16 %v1901
        %v2450 = vunpack.c.l.b16 %v1902
        %v2451 = vunpack.c.l.b16 %v1903
        %v2452 = vunpack.c.l.b16 %v1904
        %v2453 = vunpack.c.l.b16 %v1905
        %v2454 = vunpack.c.l.b16 %v1906
        %v2455 = vunpack.c.l.b16 %v1907
        %v2456 = vunpack.c.l.b16 %v1908
        %v2457 = vpack.c.b16 %v2386, %v2385
        %v2458 = vpack.c.b16 %v2388, %v2387
        %v2459 = vpack.c.b16 %v2390, %v2389
        %v2460 = vpack.c.b16 %v2392, %v2391
        %v2461 = vpack.c.b16 %v2394, %v2393
        %v2462 = vpack.c.b16 %v2396, %v2395
        %v2463 = vpack.c.b16 %v2398, %v2397
        %v2464 = vpack.c.b16 %v2400, %v2399
        %v2465 = vpack.c.b16 %v2402, %v2401
        %v2466 = vpack.c.b16 %v2404, %v2403
        %v2467 = vpack.c.b16 %v2406, %v2405
        %v2468 = vpack.c.b16 %v2408, %v2407
        %v2469 = vpack.c.b16 %v2410, %v2409
        %v2470 = vpack.c.b16 %v2412, %v2411
        %v2471 = vpack.c.b16 %v2414, %v2413
        %v2472 = vpack.c.b16 %v2416, %v2415
        %v2473 = vpack.c.b16 %v2418, %v2417
        %v2474 = vpack.c.b16 %v2420, %v2419
        %v2475 = vpack.c.b16 %v2422, %v2421
        %v2476 = vpack.c.b16 %v2424, %v2423
        %v2477 = vpack.c.b16 %v2426, %v2425
        %v2478 = vpack.c.b16 %v2428, %v2427
        %v2479 = vpack.c.b16 %v2430, %v2429
        %v2480 = vpack.c.b16 %v2432, %v2431
        %v2481 = vpack.c.b16 %v2434, %v2433
        %v2482 = vpack.c.b16 %v2436, %v2435
        %v2483 = vpack.c.b16 %v2438, %v2437
        %v2484 = vpack.c.b16 %v2440, %v2439
        %v2485 = vpack.c.b16 %v2442, %v2441
        %v2486 = vpack.c.b16 %v2444, %v2443
        %v2487 = vpack.c.b16 %v2446, %v2445
        %v2488 = vpack.c.b16 %v2448, %v2447
        %v2489 = vpack.c.b16 %v2450, %v2449
        %v2490 = vpack.c.b16 %v2452, %v2451
        %v2491 = vpack.c.b16 %v2454, %v2453
        %v2492 = vpack.c.b16 %v2456, %v2455
        %v2530 = vsel %vm224, %v2173, 0
        %v2533 = vsel %vm224, %v2178, 0
        %v2536 = vsel %vm224, %v2183, 0
        %v2539 = vsel %vm224, %v2188, 0
        %v2542 = vsel %vm224, %v2193, 0
        %v2545 = vsel %vm224, %v2198, 0
        %v2548 = vsel %vm224, %v2203, 0
        %v2551 = vsel %vm224, %v2208, 0
        %v2554 = vsel %vm224, %v2213, 0
        %v2557 = vsel %vm224, %v2218, 0
        %v2560 = vsel %vm224, %v2223, 0
        %v2563 = vsel %vm224, %v2228, 0
        %v2566 = vsel %vm224, %v2233, 0
        %v2569 = vsel %vm224, %v2238, 0
        %v2572 = vsel %vm224, %v2243, 0
        %v2575 = vsel %vm224, %v2248, 0
        %2577 = vmatpush.bf16.msra.mxu0 %v2464
        %2578 = vmatpush.bf16.msra.mxu0 %v2463
        %2579 = vmatpush.bf16.msra.mxu0 %v2462
        %2580 = vmatpush.bf16.msra.mxu0 %v2461
        %2581 = vmatpush.bf16.msra.mxu0 %v2460
        %2582 = vmatpush.bf16.msra.mxu0 %v2459
        %2583 = vmatpush.bf16.msra.mxu0 %v2458
        %2584 = vmatpush.bf16.msra.mxu0 %v2457
        %2585 = vmatmul.bf16.gmra.mxu0 %v2169
        %v2586 = vpop.f32.mrf.mxu0
        %v2587 = vadd.f32 %v1911, %v2586
        %v2588 = vpop.f32.mrf.mxu0
        %v2589 = vadd.f32 %v1911, %v2588
        %2590 = vmatmul.bf16.gmra.mxu0 %v2174
        %v2591 = vpop.f32.mrf.mxu0
        %v2592 = vadd.f32 %v1911, %v2591
        %v2593 = vpop.f32.mrf.mxu0
        %v2594 = vadd.f32 %v1911, %v2593
        %2595 = vmatmul.bf16.gmra.mxu0 %v2179
        %v2596 = vpop.f32.mrf.mxu0
        %v2597 = vadd.f32 %v1911, %v2596
        %v2598 = vpop.f32.mrf.mxu0
        %v2599 = vadd.f32 %v1911, %v2598
        %2600 = vmatmul.bf16.gmra.mxu0 %v2184
        %v2601 = vpop.f32.mrf.mxu0
        %v2602 = vadd.f32 %v1911, %v2601
        %v2603 = vpop.f32.mrf.mxu0
        %v2604 = vadd.f32 %v1911, %v2603
        %2605 = vmatmul.bf16.gmra.mxu0 %v2189
        %v2606 = vpop.f32.mrf.mxu0
        %v2607 = vadd.f32 %v1911, %v2606
        %v2608 = vpop.f32.mrf.mxu0
        %v2609 = vadd.f32 %v1911, %v2608
        %2610 = vmatmul.bf16.gmra.mxu0 %v2194
        %v2611 = vpop.f32.mrf.mxu0
        %v2612 = vadd.f32 %v1911, %v2611
        %v2613 = vpop.f32.mrf.mxu0
        %v2614 = vadd.f32 %v1911, %v2613
        %2615 = vmatmul.bf16.gmra.mxu0 %v2199
        %v2616 = vpop.f32.mrf.mxu0
        %v2617 = vadd.f32 %v1911, %v2616
        %v2618 = vpop.f32.mrf.mxu0
        %v2619 = vadd.f32 %v1911, %v2618
        %2620 = vmatmul.bf16.gmra.mxu0 %v2204
        %v2621 = vpop.f32.mrf.mxu0
        %v2622 = vadd.f32 %v1911, %v2621
        %v2623 = vpop.f32.mrf.mxu0
        %v2624 = vadd.f32 %v1911, %v2623
        %2625 = vmatmul.bf16.gmra.mxu0 %v2209
        %v2626 = vpop.f32.mrf.mxu0
        %v2627 = vadd.f32 %v1911, %v2626
        %v2628 = vpop.f32.mrf.mxu0
        %v2629 = vadd.f32 %v1911, %v2628
        %2630 = vmatmul.bf16.gmra.mxu0 %v2214
        %v2631 = vpop.f32.mrf.mxu0
        %v2632 = vadd.f32 %v1911, %v2631
        %v2633 = vpop.f32.mrf.mxu0
        %v2634 = vadd.f32 %v1911, %v2633
        %2635 = vmatmul.bf16.gmra.mxu0 %v2219
        %v2636 = vpop.f32.mrf.mxu0
        %v2637 = vadd.f32 %v1911, %v2636
        %v2638 = vpop.f32.mrf.mxu0
        %v2639 = vadd.f32 %v1911, %v2638
        %2640 = vmatmul.bf16.gmra.mxu0 %v2224
        %v2641 = vpop.f32.mrf.mxu0
        %v2642 = vadd.f32 %v1911, %v2641
        %v2643 = vpop.f32.mrf.mxu0
        %v2644 = vadd.f32 %v1911, %v2643
        %2645 = vmatmul.bf16.gmra.mxu0 %v2229
        %v2646 = vpop.f32.mrf.mxu0
        %v2647 = vadd.f32 %v1911, %v2646
        %v2648 = vpop.f32.mrf.mxu0
        %v2649 = vadd.f32 %v1911, %v2648
        %2650 = vmatmul.bf16.gmra.mxu0 %v2234
        %v2651 = vpop.f32.mrf.mxu0
        %v2652 = vadd.f32 %v1911, %v2651
        %v2653 = vpop.f32.mrf.mxu0
        %v2654 = vadd.f32 %v1911, %v2653
        %2655 = vmatmul.bf16.gmra.mxu0 %v2239
        %v2656 = vpop.f32.mrf.mxu0
        %v2657 = vadd.f32 %v1911, %v2656
        %v2658 = vpop.f32.mrf.mxu0
        %v2659 = vadd.f32 %v1911, %v2658
        %2660 = vmatmul.bf16.gmra.mxu0 %v2244
        %v2661 = vpop.f32.mrf.mxu0
        %v2662 = vadd.f32 %v1911, %v2661
        %v2663 = vpop.f32.mrf.mxu0
        %v2664 = vadd.f32 %v1911, %v2663
        %2665 = vdwg.mxu0
        %2666 = vmatpush.bf16.msra.mxu0 %v2472
        %2667 = vmatpush.bf16.msra.mxu0 %v2471
        %2668 = vmatpush.bf16.msra.mxu0 %v2470
        %2669 = vmatpush.bf16.msra.mxu0 %v2469
        %2670 = vmatpush.bf16.msra.mxu0 %v2468
        %2671 = vmatpush.bf16.msra.mxu0 %v2467
        %2672 = vmatpush.bf16.msra.mxu0 %v2466
        %2673 = vmatpush.bf16.msra.mxu0 %v2465
        %2674 = vmatmul.bf16.gmra.mxu0 %v2170
        %v2675 = vpop.f32.mrf.mxu0
        %v2676 = vadd.f32 %v2587, %v2675
        %v2677 = vpop.f32.mrf.mxu0
        %v2678 = vadd.f32 %v2589, %v2677
        %2679 = vmatmul.bf16.gmra.mxu0 %v2175
        %v2680 = vpop.f32.mrf.mxu0
        %v2681 = vadd.f32 %v2592, %v2680
        %v2682 = vpop.f32.mrf.mxu0
        %v2683 = vadd.f32 %v2594, %v2682
        %2684 = vmatmul.bf16.gmra.mxu0 %v2180
        %v2685 = vpop.f32.mrf.mxu0
        %v2686 = vadd.f32 %v2597, %v2685
        %v2687 = vpop.f32.mrf.mxu0
        %v2688 = vadd.f32 %v2599, %v2687
        %2689 = vmatmul.bf16.gmra.mxu0 %v2185
        %v2690 = vpop.f32.mrf.mxu0
        %v2691 = vadd.f32 %v2602, %v2690
        %v2692 = vpop.f32.mrf.mxu0
        %v2693 = vadd.f32 %v2604, %v2692
        %2694 = vmatmul.bf16.gmra.mxu0 %v2190
        %v2695 = vpop.f32.mrf.mxu0
        %v2696 = vadd.f32 %v2607, %v2695
        %v2697 = vpop.f32.mrf.mxu0
        %v2698 = vadd.f32 %v2609, %v2697
        %2699 = vmatmul.bf16.gmra.mxu0 %v2195
        %v2700 = vpop.f32.mrf.mxu0
        %v2701 = vadd.f32 %v2612, %v2700
        %v2702 = vpop.f32.mrf.mxu0
        %v2703 = vadd.f32 %v2614, %v2702
        %2704 = vmatmul.bf16.gmra.mxu0 %v2200
        %v2705 = vpop.f32.mrf.mxu0
        %v2706 = vadd.f32 %v2617, %v2705
        %v2707 = vpop.f32.mrf.mxu0
        %v2708 = vadd.f32 %v2619, %v2707
        %2709 = vmatmul.bf16.gmra.mxu0 %v2205
        %v2710 = vpop.f32.mrf.mxu0
        %v2711 = vadd.f32 %v2622, %v2710
        %v2712 = vpop.f32.mrf.mxu0
        %v2713 = vadd.f32 %v2624, %v2712
        %2714 = vmatmul.bf16.gmra.mxu0 %v2210
        %v2715 = vpop.f32.mrf.mxu0
        %v2716 = vadd.f32 %v2627, %v2715
        %v2717 = vpop.f32.mrf.mxu0
        %v2718 = vadd.f32 %v2629, %v2717
        %2719 = vmatmul.bf16.gmra.mxu0 %v2215
        %v2720 = vpop.f32.mrf.mxu0
        %v2721 = vadd.f32 %v2632, %v2720
        %v2722 = vpop.f32.mrf.mxu0
        %v2723 = vadd.f32 %v2634, %v2722
        %2724 = vmatmul.bf16.gmra.mxu0 %v2220
        %v2725 = vpop.f32.mrf.mxu0
        %v2726 = vadd.f32 %v2637, %v2725
        %v2727 = vpop.f32.mrf.mxu0
        %v2728 = vadd.f32 %v2639, %v2727
        %2729 = vmatmul.bf16.gmra.mxu0 %v2225
        %v2730 = vpop.f32.mrf.mxu0
        %v2731 = vadd.f32 %v2642, %v2730
        %v2732 = vpop.f32.mrf.mxu0
        %v2733 = vadd.f32 %v2644, %v2732
        %2734 = vmatmul.bf16.gmra.mxu0 %v2230
        %v2735 = vpop.f32.mrf.mxu0
        %v2736 = vadd.f32 %v2647, %v2735
        %v2737 = vpop.f32.mrf.mxu0
        %v2738 = vadd.f32 %v2649, %v2737
        %2739 = vmatmul.bf16.gmra.mxu0 %v2235
        %v2740 = vpop.f32.mrf.mxu0
        %v2741 = vadd.f32 %v2652, %v2740
        %v2742 = vpop.f32.mrf.mxu0
        %v2743 = vadd.f32 %v2654, %v2742
        %2744 = vmatmul.bf16.gmra.mxu0 %v2240
        %v2745 = vpop.f32.mrf.mxu0
        %v2746 = vadd.f32 %v2657, %v2745
        %v2747 = vpop.f32.mrf.mxu0
        %v2748 = vadd.f32 %v2659, %v2747
        %2749 = vmatmul.bf16.gmra.mxu0 %v2245
        %v2750 = vpop.f32.mrf.mxu0
        %v2751 = vadd.f32 %v2662, %v2750
        %v2752 = vpop.f32.mrf.mxu0
        %v2753 = vadd.f32 %v2664, %v2752
        %2754 = vdwg.mxu0
        %2755 = vmatpush.bf16.msra.mxu0 %v2480
        %2756 = vmatpush.bf16.msra.mxu0 %v2479
        %2757 = vmatpush.bf16.msra.mxu0 %v2478
        %2758 = vmatpush.bf16.msra.mxu0 %v2477
        %2759 = vmatpush.bf16.msra.mxu0 %v2476
        %2760 = vmatpush.bf16.msra.mxu0 %v2475
        %2761 = vmatpush.bf16.msra.mxu0 %v2474
        %2762 = vmatpush.bf16.msra.mxu0 %v2473
        %2763 = vmatmul.bf16.gmra.mxu0 %v2171
        %v2764 = vpop.f32.mrf.mxu0
        %v2765 = vadd.f32 %v2676, %v2764
        %v2766 = vpop.f32.mrf.mxu0
        %v2767 = vadd.f32 %v2678, %v2766
        %2768 = vmatmul.bf16.gmra.mxu0 %v2176
        %v2769 = vpop.f32.mrf.mxu0
        %v2770 = vadd.f32 %v2681, %v2769
        %v2771 = vpop.f32.mrf.mxu0
        %v2772 = vadd.f32 %v2683, %v2771
        %2773 = vmatmul.bf16.gmra.mxu0 %v2181
        %v2774 = vpop.f32.mrf.mxu0
        %v2775 = vadd.f32 %v2686, %v2774
        %v2776 = vpop.f32.mrf.mxu0
        %v2777 = vadd.f32 %v2688, %v2776
        %2778 = vmatmul.bf16.gmra.mxu0 %v2186
        %v2779 = vpop.f32.mrf.mxu0
        %v2780 = vadd.f32 %v2691, %v2779
        %v2781 = vpop.f32.mrf.mxu0
        %v2782 = vadd.f32 %v2693, %v2781
        %2783 = vmatmul.bf16.gmra.mxu0 %v2191
        %v2784 = vpop.f32.mrf.mxu0
        %v2785 = vadd.f32 %v2696, %v2784
        %v2786 = vpop.f32.mrf.mxu0
        %v2787 = vadd.f32 %v2698, %v2786
        %2788 = vmatmul.bf16.gmra.mxu0 %v2196
        %v2789 = vpop.f32.mrf.mxu0
        %v2790 = vadd.f32 %v2701, %v2789
        %v2791 = vpop.f32.mrf.mxu0
        %v2792 = vadd.f32 %v2703, %v2791
        %2793 = vmatmul.bf16.gmra.mxu0 %v2201
        %v2794 = vpop.f32.mrf.mxu0
        %v2795 = vadd.f32 %v2706, %v2794
        %v2796 = vpop.f32.mrf.mxu0
        %v2797 = vadd.f32 %v2708, %v2796
        %2798 = vmatmul.bf16.gmra.mxu0 %v2206
        %v2799 = vpop.f32.mrf.mxu0
        %v2800 = vadd.f32 %v2711, %v2799
        %v2801 = vpop.f32.mrf.mxu0
        %v2802 = vadd.f32 %v2713, %v2801
        %2803 = vmatmul.bf16.gmra.mxu0 %v2211
        %v2804 = vpop.f32.mrf.mxu0
        %v2805 = vadd.f32 %v2716, %v2804
        %v2806 = vpop.f32.mrf.mxu0
        %v2807 = vadd.f32 %v2718, %v2806
        %2808 = vmatmul.bf16.gmra.mxu0 %v2216
        %v2809 = vpop.f32.mrf.mxu0
        %v2810 = vadd.f32 %v2721, %v2809
        %v2811 = vpop.f32.mrf.mxu0
        %v2812 = vadd.f32 %v2723, %v2811
        %2813 = vmatmul.bf16.gmra.mxu0 %v2221
        %v2814 = vpop.f32.mrf.mxu0
        %v2815 = vadd.f32 %v2726, %v2814
        %v2816 = vpop.f32.mrf.mxu0
        %v2817 = vadd.f32 %v2728, %v2816
        %2818 = vmatmul.bf16.gmra.mxu0 %v2226
        %v2819 = vpop.f32.mrf.mxu0
        %v2820 = vadd.f32 %v2731, %v2819
        %v2821 = vpop.f32.mrf.mxu0
        %v2822 = vadd.f32 %v2733, %v2821
        %2823 = vmatmul.bf16.gmra.mxu0 %v2231
        %v2824 = vpop.f32.mrf.mxu0
        %v2825 = vadd.f32 %v2736, %v2824
        %v2826 = vpop.f32.mrf.mxu0
        %v2827 = vadd.f32 %v2738, %v2826
        %2828 = vmatmul.bf16.gmra.mxu0 %v2236
        %v2829 = vpop.f32.mrf.mxu0
        %v2830 = vadd.f32 %v2741, %v2829
        %v2831 = vpop.f32.mrf.mxu0
        %v2832 = vadd.f32 %v2743, %v2831
        %2833 = vmatmul.bf16.gmra.mxu0 %v2241
        %v2834 = vpop.f32.mrf.mxu0
        %v2835 = vadd.f32 %v2746, %v2834
        %v2836 = vpop.f32.mrf.mxu0
        %v2837 = vadd.f32 %v2748, %v2836
        %2838 = vmatmul.bf16.gmra.mxu0 %v2246
        %v2839 = vpop.f32.mrf.mxu0
        %v2840 = vadd.f32 %v2751, %v2839
        %v2841 = vpop.f32.mrf.mxu0
        %v2842 = vadd.f32 %v2753, %v2841
        %2843 = vdwg.mxu0
        %2844 = vmatpush.bf16.msra.mxu0 %v2488
        %2845 = vmatpush.bf16.msra.mxu0 %v2487
        %2846 = vmatpush.bf16.msra.mxu0 %v2486
        %2847 = vmatpush.bf16.msra.mxu0 %v2485
        %2848 = vmatpush.bf16.msra.mxu0 %v2484
        %2849 = vmatpush.bf16.msra.mxu0 %v2483
        %2850 = vmatpush.bf16.msra.mxu0 %v2482
        %2851 = vmatpush.bf16.msra.mxu0 %v2481
        %2852 = vmatmul.bf16.gmra.mxu0 %v2172
        %v2853 = vpop.f32.mrf.mxu0
        %v2854 = vadd.f32 %v2765, %v2853
        %v2855 = vpop.f32.mrf.mxu0
        %v2856 = vadd.f32 %v2767, %v2855
        %2857 = vmatmul.bf16.gmra.mxu0 %v2177
        %v2858 = vpop.f32.mrf.mxu0
        %v2859 = vadd.f32 %v2770, %v2858
        %v2860 = vpop.f32.mrf.mxu0
        %v2861 = vadd.f32 %v2772, %v2860
        %2862 = vmatmul.bf16.gmra.mxu0 %v2182
        %v2863 = vpop.f32.mrf.mxu0
        %v2864 = vadd.f32 %v2775, %v2863
        %v2865 = vpop.f32.mrf.mxu0
        %v2866 = vadd.f32 %v2777, %v2865
        %2867 = vmatmul.bf16.gmra.mxu0 %v2187
        %v2868 = vpop.f32.mrf.mxu0
        %v2869 = vadd.f32 %v2780, %v2868
        %v2870 = vpop.f32.mrf.mxu0
        %v2871 = vadd.f32 %v2782, %v2870
        %2872 = vmatmul.bf16.gmra.mxu0 %v2192
        %v2873 = vpop.f32.mrf.mxu0
        %v2874 = vadd.f32 %v2785, %v2873
        %v2875 = vpop.f32.mrf.mxu0
        %v2876 = vadd.f32 %v2787, %v2875
        %2877 = vmatmul.bf16.gmra.mxu0 %v2197
        %v2878 = vpop.f32.mrf.mxu0
        %v2879 = vadd.f32 %v2790, %v2878
        %v2880 = vpop.f32.mrf.mxu0
        %v2881 = vadd.f32 %v2792, %v2880
        %2882 = vmatmul.bf16.gmra.mxu0 %v2202
        %v2883 = vpop.f32.mrf.mxu0
        %v2884 = vadd.f32 %v2795, %v2883
        %v2885 = vpop.f32.mrf.mxu0
        %v2886 = vadd.f32 %v2797, %v2885
        %2887 = vmatmul.bf16.gmra.mxu0 %v2207
        %v2888 = vpop.f32.mrf.mxu0
        %v2889 = vadd.f32 %v2800, %v2888
        %v2890 = vpop.f32.mrf.mxu0
        %v2891 = vadd.f32 %v2802, %v2890
        %2892 = vmatmul.bf16.gmra.mxu0 %v2212
        %v2893 = vpop.f32.mrf.mxu0
        %v2894 = vadd.f32 %v2805, %v2893
        %v2895 = vpop.f32.mrf.mxu0
        %v2896 = vadd.f32 %v2807, %v2895
        %2897 = vmatmul.bf16.gmra.mxu0 %v2217
        %v2898 = vpop.f32.mrf.mxu0
        %v2899 = vadd.f32 %v2810, %v2898
        %v2900 = vpop.f32.mrf.mxu0
        %v2901 = vadd.f32 %v2812, %v2900
        %2902 = vmatmul.bf16.gmra.mxu0 %v2222
        %v2903 = vpop.f32.mrf.mxu0
        %v2904 = vadd.f32 %v2815, %v2903
        %v2905 = vpop.f32.mrf.mxu0
        %v2906 = vadd.f32 %v2817, %v2905
        %2907 = vmatmul.bf16.gmra.mxu0 %v2227
        %v2908 = vpop.f32.mrf.mxu0
        %v2909 = vadd.f32 %v2820, %v2908
        %v2910 = vpop.f32.mrf.mxu0
        %v2911 = vadd.f32 %v2822, %v2910
        %2912 = vmatmul.bf16.gmra.mxu0 %v2232
        %v2913 = vpop.f32.mrf.mxu0
        %v2914 = vadd.f32 %v2825, %v2913
        %v2915 = vpop.f32.mrf.mxu0
        %v2916 = vadd.f32 %v2827, %v2915
        %2917 = vmatmul.bf16.gmra.mxu0 %v2237
        %v2918 = vpop.f32.mrf.mxu0
        %v2919 = vadd.f32 %v2830, %v2918
        %v2920 = vpop.f32.mrf.mxu0
        %v2921 = vadd.f32 %v2832, %v2920
        %2922 = vmatmul.bf16.gmra.mxu0 %v2242
        %v2923 = vpop.f32.mrf.mxu0
        %v2924 = vadd.f32 %v2835, %v2923
        %v2925 = vpop.f32.mrf.mxu0
        %v2926 = vadd.f32 %v2837, %v2925
        %2927 = vmatmul.bf16.gmra.mxu0 %v2247
        %v2928 = vpop.f32.mrf.mxu0
        %v2929 = vadd.f32 %v2840, %v2928
        %v2930 = vpop.f32.mrf.mxu0
        %v2931 = vadd.f32 %v2842, %v2930
        %2932 = vdwg.mxu0
        %2933 = vmatpush.bf16.msra.mxu0 0
        %2934 = vmatpush.bf16.msra.mxu0 0
        %2935 = vmatpush.bf16.msra.mxu0 0
        %2936 = vmatpush.bf16.msra.mxu0 0
        %2937 = vmatpush.bf16.msra.mxu0 %v2492
        %2938 = vmatpush.bf16.msra.mxu0 %v2491
        %2939 = vmatpush.bf16.msra.mxu0 %v2490
        %2940 = vmatpush.bf16.msra.mxu0 %v2489
        %2941 = vmatmul.bf16.gmra.mxu0 %v2530
        %v2942 = vpop.f32.mrf.mxu0
        %v2943 = vadd.f32 %v2854, %v2942
        %v2944 = vpop.f32.mrf.mxu0
        %v2945 = vadd.f32 %v2856, %v2944
        %2946 = vmatmul.bf16.gmra.mxu0 %v2533
        %v2947 = vpop.f32.mrf.mxu0
        %v2948 = vadd.f32 %v2859, %v2947
        %v2949 = vpop.f32.mrf.mxu0
        %v2950 = vadd.f32 %v2861, %v2949
        %2951 = vmatmul.bf16.gmra.mxu0 %v2536
        %v2952 = vpop.f32.mrf.mxu0
        %v2953 = vadd.f32 %v2864, %v2952
        %v2954 = vpop.f32.mrf.mxu0
        %v2955 = vadd.f32 %v2866, %v2954
        %2956 = vmatmul.bf16.gmra.mxu0 %v2539
        %v2957 = vpop.f32.mrf.mxu0
        %v2958 = vadd.f32 %v2869, %v2957
        %v2959 = vpop.f32.mrf.mxu0
        %v2960 = vadd.f32 %v2871, %v2959
        %2961 = vmatmul.bf16.gmra.mxu0 %v2542
        %v2962 = vpop.f32.mrf.mxu0
        %v2963 = vadd.f32 %v2874, %v2962
        %v2964 = vpop.f32.mrf.mxu0
        %v2965 = vadd.f32 %v2876, %v2964
        %2966 = vmatmul.bf16.gmra.mxu0 %v2545
        %v2967 = vpop.f32.mrf.mxu0
        %v2968 = vadd.f32 %v2879, %v2967
        %v2969 = vpop.f32.mrf.mxu0
        %v2970 = vadd.f32 %v2881, %v2969
        %2971 = vmatmul.bf16.gmra.mxu0 %v2548
        %v2972 = vpop.f32.mrf.mxu0
        %v2973 = vadd.f32 %v2884, %v2972
        %v2974 = vpop.f32.mrf.mxu0
        %v2975 = vadd.f32 %v2886, %v2974
        %2976 = vmatmul.bf16.gmra.mxu0 %v2551
        %v2977 = vpop.f32.mrf.mxu0
        %v2978 = vadd.f32 %v2889, %v2977
        %v2979 = vpop.f32.mrf.mxu0
        %v2980 = vadd.f32 %v2891, %v2979
        %2981 = vmatmul.bf16.gmra.mxu0 %v2554
        %v2982 = vpop.f32.mrf.mxu0
        %v2983 = vadd.f32 %v2894, %v2982
        %v2984 = vpop.f32.mrf.mxu0
        %v2985 = vadd.f32 %v2896, %v2984
        %2986 = vmatmul.bf16.gmra.mxu0 %v2557
        %v2987 = vpop.f32.mrf.mxu0
        %v2988 = vadd.f32 %v2899, %v2987
        %v2989 = vpop.f32.mrf.mxu0
        %v2990 = vadd.f32 %v2901, %v2989
        %2991 = vmatmul.bf16.gmra.mxu0 %v2560
        %v2992 = vpop.f32.mrf.mxu0
        %v2993 = vadd.f32 %v2904, %v2992
        %v2994 = vpop.f32.mrf.mxu0
        %v2995 = vadd.f32 %v2906, %v2994
        %2996 = vmatmul.bf16.gmra.mxu0 %v2563
        %v2997 = vpop.f32.mrf.mxu0
        %v2998 = vadd.f32 %v2909, %v2997
        %v2999 = vpop.f32.mrf.mxu0
        %v3000 = vadd.f32 %v2911, %v2999
        %3001 = vmatmul.bf16.gmra.mxu0 %v2566
        %v3002 = vpop.f32.mrf.mxu0
        %v3003 = vadd.f32 %v2914, %v3002
        %v3004 = vpop.f32.mrf.mxu0
        %v3005 = vadd.f32 %v2916, %v3004
        %3006 = vmatmul.bf16.gmra.mxu0 %v2569
        %v3007 = vpop.f32.mrf.mxu0
        %v3008 = vadd.f32 %v2919, %v3007
        %v3009 = vpop.f32.mrf.mxu0
        %v3010 = vadd.f32 %v2921, %v3009
        %3011 = vmatmul.bf16.gmra.mxu0 %v2572
        %v3012 = vpop.f32.mrf.mxu0
        %v3013 = vadd.f32 %v2924, %v3012
        %v3014 = vpop.f32.mrf.mxu0
        %v3015 = vadd.f32 %v2926, %v3014
        %3016 = vmatmul.bf16.gmra.mxu0 %v2575
        %v3017 = vpop.f32.mrf.mxu0
        %v3018 = vadd.f32 %v2929, %v3017
        %v3019 = vpop.f32.mrf.mxu0
        %v3020 = vadd.f32 %v2931, %v3019
        %3021 = vdwg.mxu0
        %v3022 = vmax.f32 %v2943, 0.0
        %v3023 = vmax.f32 %v2945, 0.0
        %v3024 = vmax.f32 %v2948, 0.0
        %v3025 = vmax.f32 %v2950, 0.0
        %v3026 = vmax.f32 %v2953, 0.0
        %v3027 = vmax.f32 %v2955, 0.0
        %v3028 = vmax.f32 %v2958, 0.0
        %v3029 = vmax.f32 %v2960, 0.0
        %v3030 = vmax.f32 %v2963, 0.0
        %v3031 = vmax.f32 %v2965, 0.0
        %v3032 = vmax.f32 %v2968, 0.0
        %v3033 = vmax.f32 %v2970, 0.0
        %v3034 = vmax.f32 %v2973, 0.0
        %v3035 = vmax.f32 %v2975, 0.0
        %v3036 = vmax.f32 %v2978, 0.0
        %v3037 = vmax.f32 %v2980, 0.0
        %v3038 = vmax.f32 %v2983, 0.0
        %v3039 = vmax.f32 %v2985, 0.0
        %v3040 = vmax.f32 %v2988, 0.0
        %v3041 = vmax.f32 %v2990, 0.0
        %v3042 = vmax.f32 %v2993, 0.0
        %v3043 = vmax.f32 %v2995, 0.0
        %v3044 = vmax.f32 %v2998, 0.0
        %v3045 = vmax.f32 %v3000, 0.0
        %v3046 = vmax.f32 %v3003, 0.0
        %v3047 = vmax.f32 %v3005, 0.0
        %v3048 = vmax.f32 %v3008, 0.0
        %v3049 = vmax.f32 %v3010, 0.0
        %v3050 = vmax.f32 %v3013, 0.0
        %v3051 = vmax.f32 %v3015, 0.0
        %v3052 = vmax.f32 %v3018, 0.0
        %v3053 = vmax.f32 %v3020, 0.0
        %3054 = vst [vmem:[#allocation3] sm:$0xff] 0.0
        %3055 = vst [vmem:[#allocation3 + $0x8] sm:$0xff] 0.0
        %3056 = vst [vmem:[#allocation3 + $0x10] sm:$0xff] 0.0
        %3057 = vst [vmem:[#allocation3 + $0x18] sm:$0xff] 0.0
        %3058 = vst [vmem:[#allocation3 + $0x20] sm:$0xff] 0.0
        %3059 = vst [vmem:[#allocation3 + $0x28] sm:$0xff] 0.0
        %3060 = vst [vmem:[#allocation3 + $0x30] sm:$0xff] 0.0
        %3061 = vst [vmem:[#allocation3 + $0x38] sm:$0xff] 0.0
        %3062 = vst [vmem:[#allocation3 + $0x40] sm:$0xff] 0.0
        %3063 = vst [vmem:[#allocation3 + $0x48] sm:$0xff] 0.0
        %3064 = vst [vmem:[#allocation3 + $0x50] sm:$0xff] 0.0
        %3065 = vst [vmem:[#allocation3 + $0x58] sm:$0xff] 0.0
        %3066 = vst [vmem:[#allocation3 + $0x60] sm:$0xff] 0.0
        %3067 = vst [vmem:[#allocation3 + $0x68] sm:$0xff] 0.0
        %3068 = vst [vmem:[#allocation3 + $0x70] sm:$0xff] 0.0
        %3069 = vst [vmem:[#allocation3 + $0x78] sm:$0xff] 0.0
        %3070 = vst [vmem:[#allocation3 + $0x80] sm:$0xff] 0.0
        %3071 = vst [vmem:[#allocation3 + $0x88] sm:$0xff] 0.0
        %3072 = vst [vmem:[#allocation3 + $0x90] sm:$0xff] 0.0
        %3073 = vst [vmem:[#allocation3 + $0x98] sm:$0xff] 0.0
        %3074 = vst [vmem:[#allocation3 + $0xa0] sm:$0xff] 0.0
        %3075 = vst [vmem:[#allocation3 + $0xa8] sm:$0xff] 0.0
        %3076 = vst [vmem:[#allocation3 + $0xb0] sm:$0xff] 0.0
        %3077 = vst [vmem:[#allocation3 + $0xb8] sm:$0xff] 0.0
        %3078 = vst [vmem:[#allocation3 + $0xc0] sm:$0xff] 0.0
        %3079 = vst [vmem:[#allocation3 + $0xc8] sm:$0xff] 0.0
        %3080 = vst [vmem:[#allocation3 + $0xd0] sm:$0xff] 0.0
        %3081 = vst [vmem:[#allocation3 + $0xd8] sm:$0xff] 0.0
        %3082 = vst [vmem:[#allocation3 + $0xe0] sm:$0xff] 0.0
        %3083 = vst [vmem:[#allocation3 + $0xe8] sm:$0xff] 0.0
        %3084 = vst [vmem:[#allocation3 + $0xf0] sm:$0xff] 0.0
        %3085 = vst [vmem:[#allocation3 + $0xf8] sm:$0xff] 0.0
        %3086 = vst [vmem:[#allocation3 + $0x100] sm:$0xff] 0.0
        %3087 = vst [vmem:[#allocation3 + $0x108] sm:$0xff] 0.0
        %3088 = vst [vmem:[#allocation3 + $0x110] sm:$0xff] 0.0
        %3089 = vst [vmem:[#allocation3 + $0x118] sm:$0xff] 0.0
        %3090 = vst [vmem:[#allocation3 + $0x120] sm:$0xff] 0.0
        %3091 = vst [vmem:[#allocation3 + $0x128] sm:$0xff] 0.0
        %3092 = vst [vmem:[#allocation3 + $0x130] sm:$0xff] 0.0
        %3093 = vst [vmem:[#allocation3 + $0x138] sm:$0xff] 0.0
        %3094 = vst [vmem:[#allocation3 + $0x140] sm:$0xff] 0.0
        %3095 = vst [vmem:[#allocation3 + $0x148] sm:$0xff] 0.0
        %3096 = vst [vmem:[#allocation3 + $0x150] sm:$0xff] 0.0
        %3097 = vst [vmem:[#allocation3 + $0x158] sm:$0xff] 0.0
        %3098 = vst [vmem:[#allocation3 + $0x160] sm:$0xff] 0.0
        %3099 = vst [vmem:[#allocation3 + $0x168] sm:$0xff] 0.0
        %3100 = vst [vmem:[#allocation3 + $0x170] sm:$0xff] 0.0
        %3101 = vst [vmem:[#allocation3 + $0x178] sm:$0xff] 0.0
        %3102 = vst [vmem:[#allocation3 + $0x180] sm:$0xff] 0.0
        %3103 = vst [vmem:[#allocation3 + $0x188] sm:$0xff] 0.0
        %3104 = vst [vmem:[#allocation3 + $0x190] sm:$0xff] 0.0
        %3105 = vst [vmem:[#allocation3 + $0x198] sm:$0xff] 0.0
        %3106 = vst [vmem:[#allocation3 + $0x1a0] sm:$0xff] 0.0
        %3107 = vst [vmem:[#allocation3 + $0x1a8] sm:$0xff] 0.0
        %3108 = vst [vmem:[#allocation3 + $0x1b0] sm:$0xff] 0.0
        %3109 = vst [vmem:[#allocation3 + $0x1b8] sm:$0xff] 0.0
        %3110 = vst [vmem:[#allocation3 + $0x1c0] sm:$0xff] 0.0
        %3111 = vst [vmem:[#allocation3 + $0x1c8] sm:$0xff] 0.0
        %3112 = vst [vmem:[#allocation3 + $0x1d0] sm:$0xff] 0.0
        %3113 = vst [vmem:[#allocation3 + $0x1d8] sm:$0xff] 0.0
        %3114 = vst [vmem:[#allocation3 + $0x1e0] sm:$0xff] 0.0
        %3115 = vst [vmem:[#allocation3 + $0x1e8] sm:$0xff] 0.0
        %3116 = vst [vmem:[#allocation3 + $0x1f0] sm:$0xff] 0.0
        %3117 = vst [vmem:[#allocation3 + $0x1f8] sm:$0xff] 0.0
        %3118 = vst [vmem:[#allocation3 + $0x200] sm:$0xff] 0.0
        %3119 = vst [vmem:[#allocation3 + $0x208] sm:$0xff] 0.0
        %3120 = vst [vmem:[#allocation3 + $0x210] sm:$0xff] 0.0
        %3121 = vst [vmem:[#allocation3 + $0x218] sm:$0xff] 0.0
        %3122 = vst [vmem:[#allocation3 + $0x220] sm:$0xff] 0.0
        %3123 = vst [vmem:[#allocation3 + $0x228] sm:$0xff] 0.0
        %3124 = vst [vmem:[#allocation3 + $0x230] sm:$0xff] 0.0
        %3125 = vst [vmem:[#allocation3 + $0x238] sm:$0xff] 0.0
        %s3126 = scalar_lea.vmem [#allocation3], 32
        %3127 = vst [vmem:[%s3126 + $0x8] sm:$0xff] %v3022
        %3128 = vst [vmem:[%s3126 + $0x10] sm:$0xff] %v3023
        %3129 = vst [vmem:[%s3126 + $0x28] sm:$0xff] %v3024
        %3130 = vst [vmem:[%s3126 + $0x30] sm:$0xff] %v3025
        %3131 = vst [vmem:[%s3126 + $0x48] sm:$0xff] %v3026
        %3132 = vst [vmem:[%s3126 + $0x50] sm:$0xff] %v3027
        %3133 = vst [vmem:[%s3126 + $0x68] sm:$0xff] %v3028
        %3134 = vst [vmem:[%s3126 + $0x70] sm:$0xff] %v3029
        %3135 = vst [vmem:[%s3126 + $0x88] sm:$0xff] %v3030
        %3136 = vst [vmem:[%s3126 + $0x90] sm:$0xff] %v3031
        %3137 = vst [vmem:[%s3126 + $0xa8] sm:$0xff] %v3032
        %3138 = vst [vmem:[%s3126 + $0xb0] sm:$0xff] %v3033
        %3139 = vst [vmem:[%s3126 + $0xc8] sm:$0xff] %v3034
        %3140 = vst [vmem:[%s3126 + $0xd0] sm:$0xff] %v3035
        %3141 = vst [vmem:[%s3126 + $0xe8] sm:$0xff] %v3036
        %3142 = vst [vmem:[%s3126 + $0xf0] sm:$0xff] %v3037
        %3143 = vst [vmem:[%s3126 + $0x108] sm:$0xff] %v3038
        %3144 = vst [vmem:[%s3126 + $0x110] sm:$0xff] %v3039
        %3145 = vst [vmem:[%s3126 + $0x128] sm:$0xff] %v3040
        %3146 = vst [vmem:[%s3126 + $0x130] sm:$0xff] %v3041
        %3147 = vst [vmem:[%s3126 + $0x148] sm:$0xff] %v3042
        %3148 = vst [vmem:[%s3126 + $0x150] sm:$0xff] %v3043
        %3149 = vst [vmem:[%s3126 + $0x168] sm:$0xff] %v3044
        %3150 = vst [vmem:[%s3126 + $0x170] sm:$0xff] %v3045
        %3151 = vst [vmem:[%s3126 + $0x188] sm:$0xff] %v3046
        %3152 = vst [vmem:[%s3126 + $0x190] sm:$0xff] %v3047
        %3153 = vst [vmem:[%s3126 + $0x1a8] sm:$0xff] %v3048
        %3154 = vst [vmem:[%s3126 + $0x1b0] sm:$0xff] %v3049
        %3155 = vst [vmem:[%s3126 + $0x1c8] sm:$0xff] %v3050
        %3156 = vst [vmem:[%s3126 + $0x1d0] sm:$0xff] %v3051
        %3157 = vst [vmem:[%s3126 + $0x1e8] sm:$0xff] %v3052
        %3158 = vst [vmem:[%s3126 + $0x1f0] sm:$0xff] %v3053
        %v3159 = vld [vmem:[#allocation3 + $0x7] sm:$0xff]
        %v3160 = vld [vmem:[#allocation3 + $0xf] sm:$0xff]
        %v3161 = vld [vmem:[#allocation3 + $0x27] sm:$0xff]
        %v3162 = vld [vmem:[#allocation3 + $0x2f] sm:$0xff]
        %v3163 = vld [vmem:[#allocation3 + $0x47] sm:$0xff]
        %v3164 = vld [vmem:[#allocation3 + $0x4f] sm:$0xff]
        %v3165 = vld [vmem:[#allocation3 + $0x67] sm:$0xff]
        %v3166 = vld [vmem:[#allocation3 + $0x6f] sm:$0xff]
        %v3167 = vld [vmem:[#allocation3 + $0x87] sm:$0xff]
        %v3168 = vld [vmem:[#allocation3 + $0x8f] sm:$0xff]
        %v3169 = vld [vmem:[#allocation3 + $0xa7] sm:$0xff]
        %v3170 = vld [vmem:[#allocation3 + $0xaf] sm:$0xff]
        %v3171 = vld [vmem:[#allocation3 + $0xc7] sm:$0xff]
        %v3172 = vld [vmem:[#allocation3 + $0xcf] sm:$0xff]
        %v3173 = vld [vmem:[#allocation3 + $0xe7] sm:$0xff]
        %v3174 = vld [vmem:[#allocation3 + $0xef] sm:$0xff]
        %v3175 = vld [vmem:[#allocation3 + $0x107] sm:$0xff]
        %v3176 = vld [vmem:[#allocation3 + $0x10f] sm:$0xff]
        %v3177 = vld [vmem:[#allocation3 + $0x127] sm:$0xff]
        %v3178 = vld [vmem:[#allocation3 + $0x12f] sm:$0xff]
        %v3179 = vld [vmem:[#allocation3 + $0x147] sm:$0xff]
        %v3180 = vld [vmem:[#allocation3 + $0x14f] sm:$0xff]
        %v3181 = vld [vmem:[#allocation3 + $0x167] sm:$0xff]
        %v3182 = vld [vmem:[#allocation3 + $0x16f] sm:$0xff]
        %v3183 = vld [vmem:[#allocation3 + $0x187] sm:$0xff]
        %v3184 = vld [vmem:[#allocation3 + $0x18f] sm:$0xff]
        %v3185 = vld [vmem:[#allocation3 + $0x1a7] sm:$0xff]
        %v3186 = vld [vmem:[#allocation3 + $0x1af] sm:$0xff]
        %v3187 = vld [vmem:[#allocation3 + $0x1c7] sm:$0xff]
        %v3188 = vld [vmem:[#allocation3 + $0x1cf] sm:$0xff]
        %v3189 = vld [vmem:[#allocation3 + $0x1e7] sm:$0xff]
        %v3190 = vld [vmem:[#allocation3 + $0x1ef] sm:$0xff]
        %v3191 = vpack.c.bf16 %v3159, %v3159
        %v3192 = vpack.c.bf16 %v3160, %v3160
        %v3193 = vpack.c.bf16 %v3161, %v3161
        %v3194 = vpack.c.bf16 %v3162, %v3162
        %v3195 = vpack.c.bf16 %v3163, %v3163
        %v3196 = vpack.c.bf16 %v3164, %v3164
        %v3197 = vpack.c.bf16 %v3165, %v3165
        %v3198 = vpack.c.bf16 %v3166, %v3166
        %v3199 = vpack.c.bf16 %v3167, %v3167
        %v3200 = vpack.c.bf16 %v3168, %v3168
        %v3201 = vpack.c.bf16 %v3169, %v3169
        %v3202 = vpack.c.bf16 %v3170, %v3170
        %v3203 = vpack.c.bf16 %v3171, %v3171
        %v3204 = vpack.c.bf16 %v3172, %v3172
        %v3205 = vpack.c.bf16 %v3173, %v3173
        %v3206 = vpack.c.bf16 %v3174, %v3174
        %v3207 = vpack.c.bf16 %v3175, %v3175
        %v3208 = vpack.c.bf16 %v3176, %v3176
        %v3209 = vpack.c.bf16 %v3177, %v3177
        %v3210 = vpack.c.bf16 %v3178, %v3178
        %v3211 = vpack.c.bf16 %v3179, %v3179
        %v3212 = vpack.c.bf16 %v3180, %v3180
        %v3213 = vpack.c.bf16 %v3181, %v3181
        %v3214 = vpack.c.bf16 %v3182, %v3182
        %v3215 = vpack.c.bf16 %v3183, %v3183
        %v3216 = vpack.c.bf16 %v3184, %v3184
        %v3217 = vpack.c.bf16 %v3185, %v3185
        %v3218 = vpack.c.bf16 %v3186, %v3186
        %v3219 = vpack.c.bf16 %v3187, %v3187
        %v3220 = vpack.c.bf16 %v3188, %v3188
        %v3221 = vpack.c.bf16 %v3189, %v3189
        %v3222 = vpack.c.bf16 %v3190, %v3190
        %3223 = vst [vmem:[#allocation5] sm:$0xf] %v3191
        %3224 = vst [vmem:[#allocation5 + $0x24] sm:$0xf] %v3192
        %3225 = vst [vmem:[#allocation5 + $0x48] sm:$0xf] %v3193
        %3226 = vst [vmem:[#allocation5 + $0x6c] sm:$0xf] %v3194
        %3227 = vst [vmem:[#allocation5 + $0x90] sm:$0xf] %v3195
        %3228 = vst [vmem:[#allocation5 + $0xb4] sm:$0xf] %v3196
        %3229 = vst [vmem:[#allocation5 + $0xd8] sm:$0xf] %v3197
        %3230 = vst [vmem:[#allocation5 + $0xfc] sm:$0xf] %v3198
        %3231 = vst [vmem:[#allocation5 + $0x120] sm:$0xf] %v3199
        %3232 = vst [vmem:[#allocation5 + $0x144] sm:$0xf] %v3200
        %3233 = vst [vmem:[#allocation5 + $0x168] sm:$0xf] %v3201
        %3234 = vst [vmem:[#allocation5 + $0x18c] sm:$0xf] %v3202
        %3235 = vst [vmem:[#allocation5 + $0x1b0] sm:$0xf] %v3203
        %3236 = vst [vmem:[#allocation5 + $0x1d4] sm:$0xf] %v3204
        %3237 = vst [vmem:[#allocation5 + $0x1f8] sm:$0xf] %v3205
        %3238 = vst [vmem:[#allocation5 + $0x21c] sm:$0xf] %v3206
        %3239 = vst [vmem:[#allocation5 + $0x240] sm:$0xf] %v3207
        %3240 = vst [vmem:[#allocation5 + $0x264] sm:$0xf] %v3208
        %3241 = vst [vmem:[#allocation5 + $0x288] sm:$0xf] %v3209
        %3242 = vst [vmem:[#allocation5 + $0x2ac] sm:$0xf] %v3210
        %3243 = vst [vmem:[#allocation5 + $0x2d0] sm:$0xf] %v3211
        %3244 = vst [vmem:[#allocation5 + $0x2f4] sm:$0xf] %v3212
        %3245 = vst [vmem:[#allocation5 + $0x318] sm:$0xf] %v3213
        %3246 = vst [vmem:[#allocation5 + $0x33c] sm:$0xf] %v3214
        %3247 = vst [vmem:[#allocation5 + $0x360] sm:$0xf] %v3215
        %3248 = vst [vmem:[#allocation5 + $0x384] sm:$0xf] %v3216
        %3249 = vst [vmem:[#allocation5 + $0x3a8] sm:$0xf] %v3217
        %3250 = vst [vmem:[#allocation5 + $0x3cc] sm:$0xf] %v3218
        %3251 = vst [vmem:[#allocation5 + $0x3f0] sm:$0xf] %v3219
        %3252 = vst [vmem:[#allocation5 + $0x414] sm:$0xf] %v3220
        %3253 = vst [vmem:[#allocation5 + $0x438] sm:$0xf] %v3221
        %3254 = vst [vmem:[#allocation5 + $0x45c] sm:$0xf] %v3222
        %v3255 = vld [vmem:[#allocation3 + $0x8] sm:$0xff]
        %v3256 = vld [vmem:[#allocation3 + $0x10] sm:$0xff]
        %v3257 = vld [vmem:[#allocation3 + $0x28] sm:$0xff]
        %v3258 = vld [vmem:[#allocation3 + $0x30] sm:$0xff]
        %v3259 = vld [vmem:[#allocation3 + $0x48] sm:$0xff]
        %v3260 = vld [vmem:[#allocation3 + $0x50] sm:$0xff]
        %v3261 = vld [vmem:[#allocation3 + $0x68] sm:$0xff]
        %v3262 = vld [vmem:[#allocation3 + $0x70] sm:$0xff]
        %v3263 = vld [vmem:[#allocation3 + $0x88] sm:$0xff]
        %v3264 = vld [vmem:[#allocation3 + $0x90] sm:$0xff]
        %v3265 = vld [vmem:[#allocation3 + $0xa8] sm:$0xff]
        %v3266 = vld [vmem:[#allocation3 + $0xb0] sm:$0xff]
        %v3267 = vld [vmem:[#allocation3 + $0xc8] sm:$0xff]
        %v3268 = vld [vmem:[#allocation3 + $0xd0] sm:$0xff]
        %v3269 = vld [vmem:[#allocation3 + $0xe8] sm:$0xff]
        %v3270 = vld [vmem:[#allocation3 + $0xf0] sm:$0xff]
        %v3271 = vld [vmem:[#allocation3 + $0x108] sm:$0xff]
        %v3272 = vld [vmem:[#allocation3 + $0x110] sm:$0xff]
        %v3273 = vld [vmem:[#allocation3 + $0x128] sm:$0xff]
        %v3274 = vld [vmem:[#allocation3 + $0x130] sm:$0xff]
        %v3275 = vld [vmem:[#allocation3 + $0x148] sm:$0xff]
        %v3276 = vld [vmem:[#allocation3 + $0x150] sm:$0xff]
        %v3277 = vld [vmem:[#allocation3 + $0x168] sm:$0xff]
        %v3278 = vld [vmem:[#allocation3 + $0x170] sm:$0xff]
        %v3279 = vld [vmem:[#allocation3 + $0x188] sm:$0xff]
        %v3280 = vld [vmem:[#allocation3 + $0x190] sm:$0xff]
        %v3281 = vld [vmem:[#allocation3 + $0x1a8] sm:$0xff]
        %v3282 = vld [vmem:[#allocation3 + $0x1b0] sm:$0xff]
        %v3283 = vld [vmem:[#allocation3 + $0x1c8] sm:$0xff]
        %v3284 = vld [vmem:[#allocation3 + $0x1d0] sm:$0xff]
        %v3285 = vld [vmem:[#allocation3 + $0x1e8] sm:$0xff]
        %v3286 = vld [vmem:[#allocation3 + $0x1f0] sm:$0xff]
        %v3287 = vpack.c.bf16 %v3255, %v3255
        %v3288 = vpack.c.bf16 %v3256, %v3256
        %v3289 = vpack.c.bf16 %v3257, %v3257
        %v3290 = vpack.c.bf16 %v3258, %v3258
        %v3291 = vpack.c.bf16 %v3259, %v3259
        %v3292 = vpack.c.bf16 %v3260, %v3260
        %v3293 = vpack.c.bf16 %v3261, %v3261
        %v3294 = vpack.c.bf16 %v3262, %v3262
        %v3295 = vpack.c.bf16 %v3263, %v3263
        %v3296 = vpack.c.bf16 %v3264, %v3264
        %v3297 = vpack.c.bf16 %v3265, %v3265
        %v3298 = vpack.c.bf16 %v3266, %v3266
        %v3299 = vpack.c.bf16 %v3267, %v3267
        %v3300 = vpack.c.bf16 %v3268, %v3268
        %v3301 = vpack.c.bf16 %v3269, %v3269
        %v3302 = vpack.c.bf16 %v3270, %v3270
        %v3303 = vpack.c.bf16 %v3271, %v3271
        %v3304 = vpack.c.bf16 %v3272, %v3272
        %v3305 = vpack.c.bf16 %v3273, %v3273
        %v3306 = vpack.c.bf16 %v3274, %v3274
        %v3307 = vpack.c.bf16 %v3275, %v3275
        %v3308 = vpack.c.bf16 %v3276, %v3276
        %v3309 = vpack.c.bf16 %v3277, %v3277
        %v3310 = vpack.c.bf16 %v3278, %v3278
        %v3311 = vpack.c.bf16 %v3279, %v3279
        %v3312 = vpack.c.bf16 %v3280, %v3280
        %v3313 = vpack.c.bf16 %v3281, %v3281
        %v3314 = vpack.c.bf16 %v3282, %v3282
        %v3315 = vpack.c.bf16 %v3283, %v3283
        %v3316 = vpack.c.bf16 %v3284, %v3284
        %v3317 = vpack.c.bf16 %v3285, %v3285
        %v3318 = vpack.c.bf16 %v3286, %v3286
        %3319 = vst [vmem:[#allocation5 + $0x4] sm:$0xf] %v3287
        %3320 = vst [vmem:[#allocation5 + $0x28] sm:$0xf] %v3288
        %3321 = vst [vmem:[#allocation5 + $0x4c] sm:$0xf] %v3289
        %3322 = vst [vmem:[#allocation5 + $0x70] sm:$0xf] %v3290
        %3323 = vst [vmem:[#allocation5 + $0x94] sm:$0xf] %v3291
        %3324 = vst [vmem:[#allocation5 + $0xb8] sm:$0xf] %v3292
        %3325 = vst [vmem:[#allocation5 + $0xdc] sm:$0xf] %v3293
        %3326 = vst [vmem:[#allocation5 + $0x100] sm:$0xf] %v3294
        %3327 = vst [vmem:[#allocation5 + $0x124] sm:$0xf] %v3295
        %3328 = vst [vmem:[#allocation5 + $0x148] sm:$0xf] %v3296
        %3329 = vst [vmem:[#allocation5 + $0x16c] sm:$0xf] %v3297
        %3330 = vst [vmem:[#allocation5 + $0x190] sm:$0xf] %v3298
        %3331 = vst [vmem:[#allocation5 + $0x1b4] sm:$0xf] %v3299
        %3332 = vst [vmem:[#allocation5 + $0x1d8] sm:$0xf] %v3300
        %3333 = vst [vmem:[#allocation5 + $0x1fc] sm:$0xf] %v3301
        %3334 = vst [vmem:[#allocation5 + $0x220] sm:$0xf] %v3302
        %3335 = vst [vmem:[#allocation5 + $0x244] sm:$0xf] %v3303
        %3336 = vst [vmem:[#allocation5 + $0x268] sm:$0xf] %v3304
        %3337 = vst [vmem:[#allocation5 + $0x28c] sm:$0xf] %v3305
        %3338 = vst [vmem:[#allocation5 + $0x2b0] sm:$0xf] %v3306
        %3339 = vst [vmem:[#allocation5 + $0x2d4] sm:$0xf] %v3307
        %3340 = vst [vmem:[#allocation5 + $0x2f8] sm:$0xf] %v3308
        %3341 = vst [vmem:[#allocation5 + $0x31c] sm:$0xf] %v3309
        %3342 = vst [vmem:[#allocation5 + $0x340] sm:$0xf] %v3310
        %3343 = vst [vmem:[#allocation5 + $0x364] sm:$0xf] %v3311
        %3344 = vst [vmem:[#allocation5 + $0x388] sm:$0xf] %v3312
        %3345 = vst [vmem:[#allocation5 + $0x3ac] sm:$0xf] %v3313
        %3346 = vst [vmem:[#allocation5 + $0x3d0] sm:$0xf] %v3314
        %3347 = vst [vmem:[#allocation5 + $0x3f4] sm:$0xf] %v3315
        %3348 = vst [vmem:[#allocation5 + $0x418] sm:$0xf] %v3316
        %3349 = vst [vmem:[#allocation5 + $0x43c] sm:$0xf] %v3317
        %3350 = vst [vmem:[#allocation5 + $0x460] sm:$0xf] %v3318
        %v3351 = vld [vmem:[#allocation3 + $0x9] sm:$0xff]
        %v3352 = vld [vmem:[#allocation3 + $0x11] sm:$0xff]
        %v3353 = vld [vmem:[#allocation3 + $0x29] sm:$0xff]
        %v3354 = vld [vmem:[#allocation3 + $0x31] sm:$0xff]
        %v3355 = vld [vmem:[#allocation3 + $0x49] sm:$0xff]
        %v3356 = vld [vmem:[#allocation3 + $0x51] sm:$0xff]
        %v3357 = vld [vmem:[#allocation3 + $0x69] sm:$0xff]
        %v3358 = vld [vmem:[#allocation3 + $0x71] sm:$0xff]
        %v3359 = vld [vmem:[#allocation3 + $0x89] sm:$0xff]
        %v3360 = vld [vmem:[#allocation3 + $0x91] sm:$0xff]
        %v3361 = vld [vmem:[#allocation3 + $0xa9] sm:$0xff]
        %v3362 = vld [vmem:[#allocation3 + $0xb1] sm:$0xff]
        %v3363 = vld [vmem:[#allocation3 + $0xc9] sm:$0xff]
        %v3364 = vld [vmem:[#allocation3 + $0xd1] sm:$0xff]
        %v3365 = vld [vmem:[#allocation3 + $0xe9] sm:$0xff]
        %v3366 = vld [vmem:[#allocation3 + $0xf1] sm:$0xff]
        %v3367 = vld [vmem:[#allocation3 + $0x109] sm:$0xff]
        %v3368 = vld [vmem:[#allocation3 + $0x111] sm:$0xff]
        %v3369 = vld [vmem:[#allocation3 + $0x129] sm:$0xff]
        %v3370 = vld [vmem:[#allocation3 + $0x131] sm:$0xff]
        %v3371 = vld [vmem:[#allocation3 + $0x149] sm:$0xff]
        %v3372 = vld [vmem:[#allocation3 + $0x151] sm:$0xff]
        %v3373 = vld [vmem:[#allocation3 + $0x169] sm:$0xff]
        %v3374 = vld [vmem:[#allocation3 + $0x171] sm:$0xff]
        %v3375 = vld [vmem:[#allocation3 + $0x189] sm:$0xff]
        %v3376 = vld [vmem:[#allocation3 + $0x191] sm:$0xff]
        %v3377 = vld [vmem:[#allocation3 + $0x1a9] sm:$0xff]
        %v3378 = vld [vmem:[#allocation3 + $0x1b1] sm:$0xff]
        %v3379 = vld [vmem:[#allocation3 + $0x1c9] sm:$0xff]
        %v3380 = vld [vmem:[#allocation3 + $0x1d1] sm:$0xff]
        %v3381 = vld [vmem:[#allocation3 + $0x1e9] sm:$0xff]
        %v3382 = vld [vmem:[#allocation3 + $0x1f1] sm:$0xff]
        %v3383 = vpack.c.bf16 %v3351, %v3351
        %v3384 = vpack.c.bf16 %v3352, %v3352
        %v3385 = vpack.c.bf16 %v3353, %v3353
        %v3386 = vpack.c.bf16 %v3354, %v3354
        %v3387 = vpack.c.bf16 %v3355, %v3355
        %v3388 = vpack.c.bf16 %v3356, %v3356
        %v3389 = vpack.c.bf16 %v3357, %v3357
        %v3390 = vpack.c.bf16 %v3358, %v3358
        %v3391 = vpack.c.bf16 %v3359, %v3359
        %v3392 = vpack.c.bf16 %v3360, %v3360
        %v3393 = vpack.c.bf16 %v3361, %v3361
        %v3394 = vpack.c.bf16 %v3362, %v3362
        %v3395 = vpack.c.bf16 %v3363, %v3363
        %v3396 = vpack.c.bf16 %v3364, %v3364
        %v3397 = vpack.c.bf16 %v3365, %v3365
        %v3398 = vpack.c.bf16 %v3366, %v3366
        %v3399 = vpack.c.bf16 %v3367, %v3367
        %v3400 = vpack.c.bf16 %v3368, %v3368
        %v3401 = vpack.c.bf16 %v3369, %v3369
        %v3402 = vpack.c.bf16 %v3370, %v3370
        %v3403 = vpack.c.bf16 %v3371, %v3371
        %v3404 = vpack.c.bf16 %v3372, %v3372
        %v3405 = vpack.c.bf16 %v3373, %v3373
        %v3406 = vpack.c.bf16 %v3374, %v3374
        %v3407 = vpack.c.bf16 %v3375, %v3375
        %v3408 = vpack.c.bf16 %v3376, %v3376
        %v3409 = vpack.c.bf16 %v3377, %v3377
        %v3410 = vpack.c.bf16 %v3378, %v3378
        %v3411 = vpack.c.bf16 %v3379, %v3379
        %v3412 = vpack.c.bf16 %v3380, %v3380
        %v3413 = vpack.c.bf16 %v3381, %v3381
        %v3414 = vpack.c.bf16 %v3382, %v3382
        %3415 = vst [vmem:[#allocation5 + $0x8] sm:$0xf] %v3383
        %3416 = vst [vmem:[#allocation5 + $0x2c] sm:$0xf] %v3384
        %3417 = vst [vmem:[#allocation5 + $0x50] sm:$0xf] %v3385
        %3418 = vst [vmem:[#allocation5 + $0x74] sm:$0xf] %v3386
        %3419 = vst [vmem:[#allocation5 + $0x98] sm:$0xf] %v3387
        %3420 = vst [vmem:[#allocation5 + $0xbc] sm:$0xf] %v3388
        %3421 = vst [vmem:[#allocation5 + $0xe0] sm:$0xf] %v3389
        %3422 = vst [vmem:[#allocation5 + $0x104] sm:$0xf] %v3390
        %3423 = vst [vmem:[#allocation5 + $0x128] sm:$0xf] %v3391
        %3424 = vst [vmem:[#allocation5 + $0x14c] sm:$0xf] %v3392
        %3425 = vst [vmem:[#allocation5 + $0x170] sm:$0xf] %v3393
        %3426 = vst [vmem:[#allocation5 + $0x194] sm:$0xf] %v3394
        %3427 = vst [vmem:[#allocation5 + $0x1b8] sm:$0xf] %v3395
        %3428 = vst [vmem:[#allocation5 + $0x1dc] sm:$0xf] %v3396
        %3429 = vst [vmem:[#allocation5 + $0x200] sm:$0xf] %v3397
        %3430 = vst [vmem:[#allocation5 + $0x224] sm:$0xf] %v3398
        %3431 = vst [vmem:[#allocation5 + $0x248] sm:$0xf] %v3399
        %3432 = vst [vmem:[#allocation5 + $0x26c] sm:$0xf] %v3400
        %3433 = vst [vmem:[#allocation5 + $0x290] sm:$0xf] %v3401
        %3434 = vst [vmem:[#allocation5 + $0x2b4] sm:$0xf] %v3402
        %3435 = vst [vmem:[#allocation5 + $0x2d8] sm:$0xf] %v3403
        %3436 = vst [vmem:[#allocation5 + $0x2fc] sm:$0xf] %v3404
        %3437 = vst [vmem:[#allocation5 + $0x320] sm:$0xf] %v3405
        %3438 = vst [vmem:[#allocation5 + $0x344] sm:$0xf] %v3406
        %3439 = vst [vmem:[#allocation5 + $0x368] sm:$0xf] %v3407
        %3440 = vst [vmem:[#allocation5 + $0x38c] sm:$0xf] %v3408
        %3441 = vst [vmem:[#allocation5 + $0x3b0] sm:$0xf] %v3409
        %3442 = vst [vmem:[#allocation5 + $0x3d4] sm:$0xf] %v3410
        %3443 = vst [vmem:[#allocation5 + $0x3f8] sm:$0xf] %v3411
        %3444 = vst [vmem:[#allocation5 + $0x41c] sm:$0xf] %v3412
        %3445 = vst [vmem:[#allocation5 + $0x440] sm:$0xf] %v3413
        %3446 = vst [vmem:[#allocation5 + $0x464] sm:$0xf] %v3414
        %v3447 = vld [vmem:[%s3126 + $0x7] sm:$0xff]
        %v3448 = vld [vmem:[%s3126 + $0xf] sm:$0xff]
        %v3449 = vld [vmem:[%s3126 + $0x27] sm:$0xff]
        %v3450 = vld [vmem:[%s3126 + $0x2f] sm:$0xff]
        %v3451 = vld [vmem:[%s3126 + $0x47] sm:$0xff]
        %v3452 = vld [vmem:[%s3126 + $0x4f] sm:$0xff]
        %v3453 = vld [vmem:[%s3126 + $0x67] sm:$0xff]
        %v3454 = vld [vmem:[%s3126 + $0x6f] sm:$0xff]
        %v3455 = vld [vmem:[%s3126 + $0x87] sm:$0xff]
        %v3456 = vld [vmem:[%s3126 + $0x8f] sm:$0xff]
        %v3457 = vld [vmem:[%s3126 + $0xa7] sm:$0xff]
        %v3458 = vld [vmem:[%s3126 + $0xaf] sm:$0xff]
        %v3459 = vld [vmem:[%s3126 + $0xc7] sm:$0xff]
        %v3460 = vld [vmem:[%s3126 + $0xcf] sm:$0xff]
        %v3461 = vld [vmem:[%s3126 + $0xe7] sm:$0xff]
        %v3462 = vld [vmem:[%s3126 + $0xef] sm:$0xff]
        %v3463 = vld [vmem:[%s3126 + $0x107] sm:$0xff]
        %v3464 = vld [vmem:[%s3126 + $0x10f] sm:$0xff]
        %v3465 = vld [vmem:[%s3126 + $0x127] sm:$0xff]
        %v3466 = vld [vmem:[%s3126 + $0x12f] sm:$0xff]
        %v3467 = vld [vmem:[%s3126 + $0x147] sm:$0xff]
        %v3468 = vld [vmem:[%s3126 + $0x14f] sm:$0xff]
        %v3469 = vld [vmem:[%s3126 + $0x167] sm:$0xff]
        %v3470 = vld [vmem:[%s3126 + $0x16f] sm:$0xff]
        %v3471 = vld [vmem:[%s3126 + $0x187] sm:$0xff]
        %v3472 = vld [vmem:[%s3126 + $0x18f] sm:$0xff]
        %v3473 = vld [vmem:[%s3126 + $0x1a7] sm:$0xff]
        %v3474 = vld [vmem:[%s3126 + $0x1af] sm:$0xff]
        %v3475 = vld [vmem:[%s3126 + $0x1c7] sm:$0xff]
        %v3476 = vld [vmem:[%s3126 + $0x1cf] sm:$0xff]
        %v3477 = vld [vmem:[%s3126 + $0x1e7] sm:$0xff]
        %v3478 = vld [vmem:[%s3126 + $0x1ef] sm:$0xff]
        %v3479 = vpack.c.bf16 %v3447, %v3447
        %v3480 = vpack.c.bf16 %v3448, %v3448
        %v3481 = vpack.c.bf16 %v3449, %v3449
        %v3482 = vpack.c.bf16 %v3450, %v3450
        %v3483 = vpack.c.bf16 %v3451, %v3451
        %v3484 = vpack.c.bf16 %v3452, %v3452
        %v3485 = vpack.c.bf16 %v3453, %v3453
        %v3486 = vpack.c.bf16 %v3454, %v3454
        %v3487 = vpack.c.bf16 %v3455, %v3455
        %v3488 = vpack.c.bf16 %v3456, %v3456
        %v3489 = vpack.c.bf16 %v3457, %v3457
        %v3490 = vpack.c.bf16 %v3458, %v3458
        %v3491 = vpack.c.bf16 %v3459, %v3459
        %v3492 = vpack.c.bf16 %v3460, %v3460
        %v3493 = vpack.c.bf16 %v3461, %v3461
        %v3494 = vpack.c.bf16 %v3462, %v3462
        %v3495 = vpack.c.bf16 %v3463, %v3463
        %v3496 = vpack.c.bf16 %v3464, %v3464
        %v3497 = vpack.c.bf16 %v3465, %v3465
        %v3498 = vpack.c.bf16 %v3466, %v3466
        %v3499 = vpack.c.bf16 %v3467, %v3467
        %v3500 = vpack.c.bf16 %v3468, %v3468
        %v3501 = vpack.c.bf16 %v3469, %v3469
        %v3502 = vpack.c.bf16 %v3470, %v3470
        %v3503 = vpack.c.bf16 %v3471, %v3471
        %v3504 = vpack.c.bf16 %v3472, %v3472
        %v3505 = vpack.c.bf16 %v3473, %v3473
        %v3506 = vpack.c.bf16 %v3474, %v3474
        %v3507 = vpack.c.bf16 %v3475, %v3475
        %v3508 = vpack.c.bf16 %v3476, %v3476
        %v3509 = vpack.c.bf16 %v3477, %v3477
        %v3510 = vpack.c.bf16 %v3478, %v3478
        %3511 = vst [vmem:[#allocation5 + $0xc] sm:$0xf] %v3479
        %3512 = vst [vmem:[#allocation5 + $0x30] sm:$0xf] %v3480
        %3513 = vst [vmem:[#allocation5 + $0x54] sm:$0xf] %v3481
        %3514 = vst [vmem:[#allocation5 + $0x78] sm:$0xf] %v3482
        %3515 = vst [vmem:[#allocation5 + $0x9c] sm:$0xf] %v3483
        %3516 = vst [vmem:[#allocation5 + $0xc0] sm:$0xf] %v3484
        %3517 = vst [vmem:[#allocation5 + $0xe4] sm:$0xf] %v3485
        %3518 = vst [vmem:[#allocation5 + $0x108] sm:$0xf] %v3486
        %3519 = vst [vmem:[#allocation5 + $0x12c] sm:$0xf] %v3487
        %3520 = vst [vmem:[#allocation5 + $0x150] sm:$0xf] %v3488
        %3521 = vst [vmem:[#allocation5 + $0x174] sm:$0xf] %v3489
        %3522 = vst [vmem:[#allocation5 + $0x198] sm:$0xf] %v3490
        %3523 = vst [vmem:[#allocation5 + $0x1bc] sm:$0xf] %v3491
        %3524 = vst [vmem:[#allocation5 + $0x1e0] sm:$0xf] %v3492
        %3525 = vst [vmem:[#allocation5 + $0x204] sm:$0xf] %v3493
        %3526 = vst [vmem:[#allocation5 + $0x228] sm:$0xf] %v3494
        %3527 = vst [vmem:[#allocation5 + $0x24c] sm:$0xf] %v3495
        %3528 = vst [vmem:[#allocation5 + $0x270] sm:$0xf] %v3496
        %3529 = vst [vmem:[#allocation5 + $0x294] sm:$0xf] %v3497
        %3530 = vst [vmem:[#allocation5 + $0x2b8] sm:$0xf] %v3498
        %3531 = vst [vmem:[#allocation5 + $0x2dc] sm:$0xf] %v3499
        %3532 = vst [vmem:[#allocation5 + $0x300] sm:$0xf] %v3500
        %3533 = vst [vmem:[#allocation5 + $0x324] sm:$0xf] %v3501
        %3534 = vst [vmem:[#allocation5 + $0x348] sm:$0xf] %v3502
        %3535 = vst [vmem:[#allocation5 + $0x36c] sm:$0xf] %v3503
        %3536 = vst [vmem:[#allocation5 + $0x390] sm:$0xf] %v3504
        %3537 = vst [vmem:[#allocation5 + $0x3b4] sm:$0xf] %v3505
        %3538 = vst [vmem:[#allocation5 + $0x3d8] sm:$0xf] %v3506
        %3539 = vst [vmem:[#allocation5 + $0x3fc] sm:$0xf] %v3507
        %3540 = vst [vmem:[#allocation5 + $0x420] sm:$0xf] %v3508
        %3541 = vst [vmem:[#allocation5 + $0x444] sm:$0xf] %v3509
        %3542 = vst [vmem:[#allocation5 + $0x468] sm:$0xf] %v3510
        %v3543 = vld [vmem:[%s3126 + $0x8] sm:$0xff]
        %v3544 = vld [vmem:[%s3126 + $0x10] sm:$0xff]
        %v3545 = vld [vmem:[%s3126 + $0x28] sm:$0xff]
        %v3546 = vld [vmem:[%s3126 + $0x30] sm:$0xff]
        %v3547 = vld [vmem:[%s3126 + $0x48] sm:$0xff]
        %v3548 = vld [vmem:[%s3126 + $0x50] sm:$0xff]
        %v3549 = vld [vmem:[%s3126 + $0x68] sm:$0xff]
        %v3550 = vld [vmem:[%s3126 + $0x70] sm:$0xff]
        %v3551 = vld [vmem:[%s3126 + $0x88] sm:$0xff]
        %v3552 = vld [vmem:[%s3126 + $0x90] sm:$0xff]
        %v3553 = vld [vmem:[%s3126 + $0xa8] sm:$0xff]
        %v3554 = vld [vmem:[%s3126 + $0xb0] sm:$0xff]
        %v3555 = vld [vmem:[%s3126 + $0xc8] sm:$0xff]
        %v3556 = vld [vmem:[%s3126 + $0xd0] sm:$0xff]
        %v3557 = vld [vmem:[%s3126 + $0xe8] sm:$0xff]
        %v3558 = vld [vmem:[%s3126 + $0xf0] sm:$0xff]
        %v3559 = vld [vmem:[%s3126 + $0x108] sm:$0xff]
        %v3560 = vld [vmem:[%s3126 + $0x110] sm:$0xff]
        %v3561 = vld [vmem:[%s3126 + $0x128] sm:$0xff]
        %v3562 = vld [vmem:[%s3126 + $0x130] sm:$0xff]
        %v3563 = vld [vmem:[%s3126 + $0x148] sm:$0xff]
        %v3564 = vld [vmem:[%s3126 + $0x150] sm:$0xff]
        %v3565 = vld [vmem:[%s3126 + $0x168] sm:$0xff]
        %v3566 = vld [vmem:[%s3126 + $0x170] sm:$0xff]
        %v3567 = vld [vmem:[%s3126 + $0x188] sm:$0xff]
        %v3568 = vld [vmem:[%s3126 + $0x190] sm:$0xff]
        %v3569 = vld [vmem:[%s3126 + $0x1a8] sm:$0xff]
        %v3570 = vld [vmem:[%s3126 + $0x1b0] sm:$0xff]
        %v3571 = vld [vmem:[%s3126 + $0x1c8] sm:$0xff]
        %v3572 = vld [vmem:[%s3126 + $0x1d0] sm:$0xff]
        %v3573 = vld [vmem:[%s3126 + $0x1e8] sm:$0xff]
        %v3574 = vld [vmem:[%s3126 + $0x1f0] sm:$0xff]
        %v3575 = vpack.c.bf16 %v3543, %v3543
        %v3576 = vpack.c.bf16 %v3544, %v3544
        %v3577 = vpack.c.bf16 %v3545, %v3545
        %v3578 = vpack.c.bf16 %v3546, %v3546
        %v3579 = vpack.c.bf16 %v3547, %v3547
        %v3580 = vpack.c.bf16 %v3548, %v3548
        %v3581 = vpack.c.bf16 %v3549, %v3549
        %v3582 = vpack.c.bf16 %v3550, %v3550
        %v3583 = vpack.c.bf16 %v3551, %v3551
        %v3584 = vpack.c.bf16 %v3552, %v3552
        %v3585 = vpack.c.bf16 %v3553, %v3553
        %v3586 = vpack.c.bf16 %v3554, %v3554
        %v3587 = vpack.c.bf16 %v3555, %v3555
        %v3588 = vpack.c.bf16 %v3556, %v3556
        %v3589 = vpack.c.bf16 %v3557, %v3557
        %v3590 = vpack.c.bf16 %v3558, %v3558
        %v3591 = vpack.c.bf16 %v3559, %v3559
        %v3592 = vpack.c.bf16 %v3560, %v3560
        %v3593 = vpack.c.bf16 %v3561, %v3561
        %v3594 = vpack.c.bf16 %v3562, %v3562
        %v3595 = vpack.c.bf16 %v3563, %v3563
        %v3596 = vpack.c.bf16 %v3564, %v3564
        %v3597 = vpack.c.bf16 %v3565, %v3565
        %v3598 = vpack.c.bf16 %v3566, %v3566
        %v3599 = vpack.c.bf16 %v3567, %v3567
        %v3600 = vpack.c.bf16 %v3568, %v3568
        %v3601 = vpack.c.bf16 %v3569, %v3569
        %v3602 = vpack.c.bf16 %v3570, %v3570
        %v3603 = vpack.c.bf16 %v3571, %v3571
        %v3604 = vpack.c.bf16 %v3572, %v3572
        %v3605 = vpack.c.bf16 %v3573, %v3573
        %v3606 = vpack.c.bf16 %v3574, %v3574
        %3607 = vst [vmem:[#allocation5 + $0x10] sm:$0xf] %v3575
        %3608 = vst [vmem:[#allocation5 + $0x34] sm:$0xf] %v3576
        %3609 = vst [vmem:[#allocation5 + $0x58] sm:$0xf] %v3577
        %3610 = vst [vmem:[#allocation5 + $0x7c] sm:$0xf] %v3578
        %3611 = vst [vmem:[#allocation5 + $0xa0] sm:$0xf] %v3579
        %3612 = vst [vmem:[#allocation5 + $0xc4] sm:$0xf] %v3580
        %3613 = vst [vmem:[#allocation5 + $0xe8] sm:$0xf] %v3581
        %3614 = vst [vmem:[#allocation5 + $0x10c] sm:$0xf] %v3582
        %3615 = vst [vmem:[#allocation5 + $0x130] sm:$0xf] %v3583
        %3616 = vst [vmem:[#allocation5 + $0x154] sm:$0xf] %v3584
        %3617 = vst [vmem:[#allocation5 + $0x178] sm:$0xf] %v3585
        %3618 = vst [vmem:[#allocation5 + $0x19c] sm:$0xf] %v3586
        %3619 = vst [vmem:[#allocation5 + $0x1c0] sm:$0xf] %v3587
        %3620 = vst [vmem:[#allocation5 + $0x1e4] sm:$0xf] %v3588
        %3621 = vst [vmem:[#allocation5 + $0x208] sm:$0xf] %v3589
        %3622 = vst [vmem:[#allocation5 + $0x22c] sm:$0xf] %v3590
        %3623 = vst [vmem:[#allocation5 + $0x250] sm:$0xf] %v3591
        %3624 = vst [vmem:[#allocation5 + $0x274] sm:$0xf] %v3592
        %3625 = vst [vmem:[#allocation5 + $0x298] sm:$0xf] %v3593
        %3626 = vst [vmem:[#allocation5 + $0x2bc] sm:$0xf] %v3594
        %3627 = vst [vmem:[#allocation5 + $0x2e0] sm:$0xf] %v3595
        %3628 = vst [vmem:[#allocation5 + $0x304] sm:$0xf] %v3596
        %3629 = vst [vmem:[#allocation5 + $0x328] sm:$0xf] %v3597
        %3630 = vst [vmem:[#allocation5 + $0x34c] sm:$0xf] %v3598
        %3631 = vst [vmem:[#allocation5 + $0x370] sm:$0xf] %v3599
        %3632 = vst [vmem:[#allocation5 + $0x394] sm:$0xf] %v3600
        %3633 = vst [vmem:[#allocation5 + $0x3b8] sm:$0xf] %v3601
        %3634 = vst [vmem:[#allocation5 + $0x3dc] sm:$0xf] %v3602
        %3635 = vst [vmem:[#allocation5 + $0x400] sm:$0xf] %v3603
        %3636 = vst [vmem:[#allocation5 + $0x424] sm:$0xf] %v3604
        %3637 = vst [vmem:[#allocation5 + $0x448] sm:$0xf] %v3605
        %3638 = vst [vmem:[#allocation5 + $0x46c] sm:$0xf] %v3606
        %v3639 = vld [vmem:[%s3126 + $0x9] sm:$0xff]
        %v3640 = vld [vmem:[%s3126 + $0x11] sm:$0xff]
        %v3641 = vld [vmem:[%s3126 + $0x29] sm:$0xff]
        %v3642 = vld [vmem:[%s3126 + $0x31] sm:$0xff]
        %v3643 = vld [vmem:[%s3126 + $0x49] sm:$0xff]
        %v3644 = vld [vmem:[%s3126 + $0x51] sm:$0xff]
        %v3645 = vld [vmem:[%s3126 + $0x69] sm:$0xff]
        %v3646 = vld [vmem:[%s3126 + $0x71] sm:$0xff]
        %v3647 = vld [vmem:[%s3126 + $0x89] sm:$0xff]
        %v3648 = vld [vmem:[%s3126 + $0x91] sm:$0xff]
        %v3649 = vld [vmem:[%s3126 + $0xa9] sm:$0xff]
        %v3650 = vld [vmem:[%s3126 + $0xb1] sm:$0xff]
        %v3651 = vld [vmem:[%s3126 + $0xc9] sm:$0xff]
        %v3652 = vld [vmem:[%s3126 + $0xd1] sm:$0xff]
        %v3653 = vld [vmem:[%s3126 + $0xe9] sm:$0xff]
        %v3654 = vld [vmem:[%s3126 + $0xf1] sm:$0xff]
        %v3655 = vld [vmem:[%s3126 + $0x109] sm:$0xff]
        %v3656 = vld [vmem:[%s3126 + $0x111] sm:$0xff]
        %v3657 = vld [vmem:[%s3126 + $0x129] sm:$0xff]
        %v3658 = vld [vmem:[%s3126 + $0x131] sm:$0xff]
        %v3659 = vld [vmem:[%s3126 + $0x149] sm:$0xff]
        %v3660 = vld [vmem:[%s3126 + $0x151] sm:$0xff]
        %v3661 = vld [vmem:[%s3126 + $0x169] sm:$0xff]
        %v3662 = vld [vmem:[%s3126 + $0x171] sm:$0xff]
        %v3663 = vld [vmem:[%s3126 + $0x189] sm:$0xff]
        %v3664 = vld [vmem:[%s3126 + $0x191] sm:$0xff]
        %v3665 = vld [vmem:[%s3126 + $0x1a9] sm:$0xff]
        %v3666 = vld [vmem:[%s3126 + $0x1b1] sm:$0xff]
        %v3667 = vld [vmem:[%s3126 + $0x1c9] sm:$0xff]
        %v3668 = vld [vmem:[%s3126 + $0x1d1] sm:$0xff]
        %v3669 = vld [vmem:[%s3126 + $0x1e9] sm:$0xff]
        %v3670 = vld [vmem:[%s3126 + $0x1f1] sm:$0xff]
        %v3671 = vpack.c.bf16 %v3639, %v3639
        %v3672 = vpack.c.bf16 %v3640, %v3640
        %v3673 = vpack.c.bf16 %v3641, %v3641
        %v3674 = vpack.c.bf16 %v3642, %v3642
        %v3675 = vpack.c.bf16 %v3643, %v3643
        %v3676 = vpack.c.bf16 %v3644, %v3644
        %v3677 = vpack.c.bf16 %v3645, %v3645
        %v3678 = vpack.c.bf16 %v3646, %v3646
        %v3679 = vpack.c.bf16 %v3647, %v3647
        %v3680 = vpack.c.bf16 %v3648, %v3648
        %v3681 = vpack.c.bf16 %v3649, %v3649
        %v3682 = vpack.c.bf16 %v3650, %v3650
        %v3683 = vpack.c.bf16 %v3651, %v3651
        %v3684 = vpack.c.bf16 %v3652, %v3652
        %v3685 = vpack.c.bf16 %v3653, %v3653
        %v3686 = vpack.c.bf16 %v3654, %v3654
        %v3687 = vpack.c.bf16 %v3655, %v3655
        %v3688 = vpack.c.bf16 %v3656, %v3656
        %v3689 = vpack.c.bf16 %v3657, %v3657
        %v3690 = vpack.c.bf16 %v3658, %v3658
        %v3691 = vpack.c.bf16 %v3659, %v3659
        %v3692 = vpack.c.bf16 %v3660, %v3660
        %v3693 = vpack.c.bf16 %v3661, %v3661
        %v3694 = vpack.c.bf16 %v3662, %v3662
        %v3695 = vpack.c.bf16 %v3663, %v3663
        %v3696 = vpack.c.bf16 %v3664, %v3664
        %v3697 = vpack.c.bf16 %v3665, %v3665
        %v3698 = vpack.c.bf16 %v3666, %v3666
        %v3699 = vpack.c.bf16 %v3667, %v3667
        %v3700 = vpack.c.bf16 %v3668, %v3668
        %v3701 = vpack.c.bf16 %v3669, %v3669
        %v3702 = vpack.c.bf16 %v3670, %v3670
        %3703 = vst [vmem:[#allocation5 + $0x14] sm:$0xf] %v3671
        %3704 = vst [vmem:[#allocation5 + $0x38] sm:$0xf] %v3672
        %3705 = vst [vmem:[#allocation5 + $0x5c] sm:$0xf] %v3673
        %3706 = vst [vmem:[#allocation5 + $0x80] sm:$0xf] %v3674
        %3707 = vst [vmem:[#allocation5 + $0xa4] sm:$0xf] %v3675
        %3708 = vst [vmem:[#allocation5 + $0xc8] sm:$0xf] %v3676
        %3709 = vst [vmem:[#allocation5 + $0xec] sm:$0xf] %v3677
        %3710 = vst [vmem:[#allocation5 + $0x110] sm:$0xf] %v3678
        %3711 = vst [vmem:[#allocation5 + $0x134] sm:$0xf] %v3679
        %3712 = vst [vmem:[#allocation5 + $0x158] sm:$0xf] %v3680
        %3713 = vst [vmem:[#allocation5 + $0x17c] sm:$0xf] %v3681
        %3714 = vst [vmem:[#allocation5 + $0x1a0] sm:$0xf] %v3682
        %3715 = vst [vmem:[#allocation5 + $0x1c4] sm:$0xf] %v3683
        %3716 = vst [vmem:[#allocation5 + $0x1e8] sm:$0xf] %v3684
        %3717 = vst [vmem:[#allocation5 + $0x20c] sm:$0xf] %v3685
        %3718 = vst [vmem:[#allocation5 + $0x230] sm:$0xf] %v3686
        %3719 = vst [vmem:[#allocation5 + $0x254] sm:$0xf] %v3687
        %3720 = vst [vmem:[#allocation5 + $0x278] sm:$0xf] %v3688
        %3721 = vst [vmem:[#allocation5 + $0x29c] sm:$0xf] %v3689
        %3722 = vst [vmem:[#allocation5 + $0x2c0] sm:$0xf] %v3690
        %3723 = vst [vmem:[#allocation5 + $0x2e4] sm:$0xf] %v3691
        %3724 = vst [vmem:[#allocation5 + $0x308] sm:$0xf] %v3692
        %3725 = vst [vmem:[#allocation5 + $0x32c] sm:$0xf] %v3693
        %3726 = vst [vmem:[#allocation5 + $0x350] sm:$0xf] %v3694
        %3727 = vst [vmem:[#allocation5 + $0x374] sm:$0xf] %v3695
        %3728 = vst [vmem:[#allocation5 + $0x398] sm:$0xf] %v3696
        %3729 = vst [vmem:[#allocation5 + $0x3bc] sm:$0xf] %v3697
        %3730 = vst [vmem:[#allocation5 + $0x3e0] sm:$0xf] %v3698
        %3731 = vst [vmem:[#allocation5 + $0x404] sm:$0xf] %v3699
        %3732 = vst [vmem:[#allocation5 + $0x428] sm:$0xf] %v3700
        %3733 = vst [vmem:[#allocation5 + $0x44c] sm:$0xf] %v3701
        %3734 = vst [vmem:[#allocation5 + $0x470] sm:$0xf] %v3702
        %s3735 = scalar_lea.vmem [#allocation3], 64
        %v3736 = vld [vmem:[%s3735 + $0x7] sm:$0xff]
        %v3737 = vld [vmem:[%s3735 + $0xf] sm:$0xff]
        %v3738 = vld [vmem:[%s3735 + $0x27] sm:$0xff]
        %v3739 = vld [vmem:[%s3735 + $0x2f] sm:$0xff]
        %v3740 = vld [vmem:[%s3735 + $0x47] sm:$0xff]
        %v3741 = vld [vmem:[%s3735 + $0x4f] sm:$0xff]
        %v3742 = vld [vmem:[%s3735 + $0x67] sm:$0xff]
        %v3743 = vld [vmem:[%s3735 + $0x6f] sm:$0xff]
        %v3744 = vld [vmem:[%s3735 + $0x87] sm:$0xff]
        %v3745 = vld [vmem:[%s3735 + $0x8f] sm:$0xff]
        %v3746 = vld [vmem:[%s3735 + $0xa7] sm:$0xff]
        %v3747 = vld [vmem:[%s3735 + $0xaf] sm:$0xff]
        %v3748 = vld [vmem:[%s3735 + $0xc7] sm:$0xff]
        %v3749 = vld [vmem:[%s3735 + $0xcf] sm:$0xff]
        %v3750 = vld [vmem:[%s3735 + $0xe7] sm:$0xff]
        %v3751 = vld [vmem:[%s3735 + $0xef] sm:$0xff]
        %v3752 = vld [vmem:[%s3735 + $0x107] sm:$0xff]
        %v3753 = vld [vmem:[%s3735 + $0x10f] sm:$0xff]
        %v3754 = vld [vmem:[%s3735 + $0x127] sm:$0xff]
        %v3755 = vld [vmem:[%s3735 + $0x12f] sm:$0xff]
        %v3756 = vld [vmem:[%s3735 + $0x147] sm:$0xff]
        %v3757 = vld [vmem:[%s3735 + $0x14f] sm:$0xff]
        %v3758 = vld [vmem:[%s3735 + $0x167] sm:$0xff]
        %v3759 = vld [vmem:[%s3735 + $0x16f] sm:$0xff]
        %v3760 = vld [vmem:[%s3735 + $0x187] sm:$0xff]
        %v3761 = vld [vmem:[%s3735 + $0x18f] sm:$0xff]
        %v3762 = vld [vmem:[%s3735 + $0x1a7] sm:$0xff]
        %v3763 = vld [vmem:[%s3735 + $0x1af] sm:$0xff]
        %v3764 = vld [vmem:[%s3735 + $0x1c7] sm:$0xff]
        %v3765 = vld [vmem:[%s3735 + $0x1cf] sm:$0xff]
        %v3766 = vld [vmem:[%s3735 + $0x1e7] sm:$0xff]
        %v3767 = vld [vmem:[%s3735 + $0x1ef] sm:$0xff]
        %v3768 = vpack.c.bf16 %v3736, %v3736
        %v3769 = vpack.c.bf16 %v3737, %v3737
        %v3770 = vpack.c.bf16 %v3738, %v3738
        %v3771 = vpack.c.bf16 %v3739, %v3739
        %v3772 = vpack.c.bf16 %v3740, %v3740
        %v3773 = vpack.c.bf16 %v3741, %v3741
        %v3774 = vpack.c.bf16 %v3742, %v3742
        %v3775 = vpack.c.bf16 %v3743, %v3743
        %v3776 = vpack.c.bf16 %v3744, %v3744
        %v3777 = vpack.c.bf16 %v3745, %v3745
        %v3778 = vpack.c.bf16 %v3746, %v3746
        %v3779 = vpack.c.bf16 %v3747, %v3747
        %v3780 = vpack.c.bf16 %v3748, %v3748
        %v3781 = vpack.c.bf16 %v3749, %v3749
        %v3782 = vpack.c.bf16 %v3750, %v3750
        %v3783 = vpack.c.bf16 %v3751, %v3751
        %v3784 = vpack.c.bf16 %v3752, %v3752
        %v3785 = vpack.c.bf16 %v3753, %v3753
        %v3786 = vpack.c.bf16 %v3754, %v3754
        %v3787 = vpack.c.bf16 %v3755, %v3755
        %v3788 = vpack.c.bf16 %v3756, %v3756
        %v3789 = vpack.c.bf16 %v3757, %v3757
        %v3790 = vpack.c.bf16 %v3758, %v3758
        %v3791 = vpack.c.bf16 %v3759, %v3759
        %v3792 = vpack.c.bf16 %v3760, %v3760
        %v3793 = vpack.c.bf16 %v3761, %v3761
        %v3794 = vpack.c.bf16 %v3762, %v3762
        %v3795 = vpack.c.bf16 %v3763, %v3763
        %v3796 = vpack.c.bf16 %v3764, %v3764
        %v3797 = vpack.c.bf16 %v3765, %v3765
        %v3798 = vpack.c.bf16 %v3766, %v3766
        %v3799 = vpack.c.bf16 %v3767, %v3767
        %3800 = vst [vmem:[#allocation5 + $0x18] sm:$0xf] %v3768
        %3801 = vst [vmem:[#allocation5 + $0x3c] sm:$0xf] %v3769
        %3802 = vst [vmem:[#allocation5 + $0x60] sm:$0xf] %v3770
        %3803 = vst [vmem:[#allocation5 + $0x84] sm:$0xf] %v3771
        %3804 = vst [vmem:[#allocation5 + $0xa8] sm:$0xf] %v3772
        %3805 = vst [vmem:[#allocation5 + $0xcc] sm:$0xf] %v3773
        %3806 = vst [vmem:[#allocation5 + $0xf0] sm:$0xf] %v3774
        %3807 = vst [vmem:[#allocation5 + $0x114] sm:$0xf] %v3775
        %3808 = vst [vmem:[#allocation5 + $0x138] sm:$0xf] %v3776
        %3809 = vst [vmem:[#allocation5 + $0x15c] sm:$0xf] %v3777
        %3810 = vst [vmem:[#allocation5 + $0x180] sm:$0xf] %v3778
        %3811 = vst [vmem:[#allocation5 + $0x1a4] sm:$0xf] %v3779
        %3812 = vst [vmem:[#allocation5 + $0x1c8] sm:$0xf] %v3780
        %3813 = vst [vmem:[#allocation5 + $0x1ec] sm:$0xf] %v3781
        %3814 = vst [vmem:[#allocation5 + $0x210] sm:$0xf] %v3782
        %3815 = vst [vmem:[#allocation5 + $0x234] sm:$0xf] %v3783
        %3816 = vst [vmem:[#allocation5 + $0x258] sm:$0xf] %v3784
        %3817 = vst [vmem:[#allocation5 + $0x27c] sm:$0xf] %v3785
        %3818 = vst [vmem:[#allocation5 + $0x2a0] sm:$0xf] %v3786
        %3819 = vst [vmem:[#allocation5 + $0x2c4] sm:$0xf] %v3787
        %3820 = vst [vmem:[#allocation5 + $0x2e8] sm:$0xf] %v3788
        %3821 = vst [vmem:[#allocation5 + $0x30c] sm:$0xf] %v3789
        %3822 = vst [vmem:[#allocation5 + $0x330] sm:$0xf] %v3790
        %3823 = vst [vmem:[#allocation5 + $0x354] sm:$0xf] %v3791
        %3824 = vst [vmem:[#allocation5 + $0x378] sm:$0xf] %v3792
        %3825 = vst [vmem:[#allocation5 + $0x39c] sm:$0xf] %v3793
        %3826 = vst [vmem:[#allocation5 + $0x3c0] sm:$0xf] %v3794
        %3827 = vst [vmem:[#allocation5 + $0x3e4] sm:$0xf] %v3795
        %3828 = vst [vmem:[#allocation5 + $0x408] sm:$0xf] %v3796
        %3829 = vst [vmem:[#allocation5 + $0x42c] sm:$0xf] %v3797
        %3830 = vst [vmem:[#allocation5 + $0x450] sm:$0xf] %v3798
        %3831 = vst [vmem:[#allocation5 + $0x474] sm:$0xf] %v3799
        %v3832 = vld [vmem:[%s3735 + $0x8] sm:$0xff]
        %v3833 = vld [vmem:[%s3735 + $0x10] sm:$0xff]
        %v3834 = vld [vmem:[%s3735 + $0x28] sm:$0xff]
        %v3835 = vld [vmem:[%s3735 + $0x30] sm:$0xff]
        %v3836 = vld [vmem:[%s3735 + $0x48] sm:$0xff]
        %v3837 = vld [vmem:[%s3735 + $0x50] sm:$0xff]
        %v3838 = vld [vmem:[%s3735 + $0x68] sm:$0xff]
        %v3839 = vld [vmem:[%s3735 + $0x70] sm:$0xff]
        %v3840 = vld [vmem:[%s3735 + $0x88] sm:$0xff]
        %v3841 = vld [vmem:[%s3735 + $0x90] sm:$0xff]
        %v3842 = vld [vmem:[%s3735 + $0xa8] sm:$0xff]
        %v3843 = vld [vmem:[%s3735 + $0xb0] sm:$0xff]
        %v3844 = vld [vmem:[%s3735 + $0xc8] sm:$0xff]
        %v3845 = vld [vmem:[%s3735 + $0xd0] sm:$0xff]
        %v3846 = vld [vmem:[%s3735 + $0xe8] sm:$0xff]
        %v3847 = vld [vmem:[%s3735 + $0xf0] sm:$0xff]
        %v3848 = vld [vmem:[%s3735 + $0x108] sm:$0xff]
        %v3849 = vld [vmem:[%s3735 + $0x110] sm:$0xff]
        %v3850 = vld [vmem:[%s3735 + $0x128] sm:$0xff]
        %v3851 = vld [vmem:[%s3735 + $0x130] sm:$0xff]
        %v3852 = vld [vmem:[%s3735 + $0x148] sm:$0xff]
        %v3853 = vld [vmem:[%s3735 + $0x150] sm:$0xff]
        %v3854 = vld [vmem:[%s3735 + $0x168] sm:$0xff]
        %v3855 = vld [vmem:[%s3735 + $0x170] sm:$0xff]
        %v3856 = vld [vmem:[%s3735 + $0x188] sm:$0xff]
        %v3857 = vld [vmem:[%s3735 + $0x190] sm:$0xff]
        %v3858 = vld [vmem:[%s3735 + $0x1a8] sm:$0xff]
        %v3859 = vld [vmem:[%s3735 + $0x1b0] sm:$0xff]
        %v3860 = vld [vmem:[%s3735 + $0x1c8] sm:$0xff]
        %v3861 = vld [vmem:[%s3735 + $0x1d0] sm:$0xff]
        %v3862 = vld [vmem:[%s3735 + $0x1e8] sm:$0xff]
        %v3863 = vld [vmem:[%s3735 + $0x1f0] sm:$0xff]
        %v3864 = vpack.c.bf16 %v3832, %v3832
        %v3865 = vpack.c.bf16 %v3833, %v3833
        %v3866 = vpack.c.bf16 %v3834, %v3834
        %v3867 = vpack.c.bf16 %v3835, %v3835
        %v3868 = vpack.c.bf16 %v3836, %v3836
        %v3869 = vpack.c.bf16 %v3837, %v3837
        %v3870 = vpack.c.bf16 %v3838, %v3838
        %v3871 = vpack.c.bf16 %v3839, %v3839
        %v3872 = vpack.c.bf16 %v3840, %v3840
        %v3873 = vpack.c.bf16 %v3841, %v3841
        %v3874 = vpack.c.bf16 %v3842, %v3842
        %v3875 = vpack.c.bf16 %v3843, %v3843
        %v3876 = vpack.c.bf16 %v3844, %v3844
        %v3877 = vpack.c.bf16 %v3845, %v3845
        %v3878 = vpack.c.bf16 %v3846, %v3846
        %v3879 = vpack.c.bf16 %v3847, %v3847
        %v3880 = vpack.c.bf16 %v3848, %v3848
        %v3881 = vpack.c.bf16 %v3849, %v3849
        %v3882 = vpack.c.bf16 %v3850, %v3850
        %v3883 = vpack.c.bf16 %v3851, %v3851
        %v3884 = vpack.c.bf16 %v3852, %v3852
        %v3885 = vpack.c.bf16 %v3853, %v3853
        %v3886 = vpack.c.bf16 %v3854, %v3854
        %v3887 = vpack.c.bf16 %v3855, %v3855
        %v3888 = vpack.c.bf16 %v3856, %v3856
        %v3889 = vpack.c.bf16 %v3857, %v3857
        %v3890 = vpack.c.bf16 %v3858, %v3858
        %v3891 = vpack.c.bf16 %v3859, %v3859
        %v3892 = vpack.c.bf16 %v3860, %v3860
        %v3893 = vpack.c.bf16 %v3861, %v3861
        %v3894 = vpack.c.bf16 %v3862, %v3862
        %v3895 = vpack.c.bf16 %v3863, %v3863
        %3896 = vst [vmem:[#allocation5 + $0x1c] sm:$0xf] %v3864
        %3897 = vst [vmem:[#allocation5 + $0x40] sm:$0xf] %v3865
        %3898 = vst [vmem:[#allocation5 + $0x64] sm:$0xf] %v3866
        %3899 = vst [vmem:[#allocation5 + $0x88] sm:$0xf] %v3867
        %3900 = vst [vmem:[#allocation5 + $0xac] sm:$0xf] %v3868
        %3901 = vst [vmem:[#allocation5 + $0xd0] sm:$0xf] %v3869
        %3902 = vst [vmem:[#allocation5 + $0xf4] sm:$0xf] %v3870
        %3903 = vst [vmem:[#allocation5 + $0x118] sm:$0xf] %v3871
        %3904 = vst [vmem:[#allocation5 + $0x13c] sm:$0xf] %v3872
        %3905 = vst [vmem:[#allocation5 + $0x160] sm:$0xf] %v3873
        %3906 = vst [vmem:[#allocation5 + $0x184] sm:$0xf] %v3874
        %3907 = vst [vmem:[#allocation5 + $0x1a8] sm:$0xf] %v3875
        %3908 = vst [vmem:[#allocation5 + $0x1cc] sm:$0xf] %v3876
        %3909 = vst [vmem:[#allocation5 + $0x1f0] sm:$0xf] %v3877
        %3910 = vst [vmem:[#allocation5 + $0x214] sm:$0xf] %v3878
        %3911 = vst [vmem:[#allocation5 + $0x238] sm:$0xf] %v3879
        %3912 = vst [vmem:[#allocation5 + $0x25c] sm:$0xf] %v3880
        %3913 = vst [vmem:[#allocation5 + $0x280] sm:$0xf] %v3881
        %3914 = vst [vmem:[#allocation5 + $0x2a4] sm:$0xf] %v3882
        %3915 = vst [vmem:[#allocation5 + $0x2c8] sm:$0xf] %v3883
        %3916 = vst [vmem:[#allocation5 + $0x2ec] sm:$0xf] %v3884
        %3917 = vst [vmem:[#allocation5 + $0x310] sm:$0xf] %v3885
        %3918 = vst [vmem:[#allocation5 + $0x334] sm:$0xf] %v3886
        %3919 = vst [vmem:[#allocation5 + $0x358] sm:$0xf] %v3887
        %3920 = vst [vmem:[#allocation5 + $0x37c] sm:$0xf] %v3888
        %3921 = vst [vmem:[#allocation5 + $0x3a0] sm:$0xf] %v3889
        %3922 = vst [vmem:[#allocation5 + $0x3c4] sm:$0xf] %v3890
        %3923 = vst [vmem:[#allocation5 + $0x3e8] sm:$0xf] %v3891
        %3924 = vst [vmem:[#allocation5 + $0x40c] sm:$0xf] %v3892
        %3925 = vst [vmem:[#allocation5 + $0x430] sm:$0xf] %v3893
        %3926 = vst [vmem:[#allocation5 + $0x454] sm:$0xf] %v3894
        %3927 = vst [vmem:[#allocation5 + $0x478] sm:$0xf] %v3895
        %v3928 = vld [vmem:[%s3735 + $0x9] sm:$0xff]
        %v3929 = vld [vmem:[%s3735 + $0x11] sm:$0xff]
        %v3930 = vld [vmem:[%s3735 + $0x29] sm:$0xff]
        %v3931 = vld [vmem:[%s3735 + $0x31] sm:$0xff]
        %v3932 = vld [vmem:[%s3735 + $0x49] sm:$0xff]
        %v3933 = vld [vmem:[%s3735 + $0x51] sm:$0xff]
        %v3934 = vld [vmem:[%s3735 + $0x69] sm:$0xff]
        %v3935 = vld [vmem:[%s3735 + $0x71] sm:$0xff]
        %v3936 = vld [vmem:[%s3735 + $0x89] sm:$0xff]
        %v3937 = vld [vmem:[%s3735 + $0x91] sm:$0xff]
        %v3938 = vld [vmem:[%s3735 + $0xa9] sm:$0xff]
        %v3939 = vld [vmem:[%s3735 + $0xb1] sm:$0xff]
        %v3940 = vld [vmem:[%s3735 + $0xc9] sm:$0xff]
        %v3941 = vld [vmem:[%s3735 + $0xd1] sm:$0xff]
        %v3942 = vld [vmem:[%s3735 + $0xe9] sm:$0xff]
        %v3943 = vld [vmem:[%s3735 + $0xf1] sm:$0xff]
        %v3944 = vld [vmem:[%s3735 + $0x109] sm:$0xff]
        %v3945 = vld [vmem:[%s3735 + $0x111] sm:$0xff]
        %v3946 = vld [vmem:[%s3735 + $0x129] sm:$0xff]
        %v3947 = vld [vmem:[%s3735 + $0x131] sm:$0xff]
        %v3948 = vld [vmem:[%s3735 + $0x149] sm:$0xff]
        %v3949 = vld [vmem:[%s3735 + $0x151] sm:$0xff]
        %v3950 = vld [vmem:[%s3735 + $0x169] sm:$0xff]
        %v3951 = vld [vmem:[%s3735 + $0x171] sm:$0xff]
        %v3952 = vld [vmem:[%s3735 + $0x189] sm:$0xff]
        %v3953 = vld [vmem:[%s3735 + $0x191] sm:$0xff]
        %v3954 = vld [vmem:[%s3735 + $0x1a9] sm:$0xff]
        %v3955 = vld [vmem:[%s3735 + $0x1b1] sm:$0xff]
        %v3956 = vld [vmem:[%s3735 + $0x1c9] sm:$0xff]
        %v3957 = vld [vmem:[%s3735 + $0x1d1] sm:$0xff]
        %v3958 = vld [vmem:[%s3735 + $0x1e9] sm:$0xff]
        %v3959 = vld [vmem:[%s3735 + $0x1f1] sm:$0xff]
        %v3960 = vpack.c.bf16 %v3928, %v3928
        %v3961 = vpack.c.bf16 %v3929, %v3929
        %v3962 = vpack.c.bf16 %v3930, %v3930
        %v3963 = vpack.c.bf16 %v3931, %v3931
        %v3964 = vpack.c.bf16 %v3932, %v3932
        %v3965 = vpack.c.bf16 %v3933, %v3933
        %v3966 = vpack.c.bf16 %v3934, %v3934
        %v3967 = vpack.c.bf16 %v3935, %v3935
        %v3968 = vpack.c.bf16 %v3936, %v3936
        %v3969 = vpack.c.bf16 %v3937, %v3937
        %v3970 = vpack.c.bf16 %v3938, %v3938
        %v3971 = vpack.c.bf16 %v3939, %v3939
        %v3972 = vpack.c.bf16 %v3940, %v3940
        %v3973 = vpack.c.bf16 %v3941, %v3941
        %v3974 = vpack.c.bf16 %v3942, %v3942
        %v3975 = vpack.c.bf16 %v3943, %v3943
        %v3976 = vpack.c.bf16 %v3944, %v3944
        %v3977 = vpack.c.bf16 %v3945, %v3945
        %v3978 = vpack.c.bf16 %v3946, %v3946
        %v3979 = vpack.c.bf16 %v3947, %v3947
        %v3980 = vpack.c.bf16 %v3948, %v3948
        %v3981 = vpack.c.bf16 %v3949, %v3949
        %v3982 = vpack.c.bf16 %v3950, %v3950
        %v3983 = vpack.c.bf16 %v3951, %v3951
        %v3984 = vpack.c.bf16 %v3952, %v3952
        %v3985 = vpack.c.bf16 %v3953, %v3953
        %v3986 = vpack.c.bf16 %v3954, %v3954
        %v3987 = vpack.c.bf16 %v3955, %v3955
        %v3988 = vpack.c.bf16 %v3956, %v3956
        %v3989 = vpack.c.bf16 %v3957, %v3957
        %v3990 = vpack.c.bf16 %v3958, %v3958
        %v3991 = vpack.c.bf16 %v3959, %v3959
        %3992 = vst [vmem:[#allocation5 + $0x20] sm:$0xf] %v3960
        %3993 = vst [vmem:[#allocation5 + $0x44] sm:$0xf] %v3961
        %3994 = vst [vmem:[#allocation5 + $0x68] sm:$0xf] %v3962
        %3995 = vst [vmem:[#allocation5 + $0x8c] sm:$0xf] %v3963
        %3996 = vst [vmem:[#allocation5 + $0xb0] sm:$0xf] %v3964
        %3997 = vst [vmem:[#allocation5 + $0xd4] sm:$0xf] %v3965
        %3998 = vst [vmem:[#allocation5 + $0xf8] sm:$0xf] %v3966
        %3999 = vst [vmem:[#allocation5 + $0x11c] sm:$0xf] %v3967
        %4000 = vst [vmem:[#allocation5 + $0x140] sm:$0xf] %v3968
        %4001 = vst [vmem:[#allocation5 + $0x164] sm:$0xf] %v3969
        %4002 = vst [vmem:[#allocation5 + $0x188] sm:$0xf] %v3970
        %4003 = vst [vmem:[#allocation5 + $0x1ac] sm:$0xf] %v3971
        %4004 = vst [vmem:[#allocation5 + $0x1d0] sm:$0xf] %v3972
        %4005 = vst [vmem:[#allocation5 + $0x1f4] sm:$0xf] %v3973
        %4006 = vst [vmem:[#allocation5 + $0x218] sm:$0xf] %v3974
        %4007 = vst [vmem:[#allocation5 + $0x23c] sm:$0xf] %v3975
        %4008 = vst [vmem:[#allocation5 + $0x260] sm:$0xf] %v3976
        %4009 = vst [vmem:[#allocation5 + $0x284] sm:$0xf] %v3977
        %4010 = vst [vmem:[#allocation5 + $0x2a8] sm:$0xf] %v3978
        %4011 = vst [vmem:[#allocation5 + $0x2cc] sm:$0xf] %v3979
        %4012 = vst [vmem:[#allocation5 + $0x2f0] sm:$0xf] %v3980
        %4013 = vst [vmem:[#allocation5 + $0x314] sm:$0xf] %v3981
        %4014 = vst [vmem:[#allocation5 + $0x338] sm:$0xf] %v3982
        %4015 = vst [vmem:[#allocation5 + $0x35c] sm:$0xf] %v3983
        %4016 = vst [vmem:[#allocation5 + $0x380] sm:$0xf] %v3984
        %4017 = vst [vmem:[#allocation5 + $0x3a4] sm:$0xf] %v3985
        %4018 = vst [vmem:[#allocation5 + $0x3c8] sm:$0xf] %v3986
        %4019 = vst [vmem:[#allocation5 + $0x3ec] sm:$0xf] %v3987
        %4020 = vst [vmem:[#allocation5 + $0x410] sm:$0xf] %v3988
        %4021 = vst [vmem:[#allocation5 + $0x434] sm:$0xf] %v3989
        %4022 = vst [vmem:[#allocation5 + $0x458] sm:$0xf] %v3990
        %4023 = vst [vmem:[#allocation5 + $0x47c] sm:$0xf] %v3991
        %v4024 = vld [vmem:[#allocation5] sm:$0xff]
        %v4025 = vld [vmem:[#allocation5 + $0x8] sm:$0xff]
        %v4026 = vld [vmem:[#allocation5 + $0x10] sm:$0xff]
        %v4027 = vld [vmem:[#allocation5 + $0x18] sm:$0xff]
        %v4028 = vld [vmem:[#allocation5 + $0x20] sm:$0xf]
        %v4029 = vld [vmem:[#allocation5 + $0x24] sm:$0xff]
        %v4030 = vld [vmem:[#allocation5 + $0x2c] sm:$0xff]
        %v4031 = vld [vmem:[#allocation5 + $0x34] sm:$0xff]
        %v4032 = vld [vmem:[#allocation5 + $0x3c] sm:$0xff]
        %v4033 = vld [vmem:[#allocation5 + $0x44] sm:$0xf]
        %v4034 = vld [vmem:[#allocation5 + $0x48] sm:$0xff]
        %v4035 = vld [vmem:[#allocation5 + $0x50] sm:$0xff]
        %v4036 = vld [vmem:[#allocation5 + $0x58] sm:$0xff]
        %v4037 = vld [vmem:[#allocation5 + $0x60] sm:$0xff]
        %v4038 = vld [vmem:[#allocation5 + $0x68] sm:$0xf]
        %v4039 = vld [vmem:[#allocation5 + $0x6c] sm:$0xff]
        %v4040 = vld [vmem:[#allocation5 + $0x74] sm:$0xff]
        %v4041 = vld [vmem:[#allocation5 + $0x7c] sm:$0xff]
        %v4042 = vld [vmem:[#allocation5 + $0x84] sm:$0xff]
        %v4043 = vld [vmem:[#allocation5 + $0x8c] sm:$0xf]
        %v4044 = vld [vmem:[#allocation5 + $0x90] sm:$0xff]
        %v4045 = vld [vmem:[#allocation5 + $0x98] sm:$0xff]
        %v4046 = vld [vmem:[#allocation5 + $0xa0] sm:$0xff]
        %v4047 = vld [vmem:[#allocation5 + $0xa8] sm:$0xff]
        %v4048 = vld [vmem:[#allocation5 + $0xb0] sm:$0xf]
        %v4049 = vld [vmem:[#allocation5 + $0xb4] sm:$0xff]
        %v4050 = vld [vmem:[#allocation5 + $0xbc] sm:$0xff]
        %v4051 = vld [vmem:[#allocation5 + $0xc4] sm:$0xff]
        %v4052 = vld [vmem:[#allocation5 + $0xcc] sm:$0xff]
        %v4053 = vld [vmem:[#allocation5 + $0xd4] sm:$0xf]
        %v4054 = vld [vmem:[#allocation5 + $0xd8] sm:$0xff]
        %v4055 = vld [vmem:[#allocation5 + $0xe0] sm:$0xff]
        %v4056 = vld [vmem:[#allocation5 + $0xe8] sm:$0xff]
        %v4057 = vld [vmem:[#allocation5 + $0xf0] sm:$0xff]
        %v4058 = vld [vmem:[#allocation5 + $0xf8] sm:$0xf]
        %v4059 = vld [vmem:[#allocation5 + $0xfc] sm:$0xff]
        %v4060 = vld [vmem:[#allocation5 + $0x104] sm:$0xff]
        %v4061 = vld [vmem:[#allocation5 + $0x10c] sm:$0xff]
        %v4062 = vld [vmem:[#allocation5 + $0x114] sm:$0xff]
        %v4063 = vld [vmem:[#allocation5 + $0x11c] sm:$0xf]
        %v4064 = vld [vmem:[#allocation5 + $0x120] sm:$0xff]
        %v4065 = vld [vmem:[#allocation5 + $0x128] sm:$0xff]
        %v4066 = vld [vmem:[#allocation5 + $0x130] sm:$0xff]
        %v4067 = vld [vmem:[#allocation5 + $0x138] sm:$0xff]
        %v4068 = vld [vmem:[#allocation5 + $0x140] sm:$0xf]
        %v4069 = vld [vmem:[#allocation5 + $0x144] sm:$0xff]
        %v4070 = vld [vmem:[#allocation5 + $0x14c] sm:$0xff]
        %v4071 = vld [vmem:[#allocation5 + $0x154] sm:$0xff]
        %v4072 = vld [vmem:[#allocation5 + $0x15c] sm:$0xff]
        %v4073 = vld [vmem:[#allocation5 + $0x164] sm:$0xf]
        %v4074 = vld [vmem:[#allocation5 + $0x168] sm:$0xff]
        %v4075 = vld [vmem:[#allocation5 + $0x170] sm:$0xff]
        %v4076 = vld [vmem:[#allocation5 + $0x178] sm:$0xff]
        %v4077 = vld [vmem:[#allocation5 + $0x180] sm:$0xff]
        %v4078 = vld [vmem:[#allocation5 + $0x188] sm:$0xf]
        %v4079 = vld [vmem:[#allocation5 + $0x18c] sm:$0xff]
        %v4080 = vld [vmem:[#allocation5 + $0x194] sm:$0xff]
        %v4081 = vld [vmem:[#allocation5 + $0x19c] sm:$0xff]
        %v4082 = vld [vmem:[#allocation5 + $0x1a4] sm:$0xff]
        %v4083 = vld [vmem:[#allocation5 + $0x1ac] sm:$0xf]
        %v4084 = vld [vmem:[#allocation5 + $0x1b0] sm:$0xff]
        %v4085 = vld [vmem:[#allocation5 + $0x1b8] sm:$0xff]
        %v4086 = vld [vmem:[#allocation5 + $0x1c0] sm:$0xff]
        %v4087 = vld [vmem:[#allocation5 + $0x1c8] sm:$0xff]
        %v4088 = vld [vmem:[#allocation5 + $0x1d0] sm:$0xf]
        %v4089 = vld [vmem:[#allocation5 + $0x1d4] sm:$0xff]
        %v4090 = vld [vmem:[#allocation5 + $0x1dc] sm:$0xff]
        %v4091 = vld [vmem:[#allocation5 + $0x1e4] sm:$0xff]
        %v4092 = vld [vmem:[#allocation5 + $0x1ec] sm:$0xff]
        %v4093 = vld [vmem:[#allocation5 + $0x1f4] sm:$0xf]
        %v4094 = vld [vmem:[#allocation5 + $0x1f8] sm:$0xff]
        %v4095 = vld [vmem:[#allocation5 + $0x200] sm:$0xff]
        %v4096 = vld [vmem:[#allocation5 + $0x208] sm:$0xff]
        %v4097 = vld [vmem:[#allocation5 + $0x210] sm:$0xff]
        %v4098 = vld [vmem:[#allocation5 + $0x218] sm:$0xf]
        %v4099 = vld [vmem:[#allocation5 + $0x21c] sm:$0xff]
        %v4100 = vld [vmem:[#allocation5 + $0x224] sm:$0xff]
        %v4101 = vld [vmem:[#allocation5 + $0x22c] sm:$0xff]
        %v4102 = vld [vmem:[#allocation5 + $0x234] sm:$0xff]
        %v4103 = vld [vmem:[#allocation5 + $0x23c] sm:$0xf]
        %v4104 = vld [vmem:[#allocation5 + $0x240] sm:$0xff]
        %v4105 = vld [vmem:[#allocation5 + $0x248] sm:$0xff]
        %v4106 = vld [vmem:[#allocation5 + $0x250] sm:$0xff]
        %v4107 = vld [vmem:[#allocation5 + $0x258] sm:$0xff]
        %v4108 = vld [vmem:[#allocation5 + $0x260] sm:$0xf]
        %v4109 = vld [vmem:[#allocation5 + $0x264] sm:$0xff]
        %v4110 = vld [vmem:[#allocation5 + $0x26c] sm:$0xff]
        %v4111 = vld [vmem:[#allocation5 + $0x274] sm:$0xff]
        %v4112 = vld [vmem:[#allocation5 + $0x27c] sm:$0xff]
        %v4113 = vld [vmem:[#allocation5 + $0x284] sm:$0xf]
        %v4114 = vld [vmem:[#allocation5 + $0x288] sm:$0xff]
        %v4115 = vld [vmem:[#allocation5 + $0x290] sm:$0xff]
        %v4116 = vld [vmem:[#allocation5 + $0x298] sm:$0xff]
        %v4117 = vld [vmem:[#allocation5 + $0x2a0] sm:$0xff]
        %v4118 = vld [vmem:[#allocation5 + $0x2a8] sm:$0xf]
        %v4119 = vld [vmem:[#allocation5 + $0x2ac] sm:$0xff]
        %v4120 = vld [vmem:[#allocation5 + $0x2b4] sm:$0xff]
        %v4121 = vld [vmem:[#allocation5 + $0x2bc] sm:$0xff]
        %v4122 = vld [vmem:[#allocation5 + $0x2c4] sm:$0xff]
        %v4123 = vld [vmem:[#allocation5 + $0x2cc] sm:$0xf]
        %v4124 = vld [vmem:[#allocation5 + $0x2d0] sm:$0xff]
        %v4125 = vld [vmem:[#allocation5 + $0x2d8] sm:$0xff]
        %v4126 = vld [vmem:[#allocation5 + $0x2e0] sm:$0xff]
        %v4127 = vld [vmem:[#allocation5 + $0x2e8] sm:$0xff]
        %v4128 = vld [vmem:[#allocation5 + $0x2f0] sm:$0xf]
        %v4129 = vld [vmem:[#allocation5 + $0x2f4] sm:$0xff]
        %v4130 = vld [vmem:[#allocation5 + $0x2fc] sm:$0xff]
        %v4131 = vld [vmem:[#allocation5 + $0x304] sm:$0xff]
        %v4132 = vld [vmem:[#allocation5 + $0x30c] sm:$0xff]
        %v4133 = vld [vmem:[#allocation5 + $0x314] sm:$0xf]
        %v4134 = vld [vmem:[#allocation5 + $0x318] sm:$0xff]
        %v4135 = vld [vmem:[#allocation5 + $0x320] sm:$0xff]
        %v4136 = vld [vmem:[#allocation5 + $0x328] sm:$0xff]
        %v4137 = vld [vmem:[#allocation5 + $0x330] sm:$0xff]
        %v4138 = vld [vmem:[#allocation5 + $0x338] sm:$0xf]
        %v4139 = vld [vmem:[#allocation5 + $0x33c] sm:$0xff]
        %v4140 = vld [vmem:[#allocation5 + $0x344] sm:$0xff]
        %v4141 = vld [vmem:[#allocation5 + $0x34c] sm:$0xff]
        %v4142 = vld [vmem:[#allocation5 + $0x354] sm:$0xff]
        %v4143 = vld [vmem:[#allocation5 + $0x35c] sm:$0xf]
        %v4144 = vld [vmem:[#allocation5 + $0x360] sm:$0xff]
        %v4145 = vld [vmem:[#allocation5 + $0x368] sm:$0xff]
        %v4146 = vld [vmem:[#allocation5 + $0x370] sm:$0xff]
        %v4147 = vld [vmem:[#allocation5 + $0x378] sm:$0xff]
        %v4148 = vld [vmem:[#allocation5 + $0x380] sm:$0xf]
        %v4149 = vld [vmem:[#allocation5 + $0x384] sm:$0xff]
        %v4150 = vld [vmem:[#allocation5 + $0x38c] sm:$0xff]
        %v4151 = vld [vmem:[#allocation5 + $0x394] sm:$0xff]
        %v4152 = vld [vmem:[#allocation5 + $0x39c] sm:$0xff]
        %v4153 = vld [vmem:[#allocation5 + $0x3a4] sm:$0xf]
        %v4154 = vld [vmem:[#allocation5 + $0x3a8] sm:$0xff]
        %v4155 = vld [vmem:[#allocation5 + $0x3b0] sm:$0xff]
        %v4156 = vld [vmem:[#allocation5 + $0x3b8] sm:$0xff]
        %v4157 = vld [vmem:[#allocation5 + $0x3c0] sm:$0xff]
        %v4158 = vld [vmem:[#allocation5 + $0x3c8] sm:$0xf]
        %v4159 = vld [vmem:[#allocation5 + $0x3cc] sm:$0xff]
        %v4160 = vld [vmem:[#allocation5 + $0x3d4] sm:$0xff]
        %v4161 = vld [vmem:[#allocation5 + $0x3dc] sm:$0xff]
        %v4162 = vld [vmem:[#allocation5 + $0x3e4] sm:$0xff]
        %v4163 = vld [vmem:[#allocation5 + $0x3ec] sm:$0xf]
        %v4164 = vld [vmem:[#allocation5 + $0x3f0] sm:$0xff]
        %v4165 = vld [vmem:[#allocation5 + $0x3f8] sm:$0xff]
        %v4166 = vld [vmem:[#allocation5 + $0x400] sm:$0xff]
        %v4167 = vld [vmem:[#allocation5 + $0x408] sm:$0xff]
        %v4168 = vld [vmem:[#allocation5 + $0x410] sm:$0xf]
        %v4169 = vld [vmem:[#allocation5 + $0x414] sm:$0xff]
        %v4170 = vld [vmem:[#allocation5 + $0x41c] sm:$0xff]
        %v4171 = vld [vmem:[#allocation5 + $0x424] sm:$0xff]
        %v4172 = vld [vmem:[#allocation5 + $0x42c] sm:$0xff]
        %v4173 = vld [vmem:[#allocation5 + $0x434] sm:$0xf]
        %v4174 = vld [vmem:[#allocation5 + $0x438] sm:$0xff]
        %v4175 = vld [vmem:[#allocation5 + $0x440] sm:$0xff]
        %v4176 = vld [vmem:[#allocation5 + $0x448] sm:$0xff]
        %v4177 = vld [vmem:[#allocation5 + $0x450] sm:$0xff]
        %v4178 = vld [vmem:[#allocation5 + $0x458] sm:$0xf]
        %v4179 = vld [vmem:[#allocation5 + $0x45c] sm:$0xff]
        %v4180 = vld [vmem:[#allocation5 + $0x464] sm:$0xff]
        %v4181 = vld [vmem:[#allocation5 + $0x46c] sm:$0xff]
        %v4182 = vld [vmem:[#allocation5 + $0x474] sm:$0xff]
        %v4183 = vld [vmem:[#allocation5 + $0x47c] sm:$0xf]
        %v4184 = vld [vmem:[%s3] sm:$0xf]
        %v4185 = vld [vmem:[%s3 + $0x4] sm:$0xf]
        %v4186 = vld [vmem:[%s3 + $0x8] sm:$0xf]
        %v4187 = vld [vmem:[%s3 + $0xc] sm:$0xf]
        %v4188 = vld [vmem:[%s3 + $0x10] sm:$0xf]
        %v4189 = vld [vmem:[%s3 + $0x14] sm:$0xf]
        %v4190 = vld [vmem:[%s3 + $0x18] sm:$0xf]
        %v4191 = vld [vmem:[%s3 + $0x1c] sm:$0xf]
        %v4192 = vld [vmem:[%s3 + $0x20] sm:$0xf]
        %v4193 = vld [vmem:[%s3 + $0x24] sm:$0xf]
        %v4194 = vld [vmem:[%s3 + $0x28] sm:$0xf]
        %v4195 = vld [vmem:[%s3 + $0x2c] sm:$0xf]
        %v4196 = vld [vmem:[%s3 + $0x30] sm:$0xf]
        %v4197 = vld [vmem:[%s3 + $0x34] sm:$0xf]
        %v4198 = vld [vmem:[%s3 + $0x38] sm:$0xf]
        %v4199 = vld [vmem:[%s3 + $0x3c] sm:$0xf]
        %v4200 = vld [vmem:[%s3 + $0x40] sm:$0xf]
        %v4201 = vld [vmem:[%s3 + $0x44] sm:$0xf]
        %v4202 = vld [vmem:[%s3 + $0x48] sm:$0xf]
        %v4203 = vld [vmem:[%s3 + $0x4c] sm:$0xf]
        %v4204 = vld [vmem:[%s3 + $0x50] sm:$0xf]
        %v4205 = vld [vmem:[%s3 + $0x54] sm:$0xf]
        %v4206 = vld [vmem:[%s3 + $0x58] sm:$0xf]
        %v4207 = vld [vmem:[%s3 + $0x5c] sm:$0xf]
        %v4208 = vld [vmem:[%s3 + $0x60] sm:$0xf]
        %v4209 = vld [vmem:[%s3 + $0x64] sm:$0xf]
        %v4210 = vld [vmem:[%s3 + $0x68] sm:$0xf]
        %v4211 = vld [vmem:[%s3 + $0x6c] sm:$0xf]
        %v4212 = vld [vmem:[%s3 + $0x70] sm:$0xf]
        %v4213 = vld [vmem:[%s3 + $0x74] sm:$0xf]
        %v4214 = vld [vmem:[%s3 + $0x78] sm:$0xf]
        %v4215 = vld [vmem:[%s3 + $0x7c] sm:$0xf]
        %v4216 = vld [vmem:[%s3 + $0x80] sm:$0xf]
        %v4217 = vld [vmem:[%s3 + $0x84] sm:$0xf]
        %v4218 = vld [vmem:[%s3 + $0x88] sm:$0xf]
        %v4219 = vld [vmem:[%s3 + $0x8c] sm:$0xf]
        %v4220 = vld [vmem:[%s3 + $0x90] sm:$0xf]
        %v4221 = vld [vmem:[%s3 + $0x94] sm:$0xf]
        %v4222 = vld [vmem:[%s3 + $0x98] sm:$0xf]
        %v4223 = vld [vmem:[%s3 + $0x9c] sm:$0xf]
        %v4224 = vld [vmem:[%s3 + $0xa0] sm:$0xf]
        %v4225 = vld [vmem:[%s3 + $0xa4] sm:$0xf]
        %v4226 = vld [vmem:[%s3 + $0xa8] sm:$0xf]
        %v4227 = vld [vmem:[%s3 + $0xac] sm:$0xf]
        %v4228 = vld [vmem:[%s3 + $0xb0] sm:$0xf]
        %v4229 = vld [vmem:[%s3 + $0xb4] sm:$0xf]
        %v4230 = vld [vmem:[%s3 + $0xb8] sm:$0xf]
        %v4231 = vld [vmem:[%s3 + $0xbc] sm:$0xf]
        %v4232 = vld [vmem:[%s3 + $0xc0] sm:$0xf]
        %v4233 = vld [vmem:[%s3 + $0xc4] sm:$0xf]
        %v4234 = vld [vmem:[%s3 + $0xc8] sm:$0xf]
        %v4235 = vld [vmem:[%s3 + $0xcc] sm:$0xf]
        %v4236 = vld [vmem:[%s3 + $0xd0] sm:$0xf]
        %v4237 = vld [vmem:[%s3 + $0xd4] sm:$0xf]
        %v4238 = vld [vmem:[%s3 + $0xd8] sm:$0xf]
        %v4239 = vld [vmem:[%s3 + $0xdc] sm:$0xf]
        %v4240 = vld [vmem:[%s3 + $0xe0] sm:$0xf]
        %v4241 = vld [vmem:[%s3 + $0xe4] sm:$0xf]
        %v4242 = vld [vmem:[%s3 + $0xe8] sm:$0xf]
        %v4243 = vld [vmem:[%s3 + $0xec] sm:$0xf]
        %v4244 = vld [vmem:[%s3 + $0xf0] sm:$0xf]
        %v4245 = vld [vmem:[%s3 + $0xf4] sm:$0xf]
        %v4246 = vld [vmem:[%s3 + $0xf8] sm:$0xf]
        %v4247 = vld [vmem:[%s3 + $0xfc] sm:$0xf]
        %v4248 = vld [vmem:[%s3 + $0x100] sm:$0xf]
        %v4249 = vld [vmem:[%s3 + $0x104] sm:$0xf]
        %v4250 = vld [vmem:[%s3 + $0x108] sm:$0xf]
        %v4251 = vld [vmem:[%s3 + $0x10c] sm:$0xf]
        %v4252 = vld [vmem:[%s3 + $0x110] sm:$0xf]
        %v4253 = vld [vmem:[%s3 + $0x114] sm:$0xf]
        %v4254 = vld [vmem:[%s3 + $0x118] sm:$0xf]
        %v4255 = vld [vmem:[%s3 + $0x11c] sm:$0xf]
        %v4256 = vld [vmem:[%s3 + $0x120] sm:$0xf]
        %v4257 = vld [vmem:[%s3 + $0x124] sm:$0xf]
        %v4258 = vld [vmem:[%s3 + $0x128] sm:$0xf]
        %v4259 = vld [vmem:[%s3 + $0x12c] sm:$0xf]
        %v4260 = vld [vmem:[%s3 + $0x130] sm:$0xf]
        %v4261 = vld [vmem:[%s3 + $0x134] sm:$0xf]
        %v4262 = vld [vmem:[%s3 + $0x138] sm:$0xf]
        %v4263 = vld [vmem:[%s3 + $0x13c] sm:$0xf]
        %v4264 = vld [vmem:[%s3 + $0x140] sm:$0xf]
        %v4265 = vld [vmem:[%s3 + $0x144] sm:$0xf]
        %v4266 = vld [vmem:[%s3 + $0x148] sm:$0xf]
        %v4267 = vld [vmem:[%s3 + $0x14c] sm:$0xf]
        %v4268 = vld [vmem:[%s3 + $0x150] sm:$0xf]
        %v4269 = vld [vmem:[%s3 + $0x154] sm:$0xf]
        %v4270 = vld [vmem:[%s3 + $0x158] sm:$0xf]
        %v4271 = vld [vmem:[%s3 + $0x15c] sm:$0xf]
        %v4272 = vld [vmem:[%s3 + $0x160] sm:$0xf]
        %v4273 = vld [vmem:[%s3 + $0x164] sm:$0xf]
        %v4274 = vld [vmem:[%s3 + $0x168] sm:$0xf]
        %v4275 = vld [vmem:[%s3 + $0x16c] sm:$0xf]
        %v4276 = vld [vmem:[%s3 + $0x170] sm:$0xf]
        %v4277 = vld [vmem:[%s3 + $0x174] sm:$0xf]
        %v4278 = vld [vmem:[%s3 + $0x178] sm:$0xf]
        %v4279 = vld [vmem:[%s3 + $0x17c] sm:$0xf]
        %v4280 = vld [vmem:[%s3 + $0x180] sm:$0xf]
        %v4281 = vld [vmem:[%s3 + $0x184] sm:$0xf]
        %v4282 = vld [vmem:[%s3 + $0x188] sm:$0xf]
        %v4283 = vld [vmem:[%s3 + $0x18c] sm:$0xf]
        %v4284 = vld [vmem:[%s3 + $0x190] sm:$0xf]
        %v4285 = vld [vmem:[%s3 + $0x194] sm:$0xf]
        %v4286 = vld [vmem:[%s3 + $0x198] sm:$0xf]
        %v4287 = vld [vmem:[%s3 + $0x19c] sm:$0xf]
        %v4288 = vld [vmem:[%s3 + $0x1a0] sm:$0xf]
        %v4289 = vld [vmem:[%s3 + $0x1a4] sm:$0xf]
        %v4290 = vld [vmem:[%s3 + $0x1a8] sm:$0xf]
        %v4291 = vld [vmem:[%s3 + $0x1ac] sm:$0xf]
        %v4292 = vld [vmem:[%s3 + $0x1b0] sm:$0xf]
        %v4293 = vld [vmem:[%s3 + $0x1b4] sm:$0xf]
        %v4294 = vld [vmem:[%s3 + $0x1b8] sm:$0xf]
        %v4295 = vld [vmem:[%s3 + $0x1bc] sm:$0xf]
        %v4296 = vld [vmem:[%s3 + $0x1c0] sm:$0xf]
        %v4297 = vld [vmem:[%s3 + $0x1c4] sm:$0xf]
        %v4298 = vld [vmem:[%s3 + $0x1c8] sm:$0xf]
        %v4299 = vld [vmem:[%s3 + $0x1cc] sm:$0xf]
        %v4300 = vld [vmem:[%s3 + $0x1d0] sm:$0xf]
        %v4301 = vld [vmem:[%s3 + $0x1d4] sm:$0xf]
        %v4302 = vld [vmem:[%s3 + $0x1d8] sm:$0xf]
        %v4303 = vld [vmem:[%s3 + $0x1dc] sm:$0xf]
        %v4304 = vld [vmem:[%s3 + $0x1e0] sm:$0xf]
        %v4305 = vld [vmem:[%s3 + $0x1e4] sm:$0xf]
        %v4306 = vld [vmem:[%s3 + $0x1e8] sm:$0xf]
        %v4307 = vld [vmem:[%s3 + $0x1ec] sm:$0xf]
        %v4308 = vld [vmem:[%s3 + $0x1f0] sm:$0xf]
        %v4309 = vld [vmem:[%s3 + $0x1f4] sm:$0xf]
        %v4310 = vld [vmem:[%s3 + $0x1f8] sm:$0xf]
        %v4311 = vld [vmem:[%s3 + $0x1fc] sm:$0xf]
        %v4312 = vld [vmem:[%s3 + $0x200] sm:$0xf]
        %v4313 = vld [vmem:[%s3 + $0x204] sm:$0xf]
        %v4314 = vld [vmem:[%s3 + $0x208] sm:$0xf]
        %v4315 = vld [vmem:[%s3 + $0x20c] sm:$0xf]
        %v4316 = vld [vmem:[%s3 + $0x210] sm:$0xf]
        %v4317 = vld [vmem:[%s3 + $0x214] sm:$0xf]
        %v4318 = vld [vmem:[%s3 + $0x218] sm:$0xf]
        %v4319 = vld [vmem:[%s3 + $0x21c] sm:$0xf]
        %v4320 = vld [vmem:[%s3 + $0x220] sm:$0xf]
        %v4321 = vld [vmem:[%s3 + $0x224] sm:$0xf]
        %v4322 = vld [vmem:[%s3 + $0x228] sm:$0xf]
        %v4323 = vld [vmem:[%s3 + $0x22c] sm:$0xf]
        %v4324 = vld [vmem:[%s3 + $0x230] sm:$0xf]
        %v4325 = vld [vmem:[%s3 + $0x234] sm:$0xf]
        %v4326 = vld [vmem:[%s3 + $0x238] sm:$0xf]
        %v4327 = vld [vmem:[%s3 + $0x23c] sm:$0xf]
        %v4328 = vld [vmem:[%s4] sm:$0x1]
        %v4330 = vperm.slane %v4328, 0
        %v4492 = vunpack.c.l.b16 %v4024
        %v4493 = vunpack.c.h.b16 %v4024
        %v4494 = vunpack.c.l.b16 %v4025
        %v4495 = vunpack.c.h.b16 %v4025
        %v4496 = vunpack.c.l.b16 %v4026
        %v4497 = vunpack.c.h.b16 %v4026
        %v4498 = vunpack.c.l.b16 %v4027
        %v4499 = vunpack.c.h.b16 %v4027
        %v4500 = vunpack.c.l.b16 %v4028
        %v4501 = vunpack.c.l.b16 %v4029
        %v4502 = vunpack.c.h.b16 %v4029
        %v4503 = vunpack.c.l.b16 %v4030
        %v4504 = vunpack.c.h.b16 %v4030
        %v4505 = vunpack.c.l.b16 %v4031
        %v4506 = vunpack.c.h.b16 %v4031
        %v4507 = vunpack.c.l.b16 %v4032
        %v4508 = vunpack.c.h.b16 %v4032
        %v4509 = vunpack.c.l.b16 %v4033
        %v4510 = vunpack.c.l.b16 %v4034
        %v4511 = vunpack.c.h.b16 %v4034
        %v4512 = vunpack.c.l.b16 %v4035
        %v4513 = vunpack.c.h.b16 %v4035
        %v4514 = vunpack.c.l.b16 %v4036
        %v4515 = vunpack.c.h.b16 %v4036
        %v4516 = vunpack.c.l.b16 %v4037
        %v4517 = vunpack.c.h.b16 %v4037
        %v4518 = vunpack.c.l.b16 %v4038
        %v4519 = vunpack.c.l.b16 %v4039
        %v4520 = vunpack.c.h.b16 %v4039
        %v4521 = vunpack.c.l.b16 %v4040
        %v4522 = vunpack.c.h.b16 %v4040
        %v4523 = vunpack.c.l.b16 %v4041
        %v4524 = vunpack.c.h.b16 %v4041
        %v4525 = vunpack.c.l.b16 %v4042
        %v4526 = vunpack.c.h.b16 %v4042
        %v4527 = vunpack.c.l.b16 %v4043
        %v4528 = vunpack.c.l.b16 %v4044
        %v4529 = vunpack.c.h.b16 %v4044
        %v4530 = vunpack.c.l.b16 %v4045
        %v4531 = vunpack.c.h.b16 %v4045
        %v4532 = vunpack.c.l.b16 %v4046
        %v4533 = vunpack.c.h.b16 %v4046
        %v4534 = vunpack.c.l.b16 %v4047
        %v4535 = vunpack.c.h.b16 %v4047
        %v4536 = vunpack.c.l.b16 %v4048
        %v4537 = vunpack.c.l.b16 %v4049
        %v4538 = vunpack.c.h.b16 %v4049
        %v4539 = vunpack.c.l.b16 %v4050
        %v4540 = vunpack.c.h.b16 %v4050
        %v4541 = vunpack.c.l.b16 %v4051
        %v4542 = vunpack.c.h.b16 %v4051
        %v4543 = vunpack.c.l.b16 %v4052
        %v4544 = vunpack.c.h.b16 %v4052
        %v4545 = vunpack.c.l.b16 %v4053
        %v4546 = vunpack.c.l.b16 %v4054
        %v4547 = vunpack.c.h.b16 %v4054
        %v4548 = vunpack.c.l.b16 %v4055
        %v4549 = vunpack.c.h.b16 %v4055
        %v4550 = vunpack.c.l.b16 %v4056
        %v4551 = vunpack.c.h.b16 %v4056
        %v4552 = vunpack.c.l.b16 %v4057
        %v4553 = vunpack.c.h.b16 %v4057
        %v4554 = vunpack.c.l.b16 %v4058
        %v4555 = vunpack.c.l.b16 %v4059
        %v4556 = vunpack.c.h.b16 %v4059
        %v4557 = vunpack.c.l.b16 %v4060
        %v4558 = vunpack.c.h.b16 %v4060
        %v4559 = vunpack.c.l.b16 %v4061
        %v4560 = vunpack.c.h.b16 %v4061
        %v4561 = vunpack.c.l.b16 %v4062
        %v4562 = vunpack.c.h.b16 %v4062
        %v4563 = vunpack.c.l.b16 %v4063
        %v4564 = vunpack.c.l.b16 %v4064
        %v4565 = vunpack.c.h.b16 %v4064
        %v4566 = vunpack.c.l.b16 %v4065
        %v4567 = vunpack.c.h.b16 %v4065
        %v4568 = vunpack.c.l.b16 %v4066
        %v4569 = vunpack.c.h.b16 %v4066
        %v4570 = vunpack.c.l.b16 %v4067
        %v4571 = vunpack.c.h.b16 %v4067
        %v4572 = vunpack.c.l.b16 %v4068
        %v4573 = vunpack.c.l.b16 %v4069
        %v4574 = vunpack.c.h.b16 %v4069
        %v4575 = vunpack.c.l.b16 %v4070
        %v4576 = vunpack.c.h.b16 %v4070
        %v4577 = vunpack.c.l.b16 %v4071
        %v4578 = vunpack.c.h.b16 %v4071
        %v4579 = vunpack.c.l.b16 %v4072
        %v4580 = vunpack.c.h.b16 %v4072
        %v4581 = vunpack.c.l.b16 %v4073
        %v4582 = vunpack.c.l.b16 %v4074
        %v4583 = vunpack.c.h.b16 %v4074
        %v4584 = vunpack.c.l.b16 %v4075
        %v4585 = vunpack.c.h.b16 %v4075
        %v4586 = vunpack.c.l.b16 %v4076
        %v4587 = vunpack.c.h.b16 %v4076
        %v4588 = vunpack.c.l.b16 %v4077
        %v4589 = vunpack.c.h.b16 %v4077
        %v4590 = vunpack.c.l.b16 %v4078
        %v4591 = vunpack.c.l.b16 %v4079
        %v4592 = vunpack.c.h.b16 %v4079
        %v4593 = vunpack.c.l.b16 %v4080
        %v4594 = vunpack.c.h.b16 %v4080
        %v4595 = vunpack.c.l.b16 %v4081
        %v4596 = vunpack.c.h.b16 %v4081
        %v4597 = vunpack.c.l.b16 %v4082
        %v4598 = vunpack.c.h.b16 %v4082
        %v4599 = vunpack.c.l.b16 %v4083
        %v4600 = vunpack.c.l.b16 %v4084
        %v4601 = vunpack.c.h.b16 %v4084
        %v4602 = vunpack.c.l.b16 %v4085
        %v4603 = vunpack.c.h.b16 %v4085
        %v4604 = vunpack.c.l.b16 %v4086
        %v4605 = vunpack.c.h.b16 %v4086
        %v4606 = vunpack.c.l.b16 %v4087
        %v4607 = vunpack.c.h.b16 %v4087
        %v4608 = vunpack.c.l.b16 %v4088
        %v4609 = vunpack.c.l.b16 %v4089
        %v4610 = vunpack.c.h.b16 %v4089
        %v4611 = vunpack.c.l.b16 %v4090
        %v4612 = vunpack.c.h.b16 %v4090
        %v4613 = vunpack.c.l.b16 %v4091
        %v4614 = vunpack.c.h.b16 %v4091
        %v4615 = vunpack.c.l.b16 %v4092
        %v4616 = vunpack.c.h.b16 %v4092
        %v4617 = vunpack.c.l.b16 %v4093
        %v4618 = vunpack.c.l.b16 %v4094
        %v4619 = vunpack.c.h.b16 %v4094
        %v4620 = vunpack.c.l.b16 %v4095
        %v4621 = vunpack.c.h.b16 %v4095
        %v4622 = vunpack.c.l.b16 %v4096
        %v4623 = vunpack.c.h.b16 %v4096
        %v4624 = vunpack.c.l.b16 %v4097
        %v4625 = vunpack.c.h.b16 %v4097
        %v4626 = vunpack.c.l.b16 %v4098
        %v4627 = vunpack.c.l.b16 %v4099
        %v4628 = vunpack.c.h.b16 %v4099
        %v4629 = vunpack.c.l.b16 %v4100
        %v4630 = vunpack.c.h.b16 %v4100
        %v4631 = vunpack.c.l.b16 %v4101
        %v4632 = vunpack.c.h.b16 %v4101
        %v4633 = vunpack.c.l.b16 %v4102
        %v4634 = vunpack.c.h.b16 %v4102
        %v4635 = vunpack.c.l.b16 %v4103
        %v4636 = vunpack.c.l.b16 %v4104
        %v4637 = vunpack.c.h.b16 %v4104
        %v4638 = vunpack.c.l.b16 %v4105
        %v4639 = vunpack.c.h.b16 %v4105
        %v4640 = vunpack.c.l.b16 %v4106
        %v4641 = vunpack.c.h.b16 %v4106
        %v4642 = vunpack.c.l.b16 %v4107
        %v4643 = vunpack.c.h.b16 %v4107
        %v4644 = vunpack.c.l.b16 %v4108
        %v4645 = vunpack.c.l.b16 %v4109
        %v4646 = vunpack.c.h.b16 %v4109
        %v4647 = vunpack.c.l.b16 %v4110
        %v4648 = vunpack.c.h.b16 %v4110
        %v4649 = vunpack.c.l.b16 %v4111
        %v4650 = vunpack.c.h.b16 %v4111
        %v4651 = vunpack.c.l.b16 %v4112
        %v4652 = vunpack.c.h.b16 %v4112
        %v4653 = vunpack.c.l.b16 %v4113
        %v4654 = vunpack.c.l.b16 %v4114
        %v4655 = vunpack.c.h.b16 %v4114
        %v4656 = vunpack.c.l.b16 %v4115
        %v4657 = vunpack.c.h.b16 %v4115
        %v4658 = vunpack.c.l.b16 %v4116
        %v4659 = vunpack.c.h.b16 %v4116
        %v4660 = vunpack.c.l.b16 %v4117
        %v4661 = vunpack.c.h.b16 %v4117
        %v4662 = vunpack.c.l.b16 %v4118
        %v4663 = vunpack.c.l.b16 %v4119
        %v4664 = vunpack.c.h.b16 %v4119
        %v4665 = vunpack.c.l.b16 %v4120
        %v4666 = vunpack.c.h.b16 %v4120
        %v4667 = vunpack.c.l.b16 %v4121
        %v4668 = vunpack.c.h.b16 %v4121
        %v4669 = vunpack.c.l.b16 %v4122
        %v4670 = vunpack.c.h.b16 %v4122
        %v4671 = vunpack.c.l.b16 %v4123
        %v4672 = vunpack.c.l.b16 %v4124
        %v4673 = vunpack.c.h.b16 %v4124
        %v4674 = vunpack.c.l.b16 %v4125
        %v4675 = vunpack.c.h.b16 %v4125
        %v4676 = vunpack.c.l.b16 %v4126
        %v4677 = vunpack.c.h.b16 %v4126
        %v4678 = vunpack.c.l.b16 %v4127
        %v4679 = vunpack.c.h.b16 %v4127
        %v4680 = vunpack.c.l.b16 %v4128
        %v4681 = vunpack.c.l.b16 %v4129
        %v4682 = vunpack.c.h.b16 %v4129
        %v4683 = vunpack.c.l.b16 %v4130
        %v4684 = vunpack.c.h.b16 %v4130
        %v4685 = vunpack.c.l.b16 %v4131
        %v4686 = vunpack.c.h.b16 %v4131
        %v4687 = vunpack.c.l.b16 %v4132
        %v4688 = vunpack.c.h.b16 %v4132
        %v4689 = vunpack.c.l.b16 %v4133
        %v4690 = vunpack.c.l.b16 %v4134
        %v4691 = vunpack.c.h.b16 %v4134
        %v4692 = vunpack.c.l.b16 %v4135
        %v4693 = vunpack.c.h.b16 %v4135
        %v4694 = vunpack.c.l.b16 %v4136
        %v4695 = vunpack.c.h.b16 %v4136
        %v4696 = vunpack.c.l.b16 %v4137
        %v4697 = vunpack.c.h.b16 %v4137
        %v4698 = vunpack.c.l.b16 %v4138
        %v4699 = vunpack.c.l.b16 %v4139
        %v4700 = vunpack.c.h.b16 %v4139
        %v4701 = vunpack.c.l.b16 %v4140
        %v4702 = vunpack.c.h.b16 %v4140
        %v4703 = vunpack.c.l.b16 %v4141
        %v4704 = vunpack.c.h.b16 %v4141
        %v4705 = vunpack.c.l.b16 %v4142
        %v4706 = vunpack.c.h.b16 %v4142
        %v4707 = vunpack.c.l.b16 %v4143
        %v4708 = vunpack.c.l.b16 %v4144
        %v4709 = vunpack.c.h.b16 %v4144
        %v4710 = vunpack.c.l.b16 %v4145
        %v4711 = vunpack.c.h.b16 %v4145
        %v4712 = vunpack.c.l.b16 %v4146
        %v4713 = vunpack.c.h.b16 %v4146
        %v4714 = vunpack.c.l.b16 %v4147
        %v4715 = vunpack.c.h.b16 %v4147
        %v4716 = vunpack.c.l.b16 %v4148
        %v4717 = vunpack.c.l.b16 %v4149
        %v4718 = vunpack.c.h.b16 %v4149
        %v4719 = vunpack.c.l.b16 %v4150
        %v4720 = vunpack.c.h.b16 %v4150
        %v4721 = vunpack.c.l.b16 %v4151
        %v4722 = vunpack.c.h.b16 %v4151
        %v4723 = vunpack.c.l.b16 %v4152
        %v4724 = vunpack.c.h.b16 %v4152
        %v4725 = vunpack.c.l.b16 %v4153
        %v4726 = vunpack.c.l.b16 %v4154
        %v4727 = vunpack.c.h.b16 %v4154
        %v4728 = vunpack.c.l.b16 %v4155
        %v4729 = vunpack.c.h.b16 %v4155
        %v4730 = vunpack.c.l.b16 %v4156
        %v4731 = vunpack.c.h.b16 %v4156
        %v4732 = vunpack.c.l.b16 %v4157
        %v4733 = vunpack.c.h.b16 %v4157
        %v4734 = vunpack.c.l.b16 %v4158
        %v4735 = vunpack.c.l.b16 %v4159
        %v4736 = vunpack.c.h.b16 %v4159
        %v4737 = vunpack.c.l.b16 %v4160
        %v4738 = vunpack.c.h.b16 %v4160
        %v4739 = vunpack.c.l.b16 %v4161
        %v4740 = vunpack.c.h.b16 %v4161
        %v4741 = vunpack.c.l.b16 %v4162
        %v4742 = vunpack.c.h.b16 %v4162
        %v4743 = vunpack.c.l.b16 %v4163
        %v4744 = vunpack.c.l.b16 %v4164
        %v4745 = vunpack.c.h.b16 %v4164
        %v4746 = vunpack.c.l.b16 %v4165
        %v4747 = vunpack.c.h.b16 %v4165
        %v4748 = vunpack.c.l.b16 %v4166
        %v4749 = vunpack.c.h.b16 %v4166
        %v4750 = vunpack.c.l.b16 %v4167
        %v4751 = vunpack.c.h.b16 %v4167
        %v4752 = vunpack.c.l.b16 %v4168
        %v4753 = vunpack.c.l.b16 %v4169
        %v4754 = vunpack.c.h.b16 %v4169
        %v4755 = vunpack.c.l.b16 %v4170
        %v4756 = vunpack.c.h.b16 %v4170
        %v4757 = vunpack.c.l.b16 %v4171
        %v4758 = vunpack.c.h.b16 %v4171
        %v4759 = vunpack.c.l.b16 %v4172
        %v4760 = vunpack.c.h.b16 %v4172
        %v4761 = vunpack.c.l.b16 %v4173
        %v4762 = vunpack.c.l.b16 %v4174
        %v4763 = vunpack.c.h.b16 %v4174
        %v4764 = vunpack.c.l.b16 %v4175
        %v4765 = vunpack.c.h.b16 %v4175
        %v4766 = vunpack.c.l.b16 %v4176
        %v4767 = vunpack.c.h.b16 %v4176
        %v4768 = vunpack.c.l.b16 %v4177
        %v4769 = vunpack.c.h.b16 %v4177
        %v4770 = vunpack.c.l.b16 %v4178
        %v4771 = vunpack.c.l.b16 %v4179
        %v4772 = vunpack.c.h.b16 %v4179
        %v4773 = vunpack.c.l.b16 %v4180
        %v4774 = vunpack.c.h.b16 %v4180
        %v4775 = vunpack.c.l.b16 %v4181
        %v4776 = vunpack.c.h.b16 %v4181
        %v4777 = vunpack.c.l.b16 %v4182
        %v4778 = vunpack.c.h.b16 %v4182
        %v4779 = vunpack.c.l.b16 %v4183
        %v4780 = vpack.c.b16 %v4501, %v4492
        %v4781 = vpack.c.b16 %v4502, %v4493
        %v4782 = vpack.c.b16 %v4503, %v4494
        %v4783 = vpack.c.b16 %v4504, %v4495
        %v4784 = vpack.c.b16 %v4505, %v4496
        %v4785 = vpack.c.b16 %v4506, %v4497
        %v4786 = vpack.c.b16 %v4507, %v4498
        %v4787 = vpack.c.b16 %v4508, %v4499
        %v4788 = vpack.c.b16 %v4509, %v4500
        %v4789 = vpack.c.b16 %v4519, %v4510
        %v4790 = vpack.c.b16 %v4520, %v4511
        %v4791 = vpack.c.b16 %v4521, %v4512
        %v4792 = vpack.c.b16 %v4522, %v4513
        %v4793 = vpack.c.b16 %v4523, %v4514
        %v4794 = vpack.c.b16 %v4524, %v4515
        %v4795 = vpack.c.b16 %v4525, %v4516
        %v4796 = vpack.c.b16 %v4526, %v4517
        %v4797 = vpack.c.b16 %v4527, %v4518
        %v4798 = vpack.c.b16 %v4537, %v4528
        %v4799 = vpack.c.b16 %v4538, %v4529
        %v4800 = vpack.c.b16 %v4539, %v4530
        %v4801 = vpack.c.b16 %v4540, %v4531
        %v4802 = vpack.c.b16 %v4541, %v4532
        %v4803 = vpack.c.b16 %v4542, %v4533
        %v4804 = vpack.c.b16 %v4543, %v4534
        %v4805 = vpack.c.b16 %v4544, %v4535
        %v4806 = vpack.c.b16 %v4545, %v4536
        %v4807 = vpack.c.b16 %v4555, %v4546
        %v4808 = vpack.c.b16 %v4556, %v4547
        %v4809 = vpack.c.b16 %v4557, %v4548
        %v4810 = vpack.c.b16 %v4558, %v4549
        %v4811 = vpack.c.b16 %v4559, %v4550
        %v4812 = vpack.c.b16 %v4560, %v4551
        %v4813 = vpack.c.b16 %v4561, %v4552
        %v4814 = vpack.c.b16 %v4562, %v4553
        %v4815 = vpack.c.b16 %v4563, %v4554
        %v4816 = vpack.c.b16 %v4573, %v4564
        %v4817 = vpack.c.b16 %v4574, %v4565
        %v4818 = vpack.c.b16 %v4575, %v4566
        %v4819 = vpack.c.b16 %v4576, %v4567
        %v4820 = vpack.c.b16 %v4577, %v4568
        %v4821 = vpack.c.b16 %v4578, %v4569
        %v4822 = vpack.c.b16 %v4579, %v4570
        %v4823 = vpack.c.b16 %v4580, %v4571
        %v4824 = vpack.c.b16 %v4581, %v4572
        %v4825 = vpack.c.b16 %v4591, %v4582
        %v4826 = vpack.c.b16 %v4592, %v4583
        %v4827 = vpack.c.b16 %v4593, %v4584
        %v4828 = vpack.c.b16 %v4594, %v4585
        %v4829 = vpack.c.b16 %v4595, %v4586
        %v4830 = vpack.c.b16 %v4596, %v4587
        %v4831 = vpack.c.b16 %v4597, %v4588
        %v4832 = vpack.c.b16 %v4598, %v4589
        %v4833 = vpack.c.b16 %v4599, %v4590
        %v4834 = vpack.c.b16 %v4609, %v4600
        %v4835 = vpack.c.b16 %v4610, %v4601
        %v4836 = vpack.c.b16 %v4611, %v4602
        %v4837 = vpack.c.b16 %v4612, %v4603
        %v4838 = vpack.c.b16 %v4613, %v4604
        %v4839 = vpack.c.b16 %v4614, %v4605
        %v4840 = vpack.c.b16 %v4615, %v4606
        %v4841 = vpack.c.b16 %v4616, %v4607
        %v4842 = vpack.c.b16 %v4617, %v4608
        %v4843 = vpack.c.b16 %v4627, %v4618
        %v4844 = vpack.c.b16 %v4628, %v4619
        %v4845 = vpack.c.b16 %v4629, %v4620
        %v4846 = vpack.c.b16 %v4630, %v4621
        %v4847 = vpack.c.b16 %v4631, %v4622
        %v4848 = vpack.c.b16 %v4632, %v4623
        %v4849 = vpack.c.b16 %v4633, %v4624
        %v4850 = vpack.c.b16 %v4634, %v4625
        %v4851 = vpack.c.b16 %v4635, %v4626
        %v4852 = vpack.c.b16 %v4645, %v4636
        %v4853 = vpack.c.b16 %v4646, %v4637
        %v4854 = vpack.c.b16 %v4647, %v4638
        %v4855 = vpack.c.b16 %v4648, %v4639
        %v4856 = vpack.c.b16 %v4649, %v4640
        %v4857 = vpack.c.b16 %v4650, %v4641
        %v4858 = vpack.c.b16 %v4651, %v4642
        %v4859 = vpack.c.b16 %v4652, %v4643
        %v4860 = vpack.c.b16 %v4653, %v4644
        %v4861 = vpack.c.b16 %v4663, %v4654
        %v4862 = vpack.c.b16 %v4664, %v4655
        %v4863 = vpack.c.b16 %v4665, %v4656
        %v4864 = vpack.c.b16 %v4666, %v4657
        %v4865 = vpack.c.b16 %v4667, %v4658
        %v4866 = vpack.c.b16 %v4668, %v4659
        %v4867 = vpack.c.b16 %v4669, %v4660
        %v4868 = vpack.c.b16 %v4670, %v4661
        %v4869 = vpack.c.b16 %v4671, %v4662
        %v4870 = vpack.c.b16 %v4681, %v4672
        %v4871 = vpack.c.b16 %v4682, %v4673
        %v4872 = vpack.c.b16 %v4683, %v4674
        %v4873 = vpack.c.b16 %v4684, %v4675
        %v4874 = vpack.c.b16 %v4685, %v4676
        %v4875 = vpack.c.b16 %v4686, %v4677
        %v4876 = vpack.c.b16 %v4687, %v4678
        %v4877 = vpack.c.b16 %v4688, %v4679
        %v4878 = vpack.c.b16 %v4689, %v4680
        %v4879 = vpack.c.b16 %v4699, %v4690
        %v4880 = vpack.c.b16 %v4700, %v4691
        %v4881 = vpack.c.b16 %v4701, %v4692
        %v4882 = vpack.c.b16 %v4702, %v4693
        %v4883 = vpack.c.b16 %v4703, %v4694
        %v4884 = vpack.c.b16 %v4704, %v4695
        %v4885 = vpack.c.b16 %v4705, %v4696
        %v4886 = vpack.c.b16 %v4706, %v4697
        %v4887 = vpack.c.b16 %v4707, %v4698
        %v4888 = vpack.c.b16 %v4717, %v4708
        %v4889 = vpack.c.b16 %v4718, %v4709
        %v4890 = vpack.c.b16 %v4719, %v4710
        %v4891 = vpack.c.b16 %v4720, %v4711
        %v4892 = vpack.c.b16 %v4721, %v4712
        %v4893 = vpack.c.b16 %v4722, %v4713
        %v4894 = vpack.c.b16 %v4723, %v4714
        %v4895 = vpack.c.b16 %v4724, %v4715
        %v4896 = vpack.c.b16 %v4725, %v4716
        %v4897 = vpack.c.b16 %v4735, %v4726
        %v4898 = vpack.c.b16 %v4736, %v4727
        %v4899 = vpack.c.b16 %v4737, %v4728
        %v4900 = vpack.c.b16 %v4738, %v4729
        %v4901 = vpack.c.b16 %v4739, %v4730
        %v4902 = vpack.c.b16 %v4740, %v4731
        %v4903 = vpack.c.b16 %v4741, %v4732
        %v4904 = vpack.c.b16 %v4742, %v4733
        %v4905 = vpack.c.b16 %v4743, %v4734
        %v4906 = vpack.c.b16 %v4753, %v4744
        %v4907 = vpack.c.b16 %v4754, %v4745
        %v4908 = vpack.c.b16 %v4755, %v4746
        %v4909 = vpack.c.b16 %v4756, %v4747
        %v4910 = vpack.c.b16 %v4757, %v4748
        %v4911 = vpack.c.b16 %v4758, %v4749
        %v4912 = vpack.c.b16 %v4759, %v4750
        %v4913 = vpack.c.b16 %v4760, %v4751
        %v4914 = vpack.c.b16 %v4761, %v4752
        %v4915 = vpack.c.b16 %v4771, %v4762
        %v4916 = vpack.c.b16 %v4772, %v4763
        %v4917 = vpack.c.b16 %v4773, %v4764
        %v4918 = vpack.c.b16 %v4774, %v4765
        %v4919 = vpack.c.b16 %v4775, %v4766
        %v4920 = vpack.c.b16 %v4776, %v4767
        %v4921 = vpack.c.b16 %v4777, %v4768
        %v4922 = vpack.c.b16 %v4778, %v4769
        %v4923 = vpack.c.b16 %v4779, %v4770
        %v5212 = vunpack.c.l.b16 %v4184
        %v5213 = vunpack.c.l.b16 %v4185
        %v5214 = vunpack.c.l.b16 %v4186
        %v5215 = vunpack.c.l.b16 %v4187
        %v5216 = vunpack.c.l.b16 %v4188
        %v5217 = vunpack.c.l.b16 %v4189
        %v5218 = vunpack.c.l.b16 %v4190
        %v5219 = vunpack.c.l.b16 %v4191
        %v5220 = vunpack.c.l.b16 %v4192
        %v5221 = vunpack.c.l.b16 %v4193
        %v5222 = vunpack.c.l.b16 %v4194
        %v5223 = vunpack.c.l.b16 %v4195
        %v5224 = vunpack.c.l.b16 %v4196
        %v5225 = vunpack.c.l.b16 %v4197
        %v5226 = vunpack.c.l.b16 %v4198
        %v5227 = vunpack.c.l.b16 %v4199
        %v5228 = vunpack.c.l.b16 %v4200
        %v5229 = vunpack.c.l.b16 %v4201
        %v5230 = vunpack.c.l.b16 %v4202
        %v5231 = vunpack.c.l.b16 %v4203
        %v5232 = vunpack.c.l.b16 %v4204
        %v5233 = vunpack.c.l.b16 %v4205
        %v5234 = vunpack.c.l.b16 %v4206
        %v5235 = vunpack.c.l.b16 %v4207
        %v5236 = vunpack.c.l.b16 %v4208
        %v5237 = vunpack.c.l.b16 %v4209
        %v5238 = vunpack.c.l.b16 %v4210
        %v5239 = vunpack.c.l.b16 %v4211
        %v5240 = vunpack.c.l.b16 %v4212
        %v5241 = vunpack.c.l.b16 %v4213
        %v5242 = vunpack.c.l.b16 %v4214
        %v5243 = vunpack.c.l.b16 %v4215
        %v5244 = vunpack.c.l.b16 %v4216
        %v5245 = vunpack.c.l.b16 %v4217
        %v5246 = vunpack.c.l.b16 %v4218
        %v5247 = vunpack.c.l.b16 %v4219
        %v5248 = vunpack.c.l.b16 %v4220
        %v5249 = vunpack.c.l.b16 %v4221
        %v5250 = vunpack.c.l.b16 %v4222
        %v5251 = vunpack.c.l.b16 %v4223
        %v5252 = vunpack.c.l.b16 %v4224
        %v5253 = vunpack.c.l.b16 %v4225
        %v5254 = vunpack.c.l.b16 %v4226
        %v5255 = vunpack.c.l.b16 %v4227
        %v5256 = vunpack.c.l.b16 %v4228
        %v5257 = vunpack.c.l.b16 %v4229
        %v5258 = vunpack.c.l.b16 %v4230
        %v5259 = vunpack.c.l.b16 %v4231
        %v5260 = vunpack.c.l.b16 %v4232
        %v5261 = vunpack.c.l.b16 %v4233
        %v5262 = vunpack.c.l.b16 %v4234
        %v5263 = vunpack.c.l.b16 %v4235
        %v5264 = vunpack.c.l.b16 %v4236
        %v5265 = vunpack.c.l.b16 %v4237
        %v5266 = vunpack.c.l.b16 %v4238
        %v5267 = vunpack.c.l.b16 %v4239
        %v5268 = vunpack.c.l.b16 %v4240
        %v5269 = vunpack.c.l.b16 %v4241
        %v5270 = vunpack.c.l.b16 %v4242
        %v5271 = vunpack.c.l.b16 %v4243
        %v5272 = vunpack.c.l.b16 %v4244
        %v5273 = vunpack.c.l.b16 %v4245
        %v5274 = vunpack.c.l.b16 %v4246
        %v5275 = vunpack.c.l.b16 %v4247
        %v5276 = vunpack.c.l.b16 %v4248
        %v5277 = vunpack.c.l.b16 %v4249
        %v5278 = vunpack.c.l.b16 %v4250
        %v5279 = vunpack.c.l.b16 %v4251
        %v5280 = vunpack.c.l.b16 %v4252
        %v5281 = vunpack.c.l.b16 %v4253
        %v5282 = vunpack.c.l.b16 %v4254
        %v5283 = vunpack.c.l.b16 %v4255
        %v5284 = vunpack.c.l.b16 %v4256
        %v5285 = vunpack.c.l.b16 %v4257
        %v5286 = vunpack.c.l.b16 %v4258
        %v5287 = vunpack.c.l.b16 %v4259
        %v5288 = vunpack.c.l.b16 %v4260
        %v5289 = vunpack.c.l.b16 %v4261
        %v5290 = vunpack.c.l.b16 %v4262
        %v5291 = vunpack.c.l.b16 %v4263
        %v5292 = vunpack.c.l.b16 %v4264
        %v5293 = vunpack.c.l.b16 %v4265
        %v5294 = vunpack.c.l.b16 %v4266
        %v5295 = vunpack.c.l.b16 %v4267
        %v5296 = vunpack.c.l.b16 %v4268
        %v5297 = vunpack.c.l.b16 %v4269
        %v5298 = vunpack.c.l.b16 %v4270
        %v5299 = vunpack.c.l.b16 %v4271
        %v5300 = vunpack.c.l.b16 %v4272
        %v5301 = vunpack.c.l.b16 %v4273
        %v5302 = vunpack.c.l.b16 %v4274
        %v5303 = vunpack.c.l.b16 %v4275
        %v5304 = vunpack.c.l.b16 %v4276
        %v5305 = vunpack.c.l.b16 %v4277
        %v5306 = vunpack.c.l.b16 %v4278
        %v5307 = vunpack.c.l.b16 %v4279
        %v5308 = vunpack.c.l.b16 %v4280
        %v5309 = vunpack.c.l.b16 %v4281
        %v5310 = vunpack.c.l.b16 %v4282
        %v5311 = vunpack.c.l.b16 %v4283
        %v5312 = vunpack.c.l.b16 %v4284
        %v5313 = vunpack.c.l.b16 %v4285
        %v5314 = vunpack.c.l.b16 %v4286
        %v5315 = vunpack.c.l.b16 %v4287
        %v5316 = vunpack.c.l.b16 %v4288
        %v5317 = vunpack.c.l.b16 %v4289
        %v5318 = vunpack.c.l.b16 %v4290
        %v5319 = vunpack.c.l.b16 %v4291
        %v5320 = vunpack.c.l.b16 %v4292
        %v5321 = vunpack.c.l.b16 %v4293
        %v5322 = vunpack.c.l.b16 %v4294
        %v5323 = vunpack.c.l.b16 %v4295
        %v5324 = vunpack.c.l.b16 %v4296
        %v5325 = vunpack.c.l.b16 %v4297
        %v5326 = vunpack.c.l.b16 %v4298
        %v5327 = vunpack.c.l.b16 %v4299
        %v5328 = vunpack.c.l.b16 %v4300
        %v5329 = vunpack.c.l.b16 %v4301
        %v5330 = vunpack.c.l.b16 %v4302
        %v5331 = vunpack.c.l.b16 %v4303
        %v5332 = vunpack.c.l.b16 %v4304
        %v5333 = vunpack.c.l.b16 %v4305
        %v5334 = vunpack.c.l.b16 %v4306
        %v5335 = vunpack.c.l.b16 %v4307
        %v5336 = vunpack.c.l.b16 %v4308
        %v5337 = vunpack.c.l.b16 %v4309
        %v5338 = vunpack.c.l.b16 %v4310
        %v5339 = vunpack.c.l.b16 %v4311
        %v5340 = vunpack.c.l.b16 %v4312
        %v5341 = vunpack.c.l.b16 %v4313
        %v5342 = vunpack.c.l.b16 %v4314
        %v5343 = vunpack.c.l.b16 %v4315
        %v5344 = vunpack.c.l.b16 %v4316
        %v5345 = vunpack.c.l.b16 %v4317
        %v5346 = vunpack.c.l.b16 %v4318
        %v5347 = vunpack.c.l.b16 %v4319
        %v5348 = vunpack.c.l.b16 %v4320
        %v5349 = vunpack.c.l.b16 %v4321
        %v5350 = vunpack.c.l.b16 %v4322
        %v5351 = vunpack.c.l.b16 %v4323
        %v5352 = vunpack.c.l.b16 %v4324
        %v5353 = vunpack.c.l.b16 %v4325
        %v5354 = vunpack.c.l.b16 %v4326
        %v5355 = vunpack.c.l.b16 %v4327
        %v5356 = vpack.c.b16 %v5213, %v5212
        %v5357 = vpack.c.b16 %v5215, %v5214
        %v5358 = vpack.c.b16 %v5217, %v5216
        %v5359 = vpack.c.b16 %v5219, %v5218
        %v5360 = vpack.c.b16 %v5221, %v5220
        %v5361 = vpack.c.b16 %v5223, %v5222
        %v5362 = vpack.c.b16 %v5225, %v5224
        %v5363 = vpack.c.b16 %v5227, %v5226
        %v5364 = vpack.c.b16 %v5229, %v5228
        %v5365 = vpack.c.b16 %v5231, %v5230
        %v5366 = vpack.c.b16 %v5233, %v5232
        %v5367 = vpack.c.b16 %v5235, %v5234
        %v5368 = vpack.c.b16 %v5237, %v5236
        %v5369 = vpack.c.b16 %v5239, %v5238
        %v5370 = vpack.c.b16 %v5241, %v5240
        %v5371 = vpack.c.b16 %v5243, %v5242
        %v5372 = vpack.c.b16 %v5245, %v5244
        %v5373 = vpack.c.b16 %v5247, %v5246
        %v5374 = vpack.c.b16 %v5249, %v5248
        %v5375 = vpack.c.b16 %v5251, %v5250
        %v5376 = vpack.c.b16 %v5253, %v5252
        %v5377 = vpack.c.b16 %v5255, %v5254
        %v5378 = vpack.c.b16 %v5257, %v5256
        %v5379 = vpack.c.b16 %v5259, %v5258
        %v5380 = vpack.c.b16 %v5261, %v5260
        %v5381 = vpack.c.b16 %v5263, %v5262
        %v5382 = vpack.c.b16 %v5265, %v5264
        %v5383 = vpack.c.b16 %v5267, %v5266
        %v5384 = vpack.c.b16 %v5269, %v5268
        %v5385 = vpack.c.b16 %v5271, %v5270
        %v5386 = vpack.c.b16 %v5273, %v5272
        %v5387 = vpack.c.b16 %v5275, %v5274
        %v5388 = vpack.c.b16 %v5277, %v5276
        %v5389 = vpack.c.b16 %v5279, %v5278
        %v5390 = vpack.c.b16 %v5281, %v5280
        %v5391 = vpack.c.b16 %v5283, %v5282
        %v5392 = vpack.c.b16 %v5285, %v5284
        %v5393 = vpack.c.b16 %v5287, %v5286
        %v5394 = vpack.c.b16 %v5289, %v5288
        %v5395 = vpack.c.b16 %v5291, %v5290
        %v5396 = vpack.c.b16 %v5293, %v5292
        %v5397 = vpack.c.b16 %v5295, %v5294
        %v5398 = vpack.c.b16 %v5297, %v5296
        %v5399 = vpack.c.b16 %v5299, %v5298
        %v5400 = vpack.c.b16 %v5301, %v5300
        %v5401 = vpack.c.b16 %v5303, %v5302
        %v5402 = vpack.c.b16 %v5305, %v5304
        %v5403 = vpack.c.b16 %v5307, %v5306
        %v5404 = vpack.c.b16 %v5309, %v5308
        %v5405 = vpack.c.b16 %v5311, %v5310
        %v5406 = vpack.c.b16 %v5313, %v5312
        %v5407 = vpack.c.b16 %v5315, %v5314
        %v5408 = vpack.c.b16 %v5317, %v5316
        %v5409 = vpack.c.b16 %v5319, %v5318
        %v5410 = vpack.c.b16 %v5321, %v5320
        %v5411 = vpack.c.b16 %v5323, %v5322
        %v5412 = vpack.c.b16 %v5325, %v5324
        %v5413 = vpack.c.b16 %v5327, %v5326
        %v5414 = vpack.c.b16 %v5329, %v5328
        %v5415 = vpack.c.b16 %v5331, %v5330
        %v5416 = vpack.c.b16 %v5333, %v5332
        %v5417 = vpack.c.b16 %v5335, %v5334
        %v5418 = vpack.c.b16 %v5337, %v5336
        %v5419 = vpack.c.b16 %v5339, %v5338
        %v5420 = vpack.c.b16 %v5341, %v5340
        %v5421 = vpack.c.b16 %v5343, %v5342
        %v5422 = vpack.c.b16 %v5345, %v5344
        %v5423 = vpack.c.b16 %v5347, %v5346
        %v5424 = vpack.c.b16 %v5349, %v5348
        %v5425 = vpack.c.b16 %v5351, %v5350
        %v5426 = vpack.c.b16 %v5353, %v5352
        %v5427 = vpack.c.b16 %v5355, %v5354
        %5500 = vmatpush.bf16.msra.mxu0 %v5363
        %5501 = vmatpush.bf16.msra.mxu0 %v5362
        %5502 = vmatpush.bf16.msra.mxu0 %v5361
        %5503 = vmatpush.bf16.msra.mxu0 %v5360
        %5504 = vmatpush.bf16.msra.mxu0 %v5359
        %5505 = vmatpush.bf16.msra.mxu0 %v5358
        %5506 = vmatpush.bf16.msra.mxu0 %v5357
        %5507 = vmatpush.bf16.msra.mxu0 %v5356
        %5508 = vmatmul.bf16.gmra.mxu0 %v4780
        %v5509 = vpop.f32.mrf.mxu0
        %v5510 = vadd.f32 %v4330, %v5509
        %v5511 = vpop.f32.mrf.mxu0
        %v5512 = vadd.f32 %v4330, %v5511
        %5513 = vmatmul.bf16.gmra.mxu0 %v4789
        %v5514 = vpop.f32.mrf.mxu0
        %v5515 = vadd.f32 %v4330, %v5514
        %v5516 = vpop.f32.mrf.mxu0
        %v5517 = vadd.f32 %v4330, %v5516
        %5518 = vmatmul.bf16.gmra.mxu0 %v4798
        %v5519 = vpop.f32.mrf.mxu0
        %v5520 = vadd.f32 %v4330, %v5519
        %v5521 = vpop.f32.mrf.mxu0
        %v5522 = vadd.f32 %v4330, %v5521
        %5523 = vmatmul.bf16.gmra.mxu0 %v4807
        %v5524 = vpop.f32.mrf.mxu0
        %v5525 = vadd.f32 %v4330, %v5524
        %v5526 = vpop.f32.mrf.mxu0
        %v5527 = vadd.f32 %v4330, %v5526
        %5528 = vmatmul.bf16.gmra.mxu0 %v4816
        %v5529 = vpop.f32.mrf.mxu0
        %v5530 = vadd.f32 %v4330, %v5529
        %v5531 = vpop.f32.mrf.mxu0
        %v5532 = vadd.f32 %v4330, %v5531
        %5533 = vmatmul.bf16.gmra.mxu0 %v4825
        %v5534 = vpop.f32.mrf.mxu0
        %v5535 = vadd.f32 %v4330, %v5534
        %v5536 = vpop.f32.mrf.mxu0
        %v5537 = vadd.f32 %v4330, %v5536
        %5538 = vmatmul.bf16.gmra.mxu0 %v4834
        %v5539 = vpop.f32.mrf.mxu0
        %v5540 = vadd.f32 %v4330, %v5539
        %v5541 = vpop.f32.mrf.mxu0
        %v5542 = vadd.f32 %v4330, %v5541
        %5543 = vmatmul.bf16.gmra.mxu0 %v4843
        %v5544 = vpop.f32.mrf.mxu0
        %v5545 = vadd.f32 %v4330, %v5544
        %v5546 = vpop.f32.mrf.mxu0
        %v5547 = vadd.f32 %v4330, %v5546
        %5548 = vmatmul.bf16.gmra.mxu0 %v4852
        %v5549 = vpop.f32.mrf.mxu0
        %v5550 = vadd.f32 %v4330, %v5549
        %v5551 = vpop.f32.mrf.mxu0
        %v5552 = vadd.f32 %v4330, %v5551
        %5553 = vmatmul.bf16.gmra.mxu0 %v4861
        %v5554 = vpop.f32.mrf.mxu0
        %v5555 = vadd.f32 %v4330, %v5554
        %v5556 = vpop.f32.mrf.mxu0
        %v5557 = vadd.f32 %v4330, %v5556
        %5558 = vmatmul.bf16.gmra.mxu0 %v4870
        %v5559 = vpop.f32.mrf.mxu0
        %v5560 = vadd.f32 %v4330, %v5559
        %v5561 = vpop.f32.mrf.mxu0
        %v5562 = vadd.f32 %v4330, %v5561
        %5563 = vmatmul.bf16.gmra.mxu0 %v4879
        %v5564 = vpop.f32.mrf.mxu0
        %v5565 = vadd.f32 %v4330, %v5564
        %v5566 = vpop.f32.mrf.mxu0
        %v5567 = vadd.f32 %v4330, %v5566
        %5568 = vmatmul.bf16.gmra.mxu0 %v4888
        %v5569 = vpop.f32.mrf.mxu0
        %v5570 = vadd.f32 %v4330, %v5569
        %v5571 = vpop.f32.mrf.mxu0
        %v5572 = vadd.f32 %v4330, %v5571
        %5573 = vmatmul.bf16.gmra.mxu0 %v4897
        %v5574 = vpop.f32.mrf.mxu0
        %v5575 = vadd.f32 %v4330, %v5574
        %v5576 = vpop.f32.mrf.mxu0
        %v5577 = vadd.f32 %v4330, %v5576
        %5578 = vmatmul.bf16.gmra.mxu0 %v4906
        %v5579 = vpop.f32.mrf.mxu0
        %v5580 = vadd.f32 %v4330, %v5579
        %v5581 = vpop.f32.mrf.mxu0
        %v5582 = vadd.f32 %v4330, %v5581
        %5583 = vmatmul.bf16.gmra.mxu0 %v4915
        %v5584 = vpop.f32.mrf.mxu0
        %v5585 = vadd.f32 %v4330, %v5584
        %v5586 = vpop.f32.mrf.mxu0
        %v5587 = vadd.f32 %v4330, %v5586
        %5588 = vdwg.mxu0
        %5589 = vmatpush.bf16.msra.mxu0 %v5371
        %5590 = vmatpush.bf16.msra.mxu0 %v5370
        %5591 = vmatpush.bf16.msra.mxu0 %v5369
        %5592 = vmatpush.bf16.msra.mxu0 %v5368
        %5593 = vmatpush.bf16.msra.mxu0 %v5367
        %5594 = vmatpush.bf16.msra.mxu0 %v5366
        %5595 = vmatpush.bf16.msra.mxu0 %v5365
        %5596 = vmatpush.bf16.msra.mxu0 %v5364
        %5597 = vmatmul.bf16.gmra.mxu0 %v4781
        %v5598 = vpop.f32.mrf.mxu0
        %v5599 = vadd.f32 %v5510, %v5598
        %v5600 = vpop.f32.mrf.mxu0
        %v5601 = vadd.f32 %v5512, %v5600
        %5602 = vmatmul.bf16.gmra.mxu0 %v4790
        %v5603 = vpop.f32.mrf.mxu0
        %v5604 = vadd.f32 %v5515, %v5603
        %v5605 = vpop.f32.mrf.mxu0
        %v5606 = vadd.f32 %v5517, %v5605
        %5607 = vmatmul.bf16.gmra.mxu0 %v4799
        %v5608 = vpop.f32.mrf.mxu0
        %v5609 = vadd.f32 %v5520, %v5608
        %v5610 = vpop.f32.mrf.mxu0
        %v5611 = vadd.f32 %v5522, %v5610
        %5612 = vmatmul.bf16.gmra.mxu0 %v4808
        %v5613 = vpop.f32.mrf.mxu0
        %v5614 = vadd.f32 %v5525, %v5613
        %v5615 = vpop.f32.mrf.mxu0
        %v5616 = vadd.f32 %v5527, %v5615
        %5617 = vmatmul.bf16.gmra.mxu0 %v4817
        %v5618 = vpop.f32.mrf.mxu0
        %v5619 = vadd.f32 %v5530, %v5618
        %v5620 = vpop.f32.mrf.mxu0
        %v5621 = vadd.f32 %v5532, %v5620
        %5622 = vmatmul.bf16.gmra.mxu0 %v4826
        %v5623 = vpop.f32.mrf.mxu0
        %v5624 = vadd.f32 %v5535, %v5623
        %v5625 = vpop.f32.mrf.mxu0
        %v5626 = vadd.f32 %v5537, %v5625
        %5627 = vmatmul.bf16.gmra.mxu0 %v4835
        %v5628 = vpop.f32.mrf.mxu0
        %v5629 = vadd.f32 %v5540, %v5628
        %v5630 = vpop.f32.mrf.mxu0
        %v5631 = vadd.f32 %v5542, %v5630
        %5632 = vmatmul.bf16.gmra.mxu0 %v4844
        %v5633 = vpop.f32.mrf.mxu0
        %v5634 = vadd.f32 %v5545, %v5633
        %v5635 = vpop.f32.mrf.mxu0
        %v5636 = vadd.f32 %v5547, %v5635
        %5637 = vmatmul.bf16.gmra.mxu0 %v4853
        %v5638 = vpop.f32.mrf.mxu0
        %v5639 = vadd.f32 %v5550, %v5638
        %v5640 = vpop.f32.mrf.mxu0
        %v5641 = vadd.f32 %v5552, %v5640
        %5642 = vmatmul.bf16.gmra.mxu0 %v4862
        %v5643 = vpop.f32.mrf.mxu0
        %v5644 = vadd.f32 %v5555, %v5643
        %v5645 = vpop.f32.mrf.mxu0
        %v5646 = vadd.f32 %v5557, %v5645
        %5647 = vmatmul.bf16.gmra.mxu0 %v4871
        %v5648 = vpop.f32.mrf.mxu0
        %v5649 = vadd.f32 %v5560, %v5648
        %v5650 = vpop.f32.mrf.mxu0
        %v5651 = vadd.f32 %v5562, %v5650
        %5652 = vmatmul.bf16.gmra.mxu0 %v4880
        %v5653 = vpop.f32.mrf.mxu0
        %v5654 = vadd.f32 %v5565, %v5653
        %v5655 = vpop.f32.mrf.mxu0
        %v5656 = vadd.f32 %v5567, %v5655
        %5657 = vmatmul.bf16.gmra.mxu0 %v4889
        %v5658 = vpop.f32.mrf.mxu0
        %v5659 = vadd.f32 %v5570, %v5658
        %v5660 = vpop.f32.mrf.mxu0
        %v5661 = vadd.f32 %v5572, %v5660
        %5662 = vmatmul.bf16.gmra.mxu0 %v4898
        %v5663 = vpop.f32.mrf.mxu0
        %v5664 = vadd.f32 %v5575, %v5663
        %v5665 = vpop.f32.mrf.mxu0
        %v5666 = vadd.f32 %v5577, %v5665
        %5667 = vmatmul.bf16.gmra.mxu0 %v4907
        %v5668 = vpop.f32.mrf.mxu0
        %v5669 = vadd.f32 %v5580, %v5668
        %v5670 = vpop.f32.mrf.mxu0
        %v5671 = vadd.f32 %v5582, %v5670
        %5672 = vmatmul.bf16.gmra.mxu0 %v4916
        %v5673 = vpop.f32.mrf.mxu0
        %v5674 = vadd.f32 %v5585, %v5673
        %v5675 = vpop.f32.mrf.mxu0
        %v5676 = vadd.f32 %v5587, %v5675
        %5677 = vdwg.mxu0
        %5678 = vmatpush.bf16.msra.mxu0 %v5379
        %5679 = vmatpush.bf16.msra.mxu0 %v5378
        %5680 = vmatpush.bf16.msra.mxu0 %v5377
        %5681 = vmatpush.bf16.msra.mxu0 %v5376
        %5682 = vmatpush.bf16.msra.mxu0 %v5375
        %5683 = vmatpush.bf16.msra.mxu0 %v5374
        %5684 = vmatpush.bf16.msra.mxu0 %v5373
        %5685 = vmatpush.bf16.msra.mxu0 %v5372
        %5686 = vmatmul.bf16.gmra.mxu0 %v4782
        %v5687 = vpop.f32.mrf.mxu0
        %v5688 = vadd.f32 %v5599, %v5687
        %v5689 = vpop.f32.mrf.mxu0
        %v5690 = vadd.f32 %v5601, %v5689
        %5691 = vmatmul.bf16.gmra.mxu0 %v4791
        %v5692 = vpop.f32.mrf.mxu0
        %v5693 = vadd.f32 %v5604, %v5692
        %v5694 = vpop.f32.mrf.mxu0
        %v5695 = vadd.f32 %v5606, %v5694
        %5696 = vmatmul.bf16.gmra.mxu0 %v4800
        %v5697 = vpop.f32.mrf.mxu0
        %v5698 = vadd.f32 %v5609, %v5697
        %v5699 = vpop.f32.mrf.mxu0
        %v5700 = vadd.f32 %v5611, %v5699
        %5701 = vmatmul.bf16.gmra.mxu0 %v4809
        %v5702 = vpop.f32.mrf.mxu0
        %v5703 = vadd.f32 %v5614, %v5702
        %v5704 = vpop.f32.mrf.mxu0
        %v5705 = vadd.f32 %v5616, %v5704
        %5706 = vmatmul.bf16.gmra.mxu0 %v4818
        %v5707 = vpop.f32.mrf.mxu0
        %v5708 = vadd.f32 %v5619, %v5707
        %v5709 = vpop.f32.mrf.mxu0
        %v5710 = vadd.f32 %v5621, %v5709
        %5711 = vmatmul.bf16.gmra.mxu0 %v4827
        %v5712 = vpop.f32.mrf.mxu0
        %v5713 = vadd.f32 %v5624, %v5712
        %v5714 = vpop.f32.mrf.mxu0
        %v5715 = vadd.f32 %v5626, %v5714
        %5716 = vmatmul.bf16.gmra.mxu0 %v4836
        %v5717 = vpop.f32.mrf.mxu0
        %v5718 = vadd.f32 %v5629, %v5717
        %v5719 = vpop.f32.mrf.mxu0
        %v5720 = vadd.f32 %v5631, %v5719
        %5721 = vmatmul.bf16.gmra.mxu0 %v4845
        %v5722 = vpop.f32.mrf.mxu0
        %v5723 = vadd.f32 %v5634, %v5722
        %v5724 = vpop.f32.mrf.mxu0
        %v5725 = vadd.f32 %v5636, %v5724
        %5726 = vmatmul.bf16.gmra.mxu0 %v4854
        %v5727 = vpop.f32.mrf.mxu0
        %v5728 = vadd.f32 %v5639, %v5727
        %v5729 = vpop.f32.mrf.mxu0
        %v5730 = vadd.f32 %v5641, %v5729
        %5731 = vmatmul.bf16.gmra.mxu0 %v4863
        %v5732 = vpop.f32.mrf.mxu0
        %v5733 = vadd.f32 %v5644, %v5732
        %v5734 = vpop.f32.mrf.mxu0
        %v5735 = vadd.f32 %v5646, %v5734
        %5736 = vmatmul.bf16.gmra.mxu0 %v4872
        %v5737 = vpop.f32.mrf.mxu0
        %v5738 = vadd.f32 %v5649, %v5737
        %v5739 = vpop.f32.mrf.mxu0
        %v5740 = vadd.f32 %v5651, %v5739
        %5741 = vmatmul.bf16.gmra.mxu0 %v4881
        %v5742 = vpop.f32.mrf.mxu0
        %v5743 = vadd.f32 %v5654, %v5742
        %v5744 = vpop.f32.mrf.mxu0
        %v5745 = vadd.f32 %v5656, %v5744
        %5746 = vmatmul.bf16.gmra.mxu0 %v4890
        %v5747 = vpop.f32.mrf.mxu0
        %v5748 = vadd.f32 %v5659, %v5747
        %v5749 = vpop.f32.mrf.mxu0
        %v5750 = vadd.f32 %v5661, %v5749
        %5751 = vmatmul.bf16.gmra.mxu0 %v4899
        %v5752 = vpop.f32.mrf.mxu0
        %v5753 = vadd.f32 %v5664, %v5752
        %v5754 = vpop.f32.mrf.mxu0
        %v5755 = vadd.f32 %v5666, %v5754
        %5756 = vmatmul.bf16.gmra.mxu0 %v4908
        %v5757 = vpop.f32.mrf.mxu0
        %v5758 = vadd.f32 %v5669, %v5757
        %v5759 = vpop.f32.mrf.mxu0
        %v5760 = vadd.f32 %v5671, %v5759
        %5761 = vmatmul.bf16.gmra.mxu0 %v4917
        %v5762 = vpop.f32.mrf.mxu0
        %v5763 = vadd.f32 %v5674, %v5762
        %v5764 = vpop.f32.mrf.mxu0
        %v5765 = vadd.f32 %v5676, %v5764
        %5766 = vdwg.mxu0
        %5767 = vmatpush.bf16.msra.mxu0 %v5387
        %5768 = vmatpush.bf16.msra.mxu0 %v5386
        %5769 = vmatpush.bf16.msra.mxu0 %v5385
        %5770 = vmatpush.bf16.msra.mxu0 %v5384
        %5771 = vmatpush.bf16.msra.mxu0 %v5383
        %5772 = vmatpush.bf16.msra.mxu0 %v5382
        %5773 = vmatpush.bf16.msra.mxu0 %v5381
        %5774 = vmatpush.bf16.msra.mxu0 %v5380
        %5775 = vmatmul.bf16.gmra.mxu0 %v4783
        %v5776 = vpop.f32.mrf.mxu0
        %v5777 = vadd.f32 %v5688, %v5776
        %v5778 = vpop.f32.mrf.mxu0
        %v5779 = vadd.f32 %v5690, %v5778
        %5780 = vmatmul.bf16.gmra.mxu0 %v4792
        %v5781 = vpop.f32.mrf.mxu0
        %v5782 = vadd.f32 %v5693, %v5781
        %v5783 = vpop.f32.mrf.mxu0
        %v5784 = vadd.f32 %v5695, %v5783
        %5785 = vmatmul.bf16.gmra.mxu0 %v4801
        %v5786 = vpop.f32.mrf.mxu0
        %v5787 = vadd.f32 %v5698, %v5786
        %v5788 = vpop.f32.mrf.mxu0
        %v5789 = vadd.f32 %v5700, %v5788
        %5790 = vmatmul.bf16.gmra.mxu0 %v4810
        %v5791 = vpop.f32.mrf.mxu0
        %v5792 = vadd.f32 %v5703, %v5791
        %v5793 = vpop.f32.mrf.mxu0
        %v5794 = vadd.f32 %v5705, %v5793
        %5795 = vmatmul.bf16.gmra.mxu0 %v4819
        %v5796 = vpop.f32.mrf.mxu0
        %v5797 = vadd.f32 %v5708, %v5796
        %v5798 = vpop.f32.mrf.mxu0
        %v5799 = vadd.f32 %v5710, %v5798
        %5800 = vmatmul.bf16.gmra.mxu0 %v4828
        %v5801 = vpop.f32.mrf.mxu0
        %v5802 = vadd.f32 %v5713, %v5801
        %v5803 = vpop.f32.mrf.mxu0
        %v5804 = vadd.f32 %v5715, %v5803
        %5805 = vmatmul.bf16.gmra.mxu0 %v4837
        %v5806 = vpop.f32.mrf.mxu0
        %v5807 = vadd.f32 %v5718, %v5806
        %v5808 = vpop.f32.mrf.mxu0
        %v5809 = vadd.f32 %v5720, %v5808
        %5810 = vmatmul.bf16.gmra.mxu0 %v4846
        %v5811 = vpop.f32.mrf.mxu0
        %v5812 = vadd.f32 %v5723, %v5811
        %v5813 = vpop.f32.mrf.mxu0
        %v5814 = vadd.f32 %v5725, %v5813
        %5815 = vmatmul.bf16.gmra.mxu0 %v4855
        %v5816 = vpop.f32.mrf.mxu0
        %v5817 = vadd.f32 %v5728, %v5816
        %v5818 = vpop.f32.mrf.mxu0
        %v5819 = vadd.f32 %v5730, %v5818
        %5820 = vmatmul.bf16.gmra.mxu0 %v4864
        %v5821 = vpop.f32.mrf.mxu0
        %v5822 = vadd.f32 %v5733, %v5821
        %v5823 = vpop.f32.mrf.mxu0
        %v5824 = vadd.f32 %v5735, %v5823
        %5825 = vmatmul.bf16.gmra.mxu0 %v4873
        %v5826 = vpop.f32.mrf.mxu0
        %v5827 = vadd.f32 %v5738, %v5826
        %v5828 = vpop.f32.mrf.mxu0
        %v5829 = vadd.f32 %v5740, %v5828
        %5830 = vmatmul.bf16.gmra.mxu0 %v4882
        %v5831 = vpop.f32.mrf.mxu0
        %v5832 = vadd.f32 %v5743, %v5831
        %v5833 = vpop.f32.mrf.mxu0
        %v5834 = vadd.f32 %v5745, %v5833
        %5835 = vmatmul.bf16.gmra.mxu0 %v4891
        %v5836 = vpop.f32.mrf.mxu0
        %v5837 = vadd.f32 %v5748, %v5836
        %v5838 = vpop.f32.mrf.mxu0
        %v5839 = vadd.f32 %v5750, %v5838
        %5840 = vmatmul.bf16.gmra.mxu0 %v4900
        %v5841 = vpop.f32.mrf.mxu0
        %v5842 = vadd.f32 %v5753, %v5841
        %v5843 = vpop.f32.mrf.mxu0
        %v5844 = vadd.f32 %v5755, %v5843
        %5845 = vmatmul.bf16.gmra.mxu0 %v4909
        %v5846 = vpop.f32.mrf.mxu0
        %v5847 = vadd.f32 %v5758, %v5846
        %v5848 = vpop.f32.mrf.mxu0
        %v5849 = vadd.f32 %v5760, %v5848
        %5850 = vmatmul.bf16.gmra.mxu0 %v4918
        %v5851 = vpop.f32.mrf.mxu0
        %v5852 = vadd.f32 %v5763, %v5851
        %v5853 = vpop.f32.mrf.mxu0
        %v5854 = vadd.f32 %v5765, %v5853
        %5855 = vdwg.mxu0
        %5856 = vmatpush.bf16.msra.mxu0 %v5395
        %5857 = vmatpush.bf16.msra.mxu0 %v5394
        %5858 = vmatpush.bf16.msra.mxu0 %v5393
        %5859 = vmatpush.bf16.msra.mxu0 %v5392
        %5860 = vmatpush.bf16.msra.mxu0 %v5391
        %5861 = vmatpush.bf16.msra.mxu0 %v5390
        %5862 = vmatpush.bf16.msra.mxu0 %v5389
        %5863 = vmatpush.bf16.msra.mxu0 %v5388
        %5864 = vmatmul.bf16.gmra.mxu0 %v4784
        %v5865 = vpop.f32.mrf.mxu0
        %v5866 = vadd.f32 %v5777, %v5865
        %v5867 = vpop.f32.mrf.mxu0
        %v5868 = vadd.f32 %v5779, %v5867
        %5869 = vmatmul.bf16.gmra.mxu0 %v4793
        %v5870 = vpop.f32.mrf.mxu0
        %v5871 = vadd.f32 %v5782, %v5870
        %v5872 = vpop.f32.mrf.mxu0
        %v5873 = vadd.f32 %v5784, %v5872
        %5874 = vmatmul.bf16.gmra.mxu0 %v4802
        %v5875 = vpop.f32.mrf.mxu0
        %v5876 = vadd.f32 %v5787, %v5875
        %v5877 = vpop.f32.mrf.mxu0
        %v5878 = vadd.f32 %v5789, %v5877
        %5879 = vmatmul.bf16.gmra.mxu0 %v4811
        %v5880 = vpop.f32.mrf.mxu0
        %v5881 = vadd.f32 %v5792, %v5880
        %v5882 = vpop.f32.mrf.mxu0
        %v5883 = vadd.f32 %v5794, %v5882
        %5884 = vmatmul.bf16.gmra.mxu0 %v4820
        %v5885 = vpop.f32.mrf.mxu0
        %v5886 = vadd.f32 %v5797, %v5885
        %v5887 = vpop.f32.mrf.mxu0
        %v5888 = vadd.f32 %v5799, %v5887
        %5889 = vmatmul.bf16.gmra.mxu0 %v4829
        %v5890 = vpop.f32.mrf.mxu0
        %v5891 = vadd.f32 %v5802, %v5890
        %v5892 = vpop.f32.mrf.mxu0
        %v5893 = vadd.f32 %v5804, %v5892
        %5894 = vmatmul.bf16.gmra.mxu0 %v4838
        %v5895 = vpop.f32.mrf.mxu0
        %v5896 = vadd.f32 %v5807, %v5895
        %v5897 = vpop.f32.mrf.mxu0
        %v5898 = vadd.f32 %v5809, %v5897
        %5899 = vmatmul.bf16.gmra.mxu0 %v4847
        %v5900 = vpop.f32.mrf.mxu0
        %v5901 = vadd.f32 %v5812, %v5900
        %v5902 = vpop.f32.mrf.mxu0
        %v5903 = vadd.f32 %v5814, %v5902
        %5904 = vmatmul.bf16.gmra.mxu0 %v4856
        %v5905 = vpop.f32.mrf.mxu0
        %v5906 = vadd.f32 %v5817, %v5905
        %v5907 = vpop.f32.mrf.mxu0
        %v5908 = vadd.f32 %v5819, %v5907
        %5909 = vmatmul.bf16.gmra.mxu0 %v4865
        %v5910 = vpop.f32.mrf.mxu0
        %v5911 = vadd.f32 %v5822, %v5910
        %v5912 = vpop.f32.mrf.mxu0
        %v5913 = vadd.f32 %v5824, %v5912
        %5914 = vmatmul.bf16.gmra.mxu0 %v4874
        %v5915 = vpop.f32.mrf.mxu0
        %v5916 = vadd.f32 %v5827, %v5915
        %v5917 = vpop.f32.mrf.mxu0
        %v5918 = vadd.f32 %v5829, %v5917
        %5919 = vmatmul.bf16.gmra.mxu0 %v4883
        %v5920 = vpop.f32.mrf.mxu0
        %v5921 = vadd.f32 %v5832, %v5920
        %v5922 = vpop.f32.mrf.mxu0
        %v5923 = vadd.f32 %v5834, %v5922
        %5924 = vmatmul.bf16.gmra.mxu0 %v4892
        %v5925 = vpop.f32.mrf.mxu0
        %v5926 = vadd.f32 %v5837, %v5925
        %v5927 = vpop.f32.mrf.mxu0
        %v5928 = vadd.f32 %v5839, %v5927
        %5929 = vmatmul.bf16.gmra.mxu0 %v4901
        %v5930 = vpop.f32.mrf.mxu0
        %v5931 = vadd.f32 %v5842, %v5930
        %v5932 = vpop.f32.mrf.mxu0
        %v5933 = vadd.f32 %v5844, %v5932
        %5934 = vmatmul.bf16.gmra.mxu0 %v4910
        %v5935 = vpop.f32.mrf.mxu0
        %v5936 = vadd.f32 %v5847, %v5935
        %v5937 = vpop.f32.mrf.mxu0
        %v5938 = vadd.f32 %v5849, %v5937
        %5939 = vmatmul.bf16.gmra.mxu0 %v4919
        %v5940 = vpop.f32.mrf.mxu0
        %v5941 = vadd.f32 %v5852, %v5940
        %v5942 = vpop.f32.mrf.mxu0
        %v5943 = vadd.f32 %v5854, %v5942
        %5944 = vdwg.mxu0
        %5945 = vmatpush.bf16.msra.mxu0 %v5403
        %5946 = vmatpush.bf16.msra.mxu0 %v5402
        %5947 = vmatpush.bf16.msra.mxu0 %v5401
        %5948 = vmatpush.bf16.msra.mxu0 %v5400
        %5949 = vmatpush.bf16.msra.mxu0 %v5399
        %5950 = vmatpush.bf16.msra.mxu0 %v5398
        %5951 = vmatpush.bf16.msra.mxu0 %v5397
        %5952 = vmatpush.bf16.msra.mxu0 %v5396
        %5953 = vmatmul.bf16.gmra.mxu0 %v4785
        %v5954 = vpop.f32.mrf.mxu0
        %v5955 = vadd.f32 %v5866, %v5954
        %v5956 = vpop.f32.mrf.mxu0
        %v5957 = vadd.f32 %v5868, %v5956
        %5958 = vmatmul.bf16.gmra.mxu0 %v4794
        %v5959 = vpop.f32.mrf.mxu0
        %v5960 = vadd.f32 %v5871, %v5959
        %v5961 = vpop.f32.mrf.mxu0
        %v5962 = vadd.f32 %v5873, %v5961
        %5963 = vmatmul.bf16.gmra.mxu0 %v4803
        %v5964 = vpop.f32.mrf.mxu0
        %v5965 = vadd.f32 %v5876, %v5964
        %v5966 = vpop.f32.mrf.mxu0
        %v5967 = vadd.f32 %v5878, %v5966
        %5968 = vmatmul.bf16.gmra.mxu0 %v4812
        %v5969 = vpop.f32.mrf.mxu0
        %v5970 = vadd.f32 %v5881, %v5969
        %v5971 = vpop.f32.mrf.mxu0
        %v5972 = vadd.f32 %v5883, %v5971
        %5973 = vmatmul.bf16.gmra.mxu0 %v4821
        %v5974 = vpop.f32.mrf.mxu0
        %v5975 = vadd.f32 %v5886, %v5974
        %v5976 = vpop.f32.mrf.mxu0
        %v5977 = vadd.f32 %v5888, %v5976
        %5978 = vmatmul.bf16.gmra.mxu0 %v4830
        %v5979 = vpop.f32.mrf.mxu0
        %v5980 = vadd.f32 %v5891, %v5979
        %v5981 = vpop.f32.mrf.mxu0
        %v5982 = vadd.f32 %v5893, %v5981
        %5983 = vmatmul.bf16.gmra.mxu0 %v4839
        %v5984 = vpop.f32.mrf.mxu0
        %v5985 = vadd.f32 %v5896, %v5984
        %v5986 = vpop.f32.mrf.mxu0
        %v5987 = vadd.f32 %v5898, %v5986
        %5988 = vmatmul.bf16.gmra.mxu0 %v4848
        %v5989 = vpop.f32.mrf.mxu0
        %v5990 = vadd.f32 %v5901, %v5989
        %v5991 = vpop.f32.mrf.mxu0
        %v5992 = vadd.f32 %v5903, %v5991
        %5993 = vmatmul.bf16.gmra.mxu0 %v4857
        %v5994 = vpop.f32.mrf.mxu0
        %v5995 = vadd.f32 %v5906, %v5994
        %v5996 = vpop.f32.mrf.mxu0
        %v5997 = vadd.f32 %v5908, %v5996
        %5998 = vmatmul.bf16.gmra.mxu0 %v4866
        %v5999 = vpop.f32.mrf.mxu0
        %v6000 = vadd.f32 %v5911, %v5999
        %v6001 = vpop.f32.mrf.mxu0
        %v6002 = vadd.f32 %v5913, %v6001
        %6003 = vmatmul.bf16.gmra.mxu0 %v4875
        %v6004 = vpop.f32.mrf.mxu0
        %v6005 = vadd.f32 %v5916, %v6004
        %v6006 = vpop.f32.mrf.mxu0
        %v6007 = vadd.f32 %v5918, %v6006
        %6008 = vmatmul.bf16.gmra.mxu0 %v4884
        %v6009 = vpop.f32.mrf.mxu0
        %v6010 = vadd.f32 %v5921, %v6009
        %v6011 = vpop.f32.mrf.mxu0
        %v6012 = vadd.f32 %v5923, %v6011
        %6013 = vmatmul.bf16.gmra.mxu0 %v4893
        %v6014 = vpop.f32.mrf.mxu0
        %v6015 = vadd.f32 %v5926, %v6014
        %v6016 = vpop.f32.mrf.mxu0
        %v6017 = vadd.f32 %v5928, %v6016
        %6018 = vmatmul.bf16.gmra.mxu0 %v4902
        %v6019 = vpop.f32.mrf.mxu0
        %v6020 = vadd.f32 %v5931, %v6019
        %v6021 = vpop.f32.mrf.mxu0
        %v6022 = vadd.f32 %v5933, %v6021
        %6023 = vmatmul.bf16.gmra.mxu0 %v4911
        %v6024 = vpop.f32.mrf.mxu0
        %v6025 = vadd.f32 %v5936, %v6024
        %v6026 = vpop.f32.mrf.mxu0
        %v6027 = vadd.f32 %v5938, %v6026
        %6028 = vmatmul.bf16.gmra.mxu0 %v4920
        %v6029 = vpop.f32.mrf.mxu0
        %v6030 = vadd.f32 %v5941, %v6029
        %v6031 = vpop.f32.mrf.mxu0
        %v6032 = vadd.f32 %v5943, %v6031
        %6033 = vdwg.mxu0
        %6034 = vmatpush.bf16.msra.mxu0 %v5411
        %6035 = vmatpush.bf16.msra.mxu0 %v5410
        %6036 = vmatpush.bf16.msra.mxu0 %v5409
        %6037 = vmatpush.bf16.msra.mxu0 %v5408
        %6038 = vmatpush.bf16.msra.mxu0 %v5407
        %6039 = vmatpush.bf16.msra.mxu0 %v5406
        %6040 = vmatpush.bf16.msra.mxu0 %v5405
        %6041 = vmatpush.bf16.msra.mxu0 %v5404
        %6042 = vmatmul.bf16.gmra.mxu0 %v4786
        %v6043 = vpop.f32.mrf.mxu0
        %v6044 = vadd.f32 %v5955, %v6043
        %v6045 = vpop.f32.mrf.mxu0
        %v6046 = vadd.f32 %v5957, %v6045
        %6047 = vmatmul.bf16.gmra.mxu0 %v4795
        %v6048 = vpop.f32.mrf.mxu0
        %v6049 = vadd.f32 %v5960, %v6048
        %v6050 = vpop.f32.mrf.mxu0
        %v6051 = vadd.f32 %v5962, %v6050
        %6052 = vmatmul.bf16.gmra.mxu0 %v4804
        %v6053 = vpop.f32.mrf.mxu0
        %v6054 = vadd.f32 %v5965, %v6053
        %v6055 = vpop.f32.mrf.mxu0
        %v6056 = vadd.f32 %v5967, %v6055
        %6057 = vmatmul.bf16.gmra.mxu0 %v4813
        %v6058 = vpop.f32.mrf.mxu0
        %v6059 = vadd.f32 %v5970, %v6058
        %v6060 = vpop.f32.mrf.mxu0
        %v6061 = vadd.f32 %v5972, %v6060
        %6062 = vmatmul.bf16.gmra.mxu0 %v4822
        %v6063 = vpop.f32.mrf.mxu0
        %v6064 = vadd.f32 %v5975, %v6063
        %v6065 = vpop.f32.mrf.mxu0
        %v6066 = vadd.f32 %v5977, %v6065
        %6067 = vmatmul.bf16.gmra.mxu0 %v4831
        %v6068 = vpop.f32.mrf.mxu0
        %v6069 = vadd.f32 %v5980, %v6068
        %v6070 = vpop.f32.mrf.mxu0
        %v6071 = vadd.f32 %v5982, %v6070
        %6072 = vmatmul.bf16.gmra.mxu0 %v4840
        %v6073 = vpop.f32.mrf.mxu0
        %v6074 = vadd.f32 %v5985, %v6073
        %v6075 = vpop.f32.mrf.mxu0
        %v6076 = vadd.f32 %v5987, %v6075
        %6077 = vmatmul.bf16.gmra.mxu0 %v4849
        %v6078 = vpop.f32.mrf.mxu0
        %v6079 = vadd.f32 %v5990, %v6078
        %v6080 = vpop.f32.mrf.mxu0
        %v6081 = vadd.f32 %v5992, %v6080
        %6082 = vmatmul.bf16.gmra.mxu0 %v4858
        %v6083 = vpop.f32.mrf.mxu0
        %v6084 = vadd.f32 %v5995, %v6083
        %v6085 = vpop.f32.mrf.mxu0
        %v6086 = vadd.f32 %v5997, %v6085
        %6087 = vmatmul.bf16.gmra.mxu0 %v4867
        %v6088 = vpop.f32.mrf.mxu0
        %v6089 = vadd.f32 %v6000, %v6088
        %v6090 = vpop.f32.mrf.mxu0
        %v6091 = vadd.f32 %v6002, %v6090
        %6092 = vmatmul.bf16.gmra.mxu0 %v4876
        %v6093 = vpop.f32.mrf.mxu0
        %v6094 = vadd.f32 %v6005, %v6093
        %v6095 = vpop.f32.mrf.mxu0
        %v6096 = vadd.f32 %v6007, %v6095
        %6097 = vmatmul.bf16.gmra.mxu0 %v4885
        %v6098 = vpop.f32.mrf.mxu0
        %v6099 = vadd.f32 %v6010, %v6098
        %v6100 = vpop.f32.mrf.mxu0
        %v6101 = vadd.f32 %v6012, %v6100
        %6102 = vmatmul.bf16.gmra.mxu0 %v4894
        %v6103 = vpop.f32.mrf.mxu0
        %v6104 = vadd.f32 %v6015, %v6103
        %v6105 = vpop.f32.mrf.mxu0
        %v6106 = vadd.f32 %v6017, %v6105
        %6107 = vmatmul.bf16.gmra.mxu0 %v4903
        %v6108 = vpop.f32.mrf.mxu0
        %v6109 = vadd.f32 %v6020, %v6108
        %v6110 = vpop.f32.mrf.mxu0
        %v6111 = vadd.f32 %v6022, %v6110
        %6112 = vmatmul.bf16.gmra.mxu0 %v4912
        %v6113 = vpop.f32.mrf.mxu0
        %v6114 = vadd.f32 %v6025, %v6113
        %v6115 = vpop.f32.mrf.mxu0
        %v6116 = vadd.f32 %v6027, %v6115
        %6117 = vmatmul.bf16.gmra.mxu0 %v4921
        %v6118 = vpop.f32.mrf.mxu0
        %v6119 = vadd.f32 %v6030, %v6118
        %v6120 = vpop.f32.mrf.mxu0
        %v6121 = vadd.f32 %v6032, %v6120
        %6122 = vdwg.mxu0
        %6123 = vmatpush.bf16.msra.mxu0 %v5419
        %6124 = vmatpush.bf16.msra.mxu0 %v5418
        %6125 = vmatpush.bf16.msra.mxu0 %v5417
        %6126 = vmatpush.bf16.msra.mxu0 %v5416
        %6127 = vmatpush.bf16.msra.mxu0 %v5415
        %6128 = vmatpush.bf16.msra.mxu0 %v5414
        %6129 = vmatpush.bf16.msra.mxu0 %v5413
        %6130 = vmatpush.bf16.msra.mxu0 %v5412
        %6131 = vmatmul.bf16.gmra.mxu0 %v4787
        %v6132 = vpop.f32.mrf.mxu0
        %v6133 = vadd.f32 %v6044, %v6132
        %v6134 = vpop.f32.mrf.mxu0
        %v6135 = vadd.f32 %v6046, %v6134
        %6136 = vmatmul.bf16.gmra.mxu0 %v4796
        %v6137 = vpop.f32.mrf.mxu0
        %v6138 = vadd.f32 %v6049, %v6137
        %v6139 = vpop.f32.mrf.mxu0
        %v6140 = vadd.f32 %v6051, %v6139
        %6141 = vmatmul.bf16.gmra.mxu0 %v4805
        %v6142 = vpop.f32.mrf.mxu0
        %v6143 = vadd.f32 %v6054, %v6142
        %v6144 = vpop.f32.mrf.mxu0
        %v6145 = vadd.f32 %v6056, %v6144
        %6146 = vmatmul.bf16.gmra.mxu0 %v4814
        %v6147 = vpop.f32.mrf.mxu0
        %v6148 = vadd.f32 %v6059, %v6147
        %v6149 = vpop.f32.mrf.mxu0
        %v6150 = vadd.f32 %v6061, %v6149
        %6151 = vmatmul.bf16.gmra.mxu0 %v4823
        %v6152 = vpop.f32.mrf.mxu0
        %v6153 = vadd.f32 %v6064, %v6152
        %v6154 = vpop.f32.mrf.mxu0
        %v6155 = vadd.f32 %v6066, %v6154
        %6156 = vmatmul.bf16.gmra.mxu0 %v4832
        %v6157 = vpop.f32.mrf.mxu0
        %v6158 = vadd.f32 %v6069, %v6157
        %v6159 = vpop.f32.mrf.mxu0
        %v6160 = vadd.f32 %v6071, %v6159
        %6161 = vmatmul.bf16.gmra.mxu0 %v4841
        %v6162 = vpop.f32.mrf.mxu0
        %v6163 = vadd.f32 %v6074, %v6162
        %v6164 = vpop.f32.mrf.mxu0
        %v6165 = vadd.f32 %v6076, %v6164
        %6166 = vmatmul.bf16.gmra.mxu0 %v4850
        %v6167 = vpop.f32.mrf.mxu0
        %v6168 = vadd.f32 %v6079, %v6167
        %v6169 = vpop.f32.mrf.mxu0
        %v6170 = vadd.f32 %v6081, %v6169
        %6171 = vmatmul.bf16.gmra.mxu0 %v4859
        %v6172 = vpop.f32.mrf.mxu0
        %v6173 = vadd.f32 %v6084, %v6172
        %v6174 = vpop.f32.mrf.mxu0
        %v6175 = vadd.f32 %v6086, %v6174
        %6176 = vmatmul.bf16.gmra.mxu0 %v4868
        %v6177 = vpop.f32.mrf.mxu0
        %v6178 = vadd.f32 %v6089, %v6177
        %v6179 = vpop.f32.mrf.mxu0
        %v6180 = vadd.f32 %v6091, %v6179
        %6181 = vmatmul.bf16.gmra.mxu0 %v4877
        %v6182 = vpop.f32.mrf.mxu0
        %v6183 = vadd.f32 %v6094, %v6182
        %v6184 = vpop.f32.mrf.mxu0
        %v6185 = vadd.f32 %v6096, %v6184
        %6186 = vmatmul.bf16.gmra.mxu0 %v4886
        %v6187 = vpop.f32.mrf.mxu0
        %v6188 = vadd.f32 %v6099, %v6187
        %v6189 = vpop.f32.mrf.mxu0
        %v6190 = vadd.f32 %v6101, %v6189
        %6191 = vmatmul.bf16.gmra.mxu0 %v4895
        %v6192 = vpop.f32.mrf.mxu0
        %v6193 = vadd.f32 %v6104, %v6192
        %v6194 = vpop.f32.mrf.mxu0
        %v6195 = vadd.f32 %v6106, %v6194
        %6196 = vmatmul.bf16.gmra.mxu0 %v4904
        %v6197 = vpop.f32.mrf.mxu0
        %v6198 = vadd.f32 %v6109, %v6197
        %v6199 = vpop.f32.mrf.mxu0
        %v6200 = vadd.f32 %v6111, %v6199
        %6201 = vmatmul.bf16.gmra.mxu0 %v4913
        %v6202 = vpop.f32.mrf.mxu0
        %v6203 = vadd.f32 %v6114, %v6202
        %v6204 = vpop.f32.mrf.mxu0
        %v6205 = vadd.f32 %v6116, %v6204
        %6206 = vmatmul.bf16.gmra.mxu0 %v4922
        %v6207 = vpop.f32.mrf.mxu0
        %v6208 = vadd.f32 %v6119, %v6207
        %v6209 = vpop.f32.mrf.mxu0
        %v6210 = vadd.f32 %v6121, %v6209
        %6211 = vdwg.mxu0
        %6212 = vmatpush.bf16.msra.mxu0 %v5427
        %6213 = vmatpush.bf16.msra.mxu0 %v5426
        %6214 = vmatpush.bf16.msra.mxu0 %v5425
        %6215 = vmatpush.bf16.msra.mxu0 %v5424
        %6216 = vmatpush.bf16.msra.mxu0 %v5423
        %6217 = vmatpush.bf16.msra.mxu0 %v5422
        %6218 = vmatpush.bf16.msra.mxu0 %v5421
        %6219 = vmatpush.bf16.msra.mxu0 %v5420
        %6220 = vmatmul.bf16.gmra.mxu0 %v4788
        %v6221 = vpop.f32.mrf.mxu0
        %v6222 = vadd.f32 %v6133, %v6221
        %v6223 = vpop.f32.mrf.mxu0
        %v6224 = vadd.f32 %v6135, %v6223
        %6225 = vmatmul.bf16.gmra.mxu0 %v4797
        %v6226 = vpop.f32.mrf.mxu0
        %v6227 = vadd.f32 %v6138, %v6226
        %v6228 = vpop.f32.mrf.mxu0
        %v6229 = vadd.f32 %v6140, %v6228
        %6230 = vmatmul.bf16.gmra.mxu0 %v4806
        %v6231 = vpop.f32.mrf.mxu0
        %v6232 = vadd.f32 %v6143, %v6231
        %v6233 = vpop.f32.mrf.mxu0
        %v6234 = vadd.f32 %v6145, %v6233
        %6235 = vmatmul.bf16.gmra.mxu0 %v4815
        %v6236 = vpop.f32.mrf.mxu0
        %v6237 = vadd.f32 %v6148, %v6236
        %v6238 = vpop.f32.mrf.mxu0
        %v6239 = vadd.f32 %v6150, %v6238
        %6240 = vmatmul.bf16.gmra.mxu0 %v4824
        %v6241 = vpop.f32.mrf.mxu0
        %v6242 = vadd.f32 %v6153, %v6241
        %v6243 = vpop.f32.mrf.mxu0
        %v6244 = vadd.f32 %v6155, %v6243
        %6245 = vmatmul.bf16.gmra.mxu0 %v4833
        %v6246 = vpop.f32.mrf.mxu0
        %v6247 = vadd.f32 %v6158, %v6246
        %v6248 = vpop.f32.mrf.mxu0
        %v6249 = vadd.f32 %v6160, %v6248
        %6250 = vmatmul.bf16.gmra.mxu0 %v4842
        %v6251 = vpop.f32.mrf.mxu0
        %v6252 = vadd.f32 %v6163, %v6251
        %v6253 = vpop.f32.mrf.mxu0
        %v6254 = vadd.f32 %v6165, %v6253
        %6255 = vmatmul.bf16.gmra.mxu0 %v4851
        %v6256 = vpop.f32.mrf.mxu0
        %v6257 = vadd.f32 %v6168, %v6256
        %v6258 = vpop.f32.mrf.mxu0
        %v6259 = vadd.f32 %v6170, %v6258
        %6260 = vmatmul.bf16.gmra.mxu0 %v4860
        %v6261 = vpop.f32.mrf.mxu0
        %v6262 = vadd.f32 %v6173, %v6261
        %v6263 = vpop.f32.mrf.mxu0
        %v6264 = vadd.f32 %v6175, %v6263
        %6265 = vmatmul.bf16.gmra.mxu0 %v4869
        %v6266 = vpop.f32.mrf.mxu0
        %v6267 = vadd.f32 %v6178, %v6266
        %v6268 = vpop.f32.mrf.mxu0
        %v6269 = vadd.f32 %v6180, %v6268
        %6270 = vmatmul.bf16.gmra.mxu0 %v4878
        %v6271 = vpop.f32.mrf.mxu0
        %v6272 = vadd.f32 %v6183, %v6271
        %v6273 = vpop.f32.mrf.mxu0
        %v6274 = vadd.f32 %v6185, %v6273
        %6275 = vmatmul.bf16.gmra.mxu0 %v4887
        %v6276 = vpop.f32.mrf.mxu0
        %v6277 = vadd.f32 %v6188, %v6276
        %v6278 = vpop.f32.mrf.mxu0
        %v6279 = vadd.f32 %v6190, %v6278
        %6280 = vmatmul.bf16.gmra.mxu0 %v4896
        %v6281 = vpop.f32.mrf.mxu0
        %v6282 = vadd.f32 %v6193, %v6281
        %v6283 = vpop.f32.mrf.mxu0
        %v6284 = vadd.f32 %v6195, %v6283
        %6285 = vmatmul.bf16.gmra.mxu0 %v4905
        %v6286 = vpop.f32.mrf.mxu0
        %v6287 = vadd.f32 %v6198, %v6286
        %v6288 = vpop.f32.mrf.mxu0
        %v6289 = vadd.f32 %v6200, %v6288
        %6290 = vmatmul.bf16.gmra.mxu0 %v4914
        %v6291 = vpop.f32.mrf.mxu0
        %v6292 = vadd.f32 %v6203, %v6291
        %v6293 = vpop.f32.mrf.mxu0
        %v6294 = vadd.f32 %v6205, %v6293
        %6295 = vmatmul.bf16.gmra.mxu0 %v4923
        %v6296 = vpop.f32.mrf.mxu0
        %v6297 = vadd.f32 %v6208, %v6296
        %v6298 = vpop.f32.mrf.mxu0
        %v6299 = vadd.f32 %v6210, %v6298
        %6300 = vdwg.mxu0
        %v6301 = vmax.f32 %v6222, 0.0
        %v6302 = vmax.f32 %v6224, 0.0
        %v6303 = vmax.f32 %v6227, 0.0
        %v6304 = vmax.f32 %v6229, 0.0
        %v6305 = vmax.f32 %v6232, 0.0
        %v6306 = vmax.f32 %v6234, 0.0
        %v6307 = vmax.f32 %v6237, 0.0
        %v6308 = vmax.f32 %v6239, 0.0
        %v6309 = vmax.f32 %v6242, 0.0
        %v6310 = vmax.f32 %v6244, 0.0
        %v6311 = vmax.f32 %v6247, 0.0
        %v6312 = vmax.f32 %v6249, 0.0
        %v6313 = vmax.f32 %v6252, 0.0
        %v6314 = vmax.f32 %v6254, 0.0
        %v6315 = vmax.f32 %v6257, 0.0
        %v6316 = vmax.f32 %v6259, 0.0
        %v6317 = vmax.f32 %v6262, 0.0
        %v6318 = vmax.f32 %v6264, 0.0
        %v6319 = vmax.f32 %v6267, 0.0
        %v6320 = vmax.f32 %v6269, 0.0
        %v6321 = vmax.f32 %v6272, 0.0
        %v6322 = vmax.f32 %v6274, 0.0
        %v6323 = vmax.f32 %v6277, 0.0
        %v6324 = vmax.f32 %v6279, 0.0
        %v6325 = vmax.f32 %v6282, 0.0
        %v6326 = vmax.f32 %v6284, 0.0
        %v6327 = vmax.f32 %v6287, 0.0
        %v6328 = vmax.f32 %v6289, 0.0
        %v6329 = vmax.f32 %v6292, 0.0
        %v6330 = vmax.f32 %v6294, 0.0
        %v6331 = vmax.f32 %v6297, 0.0
        %v6332 = vmax.f32 %v6299, 0.0
        %6333 = vst [vmem:[%s217] sm:$0xff] %v6301
        %6334 = vst [vmem:[%s217 + $0x8] sm:$0xff] %v6302
        %6335 = vst [vmem:[%s217 + $0x10] sm:$0xff] %v6303
        %6336 = vst [vmem:[%s217 + $0x18] sm:$0xff] %v6304
        %6337 = vst [vmem:[%s217 + $0x20] sm:$0xff] %v6305
        %6338 = vst [vmem:[%s217 + $0x28] sm:$0xff] %v6306
        %6339 = vst [vmem:[%s217 + $0x30] sm:$0xff] %v6307
        %6340 = vst [vmem:[%s217 + $0x38] sm:$0xff] %v6308
        %6341 = vst [vmem:[%s217 + $0x40] sm:$0xff] %v6309
        %6342 = vst [vmem:[%s217 + $0x48] sm:$0xff] %v6310
        %6343 = vst [vmem:[%s217 + $0x50] sm:$0xff] %v6311
        %6344 = vst [vmem:[%s217 + $0x58] sm:$0xff] %v6312
        %6345 = vst [vmem:[%s217 + $0x60] sm:$0xff] %v6313
        %6346 = vst [vmem:[%s217 + $0x68] sm:$0xff] %v6314
        %6347 = vst [vmem:[%s217 + $0x70] sm:$0xff] %v6315
        %6348 = vst [vmem:[%s217 + $0x78] sm:$0xff] %v6316
        %6349 = vst [vmem:[%s217 + $0x80] sm:$0xff] %v6317
        %6350 = vst [vmem:[%s217 + $0x88] sm:$0xff] %v6318
        %6351 = vst [vmem:[%s217 + $0x90] sm:$0xff] %v6319
        %6352 = vst [vmem:[%s217 + $0x98] sm:$0xff] %v6320
        %6353 = vst [vmem:[%s217 + $0xa0] sm:$0xff] %v6321
        %6354 = vst [vmem:[%s217 + $0xa8] sm:$0xff] %v6322
        %6355 = vst [vmem:[%s217 + $0xb0] sm:$0xff] %v6323
        %6356 = vst [vmem:[%s217 + $0xb8] sm:$0xff] %v6324
        %6357 = vst [vmem:[%s217 + $0xc0] sm:$0xff] %v6325
        %6358 = vst [vmem:[%s217 + $0xc8] sm:$0xff] %v6326
        %6359 = vst [vmem:[%s217 + $0xd0] sm:$0xff] %v6327
        %6360 = vst [vmem:[%s217 + $0xd8] sm:$0xff] %v6328
        %6361 = vst [vmem:[%s217 + $0xe0] sm:$0xff] %v6329
        %6362 = vst [vmem:[%s217 + $0xe8] sm:$0xff] %v6330
        %6363 = vst [vmem:[%s217 + $0xf0] sm:$0xff] %v6331
        %6364 = vst [vmem:[%s217 + $0xf8] sm:$0xff] %v6332
        %s6365 = sand.u32 %s137, 1
        %s6366 = scalar_lea.sflag [#allocation7], %s6365
        %s6367 = sand.u32 %s137, 1
        %s6368 = smul.addr %s6367, 256
        %s6369 = scalar_lea.vmem [#allocation6], %s6368
        // Predicated region
        $region41: #{double_conv.1} parent=39 // pred_check
          %p6370 = pneg %p147
        $region42: #{double_conv.1} parent=39 // pred_check_branch
          %6372 = sbr.rel (%p6370) target = $region44
        $region43: #{double_conv.1} parent=39 // pred_region
          %6374 = vsyncadd %s6366, 0
          %s6375 = smul.addr %s19, 32
          %s6376 = smul.addr %s6375, 8
          %s6377 = scalar_lea.hbm %s5, %s6376
          %s6378 = sshll.u32 %s6369, 4
          %s6379 = int_to_ptr.vmem [resolvable:$true] %s6378
          %s6380 = sshll.u32 %s6377, 4
          %s6381 = int_to_ptr.hbm [resolvable:$true] %s6380
          %6386 = dma.vmem_to_hbm [thread:$0]  %s6379, 4096, %s6381, %s6366, 128, 128, 8
        $region44: #{double_conv.1} parent=39 // pred_fallthru
          _
      $region40: #{double_conv.1} parent=5 // pred_fallthru
        _
      %p6387 = scmp.le.s32.totalorder 2, %s14
      // Predicated region
      $region45: #{double_conv.1} parent=5 // pred_check
        %p6388 = pneg %p6387
      $region46: #{double_conv.1} parent=5 // pred_check_branch
        %6390 = sbr.rel (%p6388) target = $region48
      $region47: #{double_conv.1} parent=5 // pred_region
        %s6391 = ssub.s32 %s14, 2
        // Predicated region
        $region49: #{double_conv.1} parent=47 // pred_check
          %p6392 = pneg %p153
        $region50: #{double_conv.1} parent=47 // pred_check_branch
          %6394 = sbr.rel (%p6392) target = $region52
        $region51: #{double_conv.1} parent=47 // pred_region
          %s6395 = sand.u32 %s138, 1
          %s6396 = scalar_lea.sflag [#allocation7], %s6395
          %s6397 = sand.u32 %s138, 1
          %s6398 = smul.addr %s6397, 256
          %s6399 = scalar_lea.vmem [#allocation6], %s6398
          %6401 = dma.done %s6396, 4096
        $region52: #{double_conv.1} parent=47 // pred_fallthru
          _
      $region48: #{double_conv.1} parent=5 // pred_fallthru
        _
    $region6: #{double_conv.1} parent=1 // loop_footer
      %s18 = sadd.s32 1, %s14
    $region7: #{double_conv.1} parent=1 // loop_footer_branch
      %13 = sbr.rel target = $region3
    $region8: #{double_conv.1} parent=1 // loop_exit
      _
    %6402 = vsyncpa [#allocation7], 1
    %s6403 = scalar_lea.sflag [#allocation7], 1
    %6404 = vsyncpa %s6403, 1

</llo_original>
